<compile_context>
chip_gen: v7x
topology: tpu7x:2x2x1
jax: 0.10.0
libtpu: 0.0.40
codegen_flags: <defaults>
</compile_context>

<pallas_src>
import jax
import jax.numpy as jnp
from jax import lax
from jax.experimental import pallas as pl
from jax.experimental.pallas import tpu as pltpu


def _round_up(x, m):
    return ((x + m - 1) // m) * m


# ----------------------------------------------------------------------------
# Phase 1 kernel: LSTM recurrence (single invocation, weights VMEM-resident)
# ----------------------------------------------------------------------------
def _make_recurrence_kernel(num_layers: int, T: int, Bp: int, Hp: int, unroll):
    L = num_layers

    def kernel(*refs):
        emb_ref = refs[0]                  # (T*Bp, Ep)      bf16
        wih = refs[1:1 + L]                # l=0: (Ep,4Hp); l>0: (Hp,4Hp) bf16
        whh = refs[1 + L:1 + 2 * L]        # (Hp, 4Hp)       bf16
        hout_ref = refs[1 + 2 * L]         # (T*Bp, Hp)      f32  (output)
        xproj_ref = refs[2 + 2 * L]        # (T*Bp, 4Hp)     f32  (scratch)

        # Hoisted layer-0 input projection: one big MXU GEMM with M = T*Bp
        # instead of T tiny M=Bp matmuls on the serial critical path.
        xproj_ref[...] = jnp.dot(emb_ref[...], wih[0][...],
                                 preferred_element_type=jnp.float32)

        def step(t, carry):
            hs, cs = carry[:L], carry[L:]
            row0 = pl.multiple_of(t * Bp, Bp)
            new_hs, new_cs = [], []
            x_bf = None
            for l in range(L):
                h_prev, c_prev = hs[l], cs[l]
                h_bf = h_prev.astype(jnp.bfloat16)
                hh = jnp.dot(h_bf, whh[l][...],
                             preferred_element_type=jnp.float32)
                if l == 0:
                    gates = xproj_ref[pl.ds(row0, Bp), :] + hh
                else:
                    # Two accumulating dots -- no per-step concatenate.
                    gates = jnp.dot(x_bf, wih[l][...],
                                    preferred_element_type=jnp.float32) + hh
                # torch.nn.LSTM gate order: i, f, g, o (128-lane-aligned).
                i_g = jax.nn.sigmoid(gates[:, 0 * Hp:1 * Hp])
                f_g = jax.nn.sigmoid(gates[:, 1 * Hp:2 * Hp])
                g_g = jnp.tanh(gates[:, 2 * Hp:3 * Hp])
                o_g = jax.nn.sigmoid(gates[:, 3 * Hp:4 * Hp])
                c_new = f_g * c_prev + i_g * g_g          # f32 cell state
                h_new = o_g * jnp.tanh(c_new)
                new_hs.append(h_new)
                new_cs.append(c_new)
                # inter-layer dropout is identity at inference
                x_bf = h_new.astype(jnp.bfloat16)
            # Emit only the top-layer hidden state; logits are deferred.
            hout_ref[pl.ds(row0, Bp), :] = new_hs[-1]
            return tuple(new_hs) + tuple(new_cs)

        # init_hidden: zero LSTM state once before the recurrence.
        init = tuple(jnp.zeros((Bp, Hp), jnp.float32) for _ in range(2 * L))
        lax.fori_loop(0, T, step, init, unroll=unroll)

    return kernel


# ----------------------------------------------------------------------------
# Phase 2 kernel: batched logits + log_softmax (grid-tiled over rows)
# ----------------------------------------------------------------------------
def _logit_logsoftmax_kernel(h_ref, w_ref, b_ref, out_ref):
    logits = jnp.dot(h_ref[...].astype(jnp.bfloat16), w_ref[...],
                     preferred_element_type=jnp.float32) + b_ref[...]
    m = jnp.max(logits, axis=-1, keepdims=True)
    z = logits - m
    lse = jnp.log(jnp.sum(jnp.exp(z), axis=-1, keepdims=True))
    out_ref[...] = z - lse


# ----------------------------------------------------------------------------
# Wrapper (embedding gather, padding, weight fusion, pallas_calls)
# ----------------------------------------------------------------------------
def showtell_forward(fc_feats, seq, params):
    """Equivalent of ShowTellModel.forward (eval mode, ss_prob=0)."""
    B, _F = fc_feats.shape
    T = seq.shape[1]
    E = params["w_img"].shape[0]
    L = len(params["w_ih"])
    H = params["w_hh"][0].shape[1]
    V1 = params["w_logit"].shape[0]

    Bp = _round_up(B, 8)       # sublane multiple
    Ep = _round_up(E, 128)     # lane multiples
    Hp = _round_up(H, 128)
    Vp = _round_up(V1, 128)

    # Step 0 input is img_embed(fc_feats); steps i>0 use embed(seq[:, i-1]).
    # Both stay in XLA (single GEMM + gather); the kernel receives bf16.
    xt_img = fc_feats @ params["w_img"].T + params["b_img"]          # (B, E)
    tok_emb = params["embed"][seq[:, :T - 1]]                        # (B,T-1,E)
    xt_seq = jnp.concatenate([xt_img[:, None, :], tok_emb], axis=1)  # (B, T, E)
    xt_seq = jnp.transpose(xt_seq, (1, 0, 2))                        # (T, B, E)
    emb = jnp.zeros((T, Bp, Ep), jnp.bfloat16)
    emb = emb.at[:, :B, :E].set(xt_seq.astype(jnp.bfloat16))
    emb = emb.reshape(T * Bp, Ep)
    # TODO(synk): the data-dependent early `break` when seq[:, i-1].sum()==0
    # (i>=2) is not implemented; all T steps are computed.

    # Padded bf16 LSTM weights; gate g occupies lanes [g*Hp, g*Hp + H).
    # Zero padding keeps padded h/c lanes and padded batch rows exactly zero.
    wih_list, whh_list = [], []
    for l in range(L):
        in_dim = params["w_ih"][l].shape[1]
        in_pad = Ep if l == 0 else Hp
        wi = params["w_ih"][l].T                                     # (in_dim,4H)
        wh = params["w_hh"][l].T                                     # (H, 4H)
        wi_p = jnp.zeros((in_pad, 4 * Hp), jnp.float32)
        wh_p = jnp.zeros((Hp, 4 * Hp), jnp.float32)
        for g in range(4):
            wi_p = wi_p.at[:in_dim, g * Hp:g * Hp + H].set(wi[:, g * H:(g + 1) * H])
            wh_p = wh_p.at[:H, g * Hp:g * Hp + H].set(wh[:, g * H:(g + 1) * H])
        wih_list.append(wi_p.astype(jnp.bfloat16))
        whh_list.append(wh_p.astype(jnp.bfloat16))

    # ---- Phase 1: recurrence -------------------------------------------------
    vmem_spec = pl.BlockSpec(memory_space=pltpu.MemorySpace.VMEM)
    unroll = True if T <= 16 else 4   # avoid vreg spills at production T
    est1 = (emb.size * 2 + sum(int(w.size) * 2 for w in wih_list + whh_list)
            + T * Bp * Hp * 4 + T * Bp * 4 * Hp * 4)
    cp1 = None
    if est1 > 12 * (1 << 20):
        # v5e default scoped VMEM is only 16 MiB; size the limit to residency.
        cp1 = pltpu.CompilerParams(vmem_limit_bytes=int(est1 * 1.5) + (4 << 20))
    h_all = pl.pallas_call(
        _make_recurrence_kernel(L, T, Bp, Hp, unroll),
        out_shape=jax.ShapeDtypeStruct((T * Bp, Hp), jnp.float32),
        in_specs=[vmem_spec] * (1 + 2 * L),
        out_specs=vmem_spec,
        scratch_shapes=[pltpu.VMEM((T * Bp, 4 * Hp), jnp.float32)],
        compiler_params=cp1,
    )(emb, *wih_list, *whh_list)

    # ---- Phase 2: batched logits + log_softmax for steps t >= 1 --------------
    w_logit = (jnp.zeros((Hp, Vp), jnp.float32)
               .at[:H, :V1].set(params["w_logit"].T)).astype(jnp.bfloat16)
    b_logit = (jnp.full((1, Vp), -1e9, jnp.float32)   # -1e9 on pad vocab lanes
               .at[0, :V1].set(params["b_logit"]))

    rows = (T - 1) * Bp                    # only outputs[1:] are needed
    RT = min(rows, 256)                    # row tile (multiple of 8)
    rows_p = -(-rows // RT) * RT
    h_rows = h_all[Bp:]                    # drop step 0
    if rows_p != rows:
        h_rows = jnp.zeros((rows_p, Hp), jnp.float32).at[:rows].set(h_rows)

    # TODO(synk): at production vocab sizes also tile over Vp with an online
    # logsumexp so the per-tile (RT, Vp) logits fit v7x's 64 MiB VMEM.
    out = pl.pallas_call(
        _logit_logsoftmax_kernel,
        out_shape=jax.ShapeDtypeStruct((rows_p, Vp), jnp.float32),
        grid=(rows_p // RT,),
        in_specs=[pl.BlockSpec((RT, Hp), lambda i: (i, 0)),
                  pl.BlockSpec((Hp, Vp), lambda i: (0, 0)),
                  pl.BlockSpec((1, Vp), lambda i: (0, 0))],
        out_specs=pl.BlockSpec((RT, Vp), lambda i: (i, 0)),
        compiler_params=pltpu.CompilerParams(
            dimension_semantics=("parallel",)),
    )(h_rows, w_logit, b_logit)

    # Reassemble (B, T-1, V+1), dropping padding rows / lanes.
    out = out[:rows, :V1].reshape(T - 1, Bp, V1)[:, :B]
    return jnp.transpose(out, (1, 0, 2))


# ----------------------------------------------------------------------------
# Pure-JAX reference (f32, for correctness check)
# ----------------------------------------------------------------------------
def showtell_reference(fc_feats, seq, params):
    B = fc_feats.shape[0]
    T = seq.shape[1]
    L = len(params["w_ih"])
    H = params["w_hh"][0].shape[1]
    h = [jnp.zeros((B, H), jnp.float32) for _ in range(L)]
    c = [jnp.zeros((B, H), jnp.float32) for _ in range(L)]
    outputs = []
    for i in range(T):
        if i == 0:
            x = fc_feats @ params["w_img"].T + params["b_img"]
        else:
            x = params["embed"][seq[:, i - 1]]
        for l in range(L):
            gates = x @ params["w_ih"][l].T + h[l] @ params["w_hh"][l].T
            i_g = jax.nn.sigmoid(gates[:, 0 * H:1 * H])
            f_g = jax.nn.sigmoid(gates[:, 1 * H:2 * H])
            g_g = jnp.tanh(gates[:, 2 * H:3 * H])
            o_g = jax.nn.sigmoid(gates[:, 3 * H:4 * H])
            c[l] = f_g * c[l] + i_g * g_g
            h[l] = o_g * jnp.tanh(c[l])
            x = h[l]
        logits = x @ params["w_logit"].T + params["b_logit"]
        outputs.append(jax.nn.log_softmax(logits, axis=-1))
    return jnp.stack(outputs[1:], axis=1)


# ----------------------------------------------------------------------------
# Main
# ----------------------------------------------------------------------------
if __name__ == "__main__":
    # Small opt-like config.
    vocab_size = 31          # -> logits over vocab_size + 1 = 32
    input_encoding_size = 16
    rnn_size = 32
    num_layers = 2
    fc_feat_size = 24
    B = 4                    # batch
    T = 8                    # seq.size(1)
    V1 = vocab_size + 1

    key = jax.random.PRNGKey(0)
    keys = jax.random.split(key, 16)

    def unif(k, shape, r):
        return jax.random.uniform(k, shape, jnp.float32, minval=-r, maxval=r)

    params = {
        # nn.Linear(fc_feat_size, input_encoding_size)
        "w_img": unif(keys[0], (input_encoding_size, fc_feat_size),
                      1.0 / jnp.sqrt(fc_feat_size)),
        "b_img": unif(keys[1], (input_encoding_size,),
                      1.0 / jnp.sqrt(fc_feat_size)),
        # nn.Embedding(vocab_size + 1, input_encoding_size), uniform(-0.1, 0.1)
        "embed": unif(keys[2], (V1, input_encoding_size), 0.1),
        # nn.Linear(rnn_size, vocab_size + 1): weight U(-0.1,0.1), bias = 0
        "w_logit": unif(keys[3], (V1, rnn_size), 0.1),
        "b_logit": jnp.zeros((V1,), jnp.float32),
        # nn.LSTM(input_encoding_size, rnn_size, num_layers, bias=False)
        "w_ih": [],
        "w_hh": [],
    }
    r = 1.0 / jnp.sqrt(rnn_size)
    for l in range(num_layers):
        in_dim = input_encoding_size if l == 0 else rnn_size
        params["w_ih"].append(unif(keys[4 + 2 * l], (4 * rnn_size, in_dim), r))
        params["w_hh"].append(unif(keys[5 + 2 * l], (4 * rnn_size, rnn_size), r))

    fc_feats = jax.random.normal(keys[12], (B, fc_feat_size), jnp.float32)
    att_feats = jax.random.normal(keys[13], (B, 6, fc_feat_size), jnp.float32)
    # tokens in [1, vocab_size] so the early-break condition never triggers
    seq = jax.random.randint(keys[14], (B, T), 1, vocab_size + 1, jnp.int32)

    out = showtell_forward(fc_feats, seq, params)      # att_feats unused in fwd
    out = jax.block_until_ready(out)

    ref = showtell_reference(fc_feats, seq, params)
    assert out.shape == (B, T - 1, V1), out.shape
    # bf16 matmul operands vs f32 reference -> relaxed tolerance.
    assert jnp.allclose(out, ref, atol=3e-2, rtol=3e-2), (
        float(jnp.max(jnp.abs(out - ref))))

    print("KERNEL_OK")
</pallas_src>

<mosaic_0001>
module attributes {stable_mosaic.version = 11 : i64} {
  func.func @kernel(%arg0: memref<64x128xbf16, #tpu.memory_space<vmem>>, %arg1: memref<128x512xbf16, #tpu.memory_space<vmem>>, %arg2: memref<128x512xbf16, #tpu.memory_space<vmem>>, %arg3: memref<128x512xbf16, #tpu.memory_space<vmem>>, %arg4: memref<128x512xbf16, #tpu.memory_space<vmem>>, %arg5: memref<64x128xf32, #tpu.memory_space<vmem>>, %arg6: memref<64x512xf32, #tpu.memory_space<vmem>>) attributes {dimension_semantics = [], scalar_prefetch = 0 : i64, scratch_operands = 1 : i64, tpu.core_type = #tpu.core_type<tc>} {
    %c0 = arith.constant 0 : index
    %c0_0 = arith.constant 0 : index
    %0 = vector.load %arg0[%c0, %c0_0] : memref<64x128xbf16, #tpu.memory_space<vmem>>, vector<64x128xbf16>
    %c0_1 = arith.constant 0 : index
    %c0_2 = arith.constant 0 : index
    %1 = vector.load %arg1[%c0_1, %c0_2] : memref<128x512xbf16, #tpu.memory_space<vmem>>, vector<128x512xbf16>
    %cst = arith.constant dense<0.000000e+00> : vector<64x512xf32>
    %2 = tpu.matmul %0, %1, %cst {dimension_numbers = #tpu.dot_dimension_numbers<[1], [0], [0], [1], [0, 0, 1, 1], [], []>} : vector<64x128xbf16>, vector<128x512xbf16>, vector<64x512xf32> -> vector<64x512xf32>
    %c0_3 = arith.constant 0 : index
    %c0_4 = arith.constant 0 : index
    %3 = vector.load %arg6[%c0_3, %c0_4] : memref<64x512xf32, #tpu.memory_space<vmem>>, vector<64x512xf32>
    tpu.vector_store %arg6[%c0_3, %c0_4], %2 {strides = array<i32>} : memref<64x512xf32, #tpu.memory_space<vmem>>, vector<64x512xf32>,
    %cst_5 = arith.constant 0.000000e+00 : f32
    %4 = vector.broadcast %cst_5 : f32 to vector<8x128xf32>
    %cst_6 = arith.constant 0.000000e+00 : f32
    %5 = vector.broadcast %cst_6 : f32 to vector<8x128xf32>
    %cst_7 = arith.constant 0.000000e+00 : f32
    %6 = vector.broadcast %cst_7 : f32 to vector<8x128xf32>
    %cst_8 = arith.constant 0.000000e+00 : f32
    %7 = vector.broadcast %cst_8 : f32 to vector<8x128xf32>
    %c0_i32 = arith.constant 0 : i32
    %c8_i32 = arith.constant 8 : i32
    %8 = arith.muli %c0_i32, %c8_i32 : i32
    %9 = tpu.assume_multiple %8, 8 : i32
    %10 = arith.truncf %4 : vector<8x128xf32> to vector<8x128xbf16>
    %c0_9 = arith.constant 0 : index
    %c0_10 = arith.constant 0 : index
    %11 = vector.load %arg3[%c0_9, %c0_10] : memref<128x512xbf16, #tpu.memory_space<vmem>>, vector<128x512xbf16>
    %cst_11 = arith.constant dense<0.000000e+00> : vector<8x512xf32>
    %12 = tpu.matmul %10, %11, %cst_11 {dimension_numbers = #tpu.dot_dimension_numbers<[1], [0], [0], [1], [0, 0, 1, 1], [], []>} : vector<8x128xbf16>, vector<128x512xbf16>, vector<8x512xf32> -> vector<8x512xf32>
    %13 = arith.index_cast %9 : i32 to index
    %c0_12 = arith.constant 0 : index
    %14 = vector.load %arg6[%13, %c0_12] : memref<64x512xf32, #tpu.memory_space<vmem>>, vector<8x512xf32>
    %15 = arith.addf %14, %12 : vector<8x512xf32>
    %16 = vector.extract_strided_slice %15 {offsets = [0, 0], sizes = [8, 128], strides = [1, 1]} : vector<8x512xf32> to vector<8x128xf32>
    %17 = arith.negf %16 : vector<8x128xf32>
    %18 = math.exp %17 : vector<8x128xf32>
    %cst_13 = arith.constant 1.000000e+00 : f32
    %19 = vector.broadcast %cst_13 : f32 to vector<8x128xf32>
    %20 = arith.addf %19, %18 : vector<8x128xf32>
    %21 = arith.divf %19, %20 : vector<8x128xf32>
    %22 = vector.extract_strided_slice %15 {offsets = [0, 128], sizes = [8, 128], strides = [1, 1]} : vector<8x512xf32> to vector<8x128xf32>
    %23 = arith.negf %22 : vector<8x128xf32>
    %24 = math.exp %23 : vector<8x128xf32>
    %cst_14 = arith.constant 1.000000e+00 : f32
    %25 = vector.broadcast %cst_14 : f32 to vector<8x128xf32>
    %26 = arith.addf %25, %24 : vector<8x128xf32>
    %27 = arith.divf %25, %26 : vector<8x128xf32>
    %28 = vector.extract_strided_slice %15 {offsets = [0, 256], sizes = [8, 128], strides = [1, 1]} : vector<8x512xf32> to vector<8x128xf32>
    %29 = math.tanh %28 : vector<8x128xf32>
    %30 = vector.extract_strided_slice %15 {offsets = [0, 384], sizes = [8, 128], strides = [1, 1]} : vector<8x512xf32> to vector<8x128xf32>
    %31 = arith.negf %30 : vector<8x128xf32>
    %32 = math.exp %31 : vector<8x128xf32>
    %cst_15 = arith.constant 1.000000e+00 : f32
    %33 = vector.broadcast %cst_15 : f32 to vector<8x128xf32>
    %34 = arith.addf %33, %32 : vector<8x128xf32>
    %35 = arith.divf %33, %34 : vector<8x128xf32>
    %36 = arith.mulf %27, %6 : vector<8x128xf32>
    %37 = arith.mulf %21, %29 : vector<8x128xf32>
    %38 = arith.addf %36, %37 : vector<8x128xf32>
    %39 = math.tanh %38 : vector<8x128xf32>
    %40 = arith.mulf %35, %39 : vector<8x128xf32>
    %41 = arith.truncf %40 : vector<8x128xf32> to vector<8x128xbf16>
    %42 = arith.truncf %5 : vector<8x128xf32> to vector<8x128xbf16>
    %c0_16 = arith.constant 0 : index
    %c0_17 = arith.constant 0 : index
    %43 = vector.load %arg4[%c0_16, %c0_17] : memref<128x512xbf16, #tpu.memory_space<vmem>>, vector<128x512xbf16>
    %cst_18 = arith.constant dense<0.000000e+00> : vector<8x512xf32>
    %44 = tpu.matmul %42, %43, %cst_18 {dimension_numbers = #tpu.dot_dimension_numbers<[1], [0], [0], [1], [0, 0, 1, 1], [], []>} : vector<8x128xbf16>, vector<128x512xbf16>, vector<8x512xf32> -> vector<8x512xf32>
    %c0_19 = arith.constant 0 : index
    %c0_20 = arith.constant 0 : index
    %45 = vector.load %arg2[%c0_19, %c0_20] : memref<128x512xbf16, #tpu.memory_space<vmem>>, vector<128x512xbf16>
    %cst_21 = arith.constant dense<0.000000e+00> : vector<8x512xf32>
    %46 = tpu.matmul %41, %45, %cst_21 {dimension_numbers = #tpu.dot_dimension_numbers<[1], [0], [0], [1], [0, 0, 1, 1], [], []>} : vector<8x128xbf16>, vector<128x512xbf16>, vector<8x512xf32> -> vector<8x512xf32>
    %47 = arith.addf %46, %44 : vector<8x512xf32>
    %48 = vector.extract_strided_slice %47 {offsets = [0, 0], sizes = [8, 128], strides = [1, 1]} : vector<8x512xf32> to vector<8x128xf32>
    %49 = arith.negf %48 : vector<8x128xf32>
    %50 = math.exp %49 : vector<8x128xf32>
    %cst_22 = arith.constant 1.000000e+00 : f32
    %51 = vector.broadcast %cst_22 : f32 to vector<8x128xf32>
    %52 = arith.addf %51, %50 : vector<8x128xf32>
    %53 = arith.divf %51, %52 : vector<8x128xf32>
    %54 = vector.extract_strided_slice %47 {offsets = [0, 128], sizes = [8, 128], strides = [1, 1]} : vector<8x512xf32> to vector<8x128xf32>
    %55 = arith.negf %54 : vector<8x128xf32>
    %56 = math.exp %55 : vector<8x128xf32>
    %cst_23 = arith.constant 1.000000e+00 : f32
    %57 = vector.broadcast %cst_23 : f32 to vector<8x128xf32>
    %58 = arith.addf %57, %56 : vector<8x128xf32>
    %59 = arith.divf %57, %58 : vector<8x128xf32>
    %60 = vector.extract_strided_slice %47 {offsets = [0, 256], sizes = [8, 128], strides = [1, 1]} : vector<8x512xf32> to vector<8x128xf32>
    %61 = math.tanh %60 : vector<8x128xf32>
    %62 = vector.extract_strided_slice %47 {offsets = [0, 384], sizes = [8, 128], strides = [1, 1]} : vector<8x512xf32> to vector<8x128xf32>
    %63 = arith.negf %62 : vector<8x128xf32>
    %64 = math.exp %63 : vector<8x128xf32>
    %cst_24 = arith.constant 1.000000e+00 : f32
    %65 = vector.broadcast %cst_24 : f32 to vector<8x128xf32>
    %66 = arith.addf %65, %64 : vector<8x128xf32>
    %67 = arith.divf %65, %66 : vector<8x128xf32>
    %68 = arith.mulf %59, %7 : vector<8x128xf32>
    %69 = arith.mulf %53, %61 : vector<8x128xf32>
    %70 = arith.addf %68, %69 : vector<8x128xf32>
    %71 = math.tanh %70 : vector<8x128xf32>
    %72 = arith.mulf %67, %71 : vector<8x128xf32>
    %73 = arith.index_cast %9 : i32 to index
    %c0_25 = arith.constant 0 : index
    %74 = vector.load %arg5[%73, %c0_25] : memref<64x128xf32, #tpu.memory_space<vmem>>, vector<8x128xf32>
    tpu.vector_store %arg5[%73, %c0_25], %72 {strides = array<i32>} : memref<64x128xf32, #tpu.memory_space<vmem>>, vector<8x128xf32>,
    %c1_i32 = arith.constant 1 : i32
    %c8_i32_26 = arith.constant 8 : i32
    %75 = arith.muli %c1_i32, %c8_i32_26 : i32
    %76 = tpu.assume_multiple %75, 8 : i32
    %77 = arith.truncf %40 : vector<8x128xf32> to vector<8x128xbf16>
    %c0_27 = arith.constant 0 : index
    %c0_28 = arith.constant 0 : index
    %78 = vector.load %arg3[%c0_27, %c0_28] : memref<128x512xbf16, #tpu.memory_space<vmem>>, vector<128x512xbf16>
    %cst_29 = arith.constant dense<0.000000e+00> : vector<8x512xf32>
    %79 = tpu.matmul %77, %78, %cst_29 {dimension_numbers = #tpu.dot_dimension_numbers<[1], [0], [0], [1], [0, 0, 1, 1], [], []>} : vector<8x128xbf16>, vector<128x512xbf16>, vector<8x512xf32> -> vector<8x512xf32>
    %80 = arith.index_cast %76 : i32 to index
    %c0_30 = arith.constant 0 : index
    %81 = vector.load %arg6[%80, %c0_30] : memref<64x512xf32, #tpu.memory_space<vmem>>, vector<8x512xf32>
    %82 = arith.addf %81, %79 : vector<8x512xf32>
    %83 = vector.extract_strided_slice %82 {offsets = [0, 0], sizes = [8, 128], strides = [1, 1]} : vector<8x512xf32> to vector<8x128xf32>
    %84 = arith.negf %83 : vector<8x128xf32>
    %85 = math.exp %84 : vector<8x128xf32>
    %cst_31 = arith.constant 1.000000e+00 : f32
    %86 = vector.broadcast %cst_31 : f32 to vector<8x128xf32>
    %87 = arith.addf %86, %85 : vector<8x128xf32>
    %88 = arith.divf %86, %87 : vector<8x128xf32>
    %89 = vector.extract_strided_slice %82 {offsets = [0, 128], sizes = [8, 128], strides = [1, 1]} : vector<8x512xf32> to vector<8x128xf32>
    %90 = arith.negf %89 : vector<8x128xf32>
    %91 = math.exp %90 : vector<8x128xf32>
    %cst_32 = arith.constant 1.000000e+00 : f32
    %92 = vector.broadcast %cst_32 : f32 to vector<8x128xf32>
    %93 = arith.addf %92, %91 : vector<8x128xf32>
    %94 = arith.divf %92, %93 : vector<8x128xf32>
    %95 = vector.extract_strided_slice %82 {offsets = [0, 256], sizes = [8, 128], strides = [1, 1]} : vector<8x512xf32> to vector<8x128xf32>
    %96 = math.tanh %95 : vector<8x128xf32>
    %97 = vector.extract_strided_slice %82 {offsets = [0, 384], sizes = [8, 128], strides = [1, 1]} : vector<8x512xf32> to vector<8x128xf32>
    %98 = arith.negf %97 : vector<8x128xf32>
    %99 = math.exp %98 : vector<8x128xf32>
    %cst_33 = arith.constant 1.000000e+00 : f32
    %100 = vector.broadcast %cst_33 : f32 to vector<8x128xf32>
    %101 = arith.addf %100, %99 : vector<8x128xf32>
    %102 = arith.divf %100, %101 : vector<8x128xf32>
    %103 = arith.mulf %94, %38 : vector<8x128xf32>
    %104 = arith.mulf %88, %96 : vector<8x128xf32>
    %105 = arith.addf %103, %104 : vector<8x128xf32>
    %106 = math.tanh %105 : vector<8x128xf32>
    %107 = arith.mulf %102, %106 : vector<8x128xf32>
    %108 = arith.truncf %107 : vector<8x128xf32> to vector<8x128xbf16>
    %109 = arith.truncf %72 : vector<8x128xf32> to vector<8x128xbf16>
    %c0_34 = arith.constant 0 : index
    %c0_35 = arith.constant 0 : index
    %110 = vector.load %arg4[%c0_34, %c0_35] : memref<128x512xbf16, #tpu.memory_space<vmem>>, vector<128x512xbf16>
    %cst_36 = arith.constant dense<0.000000e+00> : vector<8x512xf32>
    %111 = tpu.matmul %109, %110, %cst_36 {dimension_numbers = #tpu.dot_dimension_numbers<[1], [0], [0], [1], [0, 0, 1, 1], [], []>} : vector<8x128xbf16>, vector<128x512xbf16>, vector<8x512xf32> -> vector<8x512xf32>
    %c0_37 = arith.constant 0 : index
    %c0_38 = arith.constant 0 : index
    %112 = vector.load %arg2[%c0_37, %c0_38] : memref<128x512xbf16, #tpu.memory_space<vmem>>, vector<128x512xbf16>
    %cst_39 = arith.constant dense<0.000000e+00> : vector<8x512xf32>
    %113 = tpu.matmul %108, %112, %cst_39 {dimension_numbers = #tpu.dot_dimension_numbers<[1], [0], [0], [1], [0, 0, 1, 1], [], []>} : vector<8x128xbf16>, vector<128x512xbf16>, vector<8x512xf32> -> vector<8x512xf32>
    %114 = arith.addf %113, %111 : vector<8x512xf32>
    %115 = vector.extract_strided_slice %114 {offsets = [0, 0], sizes = [8, 128], strides = [1, 1]} : vector<8x512xf32> to vector<8x128xf32>
    %116 = arith.negf %115 : vector<8x128xf32>
    %117 = math.exp %116 : vector<8x128xf32>
    %cst_40 = arith.constant 1.000000e+00 : f32
    %118 = vector.broadcast %cst_40 : f32 to vector<8x128xf32>
    %119 = arith.addf %118, %117 : vector<8x128xf32>
    %120 = arith.divf %118, %119 : vector<8x128xf32>
    %121 = vector.extract_strided_slice %114 {offsets = [0, 128], sizes = [8, 128], strides = [1, 1]} : vector<8x512xf32> to vector<8x128xf32>
    %122 = arith.negf %121 : vector<8x128xf32>
    %123 = math.exp %122 : vector<8x128xf32>
    %cst_41 = arith.constant 1.000000e+00 : f32
    %124 = vector.broadcast %cst_41 : f32 to vector<8x128xf32>
    %125 = arith.addf %124, %123 : vector<8x128xf32>
    %126 = arith.divf %124, %125 : vector<8x128xf32>
    %127 = vector.extract_strided_slice %114 {offsets = [0, 256], sizes = [8, 128], strides = [1, 1]} : vector<8x512xf32> to vector<8x128xf32>
    %128 = math.tanh %127 : vector<8x128xf32>
    %129 = vector.extract_strided_slice %114 {offsets = [0, 384], sizes = [8, 128], strides = [1, 1]} : vector<8x512xf32> to vector<8x128xf32>
    %130 = arith.negf %129 : vector<8x128xf32>
    %131 = math.exp %130 : vector<8x128xf32>
    %cst_42 = arith.constant 1.000000e+00 : f32
    %132 = vector.broadcast %cst_42 : f32 to vector<8x128xf32>
    %133 = arith.addf %132, %131 : vector<8x128xf32>
    %134 = arith.divf %132, %133 : vector<8x128xf32>
    %135 = arith.mulf %126, %70 : vector<8x128xf32>
    %136 = arith.mulf %120, %128 : vector<8x128xf32>
    %137 = arith.addf %135, %136 : vector<8x128xf32>
    %138 = math.tanh %137 : vector<8x128xf32>
    %139 = arith.mulf %134, %138 : vector<8x128xf32>
    %140 = arith.index_cast %76 : i32 to index
    %c0_43 = arith.constant 0 : index
    %141 = vector.load %arg5[%140, %c0_43] : memref<64x128xf32, #tpu.memory_space<vmem>>, vector<8x128xf32>
    tpu.vector_store %arg5[%140, %c0_43], %139 {strides = array<i32>} : memref<64x128xf32, #tpu.memory_space<vmem>>, vector<8x128xf32>,
    %c2_i32 = arith.constant 2 : i32
    %c8_i32_44 = arith.constant 8 : i32
    %142 = arith.muli %c2_i32, %c8_i32_44 : i32
    %143 = tpu.assume_multiple %142, 8 : i32
    %144 = arith.truncf %107 : vector<8x128xf32> to vector<8x128xbf16>
    %c0_45 = arith.constant 0 : index
    %c0_46 = arith.constant 0 : index
    %145 = vector.load %arg3[%c0_45, %c0_46] : memref<128x512xbf16, #tpu.memory_space<vmem>>, vector<128x512xbf16>
    %cst_47 = arith.constant dense<0.000000e+00> : vector<8x512xf32>
    %146 = tpu.matmul %144, %145, %cst_47 {dimension_numbers = #tpu.dot_dimension_numbers<[1], [0], [0], [1], [0, 0, 1, 1], [], []>} : vector<8x128xbf16>, vector<128x512xbf16>, vector<8x512xf32> -> vector<8x512xf32>
    %147 = arith.index_cast %143 : i32 to index
    %c0_48 = arith.constant 0 : index
    %148 = vector.load %arg6[%147, %c0_48] : memref<64x512xf32, #tpu.memory_space<vmem>>, vector<8x512xf32>
    %149 = arith.addf %148, %146 : vector<8x512xf32>
    %150 = vector.extract_strided_slice %149 {offsets = [0, 0], sizes = [8, 128], strides = [1, 1]} : vector<8x512xf32> to vector<8x128xf32>
    %151 = arith.negf %150 : vector<8x128xf32>
    %152 = math.exp %151 : vector<8x128xf32>
    %cst_49 = arith.constant 1.000000e+00 : f32
    %153 = vector.broadcast %cst_49 : f32 to vector<8x128xf32>
    %154 = arith.addf %153, %152 : vector<8x128xf32>
    %155 = arith.divf %153, %154 : vector<8x128xf32>
    %156 = vector.extract_strided_slice %149 {offsets = [0, 128], sizes = [8, 128], strides = [1, 1]} : vector<8x512xf32> to vector<8x128xf32>
    %157 = arith.negf %156 : vector<8x128xf32>
    %158 = math.exp %157 : vector<8x128xf32>
    %cst_50 = arith.constant 1.000000e+00 : f32
    %159 = vector.broadcast %cst_50 : f32 to vector<8x128xf32>
    %160 = arith.addf %159, %158 : vector<8x128xf32>
    %161 = arith.divf %159, %160 : vector<8x128xf32>
    %162 = vector.extract_strided_slice %149 {offsets = [0, 256], sizes = [8, 128], strides = [1, 1]} : vector<8x512xf32> to vector<8x128xf32>
    %163 = math.tanh %162 : vector<8x128xf32>
    %164 = vector.extract_strided_slice %149 {offsets = [0, 384], sizes = [8, 128], strides = [1, 1]} : vector<8x512xf32> to vector<8x128xf32>
    %165 = arith.negf %164 : vector<8x128xf32>
    %166 = math.exp %165 : vector<8x128xf32>
    %cst_51 = arith.constant 1.000000e+00 : f32
    %167 = vector.broadcast %cst_51 : f32 to vector<8x128xf32>
    %168 = arith.addf %167, %166 : vector<8x128xf32>
    %169 = arith.divf %167, %168 : vector<8x128xf32>
    %170 = arith.mulf %161, %105 : vector<8x128xf32>
    %171 = arith.mulf %155, %163 : vector<8x128xf32>
    %172 = arith.addf %170, %171 : vector<8x128xf32>
    %173 = math.tanh %172 : vector<8x128xf32>
    %174 = arith.mulf %169, %173 : vector<8x128xf32>
    %175 = arith.truncf %174 : vector<8x128xf32> to vector<8x128xbf16>
    %176 = arith.truncf %139 : vector<8x128xf32> to vector<8x128xbf16>
    %c0_52 = arith.constant 0 : index
    %c0_53 = arith.constant 0 : index
    %177 = vector.load %arg4[%c0_52, %c0_53] : memref<128x512xbf16, #tpu.memory_space<vmem>>, vector<128x512xbf16>
    %cst_54 = arith.constant dense<0.000000e+00> : vector<8x512xf32>
    %178 = tpu.matmul %176, %177, %cst_54 {dimension_numbers = #tpu.dot_dimension_numbers<[1], [0], [0], [1], [0, 0, 1, 1], [], []>} : vector<8x128xbf16>, vector<128x512xbf16>, vector<8x512xf32> -> vector<8x512xf32>
    %c0_55 = arith.constant 0 : index
    %c0_56 = arith.constant 0 : index
    %179 = vector.load %arg2[%c0_55, %c0_56] : memref<128x512xbf16, #tpu.memory_space<vmem>>, vector<128x512xbf16>
    %cst_57 = arith.constant dense<0.000000e+00> : vector<8x512xf32>
    %180 = tpu.matmul %175, %179, %cst_57 {dimension_numbers = #tpu.dot_dimension_numbers<[1], [0], [0], [1], [0, 0, 1, 1], [], []>} : vector<8x128xbf16>, vector<128x512xbf16>, vector<8x512xf32> -> vector<8x512xf32>
    %181 = arith.addf %180, %178 : vector<8x512xf32>
    %182 = vector.extract_strided_slice %181 {offsets = [0, 0], sizes = [8, 128], strides = [1, 1]} : vector<8x512xf32> to vector<8x128xf32>
    %183 = arith.negf %182 : vector<8x128xf32>
    %184 = math.exp %183 : vector<8x128xf32>
    %cst_58 = arith.constant 1.000000e+00 : f32
    %185 = vector.broadcast %cst_58 : f32 to vector<8x128xf32>
    %186 = arith.addf %185, %184 : vector<8x128xf32>
    %187 = arith.divf %185, %186 : vector<8x128xf32>
    %188 = vector.extract_strided_slice %181 {offsets = [0, 128], sizes = [8, 128], strides = [1, 1]} : vector<8x512xf32> to vector<8x128xf32>
    %189 = arith.negf %188 : vector<8x128xf32>
    %190 = math.exp %189 : vector<8x128xf32>
    %cst_59 = arith.constant 1.000000e+00 : f32
    %191 = vector.broadcast %cst_59 : f32 to vector<8x128xf32>
    %192 = arith.addf %191, %190 : vector<8x128xf32>
    %193 = arith.divf %191, %192 : vector<8x128xf32>
    %194 = vector.extract_strided_slice %181 {offsets = [0, 256], sizes = [8, 128], strides = [1, 1]} : vector<8x512xf32> to vector<8x128xf32>
    %195 = math.tanh %194 : vector<8x128xf32>
    %196 = vector.extract_strided_slice %181 {offsets = [0, 384], sizes = [8, 128], strides = [1, 1]} : vector<8x512xf32> to vector<8x128xf32>
    %197 = arith.negf %196 : vector<8x128xf32>
    %198 = math.exp %197 : vector<8x128xf32>
    %cst_60 = arith.constant 1.000000e+00 : f32
    %199 = vector.broadcast %cst_60 : f32 to vector<8x128xf32>
    %200 = arith.addf %199, %198 : vector<8x128xf32>
    %201 = arith.divf %199, %200 : vector<8x128xf32>
    %202 = arith.mulf %193, %137 : vector<8x128xf32>
    %203 = arith.mulf %187, %195 : vector<8x128xf32>
    %204 = arith.addf %202, %203 : vector<8x128xf32>
    %205 = math.tanh %204 : vector<8x128xf32>
    %206 = arith.mulf %201, %205 : vector<8x128xf32>
    %207 = arith.index_cast %143 : i32 to index
    %c0_61 = arith.constant 0 : index
    %208 = vector.load %arg5[%207, %c0_61] : memref<64x128xf32, #tpu.memory_space<vmem>>, vector<8x128xf32>
    tpu.vector_store %arg5[%207, %c0_61], %206 {strides = array<i32>} : memref<64x128xf32, #tpu.memory_space<vmem>>, vector<8x128xf32>,
    %c3_i32 = arith.constant 3 : i32
    %c8_i32_62 = arith.constant 8 : i32
    %209 = arith.muli %c3_i32, %c8_i32_62 : i32
    %210 = tpu.assume_multiple %209, 8 : i32
    %211 = arith.truncf %174 : vector<8x128xf32> to vector<8x128xbf16>
    %c0_63 = arith.constant 0 : index
    %c0_64 = arith.constant 0 : index
    %212 = vector.load %arg3[%c0_63, %c0_64] : memref<128x512xbf16, #tpu.memory_space<vmem>>, vector<128x512xbf16>
    %cst_65 = arith.constant dense<0.000000e+00> : vector<8x512xf32>
    %213 = tpu.matmul %211, %212, %cst_65 {dimension_numbers = #tpu.dot_dimension_numbers<[1], [0], [0], [1], [0, 0, 1, 1], [], []>} : vector<8x128xbf16>, vector<128x512xbf16>, vector<8x512xf32> -> vector<8x512xf32>
    %214 = arith.index_cast %210 : i32 to index
    %c0_66 = arith.constant 0 : index
    %215 = vector.load %arg6[%214, %c0_66] : memref<64x512xf32, #tpu.memory_space<vmem>>, vector<8x512xf32>
    %216 = arith.addf %215, %213 : vector<8x512xf32>
    %217 = vector.extract_strided_slice %216 {offsets = [0, 0], sizes = [8, 128], strides = [1, 1]} : vector<8x512xf32> to vector<8x128xf32>
    %218 = arith.negf %217 : vector<8x128xf32>
    %219 = math.exp %218 : vector<8x128xf32>
    %cst_67 = arith.constant 1.000000e+00 : f32
    %220 = vector.broadcast %cst_67 : f32 to vector<8x128xf32>
    %221 = arith.addf %220, %219 : vector<8x128xf32>
    %222 = arith.divf %220, %221 : vector<8x128xf32>
    %223 = vector.extract_strided_slice %216 {offsets = [0, 128], sizes = [8, 128], strides = [1, 1]} : vector<8x512xf32> to vector<8x128xf32>
    %224 = arith.negf %223 : vector<8x128xf32>
    %225 = math.exp %224 : vector<8x128xf32>
    %cst_68 = arith.constant 1.000000e+00 : f32
    %226 = vector.broadcast %cst_68 : f32 to vector<8x128xf32>
    %227 = arith.addf %226, %225 : vector<8x128xf32>
    %228 = arith.divf %226, %227 : vector<8x128xf32>
    %229 = vector.extract_strided_slice %216 {offsets = [0, 256], sizes = [8, 128], strides = [1, 1]} : vector<8x512xf32> to vector<8x128xf32>
    %230 = math.tanh %229 : vector<8x128xf32>
    %231 = vector.extract_strided_slice %216 {offsets = [0, 384], sizes = [8, 128], strides = [1, 1]} : vector<8x512xf32> to vector<8x128xf32>
    %232 = arith.negf %231 : vector<8x128xf32>
    %233 = math.exp %232 : vector<8x128xf32>
    %cst_69 = arith.constant 1.000000e+00 : f32
    %234 = vector.broadcast %cst_69 : f32 to vector<8x128xf32>
    %235 = arith.addf %234, %233 : vector<8x128xf32>
    %236 = arith.divf %234, %235 : vector<8x128xf32>
    %237 = arith.mulf %228, %172 : vector<8x128xf32>
    %238 = arith.mulf %222, %230 : vector<8x128xf32>
    %239 = arith.addf %237, %238 : vector<8x128xf32>
    %240 = math.tanh %239 : vector<8x128xf32>
    %241 = arith.mulf %236, %240 : vector<8x128xf32>
    %242 = arith.truncf %241 : vector<8x128xf32> to vector<8x128xbf16>
    %243 = arith.truncf %206 : vector<8x128xf32> to vector<8x128xbf16>
    %c0_70 = arith.constant 0 : index
    %c0_71 = arith.constant 0 : index
    %244 = vector.load %arg4[%c0_70, %c0_71] : memref<128x512xbf16, #tpu.memory_space<vmem>>, vector<128x512xbf16>
    %cst_72 = arith.constant dense<0.000000e+00> : vector<8x512xf32>
    %245 = tpu.matmul %243, %244, %cst_72 {dimension_numbers = #tpu.dot_dimension_numbers<[1], [0], [0], [1], [0, 0, 1, 1], [], []>} : vector<8x128xbf16>, vector<128x512xbf16>, vector<8x512xf32> -> vector<8x512xf32>
    %c0_73 = arith.constant 0 : index
    %c0_74 = arith.constant 0 : index
    %246 = vector.load %arg2[%c0_73, %c0_74] : memref<128x512xbf16, #tpu.memory_space<vmem>>, vector<128x512xbf16>
    %cst_75 = arith.constant dense<0.000000e+00> : vector<8x512xf32>
    %247 = tpu.matmul %242, %246, %cst_75 {dimension_numbers = #tpu.dot_dimension_numbers<[1], [0], [0], [1], [0, 0, 1, 1], [], []>} : vector<8x128xbf16>, vector<128x512xbf16>, vector<8x512xf32> -> vector<8x512xf32>
    %248 = arith.addf %247, %245 : vector<8x512xf32>
    %249 = vector.extract_strided_slice %248 {offsets = [0, 0], sizes = [8, 128], strides = [1, 1]} : vector<8x512xf32> to vector<8x128xf32>
    %250 = arith.negf %249 : vector<8x128xf32>
    %251 = math.exp %250 : vector<8x128xf32>
    %cst_76 = arith.constant 1.000000e+00 : f32
    %252 = vector.broadcast %cst_76 : f32 to vector<8x128xf32>
    %253 = arith.addf %252, %251 : vector<8x128xf32>
    %254 = arith.divf %252, %253 : vector<8x128xf32>
    %255 = vector.extract_strided_slice %248 {offsets = [0, 128], sizes = [8, 128], strides = [1, 1]} : vector<8x512xf32> to vector<8x128xf32>
    %256 = arith.negf %255 : vector<8x128xf32>
    %257 = math.exp %256 : vector<8x128xf32>
    %cst_77 = arith.constant 1.000000e+00 : f32
    %258 = vector.broadcast %cst_77 : f32 to vector<8x128xf32>
    %259 = arith.addf %258, %257 : vector<8x128xf32>
    %260 = arith.divf %258, %259 : vector<8x128xf32>
    %261 = vector.extract_strided_slice %248 {offsets = [0, 256], sizes = [8, 128], strides = [1, 1]} : vector<8x512xf32> to vector<8x128xf32>
    %262 = math.tanh %261 : vector<8x128xf32>
    %263 = vector.extract_strided_slice %248 {offsets = [0, 384], sizes = [8, 128], strides = [1, 1]} : vector<8x512xf32> to vector<8x128xf32>
    %264 = arith.negf %263 : vector<8x128xf32>
    %265 = math.exp %264 : vector<8x128xf32>
    %cst_78 = arith.constant 1.000000e+00 : f32
    %266 = vector.broadcast %cst_78 : f32 to vector<8x128xf32>
    %267 = arith.addf %266, %265 : vector<8x128xf32>
    %268 = arith.divf %266, %267 : vector<8x128xf32>
    %269 = arith.mulf %260, %204 : vector<8x128xf32>
    %270 = arith.mulf %254, %262 : vector<8x128xf32>
    %271 = arith.addf %269, %270 : vector<8x128xf32>
    %272 = math.tanh %271 : vector<8x128xf32>
    %273 = arith.mulf %268, %272 : vector<8x128xf32>
    %274 = arith.index_cast %210 : i32 to index
    %c0_79 = arith.constant 0 : index
    %275 = vector.load %arg5[%274, %c0_79] : memref<64x128xf32, #tpu.memory_space<vmem>>, vector<8x128xf32>
    tpu.vector_store %arg5[%274, %c0_79], %273 {strides = array<i32>} : memref<64x128xf32, #tpu.memory_space<vmem>>, vector<8x128xf32>,
    %c4_i32 = arith.constant 4 : i32
    %c8_i32_80 = arith.constant 8 : i32
    %276 = arith.muli %c4_i32, %c8_i32_80 : i32
    %277 = tpu.assume_multiple %276, 8 : i32
    %278 = arith.truncf %241 : vector<8x128xf32> to vector<8x128xbf16>
    %c0_81 = arith.constant 0 : index
    %c0_82 = arith.constant 0 : index
    %279 = vector.load %arg3[%c0_81, %c0_82] : memref<128x512xbf16, #tpu.memory_space<vmem>>, vector<128x512xbf16>
    %cst_83 = arith.constant dense<0.000000e+00> : vector<8x512xf32>
    %280 = tpu.matmul %278, %279, %cst_83 {dimension_numbers = #tpu.dot_dimension_numbers<[1], [0], [0], [1], [0, 0, 1, 1], [], []>} : vector<8x128xbf16>, vector<128x512xbf16>, vector<8x512xf32> -> vector<8x512xf32>
    %281 = arith.index_cast %277 : i32 to index
    %c0_84 = arith.constant 0 : index
    %282 = vector.load %arg6[%281, %c0_84] : memref<64x512xf32, #tpu.memory_space<vmem>>, vector<8x512xf32>
    %283 = arith.addf %282, %280 : vector<8x512xf32>
    %284 = vector.extract_strided_slice %283 {offsets = [0, 0], sizes = [8, 128], strides = [1, 1]} : vector<8x512xf32> to vector<8x128xf32>
    %285 = arith.negf %284 : vector<8x128xf32>
    %286 = math.exp %285 : vector<8x128xf32>
    %cst_85 = arith.constant 1.000000e+00 : f32
    %287 = vector.broadcast %cst_85 : f32 to vector<8x128xf32>
    %288 = arith.addf %287, %286 : vector<8x128xf32>
    %289 = arith.divf %287, %288 : vector<8x128xf32>
    %290 = vector.extract_strided_slice %283 {offsets = [0, 128], sizes = [8, 128], strides = [1, 1]} : vector<8x512xf32> to vector<8x128xf32>
    %291 = arith.negf %290 : vector<8x128xf32>
    %292 = math.exp %291 : vector<8x128xf32>
    %cst_86 = arith.constant 1.000000e+00 : f32
    %293 = vector.broadcast %cst_86 : f32 to vector<8x128xf32>
    %294 = arith.addf %293, %292 : vector<8x128xf32>
    %295 = arith.divf %293, %294 : vector<8x128xf32>
    %296 = vector.extract_strided_slice %283 {offsets = [0, 256], sizes = [8, 128], strides = [1, 1]} : vector<8x512xf32> to vector<8x128xf32>
    %297 = math.tanh %296 : vector<8x128xf32>
    %298 = vector.extract_strided_slice %283 {offsets = [0, 384], sizes = [8, 128], strides = [1, 1]} : vector<8x512xf32> to vector<8x128xf32>
    %299 = arith.negf %298 : vector<8x128xf32>
    %300 = math.exp %299 : vector<8x128xf32>
    %cst_87 = arith.constant 1.000000e+00 : f32
    %301 = vector.broadcast %cst_87 : f32 to vector<8x128xf32>
    %302 = arith.addf %301, %300 : vector<8x128xf32>
    %303 = arith.divf %301, %302 : vector<8x128xf32>
    %304 = arith.mulf %295, %239 : vector<8x128xf32>
    %305 = arith.mulf %289, %297 : vector<8x128xf32>
    %306 = arith.addf %304, %305 : vector<8x128xf32>
    %307 = math.tanh %306 : vector<8x128xf32>
    %308 = arith.mulf %303, %307 : vector<8x128xf32>
    %309 = arith.truncf %308 : vector<8x128xf32> to vector<8x128xbf16>
    %310 = arith.truncf %273 : vector<8x128xf32> to vector<8x128xbf16>
    %c0_88 = arith.constant 0 : index
    %c0_89 = arith.constant 0 : index
    %311 = vector.load %arg4[%c0_88, %c0_89] : memref<128x512xbf16, #tpu.memory_space<vmem>>, vector<128x512xbf16>
    %cst_90 = arith.constant dense<0.000000e+00> : vector<8x512xf32>
    %312 = tpu.matmul %310, %311, %cst_90 {dimension_numbers = #tpu.dot_dimension_numbers<[1], [0], [0], [1], [0, 0, 1, 1], [], []>} : vector<8x128xbf16>, vector<128x512xbf16>, vector<8x512xf32> -> vector<8x512xf32>
    %c0_91 = arith.constant 0 : index
    %c0_92 = arith.constant 0 : index
    %313 = vector.load %arg2[%c0_91, %c0_92] : memref<128x512xbf16, #tpu.memory_space<vmem>>, vector<128x512xbf16>
    %cst_93 = arith.constant dense<0.000000e+00> : vector<8x512xf32>
    %314 = tpu.matmul %309, %313, %cst_93 {dimension_numbers = #tpu.dot_dimension_numbers<[1], [0], [0], [1], [0, 0, 1, 1], [], []>} : vector<8x128xbf16>, vector<128x512xbf16>, vector<8x512xf32> -> vector<8x512xf32>
    %315 = arith.addf %314, %312 : vector<8x512xf32>
    %316 = vector.extract_strided_slice %315 {offsets = [0, 0], sizes = [8, 128], strides = [1, 1]} : vector<8x512xf32> to vector<8x128xf32>
    %317 = arith.negf %316 : vector<8x128xf32>
    %318 = math.exp %317 : vector<8x128xf32>
    %cst_94 = arith.constant 1.000000e+00 : f32
    %319 = vector.broadcast %cst_94 : f32 to vector<8x128xf32>
    %320 = arith.addf %319, %318 : vector<8x128xf32>
    %321 = arith.divf %319, %320 : vector<8x128xf32>
    %322 = vector.extract_strided_slice %315 {offsets = [0, 128], sizes = [8, 128], strides = [1, 1]} : vector<8x512xf32> to vector<8x128xf32>
    %323 = arith.negf %322 : vector<8x128xf32>
    %324 = math.exp %323 : vector<8x128xf32>
    %cst_95 = arith.constant 1.000000e+00 : f32
    %325 = vector.broadcast %cst_95 : f32 to vector<8x128xf32>
    %326 = arith.addf %325, %324 : vector<8x128xf32>
    %327 = arith.divf %325, %326 : vector<8x128xf32>
    %328 = vector.extract_strided_slice %315 {offsets = [0, 256], sizes = [8, 128], strides = [1, 1]} : vector<8x512xf32> to vector<8x128xf32>
    %329 = math.tanh %328 : vector<8x128xf32>
    %330 = vector.extract_strided_slice %315 {offsets = [0, 384], sizes = [8, 128], strides = [1, 1]} : vector<8x512xf32> to vector<8x128xf32>
    %331 = arith.negf %330 : vector<8x128xf32>
    %332 = math.exp %331 : vector<8x128xf32>
    %cst_96 = arith.constant 1.000000e+00 : f32
    %333 = vector.broadcast %cst_96 : f32 to vector<8x128xf32>
    %334 = arith.addf %333, %332 : vector<8x128xf32>
    %335 = arith.divf %333, %334 : vector<8x128xf32>
    %336 = arith.mulf %327, %271 : vector<8x128xf32>
    %337 = arith.mulf %321, %329 : vector<8x128xf32>
    %338 = arith.addf %336, %337 : vector<8x128xf32>
    %339 = math.tanh %338 : vector<8x128xf32>
    %340 = arith.mulf %335, %339 : vector<8x128xf32>
    %341 = arith.index_cast %277 : i32 to index
    %c0_97 = arith.constant 0 : index
    %342 = vector.load %arg5[%341, %c0_97] : memref<64x128xf32, #tpu.memory_space<vmem>>, vector<8x128xf32>
    tpu.vector_store %arg5[%341, %c0_97], %340 {strides = array<i32>} : memref<64x128xf32, #tpu.memory_space<vmem>>, vector<8x128xf32>,
    %c5_i32 = arith.constant 5 : i32
    %c8_i32_98 = arith.constant 8 : i32
    %343 = arith.muli %c5_i32, %c8_i32_98 : i32
    %344 = tpu.assume_multiple %343, 8 : i32
    %345 = arith.truncf %308 : vector<8x128xf32> to vector<8x128xbf16>
    %c0_99 = arith.constant 0 : index
    %c0_100 = arith.constant 0 : index
    %346 = vector.load %arg3[%c0_99, %c0_100] : memref<128x512xbf16, #tpu.memory_space<vmem>>, vector<128x512xbf16>
    %cst_101 = arith.constant dense<0.000000e+00> : vector<8x512xf32>
    %347 = tpu.matmul %345, %346, %cst_101 {dimension_numbers = #tpu.dot_dimension_numbers<[1], [0], [0], [1], [0, 0, 1, 1], [], []>} : vector<8x128xbf16>, vector<128x512xbf16>, vector<8x512xf32> -> vector<8x512xf32>
    %348 = arith.index_cast %344 : i32 to index
    %c0_102 = arith.constant 0 : index
    %349 = vector.load %arg6[%348, %c0_102] : memref<64x512xf32, #tpu.memory_space<vmem>>, vector<8x512xf32>
    %350 = arith.addf %349, %347 : vector<8x512xf32>
    %351 = vector.extract_strided_slice %350 {offsets = [0, 0], sizes = [8, 128], strides = [1, 1]} : vector<8x512xf32> to vector<8x128xf32>
    %352 = arith.negf %351 : vector<8x128xf32>
    %353 = math.exp %352 : vector<8x128xf32>
    %cst_103 = arith.constant 1.000000e+00 : f32
    %354 = vector.broadcast %cst_103 : f32 to vector<8x128xf32>
    %355 = arith.addf %354, %353 : vector<8x128xf32>
    %356 = arith.divf %354, %355 : vector<8x128xf32>
    %357 = vector.extract_strided_slice %350 {offsets = [0, 128], sizes = [8, 128], strides = [1, 1]} : vector<8x512xf32> to vector<8x128xf32>
    %358 = arith.negf %357 : vector<8x128xf32>
    %359 = math.exp %358 : vector<8x128xf32>
    %cst_104 = arith.constant 1.000000e+00 : f32
    %360 = vector.broadcast %cst_104 : f32 to vector<8x128xf32>
    %361 = arith.addf %360, %359 : vector<8x128xf32>
    %362 = arith.divf %360, %361 : vector<8x128xf32>
    %363 = vector.extract_strided_slice %350 {offsets = [0, 256], sizes = [8, 128], strides = [1, 1]} : vector<8x512xf32> to vector<8x128xf32>
    %364 = math.tanh %363 : vector<8x128xf32>
    %365 = vector.extract_strided_slice %350 {offsets = [0, 384], sizes = [8, 128], strides = [1, 1]} : vector<8x512xf32> to vector<8x128xf32>
    %366 = arith.negf %365 : vector<8x128xf32>
    %367 = math.exp %366 : vector<8x128xf32>
    %cst_105 = arith.constant 1.000000e+00 : f32
    %368 = vector.broadcast %cst_105 : f32 to vector<8x128xf32>
    %369 = arith.addf %368, %367 : vector<8x128xf32>
    %370 = arith.divf %368, %369 : vector<8x128xf32>
    %371 = arith.mulf %362, %306 : vector<8x128xf32>
    %372 = arith.mulf %356, %364 : vector<8x128xf32>
    %373 = arith.addf %371, %372 : vector<8x128xf32>
    %374 = math.tanh %373 : vector<8x128xf32>
    %375 = arith.mulf %370, %374 : vector<8x128xf32>
    %376 = arith.truncf %375 : vector<8x128xf32> to vector<8x128xbf16>
    %377 = arith.truncf %340 : vector<8x128xf32> to vector<8x128xbf16>
    %c0_106 = arith.constant 0 : index
    %c0_107 = arith.constant 0 : index
    %378 = vector.load %arg4[%c0_106, %c0_107] : memref<128x512xbf16, #tpu.memory_space<vmem>>, vector<128x512xbf16>
    %cst_108 = arith.constant dense<0.000000e+00> : vector<8x512xf32>
    %379 = tpu.matmul %377, %378, %cst_108 {dimension_numbers = #tpu.dot_dimension_numbers<[1], [0], [0], [1], [0, 0, 1, 1], [], []>} : vector<8x128xbf16>, vector<128x512xbf16>, vector<8x512xf32> -> vector<8x512xf32>
    %c0_109 = arith.constant 0 : index
    %c0_110 = arith.constant 0 : index
    %380 = vector.load %arg2[%c0_109, %c0_110] : memref<128x512xbf16, #tpu.memory_space<vmem>>, vector<128x512xbf16>
    %cst_111 = arith.constant dense<0.000000e+00> : vector<8x512xf32>
    %381 = tpu.matmul %376, %380, %cst_111 {dimension_numbers = #tpu.dot_dimension_numbers<[1], [0], [0], [1], [0, 0, 1, 1], [], []>} : vector<8x128xbf16>, vector<128x512xbf16>, vector<8x512xf32> -> vector<8x512xf32>
    %382 = arith.addf %381, %379 : vector<8x512xf32>
    %383 = vector.extract_strided_slice %382 {offsets = [0, 0], sizes = [8, 128], strides = [1, 1]} : vector<8x512xf32> to vector<8x128xf32>
    %384 = arith.negf %383 : vector<8x128xf32>
    %385 = math.exp %384 : vector<8x128xf32>
    %cst_112 = arith.constant 1.000000e+00 : f32
    %386 = vector.broadcast %cst_112 : f32 to vector<8x128xf32>
    %387 = arith.addf %386, %385 : vector<8x128xf32>
    %388 = arith.divf %386, %387 : vector<8x128xf32>
    %389 = vector.extract_strided_slice %382 {offsets = [0, 128], sizes = [8, 128], strides = [1, 1]} : vector<8x512xf32> to vector<8x128xf32>
    %390 = arith.negf %389 : vector<8x128xf32>
    %391 = math.exp %390 : vector<8x128xf32>
    %cst_113 = arith.constant 1.000000e+00 : f32
    %392 = vector.broadcast %cst_113 : f32 to vector<8x128xf32>
    %393 = arith.addf %392, %391 : vector<8x128xf32>
    %394 = arith.divf %392, %393 : vector<8x128xf32>
    %395 = vector.extract_strided_slice %382 {offsets = [0, 256], sizes = [8, 128], strides = [1, 1]} : vector<8x512xf32> to vector<8x128xf32>
    %396 = math.tanh %395 : vector<8x128xf32>
    %397 = vector.extract_strided_slice %382 {offsets = [0, 384], sizes = [8, 128], strides = [1, 1]} : vector<8x512xf32> to vector<8x128xf32>
    %398 = arith.negf %397 : vector<8x128xf32>
    %399 = math.exp %398 : vector<8x128xf32>
    %cst_114 = arith.constant 1.000000e+00 : f32
    %400 = vector.broadcast %cst_114 : f32 to vector<8x128xf32>
    %401 = arith.addf %400, %399 : vector<8x128xf32>
    %402 = arith.divf %400, %401 : vector<8x128xf32>
    %403 = arith.mulf %394, %338 : vector<8x128xf32>
    %404 = arith.mulf %388, %396 : vector<8x128xf32>
    %405 = arith.addf %403, %404 : vector<8x128xf32>
    %406 = math.tanh %405 : vector<8x128xf32>
    %407 = arith.mulf %402, %406 : vector<8x128xf32>
    %408 = arith.index_cast %344 : i32 to index
    %c0_115 = arith.constant 0 : index
    %409 = vector.load %arg5[%408, %c0_115] : memref<64x128xf32, #tpu.memory_space<vmem>>, vector<8x128xf32>
    tpu.vector_store %arg5[%408, %c0_115], %407 {strides = array<i32>} : memref<64x128xf32, #tpu.memory_space<vmem>>, vector<8x128xf32>,
    %c6_i32 = arith.constant 6 : i32
    %c8_i32_116 = arith.constant 8 : i32
    %410 = arith.muli %c6_i32, %c8_i32_116 : i32
    %411 = tpu.assume_multiple %410, 8 : i32
    %412 = arith.truncf %375 : vector<8x128xf32> to vector<8x128xbf16>
    %c0_117 = arith.constant 0 : index
    %c0_118 = arith.constant 0 : index
    %413 = vector.load %arg3[%c0_117, %c0_118] : memref<128x512xbf16, #tpu.memory_space<vmem>>, vector<128x512xbf16>
    %cst_119 = arith.constant dense<0.000000e+00> : vector<8x512xf32>
    %414 = tpu.matmul %412, %413, %cst_119 {dimension_numbers = #tpu.dot_dimension_numbers<[1], [0], [0], [1], [0, 0, 1, 1], [], []>} : vector<8x128xbf16>, vector<128x512xbf16>, vector<8x512xf32> -> vector<8x512xf32>
    %415 = arith.index_cast %411 : i32 to index
    %c0_120 = arith.constant 0 : index
    %416 = vector.load %arg6[%415, %c0_120] : memref<64x512xf32, #tpu.memory_space<vmem>>, vector<8x512xf32>
    %417 = arith.addf %416, %414 : vector<8x512xf32>
    %418 = vector.extract_strided_slice %417 {offsets = [0, 0], sizes = [8, 128], strides = [1, 1]} : vector<8x512xf32> to vector<8x128xf32>
    %419 = arith.negf %418 : vector<8x128xf32>
    %420 = math.exp %419 : vector<8x128xf32>
    %cst_121 = arith.constant 1.000000e+00 : f32
    %421 = vector.broadcast %cst_121 : f32 to vector<8x128xf32>
    %422 = arith.addf %421, %420 : vector<8x128xf32>
    %423 = arith.divf %421, %422 : vector<8x128xf32>
    %424 = vector.extract_strided_slice %417 {offsets = [0, 128], sizes = [8, 128], strides = [1, 1]} : vector<8x512xf32> to vector<8x128xf32>
    %425 = arith.negf %424 : vector<8x128xf32>
    %426 = math.exp %425 : vector<8x128xf32>
    %cst_122 = arith.constant 1.000000e+00 : f32
    %427 = vector.broadcast %cst_122 : f32 to vector<8x128xf32>
    %428 = arith.addf %427, %426 : vector<8x128xf32>
    %429 = arith.divf %427, %428 : vector<8x128xf32>
    %430 = vector.extract_strided_slice %417 {offsets = [0, 256], sizes = [8, 128], strides = [1, 1]} : vector<8x512xf32> to vector<8x128xf32>
    %431 = math.tanh %430 : vector<8x128xf32>
    %432 = vector.extract_strided_slice %417 {offsets = [0, 384], sizes = [8, 128], strides = [1, 1]} : vector<8x512xf32> to vector<8x128xf32>
    %433 = arith.negf %432 : vector<8x128xf32>
    %434 = math.exp %433 : vector<8x128xf32>
    %cst_123 = arith.constant 1.000000e+00 : f32
    %435 = vector.broadcast %cst_123 : f32 to vector<8x128xf32>
    %436 = arith.addf %435, %434 : vector<8x128xf32>
    %437 = arith.divf %435, %436 : vector<8x128xf32>
    %438 = arith.mulf %429, %373 : vector<8x128xf32>
    %439 = arith.mulf %423, %431 : vector<8x128xf32>
    %440 = arith.addf %438, %439 : vector<8x128xf32>
    %441 = math.tanh %440 : vector<8x128xf32>
    %442 = arith.mulf %437, %441 : vector<8x128xf32>
    %443 = arith.truncf %442 : vector<8x128xf32> to vector<8x128xbf16>
    %444 = arith.truncf %407 : vector<8x128xf32> to vector<8x128xbf16>
    %c0_124 = arith.constant 0 : index
    %c0_125 = arith.constant 0 : index
    %445 = vector.load %arg4[%c0_124, %c0_125] : memref<128x512xbf16, #tpu.memory_space<vmem>>, vector<128x512xbf16>
    %cst_126 = arith.constant dense<0.000000e+00> : vector<8x512xf32>
    %446 = tpu.matmul %444, %445, %cst_126 {dimension_numbers = #tpu.dot_dimension_numbers<[1], [0], [0], [1], [0, 0, 1, 1], [], []>} : vector<8x128xbf16>, vector<128x512xbf16>, vector<8x512xf32> -> vector<8x512xf32>
    %c0_127 = arith.constant 0 : index
    %c0_128 = arith.constant 0 : index
    %447 = vector.load %arg2[%c0_127, %c0_128] : memref<128x512xbf16, #tpu.memory_space<vmem>>, vector<128x512xbf16>
    %cst_129 = arith.constant dense<0.000000e+00> : vector<8x512xf32>
    %448 = tpu.matmul %443, %447, %cst_129 {dimension_numbers = #tpu.dot_dimension_numbers<[1], [0], [0], [1], [0, 0, 1, 1], [], []>} : vector<8x128xbf16>, vector<128x512xbf16>, vector<8x512xf32> -> vector<8x512xf32>
    %449 = arith.addf %448, %446 : vector<8x512xf32>
    %450 = vector.extract_strided_slice %449 {offsets = [0, 0], sizes = [8, 128], strides = [1, 1]} : vector<8x512xf32> to vector<8x128xf32>
    %451 = arith.negf %450 : vector<8x128xf32>
    %452 = math.exp %451 : vector<8x128xf32>
    %cst_130 = arith.constant 1.000000e+00 : f32
    %453 = vector.broadcast %cst_130 : f32 to vector<8x128xf32>
    %454 = arith.addf %453, %452 : vector<8x128xf32>
    %455 = arith.divf %453, %454 : vector<8x128xf32>
    %456 = vector.extract_strided_slice %449 {offsets = [0, 128], sizes = [8, 128], strides = [1, 1]} : vector<8x512xf32> to vector<8x128xf32>
    %457 = arith.negf %456 : vector<8x128xf32>
    %458 = math.exp %457 : vector<8x128xf32>
    %cst_131 = arith.constant 1.000000e+00 : f32
    %459 = vector.broadcast %cst_131 : f32 to vector<8x128xf32>
    %460 = arith.addf %459, %458 : vector<8x128xf32>
    %461 = arith.divf %459, %460 : vector<8x128xf32>
    %462 = vector.extract_strided_slice %449 {offsets = [0, 256], sizes = [8, 128], strides = [1, 1]} : vector<8x512xf32> to vector<8x128xf32>
    %463 = math.tanh %462 : vector<8x128xf32>
    %464 = vector.extract_strided_slice %449 {offsets = [0, 384], sizes = [8, 128], strides = [1, 1]} : vector<8x512xf32> to vector<8x128xf32>
    %465 = arith.negf %464 : vector<8x128xf32>
    %466 = math.exp %465 : vector<8x128xf32>
    %cst_132 = arith.constant 1.000000e+00 : f32
    %467 = vector.broadcast %cst_132 : f32 to vector<8x128xf32>
    %468 = arith.addf %467, %466 : vector<8x128xf32>
    %469 = arith.divf %467, %468 : vector<8x128xf32>
    %470 = arith.mulf %461, %405 : vector<8x128xf32>
    %471 = arith.mulf %455, %463 : vector<8x128xf32>
    %472 = arith.addf %470, %471 : vector<8x128xf32>
    %473 = math.tanh %472 : vector<8x128xf32>
    %474 = arith.mulf %469, %473 : vector<8x128xf32>
    %475 = arith.index_cast %411 : i32 to index
    %c0_133 = arith.constant 0 : index
    %476 = vector.load %arg5[%475, %c0_133] : memref<64x128xf32, #tpu.memory_space<vmem>>, vector<8x128xf32>
    tpu.vector_store %arg5[%475, %c0_133], %474 {strides = array<i32>} : memref<64x128xf32, #tpu.memory_space<vmem>>, vector<8x128xf32>,
    %c7_i32 = arith.constant 7 : i32
    %c8_i32_134 = arith.constant 8 : i32
    %477 = arith.muli %c7_i32, %c8_i32_134 : i32
    %478 = tpu.assume_multiple %477, 8 : i32
    %479 = arith.truncf %442 : vector<8x128xf32> to vector<8x128xbf16>
    %c0_135 = arith.constant 0 : index
    %c0_136 = arith.constant 0 : index
    %480 = vector.load %arg3[%c0_135, %c0_136] : memref<128x512xbf16, #tpu.memory_space<vmem>>, vector<128x512xbf16>
    %cst_137 = arith.constant dense<0.000000e+00> : vector<8x512xf32>
    %481 = tpu.matmul %479, %480, %cst_137 {dimension_numbers = #tpu.dot_dimension_numbers<[1], [0], [0], [1], [0, 0, 1, 1], [], []>} : vector<8x128xbf16>, vector<128x512xbf16>, vector<8x512xf32> -> vector<8x512xf32>
    %482 = arith.index_cast %478 : i32 to index
    %c0_138 = arith.constant 0 : index
    %483 = vector.load %arg6[%482, %c0_138] : memref<64x512xf32, #tpu.memory_space<vmem>>, vector<8x512xf32>
    %484 = arith.addf %483, %481 : vector<8x512xf32>
    %485 = vector.extract_strided_slice %484 {offsets = [0, 0], sizes = [8, 128], strides = [1, 1]} : vector<8x512xf32> to vector<8x128xf32>
    %486 = arith.negf %485 : vector<8x128xf32>
    %487 = math.exp %486 : vector<8x128xf32>
    %cst_139 = arith.constant 1.000000e+00 : f32
    %488 = vector.broadcast %cst_139 : f32 to vector<8x128xf32>
    %489 = arith.addf %488, %487 : vector<8x128xf32>
    %490 = arith.divf %488, %489 : vector<8x128xf32>
    %491 = vector.extract_strided_slice %484 {offsets = [0, 128], sizes = [8, 128], strides = [1, 1]} : vector<8x512xf32> to vector<8x128xf32>
    %492 = arith.negf %491 : vector<8x128xf32>
    %493 = math.exp %492 : vector<8x128xf32>
    %cst_140 = arith.constant 1.000000e+00 : f32
    %494 = vector.broadcast %cst_140 : f32 to vector<8x128xf32>
    %495 = arith.addf %494, %493 : vector<8x128xf32>
    %496 = arith.divf %494, %495 : vector<8x128xf32>
    %497 = vector.extract_strided_slice %484 {offsets = [0, 256], sizes = [8, 128], strides = [1, 1]} : vector<8x512xf32> to vector<8x128xf32>
    %498 = math.tanh %497 : vector<8x128xf32>
    %499 = vector.extract_strided_slice %484 {offsets = [0, 384], sizes = [8, 128], strides = [1, 1]} : vector<8x512xf32> to vector<8x128xf32>
    %500 = arith.negf %499 : vector<8x128xf32>
    %501 = math.exp %500 : vector<8x128xf32>
    %cst_141 = arith.constant 1.000000e+00 : f32
    %502 = vector.broadcast %cst_141 : f32 to vector<8x128xf32>
    %503 = arith.addf %502, %501 : vector<8x128xf32>
    %504 = arith.divf %502, %503 : vector<8x128xf32>
    %505 = arith.mulf %496, %440 : vector<8x128xf32>
    %506 = arith.mulf %490, %498 : vector<8x128xf32>
    %507 = arith.addf %505, %506 : vector<8x128xf32>
    %508 = math.tanh %507 : vector<8x128xf32>
    %509 = arith.mulf %504, %508 : vector<8x128xf32>
    %510 = arith.truncf %509 : vector<8x128xf32> to vector<8x128xbf16>
    %511 = arith.truncf %474 : vector<8x128xf32> to vector<8x128xbf16>
    %c0_142 = arith.constant 0 : index
    %c0_143 = arith.constant 0 : index
    %512 = vector.load %arg4[%c0_142, %c0_143] : memref<128x512xbf16, #tpu.memory_space<vmem>>, vector<128x512xbf16>
    %cst_144 = arith.constant dense<0.000000e+00> : vector<8x512xf32>
    %513 = tpu.matmul %511, %512, %cst_144 {dimension_numbers = #tpu.dot_dimension_numbers<[1], [0], [0], [1], [0, 0, 1, 1], [], []>} : vector<8x128xbf16>, vector<128x512xbf16>, vector<8x512xf32> -> vector<8x512xf32>
    %c0_145 = arith.constant 0 : index
    %c0_146 = arith.constant 0 : index
    %514 = vector.load %arg2[%c0_145, %c0_146] : memref<128x512xbf16, #tpu.memory_space<vmem>>, vector<128x512xbf16>
    %cst_147 = arith.constant dense<0.000000e+00> : vector<8x512xf32>
    %515 = tpu.matmul %510, %514, %cst_147 {dimension_numbers = #tpu.dot_dimension_numbers<[1], [0], [0], [1], [0, 0, 1, 1], [], []>} : vector<8x128xbf16>, vector<128x512xbf16>, vector<8x512xf32> -> vector<8x512xf32>
    %516 = arith.addf %515, %513 : vector<8x512xf32>
    %517 = vector.extract_strided_slice %516 {offsets = [0, 0], sizes = [8, 128], strides = [1, 1]} : vector<8x512xf32> to vector<8x128xf32>
    %518 = arith.negf %517 : vector<8x128xf32>
    %519 = math.exp %518 : vector<8x128xf32>
    %cst_148 = arith.constant 1.000000e+00 : f32
    %520 = vector.broadcast %cst_148 : f32 to vector<8x128xf32>
    %521 = arith.addf %520, %519 : vector<8x128xf32>
    %522 = arith.divf %520, %521 : vector<8x128xf32>
    %523 = vector.extract_strided_slice %516 {offsets = [0, 128], sizes = [8, 128], strides = [1, 1]} : vector<8x512xf32> to vector<8x128xf32>
    %524 = arith.negf %523 : vector<8x128xf32>
    %525 = math.exp %524 : vector<8x128xf32>
    %cst_149 = arith.constant 1.000000e+00 : f32
    %526 = vector.broadcast %cst_149 : f32 to vector<8x128xf32>
    %527 = arith.addf %526, %525 : vector<8x128xf32>
    %528 = arith.divf %526, %527 : vector<8x128xf32>
    %529 = vector.extract_strided_slice %516 {offsets = [0, 256], sizes = [8, 128], strides = [1, 1]} : vector<8x512xf32> to vector<8x128xf32>
    %530 = math.tanh %529 : vector<8x128xf32>
    %531 = vector.extract_strided_slice %516 {offsets = [0, 384], sizes = [8, 128], strides = [1, 1]} : vector<8x512xf32> to vector<8x128xf32>
    %532 = arith.negf %531 : vector<8x128xf32>
    %533 = math.exp %532 : vector<8x128xf32>
    %cst_150 = arith.constant 1.000000e+00 : f32
    %534 = vector.broadcast %cst_150 : f32 to vector<8x128xf32>
    %535 = arith.addf %534, %533 : vector<8x128xf32>
    %536 = arith.divf %534, %535 : vector<8x128xf32>
    %537 = arith.mulf %528, %472 : vector<8x128xf32>
    %538 = arith.mulf %522, %530 : vector<8x128xf32>
    %539 = arith.addf %537, %538 : vector<8x128xf32>
    %540 = math.tanh %539 : vector<8x128xf32>
    %541 = arith.mulf %536, %540 : vector<8x128xf32>
    %542 = arith.index_cast %478 : i32 to index
    %c0_151 = arith.constant 0 : index
    %543 = vector.load %arg5[%542, %c0_151] : memref<64x128xf32, #tpu.memory_space<vmem>>, vector<8x128xf32>
    tpu.vector_store %arg5[%542, %c0_151], %541 {strides = array<i32>} : memref<64x128xf32, #tpu.memory_space<vmem>>, vector<8x128xf32>,
    %c8_i32_152 = arith.constant 8 : i32
    return
  }
}

</mosaic_0001>

<llo_original>
// kernel: tpu_custom_call.1
$region0: #{tpu_custom_call.1}
  #allocation0 [shape = 'u32[]', space=smem, size = 0x4, offset = 0x4, fixed_abs, tag = 'smem constant byte address 0x4 - core index']
  #allocation1 [shape = 'u32[144,128]{1,0:T(1,128)}', space=vmem, size = 0x12000, scoped, tag = 'internal scratch']
  #allocation2 [shape = 'f32[64,512]{1,0:T(8,128)}', space=vmem, size = 0x20000, scoped, tag = 'scratch operand']
  %s0 = inlined_call_operand.hbm [shape: bf16[64,128], index: 0, kind: input, shape index: {}]
  %s1 = inlined_call_operand.hbm [shape: bf16[128,512], index: 1, kind: input, shape index: {}]
  %s2 = inlined_call_operand.hbm [shape: bf16[128,512], index: 2, kind: input, shape index: {}]
  %s3 = inlined_call_operand.hbm [shape: bf16[128,512], index: 3, kind: input, shape index: {}]
  %s4 = inlined_call_operand.hbm [shape: bf16[128,512], index: 4, kind: input, shape index: {}]
  %s5 = inlined_call_operand.hbm [shape: f32[64,128], index: 5, kind: output, shape index: {}]
  %s6 = sld [smem:[#allocation0]]
  $region50: #{tpu_custom_call.1} parent=0
    _
  %s8 = ssub.s32 1, %s6
  %s9 = scalar_select 0, %s8, %s6
  $region1: #{tpu_custom_call.1} parent=0
    #allocation3 [shape = 'u8[16384]{0}', space=vmem, size = 0x4000, scoped, tag = 'input window, operand 0, single buffered']
    #allocation4 [shape = 's32[1]{0}', space=sflag, size = 0x4, scoped, tag = 'scoped memory for tpu_custom_call.1']
    #allocation5 [shape = 's32[1]{0}', space=sflag, size = 0x4, scoped, tag = 'scoped memory for tpu_custom_call.1']
    #allocation6 [shape = 'u8[131072]{0}', space=vmem, size = 0x20000, scoped, tag = 'input window, operand 1, single buffered']
    #allocation7 [shape = 's32[1]{0}', space=sflag, size = 0x4, scoped, tag = 'scoped memory for tpu_custom_call.1']
    #allocation8 [shape = 'u8[131072]{0}', space=vmem, size = 0x20000, scoped, tag = 'input window, operand 2, single buffered']
    #allocation9 [shape = 'u8[131072]{0}', space=vmem, size = 0x20000, scoped, tag = 'input window, operand 3, single buffered']
    #allocation10 [shape = 's32[1]{0}', space=sflag, size = 0x4, scoped, tag = 'scoped memory for tpu_custom_call.1']
    #allocation11 [shape = 'u8[131072]{0}', space=vmem, size = 0x20000, scoped, tag = 'input window, operand 4, single buffered']
    #allocation12 [shape = 'u8[32768]{0}', space=vmem, size = 0x8000, scoped, tag = 'output window, operand 0, single buffered']
    %10 = vsyncpa [#allocation4], 0
    %11 = vsyncpa [#allocation7], 0
    %12 = vsyncpa [#allocation10], 0
    %13 = vsyncpa [#allocation5], 0
    // Predicated region
    $region2: #{tpu_custom_call.1} parent=1 // pred_check
      _
    $region3: #{tpu_custom_call.1} parent=1 // pred_check_branch
      %15 = sbr.rel (0) target = $region5
    $region4: #{tpu_custom_call.1} parent=1 // pred_region
      %s17 = ssub.s32 512, 512
      %18 = vsyncadd [#allocation4], %s17
      %s19 = sshll.u32 [#allocation3], 4
      %s20 = int_to_ptr.vmem [resolvable:$true] %s19
      %25 = dma.hbm_to_vmem [thread:$0]  %s0, 512, %s20, [#allocation4], 64, 64, 4
    $region5: #{tpu_custom_call.1} parent=1 // pred_fallthru
      _
    // Predicated region
    $region6: #{tpu_custom_call.1} parent=1 // pred_check
      _
    $region7: #{tpu_custom_call.1} parent=1 // pred_check_branch
      %27 = sbr.rel (0) target = $region9
    $region8: #{tpu_custom_call.1} parent=1 // pred_region
      %s29 = ssub.s32 4096, 4096
      %30 = vsyncadd [#allocation7], %s29
      %s31 = sshll.u32 [#allocation6], 4
      %s32 = int_to_ptr.vmem [resolvable:$true] %s31
      %37 = dma.hbm_to_vmem [thread:$0]  %s1, 4096, %s32, [#allocation7], 256, 256, 16
    $region9: #{tpu_custom_call.1} parent=1 // pred_fallthru
      _
    // Predicated region
    $region10: #{tpu_custom_call.1} parent=1 // pred_check
      _
    $region11: #{tpu_custom_call.1} parent=1 // pred_check_branch
      %39 = sbr.rel (0) target = $region13
    $region12: #{tpu_custom_call.1} parent=1 // pred_region
      %s41 = ssub.s32 4096, 4096
      %42 = vsyncadd [#allocation7], %s41
      %s43 = sshll.u32 [#allocation8], 4
      %s44 = int_to_ptr.vmem [resolvable:$true] %s43
      %49 = dma.hbm_to_vmem [thread:$0]  %s2, 4096, %s44, [#allocation7], 256, 256, 16
    $region13: #{tpu_custom_call.1} parent=1 // pred_fallthru
      _
    // Predicated region
    $region14: #{tpu_custom_call.1} parent=1 // pred_check
      _
    $region15: #{tpu_custom_call.1} parent=1 // pred_check_branch
      %51 = sbr.rel (0) target = $region17
    $region16: #{tpu_custom_call.1} parent=1 // pred_region
      %s53 = ssub.s32 4096, 4096
      %54 = vsyncadd [#allocation10], %s53
      %s55 = sshll.u32 [#allocation9], 4
      %s56 = int_to_ptr.vmem [resolvable:$true] %s55
      %61 = dma.hbm_to_vmem [thread:$0]  %s3, 4096, %s56, [#allocation10], 256, 256, 16
    $region17: #{tpu_custom_call.1} parent=1 // pred_fallthru
      _
    // Predicated region
    $region18: #{tpu_custom_call.1} parent=1 // pred_check
      _
    $region19: #{tpu_custom_call.1} parent=1 // pred_check_branch
      %63 = sbr.rel (0) target = $region21
    $region20: #{tpu_custom_call.1} parent=1 // pred_region
      %s65 = ssub.s32 4096, 4096
      %66 = vsyncadd [#allocation10], %s65
      %s67 = sshll.u32 [#allocation11], 4
      %s68 = int_to_ptr.vmem [resolvable:$true] %s67
      %73 = dma.hbm_to_vmem [thread:$0]  %s4, 4096, %s68, [#allocation10], 256, 256, 16
    $region21: #{tpu_custom_call.1} parent=1 // pred_fallthru
      _
    // Predicated region
    $region22: #{tpu_custom_call.1} parent=1 // pred_check
      _
    $region23: #{tpu_custom_call.1} parent=1 // pred_check_branch
      %75 = sbr.rel (0) target = $region25
    $region24: #{tpu_custom_call.1} parent=1 // pred_region
      %76 = dma.done [#allocation4], 512
    $region25: #{tpu_custom_call.1} parent=1 // pred_fallthru
      _
    // Predicated region
    $region26: #{tpu_custom_call.1} parent=1 // pred_check
      _
    $region27: #{tpu_custom_call.1} parent=1 // pred_check_branch
      %78 = sbr.rel (0) target = $region29
    $region28: #{tpu_custom_call.1} parent=1 // pred_region
      %79 = dma.done [#allocation7], 4096
    $region29: #{tpu_custom_call.1} parent=1 // pred_fallthru
      _
    // Predicated region
    $region30: #{tpu_custom_call.1} parent=1 // pred_check
      _
    $region31: #{tpu_custom_call.1} parent=1 // pred_check_branch
      %81 = sbr.rel (0) target = $region33
    $region32: #{tpu_custom_call.1} parent=1 // pred_region
      %82 = dma.done [#allocation7], 4096
    $region33: #{tpu_custom_call.1} parent=1 // pred_fallthru
      _
    // Predicated region
    $region34: #{tpu_custom_call.1} parent=1 // pred_check
      _
    $region35: #{tpu_custom_call.1} parent=1 // pred_check_branch
      %84 = sbr.rel (0) target = $region37
    $region36: #{tpu_custom_call.1} parent=1 // pred_region
      %85 = dma.done [#allocation10], 4096
    $region37: #{tpu_custom_call.1} parent=1 // pred_fallthru
      _
    // Predicated region
    $region38: #{tpu_custom_call.1} parent=1 // pred_check
      _
    $region39: #{tpu_custom_call.1} parent=1 // pred_check_branch
      %87 = sbr.rel (0) target = $region41
    $region40: #{tpu_custom_call.1} parent=1 // pred_region
      %88 = dma.done [#allocation10], 4096
    $region41: #{tpu_custom_call.1} parent=1 // pred_fallthru
      _
    %v90 = vld [vmem:[#allocation3] sm:$0xf]
    %v91 = vld [vmem:[#allocation3 + $0x4] sm:$0xf]
    %v92 = vld [vmem:[#allocation3 + $0x8] sm:$0xf]
    %v93 = vld [vmem:[#allocation3 + $0xc] sm:$0xf]
    %v94 = vld [vmem:[#allocation3 + $0x10] sm:$0xf]
    %v95 = vld [vmem:[#allocation3 + $0x14] sm:$0xf]
    %v96 = vld [vmem:[#allocation3 + $0x18] sm:$0xf]
    %v97 = vld [vmem:[#allocation3 + $0x1c] sm:$0xf]
    %v98 = vld [vmem:[#allocation6] sm:$0xff]
    %v99 = vld [vmem:[#allocation6 + $0x8] sm:$0xff]
    %v100 = vld [vmem:[#allocation6 + $0x10] sm:$0xff]
    %v101 = vld [vmem:[#allocation6 + $0x18] sm:$0xff]
    %v102 = vld [vmem:[#allocation6 + $0x20] sm:$0xff]
    %v103 = vld [vmem:[#allocation6 + $0x28] sm:$0xff]
    %v104 = vld [vmem:[#allocation6 + $0x30] sm:$0xff]
    %v105 = vld [vmem:[#allocation6 + $0x38] sm:$0xff]
    %v106 = vld [vmem:[#allocation6 + $0x40] sm:$0xff]
    %v107 = vld [vmem:[#allocation6 + $0x48] sm:$0xff]
    %v108 = vld [vmem:[#allocation6 + $0x50] sm:$0xff]
    %v109 = vld [vmem:[#allocation6 + $0x58] sm:$0xff]
    %v110 = vld [vmem:[#allocation6 + $0x60] sm:$0xff]
    %v111 = vld [vmem:[#allocation6 + $0x68] sm:$0xff]
    %v112 = vld [vmem:[#allocation6 + $0x70] sm:$0xff]
    %v113 = vld [vmem:[#allocation6 + $0x78] sm:$0xff]
    %v114 = vld [vmem:[#allocation6 + $0x80] sm:$0xff]
    %v115 = vld [vmem:[#allocation6 + $0x88] sm:$0xff]
    %v116 = vld [vmem:[#allocation6 + $0x90] sm:$0xff]
    %v117 = vld [vmem:[#allocation6 + $0x98] sm:$0xff]
    %v118 = vld [vmem:[#allocation6 + $0xa0] sm:$0xff]
    %v119 = vld [vmem:[#allocation6 + $0xa8] sm:$0xff]
    %v120 = vld [vmem:[#allocation6 + $0xb0] sm:$0xff]
    %v121 = vld [vmem:[#allocation6 + $0xb8] sm:$0xff]
    %v122 = vld [vmem:[#allocation6 + $0xc0] sm:$0xff]
    %v123 = vld [vmem:[#allocation6 + $0xc8] sm:$0xff]
    %v124 = vld [vmem:[#allocation6 + $0xd0] sm:$0xff]
    %v125 = vld [vmem:[#allocation6 + $0xd8] sm:$0xff]
    %v126 = vld [vmem:[#allocation6 + $0xe0] sm:$0xff]
    %v127 = vld [vmem:[#allocation6 + $0xe8] sm:$0xff]
    %v128 = vld [vmem:[#allocation6 + $0xf0] sm:$0xff]
    %v129 = vld [vmem:[#allocation6 + $0xf8] sm:$0xff]
    %v138 = vunpack.c.l.b16 %v90
    %v139 = vunpack.c.l.b16 %v91
    %v140 = vunpack.c.l.b16 %v92
    %v141 = vunpack.c.l.b16 %v93
    %v142 = vunpack.c.l.b16 %v94
    %v143 = vunpack.c.l.b16 %v95
    %v144 = vunpack.c.l.b16 %v96
    %v145 = vunpack.c.l.b16 %v97
    %v146 = vpack.c.b16 %v139, %v138
    %v147 = vpack.c.b16 %v141, %v140
    %v148 = vpack.c.b16 %v143, %v142
    %v149 = vpack.c.b16 %v145, %v144
    %v186 = vunpack.c.l.b16 %v98
    %v187 = vunpack.c.h.b16 %v98
    %v188 = vunpack.c.l.b16 %v99
    %v189 = vunpack.c.h.b16 %v99
    %v190 = vunpack.c.l.b16 %v100
    %v191 = vunpack.c.h.b16 %v100
    %v192 = vunpack.c.l.b16 %v101
    %v193 = vunpack.c.h.b16 %v101
    %v194 = vunpack.c.l.b16 %v102
    %v195 = vunpack.c.h.b16 %v102
    %v196 = vunpack.c.l.b16 %v103
    %v197 = vunpack.c.h.b16 %v103
    %v198 = vunpack.c.l.b16 %v104
    %v199 = vunpack.c.h.b16 %v104
    %v200 = vunpack.c.l.b16 %v105
    %v201 = vunpack.c.h.b16 %v105
    %v202 = vunpack.c.l.b16 %v106
    %v203 = vunpack.c.h.b16 %v106
    %v204 = vunpack.c.l.b16 %v107
    %v205 = vunpack.c.h.b16 %v107
    %v206 = vunpack.c.l.b16 %v108
    %v207 = vunpack.c.h.b16 %v108
    %v208 = vunpack.c.l.b16 %v109
    %v209 = vunpack.c.h.b16 %v109
    %v210 = vunpack.c.l.b16 %v110
    %v211 = vunpack.c.h.b16 %v110
    %v212 = vunpack.c.l.b16 %v111
    %v213 = vunpack.c.h.b16 %v111
    %v214 = vunpack.c.l.b16 %v112
    %v215 = vunpack.c.h.b16 %v112
    %v216 = vunpack.c.l.b16 %v113
    %v217 = vunpack.c.h.b16 %v113
    %v218 = vunpack.c.l.b16 %v114
    %v219 = vunpack.c.h.b16 %v114
    %v220 = vunpack.c.l.b16 %v115
    %v221 = vunpack.c.h.b16 %v115
    %v222 = vunpack.c.l.b16 %v116
    %v223 = vunpack.c.h.b16 %v116
    %v224 = vunpack.c.l.b16 %v117
    %v225 = vunpack.c.h.b16 %v117
    %v226 = vunpack.c.l.b16 %v118
    %v227 = vunpack.c.h.b16 %v118
    %v228 = vunpack.c.l.b16 %v119
    %v229 = vunpack.c.h.b16 %v119
    %v230 = vunpack.c.l.b16 %v120
    %v231 = vunpack.c.h.b16 %v120
    %v232 = vunpack.c.l.b16 %v121
    %v233 = vunpack.c.h.b16 %v121
    %v234 = vunpack.c.l.b16 %v122
    %v235 = vunpack.c.h.b16 %v122
    %v236 = vunpack.c.l.b16 %v123
    %v237 = vunpack.c.h.b16 %v123
    %v238 = vunpack.c.l.b16 %v124
    %v239 = vunpack.c.h.b16 %v124
    %v240 = vunpack.c.l.b16 %v125
    %v241 = vunpack.c.h.b16 %v125
    %v242 = vunpack.c.l.b16 %v126
    %v243 = vunpack.c.h.b16 %v126
    %v244 = vunpack.c.l.b16 %v127
    %v245 = vunpack.c.h.b16 %v127
    %v246 = vunpack.c.l.b16 %v128
    %v247 = vunpack.c.h.b16 %v128
    %v248 = vunpack.c.l.b16 %v129
    %v249 = vunpack.c.h.b16 %v129
    %v250 = vpack.c.b16 %v190, %v186
    %v251 = vpack.c.b16 %v191, %v187
    %v252 = vpack.c.b16 %v192, %v188
    %v253 = vpack.c.b16 %v193, %v189
    %v254 = vpack.c.b16 %v198, %v194
    %v255 = vpack.c.b16 %v199, %v195
    %v256 = vpack.c.b16 %v200, %v196
    %v257 = vpack.c.b16 %v201, %v197
    %v258 = vpack.c.b16 %v206, %v202
    %v259 = vpack.c.b16 %v207, %v203
    %v260 = vpack.c.b16 %v208, %v204
    %v261 = vpack.c.b16 %v209, %v205
    %v262 = vpack.c.b16 %v214, %v210
    %v263 = vpack.c.b16 %v215, %v211
    %v264 = vpack.c.b16 %v216, %v212
    %v265 = vpack.c.b16 %v217, %v213
    %v266 = vpack.c.b16 %v222, %v218
    %v267 = vpack.c.b16 %v223, %v219
    %v268 = vpack.c.b16 %v224, %v220
    %v269 = vpack.c.b16 %v225, %v221
    %v270 = vpack.c.b16 %v230, %v226
    %v271 = vpack.c.b16 %v231, %v227
    %v272 = vpack.c.b16 %v232, %v228
    %v273 = vpack.c.b16 %v233, %v229
    %v274 = vpack.c.b16 %v238, %v234
    %v275 = vpack.c.b16 %v239, %v235
    %v276 = vpack.c.b16 %v240, %v236
    %v277 = vpack.c.b16 %v241, %v237
    %v278 = vpack.c.b16 %v246, %v242
    %v279 = vpack.c.b16 %v247, %v243
    %v280 = vpack.c.b16 %v248, %v244
    %v281 = vpack.c.b16 %v249, %v245
    %314 = vmatprep.subr.bf16.mxu0 %v251
    %315 = vmatpush1.bf16.msra.mxu0 %v250
    %316 = vmatprep.subr.bf16.mxu0 %v255
    %317 = vmatpush1.bf16.msra.mxu0 %v254
    %318 = vmatprep.subr.bf16.mxu0 %v259
    %319 = vmatpush1.bf16.msra.mxu0 %v258
    %320 = vmatprep.subr.bf16.mxu0 %v263
    %321 = vmatpush1.bf16.msra.mxu0 %v262
    %322 = vmatprep.subr.bf16.mxu0 %v267
    %323 = vmatpush1.bf16.msra.mxu0 %v266
    %324 = vmatprep.subr.bf16.mxu0 %v271
    %325 = vmatpush1.bf16.msra.mxu0 %v270
    %326 = vmatprep.subr.bf16.mxu0 %v275
    %327 = vmatpush1.bf16.msra.mxu0 %v274
    %328 = vmatprep.subr.bf16.mxu0 %v279
    %329 = vmatpush1.bf16.msra.mxu0 %v278
    %330 = vmatprep.subr.bf16.mxu0 0
    %331 = vmatpush1.bf16.msra.mxu0 0
    %332 = vmatprep.subr.bf16.mxu0 0
    %333 = vmatpush1.bf16.msra.mxu0 0
    %334 = vmatprep.subr.bf16.mxu0 0
    %335 = vmatpush1.bf16.msra.mxu0 0
    %336 = vmatprep.subr.bf16.mxu0 0
    %337 = vmatpush1.bf16.msra.mxu0 0
    %338 = vmatprep.subr.bf16.mxu0 0
    %339 = vmatpush1.bf16.msra.mxu0 0
    %340 = vmatprep.subr.bf16.mxu0 0
    %341 = vmatpush1.bf16.msra.mxu0 0
    %342 = vmatprep.subr.bf16.mxu0 0
    %343 = vmatpush1.bf16.msra.mxu0 0
    %344 = vmatprep.subr.bf16.mxu0 0
    %345 = vmatpush1.bf16.msra.mxu0 0
    %346 = vmatprep.mubr.bf16.mxu0 0
    %347 = vmatmul.mubr.bf16.gmra.mrb[0].mxu0 %v146
    %v348 = vpop.f32.mrb[0].mxu0
    %v349 = vadd.f32 0.0, %v348
    %v350 = vpop.f32.mrb[0].mxu0
    %v351 = vadd.f32 0.0, %v350
    %v352 = vpop.f32.mrb[0].mxu0
    %v353 = vadd.f32 0.0, %v352
    %v354 = vpop.f32.mrb[0].mxu0
    %v355 = vadd.f32 0.0, %v354
    %356 = vmatprep.mubr.bf16.mxu0 0
    %357 = vmatmul.mubr.bf16.gmra.mrb[0].mxu0 %v147
    %v358 = vpop.f32.mrb[0].mxu0
    %v359 = vadd.f32 0.0, %v358
    %v360 = vpop.f32.mrb[0].mxu0
    %v361 = vadd.f32 0.0, %v360
    %v362 = vpop.f32.mrb[0].mxu0
    %v363 = vadd.f32 0.0, %v362
    %v364 = vpop.f32.mrb[0].mxu0
    %v365 = vadd.f32 0.0, %v364
    %366 = vmatprep.mubr.bf16.mxu0 0
    %367 = vmatmul.mubr.bf16.gmra.mrb[0].mxu0 %v148
    %v368 = vpop.f32.mrb[0].mxu0
    %v369 = vadd.f32 0.0, %v368
    %v370 = vpop.f32.mrb[0].mxu0
    %v371 = vadd.f32 0.0, %v370
    %v372 = vpop.f32.mrb[0].mxu0
    %v373 = vadd.f32 0.0, %v372
    %v374 = vpop.f32.mrb[0].mxu0
    %v375 = vadd.f32 0.0, %v374
    %376 = vmatprep.mubr.bf16.mxu0 0
    %377 = vmatmul.mubr.bf16.gmra.mrb[0].mxu0 %v149
    %v378 = vpop.f32.mrb[0].mxu0
    %v379 = vadd.f32 0.0, %v378
    %v380 = vpop.f32.mrb[0].mxu0
    %v381 = vadd.f32 0.0, %v380
    %v382 = vpop.f32.mrb[0].mxu0
    %v383 = vadd.f32 0.0, %v382
    %v384 = vpop.f32.mrb[0].mxu0
    %v385 = vadd.f32 0.0, %v384
    %386 = vdwg.mxu0
    %387 = vmatprep.subr.bf16.mxu0 %v253
    %388 = vmatpush1.bf16.msra.mxu0 %v252
    %389 = vmatprep.subr.bf16.mxu0 %v257
    %390 = vmatpush1.bf16.msra.mxu0 %v256
    %391 = vmatprep.subr.bf16.mxu0 %v261
    %392 = vmatpush1.bf16.msra.mxu0 %v260
    %393 = vmatprep.subr.bf16.mxu0 %v265
    %394 = vmatpush1.bf16.msra.mxu0 %v264
    %395 = vmatprep.subr.bf16.mxu0 %v269
    %396 = vmatpush1.bf16.msra.mxu0 %v268
    %397 = vmatprep.subr.bf16.mxu0 %v273
    %398 = vmatpush1.bf16.msra.mxu0 %v272
    %399 = vmatprep.subr.bf16.mxu0 %v277
    %400 = vmatpush1.bf16.msra.mxu0 %v276
    %401 = vmatprep.subr.bf16.mxu0 %v281
    %402 = vmatpush1.bf16.msra.mxu0 %v280
    %403 = vmatprep.subr.bf16.mxu0 0
    %404 = vmatpush1.bf16.msra.mxu0 0
    %405 = vmatprep.subr.bf16.mxu0 0
    %406 = vmatpush1.bf16.msra.mxu0 0
    %407 = vmatprep.subr.bf16.mxu0 0
    %408 = vmatpush1.bf16.msra.mxu0 0
    %409 = vmatprep.subr.bf16.mxu0 0
    %410 = vmatpush1.bf16.msra.mxu0 0
    %411 = vmatprep.subr.bf16.mxu0 0
    %412 = vmatpush1.bf16.msra.mxu0 0
    %413 = vmatprep.subr.bf16.mxu0 0
    %414 = vmatpush1.bf16.msra.mxu0 0
    %415 = vmatprep.subr.bf16.mxu0 0
    %416 = vmatpush1.bf16.msra.mxu0 0
    %417 = vmatprep.subr.bf16.mxu0 0
    %418 = vmatpush1.bf16.msra.mxu0 0
    %419 = vmatprep.mubr.bf16.mxu0 0
    %420 = vmatmul.mubr.bf16.gmra.mrb[0].mxu0 %v146
    %v421 = vpop.f32.mrb[0].mxu0
    %v422 = vadd.f32 0.0, %v421
    %v423 = vpop.f32.mrb[0].mxu0
    %v424 = vadd.f32 0.0, %v423
    %v425 = vpop.f32.mrb[0].mxu0
    %v426 = vadd.f32 0.0, %v425
    %v427 = vpop.f32.mrb[0].mxu0
    %v428 = vadd.f32 0.0, %v427
    %429 = vmatprep.mubr.bf16.mxu0 0
    %430 = vmatmul.mubr.bf16.gmra.mrb[0].mxu0 %v147
    %v431 = vpop.f32.mrb[0].mxu0
    %v432 = vadd.f32 0.0, %v431
    %v433 = vpop.f32.mrb[0].mxu0
    %v434 = vadd.f32 0.0, %v433
    %v435 = vpop.f32.mrb[0].mxu0
    %v436 = vadd.f32 0.0, %v435
    %v437 = vpop.f32.mrb[0].mxu0
    %v438 = vadd.f32 0.0, %v437
    %439 = vmatprep.mubr.bf16.mxu0 0
    %440 = vmatmul.mubr.bf16.gmra.mrb[0].mxu0 %v148
    %v441 = vpop.f32.mrb[0].mxu0
    %v442 = vadd.f32 0.0, %v441
    %v443 = vpop.f32.mrb[0].mxu0
    %v444 = vadd.f32 0.0, %v443
    %v445 = vpop.f32.mrb[0].mxu0
    %v446 = vadd.f32 0.0, %v445
    %v447 = vpop.f32.mrb[0].mxu0
    %v448 = vadd.f32 0.0, %v447
    %449 = vmatprep.mubr.bf16.mxu0 0
    %450 = vmatmul.mubr.bf16.gmra.mrb[0].mxu0 %v149
    %v451 = vpop.f32.mrb[0].mxu0
    %v452 = vadd.f32 0.0, %v451
    %v453 = vpop.f32.mrb[0].mxu0
    %v454 = vadd.f32 0.0, %v453
    %v455 = vpop.f32.mrb[0].mxu0
    %v456 = vadd.f32 0.0, %v455
    %v457 = vpop.f32.mrb[0].mxu0
    %v458 = vadd.f32 0.0, %v457
    %459 = vdwg.mxu0
    %460 = vst [vmem:[#allocation2] sm:$0xff] %v349
    %461 = vst [vmem:[#allocation2 + $0x8] sm:$0xff] %v351
    %462 = vst [vmem:[#allocation2 + $0x10] sm:$0xff] %v422
    %463 = vst [vmem:[#allocation2 + $0x18] sm:$0xff] %v424
    %464 = vst [vmem:[#allocation2 + $0x20] sm:$0xff] %v353
    %465 = vst [vmem:[#allocation2 + $0x28] sm:$0xff] %v355
    %466 = vst [vmem:[#allocation2 + $0x30] sm:$0xff] %v426
    %467 = vst [vmem:[#allocation2 + $0x38] sm:$0xff] %v428
    %468 = vst [vmem:[#allocation2 + $0x40] sm:$0xff] %v359
    %469 = vst [vmem:[#allocation2 + $0x48] sm:$0xff] %v361
    %470 = vst [vmem:[#allocation2 + $0x50] sm:$0xff] %v432
    %471 = vst [vmem:[#allocation2 + $0x58] sm:$0xff] %v434
    %472 = vst [vmem:[#allocation2 + $0x60] sm:$0xff] %v363
    %473 = vst [vmem:[#allocation2 + $0x68] sm:$0xff] %v365
    %474 = vst [vmem:[#allocation2 + $0x70] sm:$0xff] %v436
    %475 = vst [vmem:[#allocation2 + $0x78] sm:$0xff] %v438
    %476 = vst [vmem:[#allocation2 + $0x80] sm:$0xff] %v369
    %477 = vst [vmem:[#allocation2 + $0x88] sm:$0xff] %v371
    %478 = vst [vmem:[#allocation2 + $0x90] sm:$0xff] %v442
    %479 = vst [vmem:[#allocation2 + $0x98] sm:$0xff] %v444
    %480 = vst [vmem:[#allocation2 + $0xa0] sm:$0xff] %v373
    %481 = vst [vmem:[#allocation2 + $0xa8] sm:$0xff] %v375
    %482 = vst [vmem:[#allocation2 + $0xb0] sm:$0xff] %v446
    %483 = vst [vmem:[#allocation2 + $0xb8] sm:$0xff] %v448
    %484 = vst [vmem:[#allocation2 + $0xc0] sm:$0xff] %v379
    %485 = vst [vmem:[#allocation2 + $0xc8] sm:$0xff] %v381
    %486 = vst [vmem:[#allocation2 + $0xd0] sm:$0xff] %v452
    %487 = vst [vmem:[#allocation2 + $0xd8] sm:$0xff] %v454
    %488 = vst [vmem:[#allocation2 + $0xe0] sm:$0xff] %v383
    %489 = vst [vmem:[#allocation2 + $0xe8] sm:$0xff] %v385
    %490 = vst [vmem:[#allocation2 + $0xf0] sm:$0xff] %v456
    %491 = vst [vmem:[#allocation2 + $0xf8] sm:$0xff] %v458
    %v492 = vld [vmem:[#allocation9] sm:$0xff]
    %v493 = vld [vmem:[#allocation9 + $0x8] sm:$0xff]
    %v494 = vld [vmem:[#allocation9 + $0x10] sm:$0xff]
    %v495 = vld [vmem:[#allocation9 + $0x18] sm:$0xff]
    %v496 = vld [vmem:[#allocation9 + $0x20] sm:$0xff]
    %v497 = vld [vmem:[#allocation9 + $0x28] sm:$0xff]
    %v498 = vld [vmem:[#allocation9 + $0x30] sm:$0xff]
    %v499 = vld [vmem:[#allocation9 + $0x38] sm:$0xff]
    %v500 = vld [vmem:[#allocation9 + $0x40] sm:$0xff]
    %v501 = vld [vmem:[#allocation9 + $0x48] sm:$0xff]
    %v502 = vld [vmem:[#allocation9 + $0x50] sm:$0xff]
    %v503 = vld [vmem:[#allocation9 + $0x58] sm:$0xff]
    %v504 = vld [vmem:[#allocation9 + $0x60] sm:$0xff]
    %v505 = vld [vmem:[#allocation9 + $0x68] sm:$0xff]
    %v506 = vld [vmem:[#allocation9 + $0x70] sm:$0xff]
    %v507 = vld [vmem:[#allocation9 + $0x78] sm:$0xff]
    %v508 = vld [vmem:[#allocation9 + $0x80] sm:$0xff]
    %v509 = vld [vmem:[#allocation9 + $0x88] sm:$0xff]
    %v510 = vld [vmem:[#allocation9 + $0x90] sm:$0xff]
    %v511 = vld [vmem:[#allocation9 + $0x98] sm:$0xff]
    %v512 = vld [vmem:[#allocation9 + $0xa0] sm:$0xff]
    %v513 = vld [vmem:[#allocation9 + $0xa8] sm:$0xff]
    %v514 = vld [vmem:[#allocation9 + $0xb0] sm:$0xff]
    %v515 = vld [vmem:[#allocation9 + $0xb8] sm:$0xff]
    %v516 = vld [vmem:[#allocation9 + $0xc0] sm:$0xff]
    %v517 = vld [vmem:[#allocation9 + $0xc8] sm:$0xff]
    %v518 = vld [vmem:[#allocation9 + $0xd0] sm:$0xff]
    %v519 = vld [vmem:[#allocation9 + $0xd8] sm:$0xff]
    %v520 = vld [vmem:[#allocation9 + $0xe0] sm:$0xff]
    %v521 = vld [vmem:[#allocation9 + $0xe8] sm:$0xff]
    %v522 = vld [vmem:[#allocation9 + $0xf0] sm:$0xff]
    %v523 = vld [vmem:[#allocation9 + $0xf8] sm:$0xff]
    %v556 = vunpack.c.l.b16 %v492
    %v557 = vunpack.c.h.b16 %v492
    %v558 = vunpack.c.l.b16 %v493
    %v559 = vunpack.c.h.b16 %v493
    %v560 = vunpack.c.l.b16 %v494
    %v561 = vunpack.c.h.b16 %v494
    %v562 = vunpack.c.l.b16 %v495
    %v563 = vunpack.c.h.b16 %v495
    %v564 = vunpack.c.l.b16 %v496
    %v565 = vunpack.c.h.b16 %v496
    %v566 = vunpack.c.l.b16 %v497
    %v567 = vunpack.c.h.b16 %v497
    %v568 = vunpack.c.l.b16 %v498
    %v569 = vunpack.c.h.b16 %v498
    %v570 = vunpack.c.l.b16 %v499
    %v571 = vunpack.c.h.b16 %v499
    %v572 = vunpack.c.l.b16 %v500
    %v573 = vunpack.c.h.b16 %v500
    %v574 = vunpack.c.l.b16 %v501
    %v575 = vunpack.c.h.b16 %v501
    %v576 = vunpack.c.l.b16 %v502
    %v577 = vunpack.c.h.b16 %v502
    %v578 = vunpack.c.l.b16 %v503
    %v579 = vunpack.c.h.b16 %v503
    %v580 = vunpack.c.l.b16 %v504
    %v581 = vunpack.c.h.b16 %v504
    %v582 = vunpack.c.l.b16 %v505
    %v583 = vunpack.c.h.b16 %v505
    %v584 = vunpack.c.l.b16 %v506
    %v585 = vunpack.c.h.b16 %v506
    %v586 = vunpack.c.l.b16 %v507
    %v587 = vunpack.c.h.b16 %v507
    %v588 = vunpack.c.l.b16 %v508
    %v589 = vunpack.c.h.b16 %v508
    %v590 = vunpack.c.l.b16 %v509
    %v591 = vunpack.c.h.b16 %v509
    %v592 = vunpack.c.l.b16 %v510
    %v593 = vunpack.c.h.b16 %v510
    %v594 = vunpack.c.l.b16 %v511
    %v595 = vunpack.c.h.b16 %v511
    %v596 = vunpack.c.l.b16 %v512
    %v597 = vunpack.c.h.b16 %v512
    %v598 = vunpack.c.l.b16 %v513
    %v599 = vunpack.c.h.b16 %v513
    %v600 = vunpack.c.l.b16 %v514
    %v601 = vunpack.c.h.b16 %v514
    %v602 = vunpack.c.l.b16 %v515
    %v603 = vunpack.c.h.b16 %v515
    %v604 = vunpack.c.l.b16 %v516
    %v605 = vunpack.c.h.b16 %v516
    %v606 = vunpack.c.l.b16 %v517
    %v607 = vunpack.c.h.b16 %v517
    %v608 = vunpack.c.l.b16 %v518
    %v609 = vunpack.c.h.b16 %v518
    %v610 = vunpack.c.l.b16 %v519
    %v611 = vunpack.c.h.b16 %v519
    %v612 = vunpack.c.l.b16 %v520
    %v613 = vunpack.c.h.b16 %v520
    %v614 = vunpack.c.l.b16 %v521
    %v615 = vunpack.c.h.b16 %v521
    %v616 = vunpack.c.l.b16 %v522
    %v617 = vunpack.c.h.b16 %v522
    %v618 = vunpack.c.l.b16 %v523
    %v619 = vunpack.c.h.b16 %v523
    %v620 = vpack.c.b16 %v560, %v556
    %v621 = vpack.c.b16 %v561, %v557
    %v622 = vpack.c.b16 %v562, %v558
    %v623 = vpack.c.b16 %v563, %v559
    %v624 = vpack.c.b16 %v568, %v564
    %v625 = vpack.c.b16 %v569, %v565
    %v626 = vpack.c.b16 %v570, %v566
    %v627 = vpack.c.b16 %v571, %v567
    %v628 = vpack.c.b16 %v576, %v572
    %v629 = vpack.c.b16 %v577, %v573
    %v630 = vpack.c.b16 %v578, %v574
    %v631 = vpack.c.b16 %v579, %v575
    %v632 = vpack.c.b16 %v584, %v580
    %v633 = vpack.c.b16 %v585, %v581
    %v634 = vpack.c.b16 %v586, %v582
    %v635 = vpack.c.b16 %v587, %v583
    %v636 = vpack.c.b16 %v592, %v588
    %v637 = vpack.c.b16 %v593, %v589
    %v638 = vpack.c.b16 %v594, %v590
    %v639 = vpack.c.b16 %v595, %v591
    %v640 = vpack.c.b16 %v600, %v596
    %v641 = vpack.c.b16 %v601, %v597
    %v642 = vpack.c.b16 %v602, %v598
    %v643 = vpack.c.b16 %v603, %v599
    %v644 = vpack.c.b16 %v608, %v604
    %v645 = vpack.c.b16 %v609, %v605
    %v646 = vpack.c.b16 %v610, %v606
    %v647 = vpack.c.b16 %v611, %v607
    %v648 = vpack.c.b16 %v616, %v612
    %v649 = vpack.c.b16 %v617, %v613
    %v650 = vpack.c.b16 %v618, %v614
    %v651 = vpack.c.b16 %v619, %v615
    %684 = vmatprep.subr.bf16.mxu0 %v621
    %685 = vmatpush1.bf16.msra.mxu0 %v620
    %686 = vmatprep.subr.bf16.mxu0 %v625
    %687 = vmatpush1.bf16.msra.mxu0 %v624
    %688 = vmatprep.subr.bf16.mxu0 %v629
    %689 = vmatpush1.bf16.msra.mxu0 %v628
    %690 = vmatprep.subr.bf16.mxu0 %v633
    %691 = vmatpush1.bf16.msra.mxu0 %v632
    %692 = vmatprep.subr.bf16.mxu0 %v637
    %693 = vmatpush1.bf16.msra.mxu0 %v636
    %694 = vmatprep.subr.bf16.mxu0 %v641
    %695 = vmatpush1.bf16.msra.mxu0 %v640
    %696 = vmatprep.subr.bf16.mxu0 %v645
    %697 = vmatpush1.bf16.msra.mxu0 %v644
    %698 = vmatprep.subr.bf16.mxu0 %v649
    %699 = vmatpush1.bf16.msra.mxu0 %v648
    %700 = vmatprep.subr.bf16.mxu0 0
    %701 = vmatpush1.bf16.msra.mxu0 0
    %702 = vmatprep.subr.bf16.mxu0 0
    %703 = vmatpush1.bf16.msra.mxu0 0
    %704 = vmatprep.subr.bf16.mxu0 0
    %705 = vmatpush1.bf16.msra.mxu0 0
    %706 = vmatprep.subr.bf16.mxu0 0
    %707 = vmatpush1.bf16.msra.mxu0 0
    %708 = vmatprep.subr.bf16.mxu0 0
    %709 = vmatpush1.bf16.msra.mxu0 0
    %710 = vmatprep.subr.bf16.mxu0 0
    %711 = vmatpush1.bf16.msra.mxu0 0
    %712 = vmatprep.subr.bf16.mxu0 0
    %713 = vmatpush1.bf16.msra.mxu0 0
    %714 = vmatprep.subr.bf16.mxu0 0
    %715 = vmatpush1.bf16.msra.mxu0 0
    %716 = vmatprep.mubr.bf16.mxu0 0
    %717 = vmatmul.mubr.bf16.gmra.mrb[0].mxu0 0
    %v718 = vpop.f32.mrb[0].mxu0
    %v719 = vadd.f32 0.0, %v718
    %v720 = vpop.f32.mrb[0].mxu0
    %v721 = vadd.f32 0.0, %v720
    %v722 = vpop.f32.mrb[0].mxu0
    %v723 = vpop.f32.mrb[0].mxu0
    %724 = vdwg.mxu0
    %725 = vmatprep.subr.bf16.mxu0 %v623
    %726 = vmatpush1.bf16.msra.mxu0 %v622
    %727 = vmatprep.subr.bf16.mxu0 %v627
    %728 = vmatpush1.bf16.msra.mxu0 %v626
    %729 = vmatprep.subr.bf16.mxu0 %v631
    %730 = vmatpush1.bf16.msra.mxu0 %v630
    %731 = vmatprep.subr.bf16.mxu0 %v635
    %732 = vmatpush1.bf16.msra.mxu0 %v634
    %733 = vmatprep.subr.bf16.mxu0 %v639
    %734 = vmatpush1.bf16.msra.mxu0 %v638
    %735 = vmatprep.subr.bf16.mxu0 %v643
    %736 = vmatpush1.bf16.msra.mxu0 %v642
    %737 = vmatprep.subr.bf16.mxu0 %v647
    %738 = vmatpush1.bf16.msra.mxu0 %v646
    %739 = vmatprep.subr.bf16.mxu0 %v651
    %740 = vmatpush1.bf16.msra.mxu0 %v650
    %741 = vmatprep.subr.bf16.mxu0 0
    %742 = vmatpush1.bf16.msra.mxu0 0
    %743 = vmatprep.subr.bf16.mxu0 0
    %744 = vmatpush1.bf16.msra.mxu0 0
    %745 = vmatprep.subr.bf16.mxu0 0
    %746 = vmatpush1.bf16.msra.mxu0 0
    %747 = vmatprep.subr.bf16.mxu0 0
    %748 = vmatpush1.bf16.msra.mxu0 0
    %749 = vmatprep.subr.bf16.mxu0 0
    %750 = vmatpush1.bf16.msra.mxu0 0
    %751 = vmatprep.subr.bf16.mxu0 0
    %752 = vmatpush1.bf16.msra.mxu0 0
    %753 = vmatprep.subr.bf16.mxu0 0
    %754 = vmatpush1.bf16.msra.mxu0 0
    %755 = vmatprep.subr.bf16.mxu0 0
    %756 = vmatpush1.bf16.msra.mxu0 0
    %757 = vmatprep.mubr.bf16.mxu0 0
    %758 = vmatmul.mubr.bf16.gmra.mrb[0].mxu0 0
    %v759 = vpop.f32.mrb[0].mxu0
    %v760 = vadd.f32 0.0, %v759
    %v761 = vpop.f32.mrb[0].mxu0
    %v762 = vadd.f32 0.0, %v761
    %v763 = vpop.f32.mrb[0].mxu0
    %v764 = vpop.f32.mrb[0].mxu0
    %765 = vdwg.mxu0
    %s766 = smul.u32 0, 4
    %s767 = smul.addr %s766, 8
    %s768 = scalar_lea.vmem [#allocation2], %s767
    %v769 = vld [vmem:[%s768] sm:$0xff]
    %v770 = vld [vmem:[%s768 + $0x8] sm:$0xff]
    %v771 = vld [vmem:[%s768 + $0x10] sm:$0xff]
    %v772 = vld [vmem:[%s768 + $0x18] sm:$0xff]
    %v773 = vadd.f32 %v769, %v719
    %v774 = vadd.f32 %v770, %v721
    %v775 = vadd.f32 %v771, %v760
    %v776 = vadd.f32 %v772, %v762
    %v777 = vxor.u32 %v773, 2147483648
    %v778 = vmul.f32 %v777, 1.442695
    %v779 = vpow.pop %v778
    %v780 = vadd.f32 %v779, 1.0
    %v781 = vrcp.pop %v780
    %v782 = vmul.f32 1.0, %v781
    %v783 = vxor.u32 %v774, 2147483648
    %v784 = vmul.f32 %v783, 1.442695
    %v785 = vpow.pop %v784
    %v786 = vadd.f32 %v785, 1.0
    %v787 = vrcp.pop %v786
    %v788 = vmul.f32 1.0, %v787
    %v789 = vtanh.pop %v775
    %v790 = vxor.u32 %v776, 2147483648
    %v791 = vmul.f32 %v790, 1.442695
    %v792 = vpow.pop %v791
    %v793 = vadd.f32 %v792, 1.0
    %v794 = vrcp.pop %v793
    %v795 = vmul.f32 1.0, %v794
    %v796 = vmul.f32 %v788, 0.0
    %v797 = vmul.f32 %v782, %v789
    %v798 = vadd.f32 %v796, %v797
    %v799 = vtanh.pop %v798
    %v800 = vmul.f32 %v795, %v799
    %v801 = vpack.c.bf16 %v800, %v800
    %v802 = vld [vmem:[#allocation11] sm:$0xff]
    %v803 = vld [vmem:[#allocation11 + $0x8] sm:$0xff]
    %v804 = vld [vmem:[#allocation11 + $0x10] sm:$0xff]
    %v805 = vld [vmem:[#allocation11 + $0x18] sm:$0xff]
    %v806 = vld [vmem:[#allocation11 + $0x20] sm:$0xff]
    %v807 = vld [vmem:[#allocation11 + $0x28] sm:$0xff]
    %v808 = vld [vmem:[#allocation11 + $0x30] sm:$0xff]
    %v809 = vld [vmem:[#allocation11 + $0x38] sm:$0xff]
    %v810 = vld [vmem:[#allocation11 + $0x40] sm:$0xff]
    %v811 = vld [vmem:[#allocation11 + $0x48] sm:$0xff]
    %v812 = vld [vmem:[#allocation11 + $0x50] sm:$0xff]
    %v813 = vld [vmem:[#allocation11 + $0x58] sm:$0xff]
    %v814 = vld [vmem:[#allocation11 + $0x60] sm:$0xff]
    %v815 = vld [vmem:[#allocation11 + $0x68] sm:$0xff]
    %v816 = vld [vmem:[#allocation11 + $0x70] sm:$0xff]
    %v817 = vld [vmem:[#allocation11 + $0x78] sm:$0xff]
    %v818 = vld [vmem:[#allocation11 + $0x80] sm:$0xff]
    %v819 = vld [vmem:[#allocation11 + $0x88] sm:$0xff]
    %v820 = vld [vmem:[#allocation11 + $0x90] sm:$0xff]
    %v821 = vld [vmem:[#allocation11 + $0x98] sm:$0xff]
    %v822 = vld [vmem:[#allocation11 + $0xa0] sm:$0xff]
    %v823 = vld [vmem:[#allocation11 + $0xa8] sm:$0xff]
    %v824 = vld [vmem:[#allocation11 + $0xb0] sm:$0xff]
    %v825 = vld [vmem:[#allocation11 + $0xb8] sm:$0xff]
    %v826 = vld [vmem:[#allocation11 + $0xc0] sm:$0xff]
    %v827 = vld [vmem:[#allocation11 + $0xc8] sm:$0xff]
    %v828 = vld [vmem:[#allocation11 + $0xd0] sm:$0xff]
    %v829 = vld [vmem:[#allocation11 + $0xd8] sm:$0xff]
    %v830 = vld [vmem:[#allocation11 + $0xe0] sm:$0xff]
    %v831 = vld [vmem:[#allocation11 + $0xe8] sm:$0xff]
    %v832 = vld [vmem:[#allocation11 + $0xf0] sm:$0xff]
    %v833 = vld [vmem:[#allocation11 + $0xf8] sm:$0xff]
    %v866 = vunpack.c.l.b16 %v802
    %v867 = vunpack.c.h.b16 %v802
    %v868 = vunpack.c.l.b16 %v803
    %v869 = vunpack.c.h.b16 %v803
    %v870 = vunpack.c.l.b16 %v804
    %v871 = vunpack.c.h.b16 %v804
    %v872 = vunpack.c.l.b16 %v805
    %v873 = vunpack.c.h.b16 %v805
    %v874 = vunpack.c.l.b16 %v806
    %v875 = vunpack.c.h.b16 %v806
    %v876 = vunpack.c.l.b16 %v807
    %v877 = vunpack.c.h.b16 %v807
    %v878 = vunpack.c.l.b16 %v808
    %v879 = vunpack.c.h.b16 %v808
    %v880 = vunpack.c.l.b16 %v809
    %v881 = vunpack.c.h.b16 %v809
    %v882 = vunpack.c.l.b16 %v810
    %v883 = vunpack.c.h.b16 %v810
    %v884 = vunpack.c.l.b16 %v811
    %v885 = vunpack.c.h.b16 %v811
    %v886 = vunpack.c.l.b16 %v812
    %v887 = vunpack.c.h.b16 %v812
    %v888 = vunpack.c.l.b16 %v813
    %v889 = vunpack.c.h.b16 %v813
    %v890 = vunpack.c.l.b16 %v814
    %v891 = vunpack.c.h.b16 %v814
    %v892 = vunpack.c.l.b16 %v815
    %v893 = vunpack.c.h.b16 %v815
    %v894 = vunpack.c.l.b16 %v816
    %v895 = vunpack.c.h.b16 %v816
    %v896 = vunpack.c.l.b16 %v817
    %v897 = vunpack.c.h.b16 %v817
    %v898 = vunpack.c.l.b16 %v818
    %v899 = vunpack.c.h.b16 %v818
    %v900 = vunpack.c.l.b16 %v819
    %v901 = vunpack.c.h.b16 %v819
    %v902 = vunpack.c.l.b16 %v820
    %v903 = vunpack.c.h.b16 %v820
    %v904 = vunpack.c.l.b16 %v821
    %v905 = vunpack.c.h.b16 %v821
    %v906 = vunpack.c.l.b16 %v822
    %v907 = vunpack.c.h.b16 %v822
    %v908 = vunpack.c.l.b16 %v823
    %v909 = vunpack.c.h.b16 %v823
    %v910 = vunpack.c.l.b16 %v824
    %v911 = vunpack.c.h.b16 %v824
    %v912 = vunpack.c.l.b16 %v825
    %v913 = vunpack.c.h.b16 %v825
    %v914 = vunpack.c.l.b16 %v826
    %v915 = vunpack.c.h.b16 %v826
    %v916 = vunpack.c.l.b16 %v827
    %v917 = vunpack.c.h.b16 %v827
    %v918 = vunpack.c.l.b16 %v828
    %v919 = vunpack.c.h.b16 %v828
    %v920 = vunpack.c.l.b16 %v829
    %v921 = vunpack.c.h.b16 %v829
    %v922 = vunpack.c.l.b16 %v830
    %v923 = vunpack.c.h.b16 %v830
    %v924 = vunpack.c.l.b16 %v831
    %v925 = vunpack.c.h.b16 %v831
    %v926 = vunpack.c.l.b16 %v832
    %v927 = vunpack.c.h.b16 %v832
    %v928 = vunpack.c.l.b16 %v833
    %v929 = vunpack.c.h.b16 %v833
    %v930 = vpack.c.b16 %v870, %v866
    %v931 = vpack.c.b16 %v871, %v867
    %v932 = vpack.c.b16 %v872, %v868
    %v933 = vpack.c.b16 %v873, %v869
    %v934 = vpack.c.b16 %v878, %v874
    %v935 = vpack.c.b16 %v879, %v875
    %v936 = vpack.c.b16 %v880, %v876
    %v937 = vpack.c.b16 %v881, %v877
    %v938 = vpack.c.b16 %v886, %v882
    %v939 = vpack.c.b16 %v887, %v883
    %v940 = vpack.c.b16 %v888, %v884
    %v941 = vpack.c.b16 %v889, %v885
    %v942 = vpack.c.b16 %v894, %v890
    %v943 = vpack.c.b16 %v895, %v891
    %v944 = vpack.c.b16 %v896, %v892
    %v945 = vpack.c.b16 %v897, %v893
    %v946 = vpack.c.b16 %v902, %v898
    %v947 = vpack.c.b16 %v903, %v899
    %v948 = vpack.c.b16 %v904, %v900
    %v949 = vpack.c.b16 %v905, %v901
    %v950 = vpack.c.b16 %v910, %v906
    %v951 = vpack.c.b16 %v911, %v907
    %v952 = vpack.c.b16 %v912, %v908
    %v953 = vpack.c.b16 %v913, %v909
    %v954 = vpack.c.b16 %v918, %v914
    %v955 = vpack.c.b16 %v919, %v915
    %v956 = vpack.c.b16 %v920, %v916
    %v957 = vpack.c.b16 %v921, %v917
    %v958 = vpack.c.b16 %v926, %v922
    %v959 = vpack.c.b16 %v927, %v923
    %v960 = vpack.c.b16 %v928, %v924
    %v961 = vpack.c.b16 %v929, %v925
    %994 = vmatprep.subr.bf16.mxu0 %v931
    %995 = vmatpush1.bf16.msra.mxu0 %v930
    %996 = vmatprep.subr.bf16.mxu0 %v935
    %997 = vmatpush1.bf16.msra.mxu0 %v934
    %998 = vmatprep.subr.bf16.mxu0 %v939
    %999 = vmatpush1.bf16.msra.mxu0 %v938
    %1000 = vmatprep.subr.bf16.mxu0 %v943
    %1001 = vmatpush1.bf16.msra.mxu0 %v942
    %1002 = vmatprep.subr.bf16.mxu0 %v947
    %1003 = vmatpush1.bf16.msra.mxu0 %v946
    %1004 = vmatprep.subr.bf16.mxu0 %v951
    %1005 = vmatpush1.bf16.msra.mxu0 %v950
    %1006 = vmatprep.subr.bf16.mxu0 %v955
    %1007 = vmatpush1.bf16.msra.mxu0 %v954
    %1008 = vmatprep.subr.bf16.mxu0 %v959
    %1009 = vmatpush1.bf16.msra.mxu0 %v958
    %1010 = vmatprep.subr.bf16.mxu0 0
    %1011 = vmatpush1.bf16.msra.mxu0 0
    %1012 = vmatprep.subr.bf16.mxu0 0
    %1013 = vmatpush1.bf16.msra.mxu0 0
    %1014 = vmatprep.subr.bf16.mxu0 0
    %1015 = vmatpush1.bf16.msra.mxu0 0
    %1016 = vmatprep.subr.bf16.mxu0 0
    %1017 = vmatpush1.bf16.msra.mxu0 0
    %1018 = vmatprep.subr.bf16.mxu0 0
    %1019 = vmatpush1.bf16.msra.mxu0 0
    %1020 = vmatprep.subr.bf16.mxu0 0
    %1021 = vmatpush1.bf16.msra.mxu0 0
    %1022 = vmatprep.subr.bf16.mxu0 0
    %1023 = vmatpush1.bf16.msra.mxu0 0
    %1024 = vmatprep.subr.bf16.mxu0 0
    %1025 = vmatpush1.bf16.msra.mxu0 0
    %1026 = vmatprep.mubr.bf16.mxu0 0
    %1027 = vmatmul.mubr.bf16.gmra.mrb[0].mxu0 0
    %v1028 = vpop.f32.mrb[0].mxu0
    %v1029 = vadd.f32 0.0, %v1028
    %v1030 = vpop.f32.mrb[0].mxu0
    %v1031 = vadd.f32 0.0, %v1030
    %v1032 = vpop.f32.mrb[0].mxu0
    %v1033 = vpop.f32.mrb[0].mxu0
    %1034 = vdwg.mxu0
    %1035 = vmatprep.subr.bf16.mxu0 %v933
    %1036 = vmatpush1.bf16.msra.mxu0 %v932
    %1037 = vmatprep.subr.bf16.mxu0 %v937
    %1038 = vmatpush1.bf16.msra.mxu0 %v936
    %1039 = vmatprep.subr.bf16.mxu0 %v941
    %1040 = vmatpush1.bf16.msra.mxu0 %v940
    %1041 = vmatprep.subr.bf16.mxu0 %v945
    %1042 = vmatpush1.bf16.msra.mxu0 %v944
    %1043 = vmatprep.subr.bf16.mxu0 %v949
    %1044 = vmatpush1.bf16.msra.mxu0 %v948
    %1045 = vmatprep.subr.bf16.mxu0 %v953
    %1046 = vmatpush1.bf16.msra.mxu0 %v952
    %1047 = vmatprep.subr.bf16.mxu0 %v957
    %1048 = vmatpush1.bf16.msra.mxu0 %v956
    %1049 = vmatprep.subr.bf16.mxu0 %v961
    %1050 = vmatpush1.bf16.msra.mxu0 %v960
    %1051 = vmatprep.subr.bf16.mxu0 0
    %1052 = vmatpush1.bf16.msra.mxu0 0
    %1053 = vmatprep.subr.bf16.mxu0 0
    %1054 = vmatpush1.bf16.msra.mxu0 0
    %1055 = vmatprep.subr.bf16.mxu0 0
    %1056 = vmatpush1.bf16.msra.mxu0 0
    %1057 = vmatprep.subr.bf16.mxu0 0
    %1058 = vmatpush1.bf16.msra.mxu0 0
    %1059 = vmatprep.subr.bf16.mxu0 0
    %1060 = vmatpush1.bf16.msra.mxu0 0
    %1061 = vmatprep.subr.bf16.mxu0 0
    %1062 = vmatpush1.bf16.msra.mxu0 0
    %1063 = vmatprep.subr.bf16.mxu0 0
    %1064 = vmatpush1.bf16.msra.mxu0 0
    %1065 = vmatprep.subr.bf16.mxu0 0
    %1066 = vmatpush1.bf16.msra.mxu0 0
    %1067 = vmatprep.mubr.bf16.mxu0 0
    %1068 = vmatmul.mubr.bf16.gmra.mrb[0].mxu0 0
    %v1069 = vpop.f32.mrb[0].mxu0
    %v1070 = vadd.f32 0.0, %v1069
    %v1071 = vpop.f32.mrb[0].mxu0
    %v1072 = vadd.f32 0.0, %v1071
    %v1073 = vpop.f32.mrb[0].mxu0
    %v1074 = vpop.f32.mrb[0].mxu0
    %1075 = vdwg.mxu0
    %v1076 = vld [vmem:[#allocation8] sm:$0xff]
    %v1077 = vld [vmem:[#allocation8 + $0x8] sm:$0xff]
    %v1078 = vld [vmem:[#allocation8 + $0x10] sm:$0xff]
    %v1079 = vld [vmem:[#allocation8 + $0x18] sm:$0xff]
    %v1080 = vld [vmem:[#allocation8 + $0x20] sm:$0xff]
    %v1081 = vld [vmem:[#allocation8 + $0x28] sm:$0xff]
    %v1082 = vld [vmem:[#allocation8 + $0x30] sm:$0xff]
    %v1083 = vld [vmem:[#allocation8 + $0x38] sm:$0xff]
    %v1084 = vld [vmem:[#allocation8 + $0x40] sm:$0xff]
    %v1085 = vld [vmem:[#allocation8 + $0x48] sm:$0xff]
    %v1086 = vld [vmem:[#allocation8 + $0x50] sm:$0xff]
    %v1087 = vld [vmem:[#allocation8 + $0x58] sm:$0xff]
    %v1088 = vld [vmem:[#allocation8 + $0x60] sm:$0xff]
    %v1089 = vld [vmem:[#allocation8 + $0x68] sm:$0xff]
    %v1090 = vld [vmem:[#allocation8 + $0x70] sm:$0xff]
    %v1091 = vld [vmem:[#allocation8 + $0x78] sm:$0xff]
    %v1092 = vld [vmem:[#allocation8 + $0x80] sm:$0xff]
    %v1093 = vld [vmem:[#allocation8 + $0x88] sm:$0xff]
    %v1094 = vld [vmem:[#allocation8 + $0x90] sm:$0xff]
    %v1095 = vld [vmem:[#allocation8 + $0x98] sm:$0xff]
    %v1096 = vld [vmem:[#allocation8 + $0xa0] sm:$0xff]
    %v1097 = vld [vmem:[#allocation8 + $0xa8] sm:$0xff]
    %v1098 = vld [vmem:[#allocation8 + $0xb0] sm:$0xff]
    %v1099 = vld [vmem:[#allocation8 + $0xb8] sm:$0xff]
    %v1100 = vld [vmem:[#allocation8 + $0xc0] sm:$0xff]
    %v1101 = vld [vmem:[#allocation8 + $0xc8] sm:$0xff]
    %v1102 = vld [vmem:[#allocation8 + $0xd0] sm:$0xff]
    %v1103 = vld [vmem:[#allocation8 + $0xd8] sm:$0xff]
    %v1104 = vld [vmem:[#allocation8 + $0xe0] sm:$0xff]
    %v1105 = vld [vmem:[#allocation8 + $0xe8] sm:$0xff]
    %v1106 = vld [vmem:[#allocation8 + $0xf0] sm:$0xff]
    %v1107 = vld [vmem:[#allocation8 + $0xf8] sm:$0xff]
    %v1140 = vunpack.c.l.b16 %v1076
    %v1141 = vunpack.c.h.b16 %v1076
    %v1142 = vunpack.c.l.b16 %v1077
    %v1143 = vunpack.c.h.b16 %v1077
    %v1144 = vunpack.c.l.b16 %v1078
    %v1145 = vunpack.c.h.b16 %v1078
    %v1146 = vunpack.c.l.b16 %v1079
    %v1147 = vunpack.c.h.b16 %v1079
    %v1148 = vunpack.c.l.b16 %v1080
    %v1149 = vunpack.c.h.b16 %v1080
    %v1150 = vunpack.c.l.b16 %v1081
    %v1151 = vunpack.c.h.b16 %v1081
    %v1152 = vunpack.c.l.b16 %v1082
    %v1153 = vunpack.c.h.b16 %v1082
    %v1154 = vunpack.c.l.b16 %v1083
    %v1155 = vunpack.c.h.b16 %v1083
    %v1156 = vunpack.c.l.b16 %v1084
    %v1157 = vunpack.c.h.b16 %v1084
    %v1158 = vunpack.c.l.b16 %v1085
    %v1159 = vunpack.c.h.b16 %v1085
    %v1160 = vunpack.c.l.b16 %v1086
    %v1161 = vunpack.c.h.b16 %v1086
    %v1162 = vunpack.c.l.b16 %v1087
    %v1163 = vunpack.c.h.b16 %v1087
    %v1164 = vunpack.c.l.b16 %v1088
    %v1165 = vunpack.c.h.b16 %v1088
    %v1166 = vunpack.c.l.b16 %v1089
    %v1167 = vunpack.c.h.b16 %v1089
    %v1168 = vunpack.c.l.b16 %v1090
    %v1169 = vunpack.c.h.b16 %v1090
    %v1170 = vunpack.c.l.b16 %v1091
    %v1171 = vunpack.c.h.b16 %v1091
    %v1172 = vunpack.c.l.b16 %v1092
    %v1173 = vunpack.c.h.b16 %v1092
    %v1174 = vunpack.c.l.b16 %v1093
    %v1175 = vunpack.c.h.b16 %v1093
    %v1176 = vunpack.c.l.b16 %v1094
    %v1177 = vunpack.c.h.b16 %v1094
    %v1178 = vunpack.c.l.b16 %v1095
    %v1179 = vunpack.c.h.b16 %v1095
    %v1180 = vunpack.c.l.b16 %v1096
    %v1181 = vunpack.c.h.b16 %v1096
    %v1182 = vunpack.c.l.b16 %v1097
    %v1183 = vunpack.c.h.b16 %v1097
    %v1184 = vunpack.c.l.b16 %v1098
    %v1185 = vunpack.c.h.b16 %v1098
    %v1186 = vunpack.c.l.b16 %v1099
    %v1187 = vunpack.c.h.b16 %v1099
    %v1188 = vunpack.c.l.b16 %v1100
    %v1189 = vunpack.c.h.b16 %v1100
    %v1190 = vunpack.c.l.b16 %v1101
    %v1191 = vunpack.c.h.b16 %v1101
    %v1192 = vunpack.c.l.b16 %v1102
    %v1193 = vunpack.c.h.b16 %v1102
    %v1194 = vunpack.c.l.b16 %v1103
    %v1195 = vunpack.c.h.b16 %v1103
    %v1196 = vunpack.c.l.b16 %v1104
    %v1197 = vunpack.c.h.b16 %v1104
    %v1198 = vunpack.c.l.b16 %v1105
    %v1199 = vunpack.c.h.b16 %v1105
    %v1200 = vunpack.c.l.b16 %v1106
    %v1201 = vunpack.c.h.b16 %v1106
    %v1202 = vunpack.c.l.b16 %v1107
    %v1203 = vunpack.c.h.b16 %v1107
    %v1204 = vpack.c.b16 %v1144, %v1140
    %v1205 = vpack.c.b16 %v1145, %v1141
    %v1206 = vpack.c.b16 %v1146, %v1142
    %v1207 = vpack.c.b16 %v1147, %v1143
    %v1208 = vpack.c.b16 %v1152, %v1148
    %v1209 = vpack.c.b16 %v1153, %v1149
    %v1210 = vpack.c.b16 %v1154, %v1150
    %v1211 = vpack.c.b16 %v1155, %v1151
    %v1212 = vpack.c.b16 %v1160, %v1156
    %v1213 = vpack.c.b16 %v1161, %v1157
    %v1214 = vpack.c.b16 %v1162, %v1158
    %v1215 = vpack.c.b16 %v1163, %v1159
    %v1216 = vpack.c.b16 %v1168, %v1164
    %v1217 = vpack.c.b16 %v1169, %v1165
    %v1218 = vpack.c.b16 %v1170, %v1166
    %v1219 = vpack.c.b16 %v1171, %v1167
    %v1220 = vpack.c.b16 %v1176, %v1172
    %v1221 = vpack.c.b16 %v1177, %v1173
    %v1222 = vpack.c.b16 %v1178, %v1174
    %v1223 = vpack.c.b16 %v1179, %v1175
    %v1224 = vpack.c.b16 %v1184, %v1180
    %v1225 = vpack.c.b16 %v1185, %v1181
    %v1226 = vpack.c.b16 %v1186, %v1182
    %v1227 = vpack.c.b16 %v1187, %v1183
    %v1228 = vpack.c.b16 %v1192, %v1188
    %v1229 = vpack.c.b16 %v1193, %v1189
    %v1230 = vpack.c.b16 %v1194, %v1190
    %v1231 = vpack.c.b16 %v1195, %v1191
    %v1232 = vpack.c.b16 %v1200, %v1196
    %v1233 = vpack.c.b16 %v1201, %v1197
    %v1234 = vpack.c.b16 %v1202, %v1198
    %v1235 = vpack.c.b16 %v1203, %v1199
    %1268 = vmatprep.subr.bf16.mxu0 %v1205
    %1269 = vmatpush1.bf16.msra.mxu0 %v1204
    %1270 = vmatprep.subr.bf16.mxu0 %v1209
    %1271 = vmatpush1.bf16.msra.mxu0 %v1208
    %1272 = vmatprep.subr.bf16.mxu0 %v1213
    %1273 = vmatpush1.bf16.msra.mxu0 %v1212
    %1274 = vmatprep.subr.bf16.mxu0 %v1217
    %1275 = vmatpush1.bf16.msra.mxu0 %v1216
    %1276 = vmatprep.subr.bf16.mxu0 %v1221
    %1277 = vmatpush1.bf16.msra.mxu0 %v1220
    %1278 = vmatprep.subr.bf16.mxu0 %v1225
    %1279 = vmatpush1.bf16.msra.mxu0 %v1224
    %1280 = vmatprep.subr.bf16.mxu0 %v1229
    %1281 = vmatpush1.bf16.msra.mxu0 %v1228
    %1282 = vmatprep.subr.bf16.mxu0 %v1233
    %1283 = vmatpush1.bf16.msra.mxu0 %v1232
    %1284 = vmatprep.subr.bf16.mxu0 0
    %1285 = vmatpush1.bf16.msra.mxu0 0
    %1286 = vmatprep.subr.bf16.mxu0 0
    %1287 = vmatpush1.bf16.msra.mxu0 0
    %1288 = vmatprep.subr.bf16.mxu0 0
    %1289 = vmatpush1.bf16.msra.mxu0 0
    %1290 = vmatprep.subr.bf16.mxu0 0
    %1291 = vmatpush1.bf16.msra.mxu0 0
    %1292 = vmatprep.subr.bf16.mxu0 0
    %1293 = vmatpush1.bf16.msra.mxu0 0
    %1294 = vmatprep.subr.bf16.mxu0 0
    %1295 = vmatpush1.bf16.msra.mxu0 0
    %1296 = vmatprep.subr.bf16.mxu0 0
    %1297 = vmatpush1.bf16.msra.mxu0 0
    %1298 = vmatprep.subr.bf16.mxu0 0
    %1299 = vmatpush1.bf16.msra.mxu0 0
    %1300 = vmatprep.mubr.bf16.mxu0 0
    %1301 = vmatmul.mubr.bf16.gmra.mrb[0].mxu0 %v801
    %v1302 = vpop.f32.mrb[0].mxu0
    %v1303 = vadd.f32 %v1029, %v1302
    %v1304 = vpop.f32.mrb[0].mxu0
    %v1305 = vadd.f32 %v1031, %v1304
    %v1306 = vpop.f32.mrb[0].mxu0
    %v1307 = vpop.f32.mrb[0].mxu0
    %1308 = vdwg.mxu0
    %1309 = vmatprep.subr.bf16.mxu0 %v1207
    %1310 = vmatpush1.bf16.msra.mxu0 %v1206
    %1311 = vmatprep.subr.bf16.mxu0 %v1211
    %1312 = vmatpush1.bf16.msra.mxu0 %v1210
    %1313 = vmatprep.subr.bf16.mxu0 %v1215
    %1314 = vmatpush1.bf16.msra.mxu0 %v1214
    %1315 = vmatprep.subr.bf16.mxu0 %v1219
    %1316 = vmatpush1.bf16.msra.mxu0 %v1218
    %1317 = vmatprep.subr.bf16.mxu0 %v1223
    %1318 = vmatpush1.bf16.msra.mxu0 %v1222
    %1319 = vmatprep.subr.bf16.mxu0 %v1227
    %1320 = vmatpush1.bf16.msra.mxu0 %v1226
    %1321 = vmatprep.subr.bf16.mxu0 %v1231
    %1322 = vmatpush1.bf16.msra.mxu0 %v1230
    %1323 = vmatprep.subr.bf16.mxu0 %v1235
    %1324 = vmatpush1.bf16.msra.mxu0 %v1234
    %1325 = vmatprep.subr.bf16.mxu0 0
    %1326 = vmatpush1.bf16.msra.mxu0 0
    %1327 = vmatprep.subr.bf16.mxu0 0
    %1328 = vmatpush1.bf16.msra.mxu0 0
    %1329 = vmatprep.subr.bf16.mxu0 0
    %1330 = vmatpush1.bf16.msra.mxu0 0
    %1331 = vmatprep.subr.bf16.mxu0 0
    %1332 = vmatpush1.bf16.msra.mxu0 0
    %1333 = vmatprep.subr.bf16.mxu0 0
    %1334 = vmatpush1.bf16.msra.mxu0 0
    %1335 = vmatprep.subr.bf16.mxu0 0
    %1336 = vmatpush1.bf16.msra.mxu0 0
    %1337 = vmatprep.subr.bf16.mxu0 0
    %1338 = vmatpush1.bf16.msra.mxu0 0
    %1339 = vmatprep.subr.bf16.mxu0 0
    %1340 = vmatpush1.bf16.msra.mxu0 0
    %1341 = vmatprep.mubr.bf16.mxu0 0
    %1342 = vmatmul.mubr.bf16.gmra.mrb[0].mxu0 %v801
    %v1343 = vpop.f32.mrb[0].mxu0
    %v1344 = vadd.f32 %v1070, %v1343
    %v1345 = vpop.f32.mrb[0].mxu0
    %v1346 = vadd.f32 %v1072, %v1345
    %v1347 = vpop.f32.mrb[0].mxu0
    %v1348 = vpop.f32.mrb[0].mxu0
    %1349 = vdwg.mxu0
    %v1350 = vxor.u32 %v1303, 2147483648
    %v1351 = vmul.f32 %v1350, 1.442695
    %v1352 = vpow.pop %v1351
    %v1353 = vadd.f32 %v1352, 1.0
    %v1354 = vrcp.pop %v1353
    %v1355 = vmul.f32 1.0, %v1354
    %v1356 = vxor.u32 %v1305, 2147483648
    %v1357 = vmul.f32 %v1356, 1.442695
    %v1358 = vpow.pop %v1357
    %v1359 = vadd.f32 %v1358, 1.0
    %v1360 = vrcp.pop %v1359
    %v1361 = vmul.f32 1.0, %v1360
    %v1362 = vtanh.pop %v1344
    %v1363 = vxor.u32 %v1346, 2147483648
    %v1364 = vmul.f32 %v1363, 1.442695
    %v1365 = vpow.pop %v1364
    %v1366 = vadd.f32 %v1365, 1.0
    %v1367 = vrcp.pop %v1366
    %v1368 = vmul.f32 1.0, %v1367
    %v1369 = vmul.f32 %v1361, 0.0
    %v1370 = vmul.f32 %v1355, %v1362
    %v1371 = vadd.f32 %v1369, %v1370
    %v1372 = vtanh.pop %v1371
    %v1373 = vmul.f32 %v1368, %v1372
    %1374 = vst [vmem:[#allocation12] sm:$0xff] %v1373
    %v1375 = vld [vmem:[#allocation9] sm:$0xff]
    %v1376 = vld [vmem:[#allocation9 + $0x8] sm:$0xff]
    %v1377 = vld [vmem:[#allocation9 + $0x10] sm:$0xff]
    %v1378 = vld [vmem:[#allocation9 + $0x18] sm:$0xff]
    %v1379 = vld [vmem:[#allocation9 + $0x20] sm:$0xff]
    %v1380 = vld [vmem:[#allocation9 + $0x28] sm:$0xff]
    %v1381 = vld [vmem:[#allocation9 + $0x30] sm:$0xff]
    %v1382 = vld [vmem:[#allocation9 + $0x38] sm:$0xff]
    %v1383 = vld [vmem:[#allocation9 + $0x40] sm:$0xff]
    %v1384 = vld [vmem:[#allocation9 + $0x48] sm:$0xff]
    %v1385 = vld [vmem:[#allocation9 + $0x50] sm:$0xff]
    %v1386 = vld [vmem:[#allocation9 + $0x58] sm:$0xff]
    %v1387 = vld [vmem:[#allocation9 + $0x60] sm:$0xff]
    %v1388 = vld [vmem:[#allocation9 + $0x68] sm:$0xff]
    %v1389 = vld [vmem:[#allocation9 + $0x70] sm:$0xff]
    %v1390 = vld [vmem:[#allocation9 + $0x78] sm:$0xff]
    %v1391 = vld [vmem:[#allocation9 + $0x80] sm:$0xff]
    %v1392 = vld [vmem:[#allocation9 + $0x88] sm:$0xff]
    %v1393 = vld [vmem:[#allocation9 + $0x90] sm:$0xff]
    %v1394 = vld [vmem:[#allocation9 + $0x98] sm:$0xff]
    %v1395 = vld [vmem:[#allocation9 + $0xa0] sm:$0xff]
    %v1396 = vld [vmem:[#allocation9 + $0xa8] sm:$0xff]
    %v1397 = vld [vmem:[#allocation9 + $0xb0] sm:$0xff]
    %v1398 = vld [vmem:[#allocation9 + $0xb8] sm:$0xff]
    %v1399 = vld [vmem:[#allocation9 + $0xc0] sm:$0xff]
    %v1400 = vld [vmem:[#allocation9 + $0xc8] sm:$0xff]
    %v1401 = vld [vmem:[#allocation9 + $0xd0] sm:$0xff]
    %v1402 = vld [vmem:[#allocation9 + $0xd8] sm:$0xff]
    %v1403 = vld [vmem:[#allocation9 + $0xe0] sm:$0xff]
    %v1404 = vld [vmem:[#allocation9 + $0xe8] sm:$0xff]
    %v1405 = vld [vmem:[#allocation9 + $0xf0] sm:$0xff]
    %v1406 = vld [vmem:[#allocation9 + $0xf8] sm:$0xff]
    %v1439 = vunpack.c.l.b16 %v1375
    %v1440 = vunpack.c.h.b16 %v1375
    %v1441 = vunpack.c.l.b16 %v1376
    %v1442 = vunpack.c.h.b16 %v1376
    %v1443 = vunpack.c.l.b16 %v1377
    %v1444 = vunpack.c.h.b16 %v1377
    %v1445 = vunpack.c.l.b16 %v1378
    %v1446 = vunpack.c.h.b16 %v1378
    %v1447 = vunpack.c.l.b16 %v1379
    %v1448 = vunpack.c.h.b16 %v1379
    %v1449 = vunpack.c.l.b16 %v1380
    %v1450 = vunpack.c.h.b16 %v1380
    %v1451 = vunpack.c.l.b16 %v1381
    %v1452 = vunpack.c.h.b16 %v1381
    %v1453 = vunpack.c.l.b16 %v1382
    %v1454 = vunpack.c.h.b16 %v1382
    %v1455 = vunpack.c.l.b16 %v1383
    %v1456 = vunpack.c.h.b16 %v1383
    %v1457 = vunpack.c.l.b16 %v1384
    %v1458 = vunpack.c.h.b16 %v1384
    %v1459 = vunpack.c.l.b16 %v1385
    %v1460 = vunpack.c.h.b16 %v1385
    %v1461 = vunpack.c.l.b16 %v1386
    %v1462 = vunpack.c.h.b16 %v1386
    %v1463 = vunpack.c.l.b16 %v1387
    %v1464 = vunpack.c.h.b16 %v1387
    %v1465 = vunpack.c.l.b16 %v1388
    %v1466 = vunpack.c.h.b16 %v1388
    %v1467 = vunpack.c.l.b16 %v1389
    %v1468 = vunpack.c.h.b16 %v1389
    %v1469 = vunpack.c.l.b16 %v1390
    %v1470 = vunpack.c.h.b16 %v1390
    %v1471 = vunpack.c.l.b16 %v1391
    %v1472 = vunpack.c.h.b16 %v1391
    %v1473 = vunpack.c.l.b16 %v1392
    %v1474 = vunpack.c.h.b16 %v1392
    %v1475 = vunpack.c.l.b16 %v1393
    %v1476 = vunpack.c.h.b16 %v1393
    %v1477 = vunpack.c.l.b16 %v1394
    %v1478 = vunpack.c.h.b16 %v1394
    %v1479 = vunpack.c.l.b16 %v1395
    %v1480 = vunpack.c.h.b16 %v1395
    %v1481 = vunpack.c.l.b16 %v1396
    %v1482 = vunpack.c.h.b16 %v1396
    %v1483 = vunpack.c.l.b16 %v1397
    %v1484 = vunpack.c.h.b16 %v1397
    %v1485 = vunpack.c.l.b16 %v1398
    %v1486 = vunpack.c.h.b16 %v1398
    %v1487 = vunpack.c.l.b16 %v1399
    %v1488 = vunpack.c.h.b16 %v1399
    %v1489 = vunpack.c.l.b16 %v1400
    %v1490 = vunpack.c.h.b16 %v1400
    %v1491 = vunpack.c.l.b16 %v1401
    %v1492 = vunpack.c.h.b16 %v1401
    %v1493 = vunpack.c.l.b16 %v1402
    %v1494 = vunpack.c.h.b16 %v1402
    %v1495 = vunpack.c.l.b16 %v1403
    %v1496 = vunpack.c.h.b16 %v1403
    %v1497 = vunpack.c.l.b16 %v1404
    %v1498 = vunpack.c.h.b16 %v1404
    %v1499 = vunpack.c.l.b16 %v1405
    %v1500 = vunpack.c.h.b16 %v1405
    %v1501 = vunpack.c.l.b16 %v1406
    %v1502 = vunpack.c.h.b16 %v1406
    %v1503 = vpack.c.b16 %v1443, %v1439
    %v1504 = vpack.c.b16 %v1444, %v1440
    %v1505 = vpack.c.b16 %v1445, %v1441
    %v1506 = vpack.c.b16 %v1446, %v1442
    %v1507 = vpack.c.b16 %v1451, %v1447
    %v1508 = vpack.c.b16 %v1452, %v1448
    %v1509 = vpack.c.b16 %v1453, %v1449
    %v1510 = vpack.c.b16 %v1454, %v1450
    %v1511 = vpack.c.b16 %v1459, %v1455
    %v1512 = vpack.c.b16 %v1460, %v1456
    %v1513 = vpack.c.b16 %v1461, %v1457
    %v1514 = vpack.c.b16 %v1462, %v1458
    %v1515 = vpack.c.b16 %v1467, %v1463
    %v1516 = vpack.c.b16 %v1468, %v1464
    %v1517 = vpack.c.b16 %v1469, %v1465
    %v1518 = vpack.c.b16 %v1470, %v1466
    %v1519 = vpack.c.b16 %v1475, %v1471
    %v1520 = vpack.c.b16 %v1476, %v1472
    %v1521 = vpack.c.b16 %v1477, %v1473
    %v1522 = vpack.c.b16 %v1478, %v1474
    %v1523 = vpack.c.b16 %v1483, %v1479
    %v1524 = vpack.c.b16 %v1484, %v1480
    %v1525 = vpack.c.b16 %v1485, %v1481
    %v1526 = vpack.c.b16 %v1486, %v1482
    %v1527 = vpack.c.b16 %v1491, %v1487
    %v1528 = vpack.c.b16 %v1492, %v1488
    %v1529 = vpack.c.b16 %v1493, %v1489
    %v1530 = vpack.c.b16 %v1494, %v1490
    %v1531 = vpack.c.b16 %v1499, %v1495
    %v1532 = vpack.c.b16 %v1500, %v1496
    %v1533 = vpack.c.b16 %v1501, %v1497
    %v1534 = vpack.c.b16 %v1502, %v1498
    %1567 = vmatprep.subr.bf16.mxu0 %v1504
    %1568 = vmatpush1.bf16.msra.mxu0 %v1503
    %1569 = vmatprep.subr.bf16.mxu0 %v1508
    %1570 = vmatpush1.bf16.msra.mxu0 %v1507
    %1571 = vmatprep.subr.bf16.mxu0 %v1512
    %1572 = vmatpush1.bf16.msra.mxu0 %v1511
    %1573 = vmatprep.subr.bf16.mxu0 %v1516
    %1574 = vmatpush1.bf16.msra.mxu0 %v1515
    %1575 = vmatprep.subr.bf16.mxu0 %v1520
    %1576 = vmatpush1.bf16.msra.mxu0 %v1519
    %1577 = vmatprep.subr.bf16.mxu0 %v1524
    %1578 = vmatpush1.bf16.msra.mxu0 %v1523
    %1579 = vmatprep.subr.bf16.mxu0 %v1528
    %1580 = vmatpush1.bf16.msra.mxu0 %v1527
    %1581 = vmatprep.subr.bf16.mxu0 %v1532
    %1582 = vmatpush1.bf16.msra.mxu0 %v1531
    %1583 = vmatprep.subr.bf16.mxu0 0
    %1584 = vmatpush1.bf16.msra.mxu0 0
    %1585 = vmatprep.subr.bf16.mxu0 0
    %1586 = vmatpush1.bf16.msra.mxu0 0
    %1587 = vmatprep.subr.bf16.mxu0 0
    %1588 = vmatpush1.bf16.msra.mxu0 0
    %1589 = vmatprep.subr.bf16.mxu0 0
    %1590 = vmatpush1.bf16.msra.mxu0 0
    %1591 = vmatprep.subr.bf16.mxu0 0
    %1592 = vmatpush1.bf16.msra.mxu0 0
    %1593 = vmatprep.subr.bf16.mxu0 0
    %1594 = vmatpush1.bf16.msra.mxu0 0
    %1595 = vmatprep.subr.bf16.mxu0 0
    %1596 = vmatpush1.bf16.msra.mxu0 0
    %1597 = vmatprep.subr.bf16.mxu0 0
    %1598 = vmatpush1.bf16.msra.mxu0 0
    %1599 = vmatprep.mubr.bf16.mxu0 0
    %1600 = vmatmul.mubr.bf16.gmra.mrb[0].mxu0 %v801
    %v1601 = vpop.f32.mrb[0].mxu0
    %v1602 = vadd.f32 0.0, %v1601
    %v1603 = vpop.f32.mrb[0].mxu0
    %v1604 = vadd.f32 0.0, %v1603
    %v1605 = vpop.f32.mrb[0].mxu0
    %v1606 = vpop.f32.mrb[0].mxu0
    %1607 = vdwg.mxu0
    %1608 = vmatprep.subr.bf16.mxu0 %v1506
    %1609 = vmatpush1.bf16.msra.mxu0 %v1505
    %1610 = vmatprep.subr.bf16.mxu0 %v1510
    %1611 = vmatpush1.bf16.msra.mxu0 %v1509
    %1612 = vmatprep.subr.bf16.mxu0 %v1514
    %1613 = vmatpush1.bf16.msra.mxu0 %v1513
    %1614 = vmatprep.subr.bf16.mxu0 %v1518
    %1615 = vmatpush1.bf16.msra.mxu0 %v1517
    %1616 = vmatprep.subr.bf16.mxu0 %v1522
    %1617 = vmatpush1.bf16.msra.mxu0 %v1521
    %1618 = vmatprep.subr.bf16.mxu0 %v1526
    %1619 = vmatpush1.bf16.msra.mxu0 %v1525
    %1620 = vmatprep.subr.bf16.mxu0 %v1530
    %1621 = vmatpush1.bf16.msra.mxu0 %v1529
    %1622 = vmatprep.subr.bf16.mxu0 %v1534
    %1623 = vmatpush1.bf16.msra.mxu0 %v1533
    %1624 = vmatprep.subr.bf16.mxu0 0
    %1625 = vmatpush1.bf16.msra.mxu0 0
    %1626 = vmatprep.subr.bf16.mxu0 0
    %1627 = vmatpush1.bf16.msra.mxu0 0
    %1628 = vmatprep.subr.bf16.mxu0 0
    %1629 = vmatpush1.bf16.msra.mxu0 0
    %1630 = vmatprep.subr.bf16.mxu0 0
    %1631 = vmatpush1.bf16.msra.mxu0 0
    %1632 = vmatprep.subr.bf16.mxu0 0
    %1633 = vmatpush1.bf16.msra.mxu0 0
    %1634 = vmatprep.subr.bf16.mxu0 0
    %1635 = vmatpush1.bf16.msra.mxu0 0
    %1636 = vmatprep.subr.bf16.mxu0 0
    %1637 = vmatpush1.bf16.msra.mxu0 0
    %1638 = vmatprep.subr.bf16.mxu0 0
    %1639 = vmatpush1.bf16.msra.mxu0 0
    %1640 = vmatprep.mubr.bf16.mxu0 0
    %1641 = vmatmul.mubr.bf16.gmra.mrb[0].mxu0 %v801
    %v1642 = vpop.f32.mrb[0].mxu0
    %v1643 = vadd.f32 0.0, %v1642
    %v1644 = vpop.f32.mrb[0].mxu0
    %v1645 = vadd.f32 0.0, %v1644
    %v1646 = vpop.f32.mrb[0].mxu0
    %v1647 = vpop.f32.mrb[0].mxu0
    %1648 = vdwg.mxu0
    %s1649 = smul.u32 1, 4
    %s1650 = smul.addr %s1649, 8
    %s1651 = scalar_lea.vmem [#allocation2], %s1650
    %v1652 = vld [vmem:[%s1651] sm:$0xff]
    %v1653 = vld [vmem:[%s1651 + $0x8] sm:$0xff]
    %v1654 = vld [vmem:[%s1651 + $0x10] sm:$0xff]
    %v1655 = vld [vmem:[%s1651 + $0x18] sm:$0xff]
    %v1656 = vadd.f32 %v1652, %v1602
    %v1657 = vadd.f32 %v1653, %v1604
    %v1658 = vadd.f32 %v1654, %v1643
    %v1659 = vadd.f32 %v1655, %v1645
    %v1660 = vxor.u32 %v1656, 2147483648
    %v1661 = vmul.f32 %v1660, 1.442695
    %v1662 = vpow.pop %v1661
    %v1663 = vadd.f32 %v1662, 1.0
    %v1664 = vrcp.pop %v1663
    %v1665 = vmul.f32 1.0, %v1664
    %v1666 = vxor.u32 %v1657, 2147483648
    %v1667 = vmul.f32 %v1666, 1.442695
    %v1668 = vpow.pop %v1667
    %v1669 = vadd.f32 %v1668, 1.0
    %v1670 = vrcp.pop %v1669
    %v1671 = vmul.f32 1.0, %v1670
    %v1672 = vtanh.pop %v1658
    %v1673 = vxor.u32 %v1659, 2147483648
    %v1674 = vmul.f32 %v1673, 1.442695
    %v1675 = vpow.pop %v1674
    %v1676 = vadd.f32 %v1675, 1.0
    %v1677 = vrcp.pop %v1676
    %v1678 = vmul.f32 1.0, %v1677
    %v1679 = vmul.f32 %v1671, %v798
    %v1680 = vmul.f32 %v1665, %v1672
    %v1681 = vadd.f32 %v1679, %v1680
    %v1682 = vtanh.pop %v1681
    %v1683 = vmul.f32 %v1678, %v1682
    %v1684 = vpack.c.bf16 %v1683, %v1683
    %v1685 = vpack.c.bf16 %v1373, %v1373
    %v1686 = vld [vmem:[#allocation11] sm:$0xff]
    %v1687 = vld [vmem:[#allocation11 + $0x8] sm:$0xff]
    %v1688 = vld [vmem:[#allocation11 + $0x10] sm:$0xff]
    %v1689 = vld [vmem:[#allocation11 + $0x18] sm:$0xff]
    %v1690 = vld [vmem:[#allocation11 + $0x20] sm:$0xff]
    %v1691 = vld [vmem:[#allocation11 + $0x28] sm:$0xff]
    %v1692 = vld [vmem:[#allocation11 + $0x30] sm:$0xff]
    %v1693 = vld [vmem:[#allocation11 + $0x38] sm:$0xff]
    %v1694 = vld [vmem:[#allocation11 + $0x40] sm:$0xff]
    %v1695 = vld [vmem:[#allocation11 + $0x48] sm:$0xff]
    %v1696 = vld [vmem:[#allocation11 + $0x50] sm:$0xff]
    %v1697 = vld [vmem:[#allocation11 + $0x58] sm:$0xff]
    %v1698 = vld [vmem:[#allocation11 + $0x60] sm:$0xff]
    %v1699 = vld [vmem:[#allocation11 + $0x68] sm:$0xff]
    %v1700 = vld [vmem:[#allocation11 + $0x70] sm:$0xff]
    %v1701 = vld [vmem:[#allocation11 + $0x78] sm:$0xff]
    %v1702 = vld [vmem:[#allocation11 + $0x80] sm:$0xff]
    %v1703 = vld [vmem:[#allocation11 + $0x88] sm:$0xff]
    %v1704 = vld [vmem:[#allocation11 + $0x90] sm:$0xff]
    %v1705 = vld [vmem:[#allocation11 + $0x98] sm:$0xff]
    %v1706 = vld [vmem:[#allocation11 + $0xa0] sm:$0xff]
    %v1707 = vld [vmem:[#allocation11 + $0xa8] sm:$0xff]
    %v1708 = vld [vmem:[#allocation11 + $0xb0] sm:$0xff]
    %v1709 = vld [vmem:[#allocation11 + $0xb8] sm:$0xff]
    %v1710 = vld [vmem:[#allocation11 + $0xc0] sm:$0xff]
    %v1711 = vld [vmem:[#allocation11 + $0xc8] sm:$0xff]
    %v1712 = vld [vmem:[#allocation11 + $0xd0] sm:$0xff]
    %v1713 = vld [vmem:[#allocation11 + $0xd8] sm:$0xff]
    %v1714 = vld [vmem:[#allocation11 + $0xe0] sm:$0xff]
    %v1715 = vld [vmem:[#allocation11 + $0xe8] sm:$0xff]
    %v1716 = vld [vmem:[#allocation11 + $0xf0] sm:$0xff]
    %v1717 = vld [vmem:[#allocation11 + $0xf8] sm:$0xff]
    %v1750 = vunpack.c.l.b16 %v1686
    %v1751 = vunpack.c.h.b16 %v1686
    %v1752 = vunpack.c.l.b16 %v1687
    %v1753 = vunpack.c.h.b16 %v1687
    %v1754 = vunpack.c.l.b16 %v1688
    %v1755 = vunpack.c.h.b16 %v1688
    %v1756 = vunpack.c.l.b16 %v1689
    %v1757 = vunpack.c.h.b16 %v1689
    %v1758 = vunpack.c.l.b16 %v1690
    %v1759 = vunpack.c.h.b16 %v1690
    %v1760 = vunpack.c.l.b16 %v1691
    %v1761 = vunpack.c.h.b16 %v1691
    %v1762 = vunpack.c.l.b16 %v1692
    %v1763 = vunpack.c.h.b16 %v1692
    %v1764 = vunpack.c.l.b16 %v1693
    %v1765 = vunpack.c.h.b16 %v1693
    %v1766 = vunpack.c.l.b16 %v1694
    %v1767 = vunpack.c.h.b16 %v1694
    %v1768 = vunpack.c.l.b16 %v1695
    %v1769 = vunpack.c.h.b16 %v1695
    %v1770 = vunpack.c.l.b16 %v1696
    %v1771 = vunpack.c.h.b16 %v1696
    %v1772 = vunpack.c.l.b16 %v1697
    %v1773 = vunpack.c.h.b16 %v1697
    %v1774 = vunpack.c.l.b16 %v1698
    %v1775 = vunpack.c.h.b16 %v1698
    %v1776 = vunpack.c.l.b16 %v1699
    %v1777 = vunpack.c.h.b16 %v1699
    %v1778 = vunpack.c.l.b16 %v1700
    %v1779 = vunpack.c.h.b16 %v1700
    %v1780 = vunpack.c.l.b16 %v1701
    %v1781 = vunpack.c.h.b16 %v1701
    %v1782 = vunpack.c.l.b16 %v1702
    %v1783 = vunpack.c.h.b16 %v1702
    %v1784 = vunpack.c.l.b16 %v1703
    %v1785 = vunpack.c.h.b16 %v1703
    %v1786 = vunpack.c.l.b16 %v1704
    %v1787 = vunpack.c.h.b16 %v1704
    %v1788 = vunpack.c.l.b16 %v1705
    %v1789 = vunpack.c.h.b16 %v1705
    %v1790 = vunpack.c.l.b16 %v1706
    %v1791 = vunpack.c.h.b16 %v1706
    %v1792 = vunpack.c.l.b16 %v1707
    %v1793 = vunpack.c.h.b16 %v1707
    %v1794 = vunpack.c.l.b16 %v1708
    %v1795 = vunpack.c.h.b16 %v1708
    %v1796 = vunpack.c.l.b16 %v1709
    %v1797 = vunpack.c.h.b16 %v1709
    %v1798 = vunpack.c.l.b16 %v1710
    %v1799 = vunpack.c.h.b16 %v1710
    %v1800 = vunpack.c.l.b16 %v1711
    %v1801 = vunpack.c.h.b16 %v1711
    %v1802 = vunpack.c.l.b16 %v1712
    %v1803 = vunpack.c.h.b16 %v1712
    %v1804 = vunpack.c.l.b16 %v1713
    %v1805 = vunpack.c.h.b16 %v1713
    %v1806 = vunpack.c.l.b16 %v1714
    %v1807 = vunpack.c.h.b16 %v1714
    %v1808 = vunpack.c.l.b16 %v1715
    %v1809 = vunpack.c.h.b16 %v1715
    %v1810 = vunpack.c.l.b16 %v1716
    %v1811 = vunpack.c.h.b16 %v1716
    %v1812 = vunpack.c.l.b16 %v1717
    %v1813 = vunpack.c.h.b16 %v1717
    %v1814 = vpack.c.b16 %v1754, %v1750
    %v1815 = vpack.c.b16 %v1755, %v1751
    %v1816 = vpack.c.b16 %v1756, %v1752
    %v1817 = vpack.c.b16 %v1757, %v1753
    %v1818 = vpack.c.b16 %v1762, %v1758
    %v1819 = vpack.c.b16 %v1763, %v1759
    %v1820 = vpack.c.b16 %v1764, %v1760
    %v1821 = vpack.c.b16 %v1765, %v1761
    %v1822 = vpack.c.b16 %v1770, %v1766
    %v1823 = vpack.c.b16 %v1771, %v1767
    %v1824 = vpack.c.b16 %v1772, %v1768
    %v1825 = vpack.c.b16 %v1773, %v1769
    %v1826 = vpack.c.b16 %v1778, %v1774
    %v1827 = vpack.c.b16 %v1779, %v1775
    %v1828 = vpack.c.b16 %v1780, %v1776
    %v1829 = vpack.c.b16 %v1781, %v1777
    %v1830 = vpack.c.b16 %v1786, %v1782
    %v1831 = vpack.c.b16 %v1787, %v1783
    %v1832 = vpack.c.b16 %v1788, %v1784
    %v1833 = vpack.c.b16 %v1789, %v1785
    %v1834 = vpack.c.b16 %v1794, %v1790
    %v1835 = vpack.c.b16 %v1795, %v1791
    %v1836 = vpack.c.b16 %v1796, %v1792
    %v1837 = vpack.c.b16 %v1797, %v1793
    %v1838 = vpack.c.b16 %v1802, %v1798
    %v1839 = vpack.c.b16 %v1803, %v1799
    %v1840 = vpack.c.b16 %v1804, %v1800
    %v1841 = vpack.c.b16 %v1805, %v1801
    %v1842 = vpack.c.b16 %v1810, %v1806
    %v1843 = vpack.c.b16 %v1811, %v1807
    %v1844 = vpack.c.b16 %v1812, %v1808
    %v1845 = vpack.c.b16 %v1813, %v1809
    %1878 = vmatprep.subr.bf16.mxu0 %v1815
    %1879 = vmatpush1.bf16.msra.mxu0 %v1814
    %1880 = vmatprep.subr.bf16.mxu0 %v1819
    %1881 = vmatpush1.bf16.msra.mxu0 %v1818
    %1882 = vmatprep.subr.bf16.mxu0 %v1823
    %1883 = vmatpush1.bf16.msra.mxu0 %v1822
    %1884 = vmatprep.subr.bf16.mxu0 %v1827
    %1885 = vmatpush1.bf16.msra.mxu0 %v1826
    %1886 = vmatprep.subr.bf16.mxu0 %v1831
    %1887 = vmatpush1.bf16.msra.mxu0 %v1830
    %1888 = vmatprep.subr.bf16.mxu0 %v1835
    %1889 = vmatpush1.bf16.msra.mxu0 %v1834
    %1890 = vmatprep.subr.bf16.mxu0 %v1839
    %1891 = vmatpush1.bf16.msra.mxu0 %v1838
    %1892 = vmatprep.subr.bf16.mxu0 %v1843
    %1893 = vmatpush1.bf16.msra.mxu0 %v1842
    %1894 = vmatprep.subr.bf16.mxu0 0
    %1895 = vmatpush1.bf16.msra.mxu0 0
    %1896 = vmatprep.subr.bf16.mxu0 0
    %1897 = vmatpush1.bf16.msra.mxu0 0
    %1898 = vmatprep.subr.bf16.mxu0 0
    %1899 = vmatpush1.bf16.msra.mxu0 0
    %1900 = vmatprep.subr.bf16.mxu0 0
    %1901 = vmatpush1.bf16.msra.mxu0 0
    %1902 = vmatprep.subr.bf16.mxu0 0
    %1903 = vmatpush1.bf16.msra.mxu0 0
    %1904 = vmatprep.subr.bf16.mxu0 0
    %1905 = vmatpush1.bf16.msra.mxu0 0
    %1906 = vmatprep.subr.bf16.mxu0 0
    %1907 = vmatpush1.bf16.msra.mxu0 0
    %1908 = vmatprep.subr.bf16.mxu0 0
    %1909 = vmatpush1.bf16.msra.mxu0 0
    %1910 = vmatprep.mubr.bf16.mxu0 0
    %1911 = vmatmul.mubr.bf16.gmra.mrb[0].mxu0 %v1685
    %v1912 = vpop.f32.mrb[0].mxu0
    %v1913 = vadd.f32 0.0, %v1912
    %v1914 = vpop.f32.mrb[0].mxu0
    %v1915 = vadd.f32 0.0, %v1914
    %v1916 = vpop.f32.mrb[0].mxu0
    %v1917 = vpop.f32.mrb[0].mxu0
    %1918 = vdwg.mxu0
    %1919 = vmatprep.subr.bf16.mxu0 %v1817
    %1920 = vmatpush1.bf16.msra.mxu0 %v1816
    %1921 = vmatprep.subr.bf16.mxu0 %v1821
    %1922 = vmatpush1.bf16.msra.mxu0 %v1820
    %1923 = vmatprep.subr.bf16.mxu0 %v1825
    %1924 = vmatpush1.bf16.msra.mxu0 %v1824
    %1925 = vmatprep.subr.bf16.mxu0 %v1829
    %1926 = vmatpush1.bf16.msra.mxu0 %v1828
    %1927 = vmatprep.subr.bf16.mxu0 %v1833
    %1928 = vmatpush1.bf16.msra.mxu0 %v1832
    %1929 = vmatprep.subr.bf16.mxu0 %v1837
    %1930 = vmatpush1.bf16.msra.mxu0 %v1836
    %1931 = vmatprep.subr.bf16.mxu0 %v1841
    %1932 = vmatpush1.bf16.msra.mxu0 %v1840
    %1933 = vmatprep.subr.bf16.mxu0 %v1845
    %1934 = vmatpush1.bf16.msra.mxu0 %v1844
    %1935 = vmatprep.subr.bf16.mxu0 0
    %1936 = vmatpush1.bf16.msra.mxu0 0
    %1937 = vmatprep.subr.bf16.mxu0 0
    %1938 = vmatpush1.bf16.msra.mxu0 0
    %1939 = vmatprep.subr.bf16.mxu0 0
    %1940 = vmatpush1.bf16.msra.mxu0 0
    %1941 = vmatprep.subr.bf16.mxu0 0
    %1942 = vmatpush1.bf16.msra.mxu0 0
    %1943 = vmatprep.subr.bf16.mxu0 0
    %1944 = vmatpush1.bf16.msra.mxu0 0
    %1945 = vmatprep.subr.bf16.mxu0 0
    %1946 = vmatpush1.bf16.msra.mxu0 0
    %1947 = vmatprep.subr.bf16.mxu0 0
    %1948 = vmatpush1.bf16.msra.mxu0 0
    %1949 = vmatprep.subr.bf16.mxu0 0
    %1950 = vmatpush1.bf16.msra.mxu0 0
    %1951 = vmatprep.mubr.bf16.mxu0 0
    %1952 = vmatmul.mubr.bf16.gmra.mrb[0].mxu0 %v1685
    %v1953 = vpop.f32.mrb[0].mxu0
    %v1954 = vadd.f32 0.0, %v1953
    %v1955 = vpop.f32.mrb[0].mxu0
    %v1956 = vadd.f32 0.0, %v1955
    %v1957 = vpop.f32.mrb[0].mxu0
    %v1958 = vpop.f32.mrb[0].mxu0
    %1959 = vdwg.mxu0
    %v1960 = vld [vmem:[#allocation8] sm:$0xff]
    %v1961 = vld [vmem:[#allocation8 + $0x8] sm:$0xff]
    %v1962 = vld [vmem:[#allocation8 + $0x10] sm:$0xff]
    %v1963 = vld [vmem:[#allocation8 + $0x18] sm:$0xff]
    %v1964 = vld [vmem:[#allocation8 + $0x20] sm:$0xff]
    %v1965 = vld [vmem:[#allocation8 + $0x28] sm:$0xff]
    %v1966 = vld [vmem:[#allocation8 + $0x30] sm:$0xff]
    %v1967 = vld [vmem:[#allocation8 + $0x38] sm:$0xff]
    %v1968 = vld [vmem:[#allocation8 + $0x40] sm:$0xff]
    %v1969 = vld [vmem:[#allocation8 + $0x48] sm:$0xff]
    %v1970 = vld [vmem:[#allocation8 + $0x50] sm:$0xff]
    %v1971 = vld [vmem:[#allocation8 + $0x58] sm:$0xff]
    %v1972 = vld [vmem:[#allocation8 + $0x60] sm:$0xff]
    %v1973 = vld [vmem:[#allocation8 + $0x68] sm:$0xff]
    %v1974 = vld [vmem:[#allocation8 + $0x70] sm:$0xff]
    %v1975 = vld [vmem:[#allocation8 + $0x78] sm:$0xff]
    %v1976 = vld [vmem:[#allocation8 + $0x80] sm:$0xff]
    %v1977 = vld [vmem:[#allocation8 + $0x88] sm:$0xff]
    %v1978 = vld [vmem:[#allocation8 + $0x90] sm:$0xff]
    %v1979 = vld [vmem:[#allocation8 + $0x98] sm:$0xff]
    %v1980 = vld [vmem:[#allocation8 + $0xa0] sm:$0xff]
    %v1981 = vld [vmem:[#allocation8 + $0xa8] sm:$0xff]
    %v1982 = vld [vmem:[#allocation8 + $0xb0] sm:$0xff]
    %v1983 = vld [vmem:[#allocation8 + $0xb8] sm:$0xff]
    %v1984 = vld [vmem:[#allocation8 + $0xc0] sm:$0xff]
    %v1985 = vld [vmem:[#allocation8 + $0xc8] sm:$0xff]
    %v1986 = vld [vmem:[#allocation8 + $0xd0] sm:$0xff]
    %v1987 = vld [vmem:[#allocation8 + $0xd8] sm:$0xff]
    %v1988 = vld [vmem:[#allocation8 + $0xe0] sm:$0xff]
    %v1989 = vld [vmem:[#allocation8 + $0xe8] sm:$0xff]
    %v1990 = vld [vmem:[#allocation8 + $0xf0] sm:$0xff]
    %v1991 = vld [vmem:[#allocation8 + $0xf8] sm:$0xff]
    %v2024 = vunpack.c.l.b16 %v1960
    %v2025 = vunpack.c.h.b16 %v1960
    %v2026 = vunpack.c.l.b16 %v1961
    %v2027 = vunpack.c.h.b16 %v1961
    %v2028 = vunpack.c.l.b16 %v1962
    %v2029 = vunpack.c.h.b16 %v1962
    %v2030 = vunpack.c.l.b16 %v1963
    %v2031 = vunpack.c.h.b16 %v1963
    %v2032 = vunpack.c.l.b16 %v1964
    %v2033 = vunpack.c.h.b16 %v1964
    %v2034 = vunpack.c.l.b16 %v1965
    %v2035 = vunpack.c.h.b16 %v1965
    %v2036 = vunpack.c.l.b16 %v1966
    %v2037 = vunpack.c.h.b16 %v1966
    %v2038 = vunpack.c.l.b16 %v1967
    %v2039 = vunpack.c.h.b16 %v1967
    %v2040 = vunpack.c.l.b16 %v1968
    %v2041 = vunpack.c.h.b16 %v1968
    %v2042 = vunpack.c.l.b16 %v1969
    %v2043 = vunpack.c.h.b16 %v1969
    %v2044 = vunpack.c.l.b16 %v1970
    %v2045 = vunpack.c.h.b16 %v1970
    %v2046 = vunpack.c.l.b16 %v1971
    %v2047 = vunpack.c.h.b16 %v1971
    %v2048 = vunpack.c.l.b16 %v1972
    %v2049 = vunpack.c.h.b16 %v1972
    %v2050 = vunpack.c.l.b16 %v1973
    %v2051 = vunpack.c.h.b16 %v1973
    %v2052 = vunpack.c.l.b16 %v1974
    %v2053 = vunpack.c.h.b16 %v1974
    %v2054 = vunpack.c.l.b16 %v1975
    %v2055 = vunpack.c.h.b16 %v1975
    %v2056 = vunpack.c.l.b16 %v1976
    %v2057 = vunpack.c.h.b16 %v1976
    %v2058 = vunpack.c.l.b16 %v1977
    %v2059 = vunpack.c.h.b16 %v1977
    %v2060 = vunpack.c.l.b16 %v1978
    %v2061 = vunpack.c.h.b16 %v1978
    %v2062 = vunpack.c.l.b16 %v1979
    %v2063 = vunpack.c.h.b16 %v1979
    %v2064 = vunpack.c.l.b16 %v1980
    %v2065 = vunpack.c.h.b16 %v1980
    %v2066 = vunpack.c.l.b16 %v1981
    %v2067 = vunpack.c.h.b16 %v1981
    %v2068 = vunpack.c.l.b16 %v1982
    %v2069 = vunpack.c.h.b16 %v1982
    %v2070 = vunpack.c.l.b16 %v1983
    %v2071 = vunpack.c.h.b16 %v1983
    %v2072 = vunpack.c.l.b16 %v1984
    %v2073 = vunpack.c.h.b16 %v1984
    %v2074 = vunpack.c.l.b16 %v1985
    %v2075 = vunpack.c.h.b16 %v1985
    %v2076 = vunpack.c.l.b16 %v1986
    %v2077 = vunpack.c.h.b16 %v1986
    %v2078 = vunpack.c.l.b16 %v1987
    %v2079 = vunpack.c.h.b16 %v1987
    %v2080 = vunpack.c.l.b16 %v1988
    %v2081 = vunpack.c.h.b16 %v1988
    %v2082 = vunpack.c.l.b16 %v1989
    %v2083 = vunpack.c.h.b16 %v1989
    %v2084 = vunpack.c.l.b16 %v1990
    %v2085 = vunpack.c.h.b16 %v1990
    %v2086 = vunpack.c.l.b16 %v1991
    %v2087 = vunpack.c.h.b16 %v1991
    %v2088 = vpack.c.b16 %v2028, %v2024
    %v2089 = vpack.c.b16 %v2029, %v2025
    %v2090 = vpack.c.b16 %v2030, %v2026
    %v2091 = vpack.c.b16 %v2031, %v2027
    %v2092 = vpack.c.b16 %v2036, %v2032
    %v2093 = vpack.c.b16 %v2037, %v2033
    %v2094 = vpack.c.b16 %v2038, %v2034
    %v2095 = vpack.c.b16 %v2039, %v2035
    %v2096 = vpack.c.b16 %v2044, %v2040
    %v2097 = vpack.c.b16 %v2045, %v2041
    %v2098 = vpack.c.b16 %v2046, %v2042
    %v2099 = vpack.c.b16 %v2047, %v2043
    %v2100 = vpack.c.b16 %v2052, %v2048
    %v2101 = vpack.c.b16 %v2053, %v2049
    %v2102 = vpack.c.b16 %v2054, %v2050
    %v2103 = vpack.c.b16 %v2055, %v2051
    %v2104 = vpack.c.b16 %v2060, %v2056
    %v2105 = vpack.c.b16 %v2061, %v2057
    %v2106 = vpack.c.b16 %v2062, %v2058
    %v2107 = vpack.c.b16 %v2063, %v2059
    %v2108 = vpack.c.b16 %v2068, %v2064
    %v2109 = vpack.c.b16 %v2069, %v2065
    %v2110 = vpack.c.b16 %v2070, %v2066
    %v2111 = vpack.c.b16 %v2071, %v2067
    %v2112 = vpack.c.b16 %v2076, %v2072
    %v2113 = vpack.c.b16 %v2077, %v2073
    %v2114 = vpack.c.b16 %v2078, %v2074
    %v2115 = vpack.c.b16 %v2079, %v2075
    %v2116 = vpack.c.b16 %v2084, %v2080
    %v2117 = vpack.c.b16 %v2085, %v2081
    %v2118 = vpack.c.b16 %v2086, %v2082
    %v2119 = vpack.c.b16 %v2087, %v2083
    %2152 = vmatprep.subr.bf16.mxu0 %v2089
    %2153 = vmatpush1.bf16.msra.mxu0 %v2088
    %2154 = vmatprep.subr.bf16.mxu0 %v2093
    %2155 = vmatpush1.bf16.msra.mxu0 %v2092
    %2156 = vmatprep.subr.bf16.mxu0 %v2097
    %2157 = vmatpush1.bf16.msra.mxu0 %v2096
    %2158 = vmatprep.subr.bf16.mxu0 %v2101
    %2159 = vmatpush1.bf16.msra.mxu0 %v2100
    %2160 = vmatprep.subr.bf16.mxu0 %v2105
    %2161 = vmatpush1.bf16.msra.mxu0 %v2104
    %2162 = vmatprep.subr.bf16.mxu0 %v2109
    %2163 = vmatpush1.bf16.msra.mxu0 %v2108
    %2164 = vmatprep.subr.bf16.mxu0 %v2113
    %2165 = vmatpush1.bf16.msra.mxu0 %v2112
    %2166 = vmatprep.subr.bf16.mxu0 %v2117
    %2167 = vmatpush1.bf16.msra.mxu0 %v2116
    %2168 = vmatprep.subr.bf16.mxu0 0
    %2169 = vmatpush1.bf16.msra.mxu0 0
    %2170 = vmatprep.subr.bf16.mxu0 0
    %2171 = vmatpush1.bf16.msra.mxu0 0
    %2172 = vmatprep.subr.bf16.mxu0 0
    %2173 = vmatpush1.bf16.msra.mxu0 0
    %2174 = vmatprep.subr.bf16.mxu0 0
    %2175 = vmatpush1.bf16.msra.mxu0 0
    %2176 = vmatprep.subr.bf16.mxu0 0
    %2177 = vmatpush1.bf16.msra.mxu0 0
    %2178 = vmatprep.subr.bf16.mxu0 0
    %2179 = vmatpush1.bf16.msra.mxu0 0
    %2180 = vmatprep.subr.bf16.mxu0 0
    %2181 = vmatpush1.bf16.msra.mxu0 0
    %2182 = vmatprep.subr.bf16.mxu0 0
    %2183 = vmatpush1.bf16.msra.mxu0 0
    %2184 = vmatprep.mubr.bf16.mxu0 0
    %2185 = vmatmul.mubr.bf16.gmra.mrb[0].mxu0 %v1684
    %v2186 = vpop.f32.mrb[0].mxu0
    %v2187 = vadd.f32 %v1913, %v2186
    %v2188 = vpop.f32.mrb[0].mxu0
    %v2189 = vadd.f32 %v1915, %v2188
    %v2190 = vpop.f32.mrb[0].mxu0
    %v2191 = vpop.f32.mrb[0].mxu0
    %2192 = vdwg.mxu0
    %2193 = vmatprep.subr.bf16.mxu0 %v2091
    %2194 = vmatpush1.bf16.msra.mxu0 %v2090
    %2195 = vmatprep.subr.bf16.mxu0 %v2095
    %2196 = vmatpush1.bf16.msra.mxu0 %v2094
    %2197 = vmatprep.subr.bf16.mxu0 %v2099
    %2198 = vmatpush1.bf16.msra.mxu0 %v2098
    %2199 = vmatprep.subr.bf16.mxu0 %v2103
    %2200 = vmatpush1.bf16.msra.mxu0 %v2102
    %2201 = vmatprep.subr.bf16.mxu0 %v2107
    %2202 = vmatpush1.bf16.msra.mxu0 %v2106
    %2203 = vmatprep.subr.bf16.mxu0 %v2111
    %2204 = vmatpush1.bf16.msra.mxu0 %v2110
    %2205 = vmatprep.subr.bf16.mxu0 %v2115
    %2206 = vmatpush1.bf16.msra.mxu0 %v2114
    %2207 = vmatprep.subr.bf16.mxu0 %v2119
    %2208 = vmatpush1.bf16.msra.mxu0 %v2118
    %2209 = vmatprep.subr.bf16.mxu0 0
    %2210 = vmatpush1.bf16.msra.mxu0 0
    %2211 = vmatprep.subr.bf16.mxu0 0
    %2212 = vmatpush1.bf16.msra.mxu0 0
    %2213 = vmatprep.subr.bf16.mxu0 0
    %2214 = vmatpush1.bf16.msra.mxu0 0
    %2215 = vmatprep.subr.bf16.mxu0 0
    %2216 = vmatpush1.bf16.msra.mxu0 0
    %2217 = vmatprep.subr.bf16.mxu0 0
    %2218 = vmatpush1.bf16.msra.mxu0 0
    %2219 = vmatprep.subr.bf16.mxu0 0
    %2220 = vmatpush1.bf16.msra.mxu0 0
    %2221 = vmatprep.subr.bf16.mxu0 0
    %2222 = vmatpush1.bf16.msra.mxu0 0
    %2223 = vmatprep.subr.bf16.mxu0 0
    %2224 = vmatpush1.bf16.msra.mxu0 0
    %2225 = vmatprep.mubr.bf16.mxu0 0
    %2226 = vmatmul.mubr.bf16.gmra.mrb[0].mxu0 %v1684
    %v2227 = vpop.f32.mrb[0].mxu0
    %v2228 = vadd.f32 %v1954, %v2227
    %v2229 = vpop.f32.mrb[0].mxu0
    %v2230 = vadd.f32 %v1956, %v2229
    %v2231 = vpop.f32.mrb[0].mxu0
    %v2232 = vpop.f32.mrb[0].mxu0
    %2233 = vdwg.mxu0
    %v2234 = vxor.u32 %v2187, 2147483648
    %v2235 = vmul.f32 %v2234, 1.442695
    %v2236 = vpow.pop %v2235
    %v2237 = vadd.f32 %v2236, 1.0
    %v2238 = vrcp.pop %v2237
    %v2239 = vmul.f32 1.0, %v2238
    %v2240 = vxor.u32 %v2189, 2147483648
    %v2241 = vmul.f32 %v2240, 1.442695
    %v2242 = vpow.pop %v2241
    %v2243 = vadd.f32 %v2242, 1.0
    %v2244 = vrcp.pop %v2243
    %v2245 = vmul.f32 1.0, %v2244
    %v2246 = vtanh.pop %v2228
    %v2247 = vxor.u32 %v2230, 2147483648
    %v2248 = vmul.f32 %v2247, 1.442695
    %v2249 = vpow.pop %v2248
    %v2250 = vadd.f32 %v2249, 1.0
    %v2251 = vrcp.pop %v2250
    %v2252 = vmul.f32 1.0, %v2251
    %v2253 = vmul.f32 %v2245, %v1371
    %v2254 = vmul.f32 %v2239, %v2246
    %v2255 = vadd.f32 %v2253, %v2254
    %v2256 = vtanh.pop %v2255
    %v2257 = vmul.f32 %v2252, %v2256
    %s2258 = scalar_lea.vmem [#allocation12], 8
    %2259 = vst [vmem:[%s2258] sm:$0xff] %v2257
    %v2260 = vld [vmem:[#allocation9] sm:$0xff]
    %v2261 = vld [vmem:[#allocation9 + $0x8] sm:$0xff]
    %v2262 = vld [vmem:[#allocation9 + $0x10] sm:$0xff]
    %v2263 = vld [vmem:[#allocation9 + $0x18] sm:$0xff]
    %v2264 = vld [vmem:[#allocation9 + $0x20] sm:$0xff]
    %v2265 = vld [vmem:[#allocation9 + $0x28] sm:$0xff]
    %v2266 = vld [vmem:[#allocation9 + $0x30] sm:$0xff]
    %v2267 = vld [vmem:[#allocation9 + $0x38] sm:$0xff]
    %v2268 = vld [vmem:[#allocation9 + $0x40] sm:$0xff]
    %v2269 = vld [vmem:[#allocation9 + $0x48] sm:$0xff]
    %v2270 = vld [vmem:[#allocation9 + $0x50] sm:$0xff]
    %v2271 = vld [vmem:[#allocation9 + $0x58] sm:$0xff]
    %v2272 = vld [vmem:[#allocation9 + $0x60] sm:$0xff]
    %v2273 = vld [vmem:[#allocation9 + $0x68] sm:$0xff]
    %v2274 = vld [vmem:[#allocation9 + $0x70] sm:$0xff]
    %v2275 = vld [vmem:[#allocation9 + $0x78] sm:$0xff]
    %v2276 = vld [vmem:[#allocation9 + $0x80] sm:$0xff]
    %v2277 = vld [vmem:[#allocation9 + $0x88] sm:$0xff]
    %v2278 = vld [vmem:[#allocation9 + $0x90] sm:$0xff]
    %v2279 = vld [vmem:[#allocation9 + $0x98] sm:$0xff]
    %v2280 = vld [vmem:[#allocation9 + $0xa0] sm:$0xff]
    %v2281 = vld [vmem:[#allocation9 + $0xa8] sm:$0xff]
    %v2282 = vld [vmem:[#allocation9 + $0xb0] sm:$0xff]
    %v2283 = vld [vmem:[#allocation9 + $0xb8] sm:$0xff]
    %v2284 = vld [vmem:[#allocation9 + $0xc0] sm:$0xff]
    %v2285 = vld [vmem:[#allocation9 + $0xc8] sm:$0xff]
    %v2286 = vld [vmem:[#allocation9 + $0xd0] sm:$0xff]
    %v2287 = vld [vmem:[#allocation9 + $0xd8] sm:$0xff]
    %v2288 = vld [vmem:[#allocation9 + $0xe0] sm:$0xff]
    %v2289 = vld [vmem:[#allocation9 + $0xe8] sm:$0xff]
    %v2290 = vld [vmem:[#allocation9 + $0xf0] sm:$0xff]
    %v2291 = vld [vmem:[#allocation9 + $0xf8] sm:$0xff]
    %v2324 = vunpack.c.l.b16 %v2260
    %v2325 = vunpack.c.h.b16 %v2260
    %v2326 = vunpack.c.l.b16 %v2261
    %v2327 = vunpack.c.h.b16 %v2261
    %v2328 = vunpack.c.l.b16 %v2262
    %v2329 = vunpack.c.h.b16 %v2262
    %v2330 = vunpack.c.l.b16 %v2263
    %v2331 = vunpack.c.h.b16 %v2263
    %v2332 = vunpack.c.l.b16 %v2264
    %v2333 = vunpack.c.h.b16 %v2264
    %v2334 = vunpack.c.l.b16 %v2265
    %v2335 = vunpack.c.h.b16 %v2265
    %v2336 = vunpack.c.l.b16 %v2266
    %v2337 = vunpack.c.h.b16 %v2266
    %v2338 = vunpack.c.l.b16 %v2267
    %v2339 = vunpack.c.h.b16 %v2267
    %v2340 = vunpack.c.l.b16 %v2268
    %v2341 = vunpack.c.h.b16 %v2268
    %v2342 = vunpack.c.l.b16 %v2269
    %v2343 = vunpack.c.h.b16 %v2269
    %v2344 = vunpack.c.l.b16 %v2270
    %v2345 = vunpack.c.h.b16 %v2270
    %v2346 = vunpack.c.l.b16 %v2271
    %v2347 = vunpack.c.h.b16 %v2271
    %v2348 = vunpack.c.l.b16 %v2272
    %v2349 = vunpack.c.h.b16 %v2272
    %v2350 = vunpack.c.l.b16 %v2273
    %v2351 = vunpack.c.h.b16 %v2273
    %v2352 = vunpack.c.l.b16 %v2274
    %v2353 = vunpack.c.h.b16 %v2274
    %v2354 = vunpack.c.l.b16 %v2275
    %v2355 = vunpack.c.h.b16 %v2275
    %v2356 = vunpack.c.l.b16 %v2276
    %v2357 = vunpack.c.h.b16 %v2276
    %v2358 = vunpack.c.l.b16 %v2277
    %v2359 = vunpack.c.h.b16 %v2277
    %v2360 = vunpack.c.l.b16 %v2278
    %v2361 = vunpack.c.h.b16 %v2278
    %v2362 = vunpack.c.l.b16 %v2279
    %v2363 = vunpack.c.h.b16 %v2279
    %v2364 = vunpack.c.l.b16 %v2280
    %v2365 = vunpack.c.h.b16 %v2280
    %v2366 = vunpack.c.l.b16 %v2281
    %v2367 = vunpack.c.h.b16 %v2281
    %v2368 = vunpack.c.l.b16 %v2282
    %v2369 = vunpack.c.h.b16 %v2282
    %v2370 = vunpack.c.l.b16 %v2283
    %v2371 = vunpack.c.h.b16 %v2283
    %v2372 = vunpack.c.l.b16 %v2284
    %v2373 = vunpack.c.h.b16 %v2284
    %v2374 = vunpack.c.l.b16 %v2285
    %v2375 = vunpack.c.h.b16 %v2285
    %v2376 = vunpack.c.l.b16 %v2286
    %v2377 = vunpack.c.h.b16 %v2286
    %v2378 = vunpack.c.l.b16 %v2287
    %v2379 = vunpack.c.h.b16 %v2287
    %v2380 = vunpack.c.l.b16 %v2288
    %v2381 = vunpack.c.h.b16 %v2288
    %v2382 = vunpack.c.l.b16 %v2289
    %v2383 = vunpack.c.h.b16 %v2289
    %v2384 = vunpack.c.l.b16 %v2290
    %v2385 = vunpack.c.h.b16 %v2290
    %v2386 = vunpack.c.l.b16 %v2291
    %v2387 = vunpack.c.h.b16 %v2291
    %v2388 = vpack.c.b16 %v2328, %v2324
    %v2389 = vpack.c.b16 %v2329, %v2325
    %v2390 = vpack.c.b16 %v2330, %v2326
    %v2391 = vpack.c.b16 %v2331, %v2327
    %v2392 = vpack.c.b16 %v2336, %v2332
    %v2393 = vpack.c.b16 %v2337, %v2333
    %v2394 = vpack.c.b16 %v2338, %v2334
    %v2395 = vpack.c.b16 %v2339, %v2335
    %v2396 = vpack.c.b16 %v2344, %v2340
    %v2397 = vpack.c.b16 %v2345, %v2341
    %v2398 = vpack.c.b16 %v2346, %v2342
    %v2399 = vpack.c.b16 %v2347, %v2343
    %v2400 = vpack.c.b16 %v2352, %v2348
    %v2401 = vpack.c.b16 %v2353, %v2349
    %v2402 = vpack.c.b16 %v2354, %v2350
    %v2403 = vpack.c.b16 %v2355, %v2351
    %v2404 = vpack.c.b16 %v2360, %v2356
    %v2405 = vpack.c.b16 %v2361, %v2357
    %v2406 = vpack.c.b16 %v2362, %v2358
    %v2407 = vpack.c.b16 %v2363, %v2359
    %v2408 = vpack.c.b16 %v2368, %v2364
    %v2409 = vpack.c.b16 %v2369, %v2365
    %v2410 = vpack.c.b16 %v2370, %v2366
    %v2411 = vpack.c.b16 %v2371, %v2367
    %v2412 = vpack.c.b16 %v2376, %v2372
    %v2413 = vpack.c.b16 %v2377, %v2373
    %v2414 = vpack.c.b16 %v2378, %v2374
    %v2415 = vpack.c.b16 %v2379, %v2375
    %v2416 = vpack.c.b16 %v2384, %v2380
    %v2417 = vpack.c.b16 %v2385, %v2381
    %v2418 = vpack.c.b16 %v2386, %v2382
    %v2419 = vpack.c.b16 %v2387, %v2383
    %2452 = vmatprep.subr.bf16.mxu0 %v2389
    %2453 = vmatpush1.bf16.msra.mxu0 %v2388
    %2454 = vmatprep.subr.bf16.mxu0 %v2393
    %2455 = vmatpush1.bf16.msra.mxu0 %v2392
    %2456 = vmatprep.subr.bf16.mxu0 %v2397
    %2457 = vmatpush1.bf16.msra.mxu0 %v2396
    %2458 = vmatprep.subr.bf16.mxu0 %v2401
    %2459 = vmatpush1.bf16.msra.mxu0 %v2400
    %2460 = vmatprep.subr.bf16.mxu0 %v2405
    %2461 = vmatpush1.bf16.msra.mxu0 %v2404
    %2462 = vmatprep.subr.bf16.mxu0 %v2409
    %2463 = vmatpush1.bf16.msra.mxu0 %v2408
    %2464 = vmatprep.subr.bf16.mxu0 %v2413
    %2465 = vmatpush1.bf16.msra.mxu0 %v2412
    %2466 = vmatprep.subr.bf16.mxu0 %v2417
    %2467 = vmatpush1.bf16.msra.mxu0 %v2416
    %2468 = vmatprep.subr.bf16.mxu0 0
    %2469 = vmatpush1.bf16.msra.mxu0 0
    %2470 = vmatprep.subr.bf16.mxu0 0
    %2471 = vmatpush1.bf16.msra.mxu0 0
    %2472 = vmatprep.subr.bf16.mxu0 0
    %2473 = vmatpush1.bf16.msra.mxu0 0
    %2474 = vmatprep.subr.bf16.mxu0 0
    %2475 = vmatpush1.bf16.msra.mxu0 0
    %2476 = vmatprep.subr.bf16.mxu0 0
    %2477 = vmatpush1.bf16.msra.mxu0 0
    %2478 = vmatprep.subr.bf16.mxu0 0
    %2479 = vmatpush1.bf16.msra.mxu0 0
    %2480 = vmatprep.subr.bf16.mxu0 0
    %2481 = vmatpush1.bf16.msra.mxu0 0
    %2482 = vmatprep.subr.bf16.mxu0 0
    %2483 = vmatpush1.bf16.msra.mxu0 0
    %2484 = vmatprep.mubr.bf16.mxu0 0
    %2485 = vmatmul.mubr.bf16.gmra.mrb[0].mxu0 %v1684
    %v2486 = vpop.f32.mrb[0].mxu0
    %v2487 = vadd.f32 0.0, %v2486
    %v2488 = vpop.f32.mrb[0].mxu0
    %v2489 = vadd.f32 0.0, %v2488
    %v2490 = vpop.f32.mrb[0].mxu0
    %v2491 = vpop.f32.mrb[0].mxu0
    %2492 = vdwg.mxu0
    %2493 = vmatprep.subr.bf16.mxu0 %v2391
    %2494 = vmatpush1.bf16.msra.mxu0 %v2390
    %2495 = vmatprep.subr.bf16.mxu0 %v2395
    %2496 = vmatpush1.bf16.msra.mxu0 %v2394
    %2497 = vmatprep.subr.bf16.mxu0 %v2399
    %2498 = vmatpush1.bf16.msra.mxu0 %v2398
    %2499 = vmatprep.subr.bf16.mxu0 %v2403
    %2500 = vmatpush1.bf16.msra.mxu0 %v2402
    %2501 = vmatprep.subr.bf16.mxu0 %v2407
    %2502 = vmatpush1.bf16.msra.mxu0 %v2406
    %2503 = vmatprep.subr.bf16.mxu0 %v2411
    %2504 = vmatpush1.bf16.msra.mxu0 %v2410
    %2505 = vmatprep.subr.bf16.mxu0 %v2415
    %2506 = vmatpush1.bf16.msra.mxu0 %v2414
    %2507 = vmatprep.subr.bf16.mxu0 %v2419
    %2508 = vmatpush1.bf16.msra.mxu0 %v2418
    %2509 = vmatprep.subr.bf16.mxu0 0
    %2510 = vmatpush1.bf16.msra.mxu0 0
    %2511 = vmatprep.subr.bf16.mxu0 0
    %2512 = vmatpush1.bf16.msra.mxu0 0
    %2513 = vmatprep.subr.bf16.mxu0 0
    %2514 = vmatpush1.bf16.msra.mxu0 0
    %2515 = vmatprep.subr.bf16.mxu0 0
    %2516 = vmatpush1.bf16.msra.mxu0 0
    %2517 = vmatprep.subr.bf16.mxu0 0
    %2518 = vmatpush1.bf16.msra.mxu0 0
    %2519 = vmatprep.subr.bf16.mxu0 0
    %2520 = vmatpush1.bf16.msra.mxu0 0
    %2521 = vmatprep.subr.bf16.mxu0 0
    %2522 = vmatpush1.bf16.msra.mxu0 0
    %2523 = vmatprep.subr.bf16.mxu0 0
    %2524 = vmatpush1.bf16.msra.mxu0 0
    %2525 = vmatprep.mubr.bf16.mxu0 0
    %2526 = vmatmul.mubr.bf16.gmra.mrb[0].mxu0 %v1684
    %v2527 = vpop.f32.mrb[0].mxu0
    %v2528 = vadd.f32 0.0, %v2527
    %v2529 = vpop.f32.mrb[0].mxu0
    %v2530 = vadd.f32 0.0, %v2529
    %v2531 = vpop.f32.mrb[0].mxu0
    %v2532 = vpop.f32.mrb[0].mxu0
    %2533 = vdwg.mxu0
    %s2534 = smul.u32 2, 4
    %s2535 = smul.addr %s2534, 8
    %s2536 = scalar_lea.vmem [#allocation2], %s2535
    %v2537 = vld [vmem:[%s2536] sm:$0xff]
    %v2538 = vld [vmem:[%s2536 + $0x8] sm:$0xff]
    %v2539 = vld [vmem:[%s2536 + $0x10] sm:$0xff]
    %v2540 = vld [vmem:[%s2536 + $0x18] sm:$0xff]
    %v2541 = vadd.f32 %v2537, %v2487
    %v2542 = vadd.f32 %v2538, %v2489
    %v2543 = vadd.f32 %v2539, %v2528
    %v2544 = vadd.f32 %v2540, %v2530
    %v2545 = vxor.u32 %v2541, 2147483648
    %v2546 = vmul.f32 %v2545, 1.442695
    %v2547 = vpow.pop %v2546
    %v2548 = vadd.f32 %v2547, 1.0
    %v2549 = vrcp.pop %v2548
    %v2550 = vmul.f32 1.0, %v2549
    %v2551 = vxor.u32 %v2542, 2147483648
    %v2552 = vmul.f32 %v2551, 1.442695
    %v2553 = vpow.pop %v2552
    %v2554 = vadd.f32 %v2553, 1.0
    %v2555 = vrcp.pop %v2554
    %v2556 = vmul.f32 1.0, %v2555
    %v2557 = vtanh.pop %v2543
    %v2558 = vxor.u32 %v2544, 2147483648
    %v2559 = vmul.f32 %v2558, 1.442695
    %v2560 = vpow.pop %v2559
    %v2561 = vadd.f32 %v2560, 1.0
    %v2562 = vrcp.pop %v2561
    %v2563 = vmul.f32 1.0, %v2562
    %v2564 = vmul.f32 %v2556, %v1681
    %v2565 = vmul.f32 %v2550, %v2557
    %v2566 = vadd.f32 %v2564, %v2565
    %v2567 = vtanh.pop %v2566
    %v2568 = vmul.f32 %v2563, %v2567
    %v2569 = vpack.c.bf16 %v2568, %v2568
    %v2570 = vpack.c.bf16 %v2257, %v2257
    %v2571 = vld [vmem:[#allocation11] sm:$0xff]
    %v2572 = vld [vmem:[#allocation11 + $0x8] sm:$0xff]
    %v2573 = vld [vmem:[#allocation11 + $0x10] sm:$0xff]
    %v2574 = vld [vmem:[#allocation11 + $0x18] sm:$0xff]
    %v2575 = vld [vmem:[#allocation11 + $0x20] sm:$0xff]
    %v2576 = vld [vmem:[#allocation11 + $0x28] sm:$0xff]
    %v2577 = vld [vmem:[#allocation11 + $0x30] sm:$0xff]
    %v2578 = vld [vmem:[#allocation11 + $0x38] sm:$0xff]
    %v2579 = vld [vmem:[#allocation11 + $0x40] sm:$0xff]
    %v2580 = vld [vmem:[#allocation11 + $0x48] sm:$0xff]
    %v2581 = vld [vmem:[#allocation11 + $0x50] sm:$0xff]
    %v2582 = vld [vmem:[#allocation11 + $0x58] sm:$0xff]
    %v2583 = vld [vmem:[#allocation11 + $0x60] sm:$0xff]
    %v2584 = vld [vmem:[#allocation11 + $0x68] sm:$0xff]
    %v2585 = vld [vmem:[#allocation11 + $0x70] sm:$0xff]
    %v2586 = vld [vmem:[#allocation11 + $0x78] sm:$0xff]
    %v2587 = vld [vmem:[#allocation11 + $0x80] sm:$0xff]
    %v2588 = vld [vmem:[#allocation11 + $0x88] sm:$0xff]
    %v2589 = vld [vmem:[#allocation11 + $0x90] sm:$0xff]
    %v2590 = vld [vmem:[#allocation11 + $0x98] sm:$0xff]
    %v2591 = vld [vmem:[#allocation11 + $0xa0] sm:$0xff]
    %v2592 = vld [vmem:[#allocation11 + $0xa8] sm:$0xff]
    %v2593 = vld [vmem:[#allocation11 + $0xb0] sm:$0xff]
    %v2594 = vld [vmem:[#allocation11 + $0xb8] sm:$0xff]
    %v2595 = vld [vmem:[#allocation11 + $0xc0] sm:$0xff]
    %v2596 = vld [vmem:[#allocation11 + $0xc8] sm:$0xff]
    %v2597 = vld [vmem:[#allocation11 + $0xd0] sm:$0xff]
    %v2598 = vld [vmem:[#allocation11 + $0xd8] sm:$0xff]
    %v2599 = vld [vmem:[#allocation11 + $0xe0] sm:$0xff]
    %v2600 = vld [vmem:[#allocation11 + $0xe8] sm:$0xff]
    %v2601 = vld [vmem:[#allocation11 + $0xf0] sm:$0xff]
    %v2602 = vld [vmem:[#allocation11 + $0xf8] sm:$0xff]
    %v2635 = vunpack.c.l.b16 %v2571
    %v2636 = vunpack.c.h.b16 %v2571
    %v2637 = vunpack.c.l.b16 %v2572
    %v2638 = vunpack.c.h.b16 %v2572
    %v2639 = vunpack.c.l.b16 %v2573
    %v2640 = vunpack.c.h.b16 %v2573
    %v2641 = vunpack.c.l.b16 %v2574
    %v2642 = vunpack.c.h.b16 %v2574
    %v2643 = vunpack.c.l.b16 %v2575
    %v2644 = vunpack.c.h.b16 %v2575
    %v2645 = vunpack.c.l.b16 %v2576
    %v2646 = vunpack.c.h.b16 %v2576
    %v2647 = vunpack.c.l.b16 %v2577
    %v2648 = vunpack.c.h.b16 %v2577
    %v2649 = vunpack.c.l.b16 %v2578
    %v2650 = vunpack.c.h.b16 %v2578
    %v2651 = vunpack.c.l.b16 %v2579
    %v2652 = vunpack.c.h.b16 %v2579
    %v2653 = vunpack.c.l.b16 %v2580
    %v2654 = vunpack.c.h.b16 %v2580
    %v2655 = vunpack.c.l.b16 %v2581
    %v2656 = vunpack.c.h.b16 %v2581
    %v2657 = vunpack.c.l.b16 %v2582
    %v2658 = vunpack.c.h.b16 %v2582
    %v2659 = vunpack.c.l.b16 %v2583
    %v2660 = vunpack.c.h.b16 %v2583
    %v2661 = vunpack.c.l.b16 %v2584
    %v2662 = vunpack.c.h.b16 %v2584
    %v2663 = vunpack.c.l.b16 %v2585
    %v2664 = vunpack.c.h.b16 %v2585
    %v2665 = vunpack.c.l.b16 %v2586
    %v2666 = vunpack.c.h.b16 %v2586
    %v2667 = vunpack.c.l.b16 %v2587
    %v2668 = vunpack.c.h.b16 %v2587
    %v2669 = vunpack.c.l.b16 %v2588
    %v2670 = vunpack.c.h.b16 %v2588
    %v2671 = vunpack.c.l.b16 %v2589
    %v2672 = vunpack.c.h.b16 %v2589
    %v2673 = vunpack.c.l.b16 %v2590
    %v2674 = vunpack.c.h.b16 %v2590
    %v2675 = vunpack.c.l.b16 %v2591
    %v2676 = vunpack.c.h.b16 %v2591
    %v2677 = vunpack.c.l.b16 %v2592
    %v2678 = vunpack.c.h.b16 %v2592
    %v2679 = vunpack.c.l.b16 %v2593
    %v2680 = vunpack.c.h.b16 %v2593
    %v2681 = vunpack.c.l.b16 %v2594
    %v2682 = vunpack.c.h.b16 %v2594
    %v2683 = vunpack.c.l.b16 %v2595
    %v2684 = vunpack.c.h.b16 %v2595
    %v2685 = vunpack.c.l.b16 %v2596
    %v2686 = vunpack.c.h.b16 %v2596
    %v2687 = vunpack.c.l.b16 %v2597
    %v2688 = vunpack.c.h.b16 %v2597
    %v2689 = vunpack.c.l.b16 %v2598
    %v2690 = vunpack.c.h.b16 %v2598
    %v2691 = vunpack.c.l.b16 %v2599
    %v2692 = vunpack.c.h.b16 %v2599
    %v2693 = vunpack.c.l.b16 %v2600
    %v2694 = vunpack.c.h.b16 %v2600
    %v2695 = vunpack.c.l.b16 %v2601
    %v2696 = vunpack.c.h.b16 %v2601
    %v2697 = vunpack.c.l.b16 %v2602
    %v2698 = vunpack.c.h.b16 %v2602
    %v2699 = vpack.c.b16 %v2639, %v2635
    %v2700 = vpack.c.b16 %v2640, %v2636
    %v2701 = vpack.c.b16 %v2641, %v2637
    %v2702 = vpack.c.b16 %v2642, %v2638
    %v2703 = vpack.c.b16 %v2647, %v2643
    %v2704 = vpack.c.b16 %v2648, %v2644
    %v2705 = vpack.c.b16 %v2649, %v2645
    %v2706 = vpack.c.b16 %v2650, %v2646
    %v2707 = vpack.c.b16 %v2655, %v2651
    %v2708 = vpack.c.b16 %v2656, %v2652
    %v2709 = vpack.c.b16 %v2657, %v2653
    %v2710 = vpack.c.b16 %v2658, %v2654
    %v2711 = vpack.c.b16 %v2663, %v2659
    %v2712 = vpack.c.b16 %v2664, %v2660
    %v2713 = vpack.c.b16 %v2665, %v2661
    %v2714 = vpack.c.b16 %v2666, %v2662
    %v2715 = vpack.c.b16 %v2671, %v2667
    %v2716 = vpack.c.b16 %v2672, %v2668
    %v2717 = vpack.c.b16 %v2673, %v2669
    %v2718 = vpack.c.b16 %v2674, %v2670
    %v2719 = vpack.c.b16 %v2679, %v2675
    %v2720 = vpack.c.b16 %v2680, %v2676
    %v2721 = vpack.c.b16 %v2681, %v2677
    %v2722 = vpack.c.b16 %v2682, %v2678
    %v2723 = vpack.c.b16 %v2687, %v2683
    %v2724 = vpack.c.b16 %v2688, %v2684
    %v2725 = vpack.c.b16 %v2689, %v2685
    %v2726 = vpack.c.b16 %v2690, %v2686
    %v2727 = vpack.c.b16 %v2695, %v2691
    %v2728 = vpack.c.b16 %v2696, %v2692
    %v2729 = vpack.c.b16 %v2697, %v2693
    %v2730 = vpack.c.b16 %v2698, %v2694
    %2763 = vmatprep.subr.bf16.mxu0 %v2700
    %2764 = vmatpush1.bf16.msra.mxu0 %v2699
    %2765 = vmatprep.subr.bf16.mxu0 %v2704
    %2766 = vmatpush1.bf16.msra.mxu0 %v2703
    %2767 = vmatprep.subr.bf16.mxu0 %v2708
    %2768 = vmatpush1.bf16.msra.mxu0 %v2707
    %2769 = vmatprep.subr.bf16.mxu0 %v2712
    %2770 = vmatpush1.bf16.msra.mxu0 %v2711
    %2771 = vmatprep.subr.bf16.mxu0 %v2716
    %2772 = vmatpush1.bf16.msra.mxu0 %v2715
    %2773 = vmatprep.subr.bf16.mxu0 %v2720
    %2774 = vmatpush1.bf16.msra.mxu0 %v2719
    %2775 = vmatprep.subr.bf16.mxu0 %v2724
    %2776 = vmatpush1.bf16.msra.mxu0 %v2723
    %2777 = vmatprep.subr.bf16.mxu0 %v2728
    %2778 = vmatpush1.bf16.msra.mxu0 %v2727
    %2779 = vmatprep.subr.bf16.mxu0 0
    %2780 = vmatpush1.bf16.msra.mxu0 0
    %2781 = vmatprep.subr.bf16.mxu0 0
    %2782 = vmatpush1.bf16.msra.mxu0 0
    %2783 = vmatprep.subr.bf16.mxu0 0
    %2784 = vmatpush1.bf16.msra.mxu0 0
    %2785 = vmatprep.subr.bf16.mxu0 0
    %2786 = vmatpush1.bf16.msra.mxu0 0
    %2787 = vmatprep.subr.bf16.mxu0 0
    %2788 = vmatpush1.bf16.msra.mxu0 0
    %2789 = vmatprep.subr.bf16.mxu0 0
    %2790 = vmatpush1.bf16.msra.mxu0 0
    %2791 = vmatprep.subr.bf16.mxu0 0
    %2792 = vmatpush1.bf16.msra.mxu0 0
    %2793 = vmatprep.subr.bf16.mxu0 0
    %2794 = vmatpush1.bf16.msra.mxu0 0
    %2795 = vmatprep.mubr.bf16.mxu0 0
    %2796 = vmatmul.mubr.bf16.gmra.mrb[0].mxu0 %v2570
    %v2797 = vpop.f32.mrb[0].mxu0
    %v2798 = vadd.f32 0.0, %v2797
    %v2799 = vpop.f32.mrb[0].mxu0
    %v2800 = vadd.f32 0.0, %v2799
    %v2801 = vpop.f32.mrb[0].mxu0
    %v2802 = vpop.f32.mrb[0].mxu0
    %2803 = vdwg.mxu0
    %2804 = vmatprep.subr.bf16.mxu0 %v2702
    %2805 = vmatpush1.bf16.msra.mxu0 %v2701
    %2806 = vmatprep.subr.bf16.mxu0 %v2706
    %2807 = vmatpush1.bf16.msra.mxu0 %v2705
    %2808 = vmatprep.subr.bf16.mxu0 %v2710
    %2809 = vmatpush1.bf16.msra.mxu0 %v2709
    %2810 = vmatprep.subr.bf16.mxu0 %v2714
    %2811 = vmatpush1.bf16.msra.mxu0 %v2713
    %2812 = vmatprep.subr.bf16.mxu0 %v2718
    %2813 = vmatpush1.bf16.msra.mxu0 %v2717
    %2814 = vmatprep.subr.bf16.mxu0 %v2722
    %2815 = vmatpush1.bf16.msra.mxu0 %v2721
    %2816 = vmatprep.subr.bf16.mxu0 %v2726
    %2817 = vmatpush1.bf16.msra.mxu0 %v2725
    %2818 = vmatprep.subr.bf16.mxu0 %v2730
    %2819 = vmatpush1.bf16.msra.mxu0 %v2729
    %2820 = vmatprep.subr.bf16.mxu0 0
    %2821 = vmatpush1.bf16.msra.mxu0 0
    %2822 = vmatprep.subr.bf16.mxu0 0
    %2823 = vmatpush1.bf16.msra.mxu0 0
    %2824 = vmatprep.subr.bf16.mxu0 0
    %2825 = vmatpush1.bf16.msra.mxu0 0
    %2826 = vmatprep.subr.bf16.mxu0 0
    %2827 = vmatpush1.bf16.msra.mxu0 0
    %2828 = vmatprep.subr.bf16.mxu0 0
    %2829 = vmatpush1.bf16.msra.mxu0 0
    %2830 = vmatprep.subr.bf16.mxu0 0
    %2831 = vmatpush1.bf16.msra.mxu0 0
    %2832 = vmatprep.subr.bf16.mxu0 0
    %2833 = vmatpush1.bf16.msra.mxu0 0
    %2834 = vmatprep.subr.bf16.mxu0 0
    %2835 = vmatpush1.bf16.msra.mxu0 0
    %2836 = vmatprep.mubr.bf16.mxu0 0
    %2837 = vmatmul.mubr.bf16.gmra.mrb[0].mxu0 %v2570
    %v2838 = vpop.f32.mrb[0].mxu0
    %v2839 = vadd.f32 0.0, %v2838
    %v2840 = vpop.f32.mrb[0].mxu0
    %v2841 = vadd.f32 0.0, %v2840
    %v2842 = vpop.f32.mrb[0].mxu0
    %v2843 = vpop.f32.mrb[0].mxu0
    %2844 = vdwg.mxu0
    %v2845 = vld [vmem:[#allocation8] sm:$0xff]
    %v2846 = vld [vmem:[#allocation8 + $0x8] sm:$0xff]
    %v2847 = vld [vmem:[#allocation8 + $0x10] sm:$0xff]
    %v2848 = vld [vmem:[#allocation8 + $0x18] sm:$0xff]
    %v2849 = vld [vmem:[#allocation8 + $0x20] sm:$0xff]
    %v2850 = vld [vmem:[#allocation8 + $0x28] sm:$0xff]
    %v2851 = vld [vmem:[#allocation8 + $0x30] sm:$0xff]
    %v2852 = vld [vmem:[#allocation8 + $0x38] sm:$0xff]
    %v2853 = vld [vmem:[#allocation8 + $0x40] sm:$0xff]
    %v2854 = vld [vmem:[#allocation8 + $0x48] sm:$0xff]
    %v2855 = vld [vmem:[#allocation8 + $0x50] sm:$0xff]
    %v2856 = vld [vmem:[#allocation8 + $0x58] sm:$0xff]
    %v2857 = vld [vmem:[#allocation8 + $0x60] sm:$0xff]
    %v2858 = vld [vmem:[#allocation8 + $0x68] sm:$0xff]
    %v2859 = vld [vmem:[#allocation8 + $0x70] sm:$0xff]
    %v2860 = vld [vmem:[#allocation8 + $0x78] sm:$0xff]
    %v2861 = vld [vmem:[#allocation8 + $0x80] sm:$0xff]
    %v2862 = vld [vmem:[#allocation8 + $0x88] sm:$0xff]
    %v2863 = vld [vmem:[#allocation8 + $0x90] sm:$0xff]
    %v2864 = vld [vmem:[#allocation8 + $0x98] sm:$0xff]
    %v2865 = vld [vmem:[#allocation8 + $0xa0] sm:$0xff]
    %v2866 = vld [vmem:[#allocation8 + $0xa8] sm:$0xff]
    %v2867 = vld [vmem:[#allocation8 + $0xb0] sm:$0xff]
    %v2868 = vld [vmem:[#allocation8 + $0xb8] sm:$0xff]
    %v2869 = vld [vmem:[#allocation8 + $0xc0] sm:$0xff]
    %v2870 = vld [vmem:[#allocation8 + $0xc8] sm:$0xff]
    %v2871 = vld [vmem:[#allocation8 + $0xd0] sm:$0xff]
    %v2872 = vld [vmem:[#allocation8 + $0xd8] sm:$0xff]
    %v2873 = vld [vmem:[#allocation8 + $0xe0] sm:$0xff]
    %v2874 = vld [vmem:[#allocation8 + $0xe8] sm:$0xff]
    %v2875 = vld [vmem:[#allocation8 + $0xf0] sm:$0xff]
    %v2876 = vld [vmem:[#allocation8 + $0xf8] sm:$0xff]
    %v2909 = vunpack.c.l.b16 %v2845
    %v2910 = vunpack.c.h.b16 %v2845
    %v2911 = vunpack.c.l.b16 %v2846
    %v2912 = vunpack.c.h.b16 %v2846
    %v2913 = vunpack.c.l.b16 %v2847
    %v2914 = vunpack.c.h.b16 %v2847
    %v2915 = vunpack.c.l.b16 %v2848
    %v2916 = vunpack.c.h.b16 %v2848
    %v2917 = vunpack.c.l.b16 %v2849
    %v2918 = vunpack.c.h.b16 %v2849
    %v2919 = vunpack.c.l.b16 %v2850
    %v2920 = vunpack.c.h.b16 %v2850
    %v2921 = vunpack.c.l.b16 %v2851
    %v2922 = vunpack.c.h.b16 %v2851
    %v2923 = vunpack.c.l.b16 %v2852
    %v2924 = vunpack.c.h.b16 %v2852
    %v2925 = vunpack.c.l.b16 %v2853
    %v2926 = vunpack.c.h.b16 %v2853
    %v2927 = vunpack.c.l.b16 %v2854
    %v2928 = vunpack.c.h.b16 %v2854
    %v2929 = vunpack.c.l.b16 %v2855
    %v2930 = vunpack.c.h.b16 %v2855
    %v2931 = vunpack.c.l.b16 %v2856
    %v2932 = vunpack.c.h.b16 %v2856
    %v2933 = vunpack.c.l.b16 %v2857
    %v2934 = vunpack.c.h.b16 %v2857
    %v2935 = vunpack.c.l.b16 %v2858
    %v2936 = vunpack.c.h.b16 %v2858
    %v2937 = vunpack.c.l.b16 %v2859
    %v2938 = vunpack.c.h.b16 %v2859
    %v2939 = vunpack.c.l.b16 %v2860
    %v2940 = vunpack.c.h.b16 %v2860
    %v2941 = vunpack.c.l.b16 %v2861
    %v2942 = vunpack.c.h.b16 %v2861
    %v2943 = vunpack.c.l.b16 %v2862
    %v2944 = vunpack.c.h.b16 %v2862
    %v2945 = vunpack.c.l.b16 %v2863
    %v2946 = vunpack.c.h.b16 %v2863
    %v2947 = vunpack.c.l.b16 %v2864
    %v2948 = vunpack.c.h.b16 %v2864
    %v2949 = vunpack.c.l.b16 %v2865
    %v2950 = vunpack.c.h.b16 %v2865
    %v2951 = vunpack.c.l.b16 %v2866
    %v2952 = vunpack.c.h.b16 %v2866
    %v2953 = vunpack.c.l.b16 %v2867
    %v2954 = vunpack.c.h.b16 %v2867
    %v2955 = vunpack.c.l.b16 %v2868
    %v2956 = vunpack.c.h.b16 %v2868
    %v2957 = vunpack.c.l.b16 %v2869
    %v2958 = vunpack.c.h.b16 %v2869
    %v2959 = vunpack.c.l.b16 %v2870
    %v2960 = vunpack.c.h.b16 %v2870
    %v2961 = vunpack.c.l.b16 %v2871
    %v2962 = vunpack.c.h.b16 %v2871
    %v2963 = vunpack.c.l.b16 %v2872
    %v2964 = vunpack.c.h.b16 %v2872
    %v2965 = vunpack.c.l.b16 %v2873
    %v2966 = vunpack.c.h.b16 %v2873
    %v2967 = vunpack.c.l.b16 %v2874
    %v2968 = vunpack.c.h.b16 %v2874
    %v2969 = vunpack.c.l.b16 %v2875
    %v2970 = vunpack.c.h.b16 %v2875
    %v2971 = vunpack.c.l.b16 %v2876
    %v2972 = vunpack.c.h.b16 %v2876
    %v2973 = vpack.c.b16 %v2913, %v2909
    %v2974 = vpack.c.b16 %v2914, %v2910
    %v2975 = vpack.c.b16 %v2915, %v2911
    %v2976 = vpack.c.b16 %v2916, %v2912
    %v2977 = vpack.c.b16 %v2921, %v2917
    %v2978 = vpack.c.b16 %v2922, %v2918
    %v2979 = vpack.c.b16 %v2923, %v2919
    %v2980 = vpack.c.b16 %v2924, %v2920
    %v2981 = vpack.c.b16 %v2929, %v2925
    %v2982 = vpack.c.b16 %v2930, %v2926
    %v2983 = vpack.c.b16 %v2931, %v2927
    %v2984 = vpack.c.b16 %v2932, %v2928
    %v2985 = vpack.c.b16 %v2937, %v2933
    %v2986 = vpack.c.b16 %v2938, %v2934
    %v2987 = vpack.c.b16 %v2939, %v2935
    %v2988 = vpack.c.b16 %v2940, %v2936
    %v2989 = vpack.c.b16 %v2945, %v2941
    %v2990 = vpack.c.b16 %v2946, %v2942
    %v2991 = vpack.c.b16 %v2947, %v2943
    %v2992 = vpack.c.b16 %v2948, %v2944
    %v2993 = vpack.c.b16 %v2953, %v2949
    %v2994 = vpack.c.b16 %v2954, %v2950
    %v2995 = vpack.c.b16 %v2955, %v2951
    %v2996 = vpack.c.b16 %v2956, %v2952
    %v2997 = vpack.c.b16 %v2961, %v2957
    %v2998 = vpack.c.b16 %v2962, %v2958
    %v2999 = vpack.c.b16 %v2963, %v2959
    %v3000 = vpack.c.b16 %v2964, %v2960
    %v3001 = vpack.c.b16 %v2969, %v2965
    %v3002 = vpack.c.b16 %v2970, %v2966
    %v3003 = vpack.c.b16 %v2971, %v2967
    %v3004 = vpack.c.b16 %v2972, %v2968
    %3037 = vmatprep.subr.bf16.mxu0 %v2974
    %3038 = vmatpush1.bf16.msra.mxu0 %v2973
    %3039 = vmatprep.subr.bf16.mxu0 %v2978
    %3040 = vmatpush1.bf16.msra.mxu0 %v2977
    %3041 = vmatprep.subr.bf16.mxu0 %v2982
    %3042 = vmatpush1.bf16.msra.mxu0 %v2981
    %3043 = vmatprep.subr.bf16.mxu0 %v2986
    %3044 = vmatpush1.bf16.msra.mxu0 %v2985
    %3045 = vmatprep.subr.bf16.mxu0 %v2990
    %3046 = vmatpush1.bf16.msra.mxu0 %v2989
    %3047 = vmatprep.subr.bf16.mxu0 %v2994
    %3048 = vmatpush1.bf16.msra.mxu0 %v2993
    %3049 = vmatprep.subr.bf16.mxu0 %v2998
    %3050 = vmatpush1.bf16.msra.mxu0 %v2997
    %3051 = vmatprep.subr.bf16.mxu0 %v3002
    %3052 = vmatpush1.bf16.msra.mxu0 %v3001
    %3053 = vmatprep.subr.bf16.mxu0 0
    %3054 = vmatpush1.bf16.msra.mxu0 0
    %3055 = vmatprep.subr.bf16.mxu0 0
    %3056 = vmatpush1.bf16.msra.mxu0 0
    %3057 = vmatprep.subr.bf16.mxu0 0
    %3058 = vmatpush1.bf16.msra.mxu0 0
    %3059 = vmatprep.subr.bf16.mxu0 0
    %3060 = vmatpush1.bf16.msra.mxu0 0
    %3061 = vmatprep.subr.bf16.mxu0 0
    %3062 = vmatpush1.bf16.msra.mxu0 0
    %3063 = vmatprep.subr.bf16.mxu0 0
    %3064 = vmatpush1.bf16.msra.mxu0 0
    %3065 = vmatprep.subr.bf16.mxu0 0
    %3066 = vmatpush1.bf16.msra.mxu0 0
    %3067 = vmatprep.subr.bf16.mxu0 0
    %3068 = vmatpush1.bf16.msra.mxu0 0
    %3069 = vmatprep.mubr.bf16.mxu0 0
    %3070 = vmatmul.mubr.bf16.gmra.mrb[0].mxu0 %v2569
    %v3071 = vpop.f32.mrb[0].mxu0
    %v3072 = vadd.f32 %v2798, %v3071
    %v3073 = vpop.f32.mrb[0].mxu0
    %v3074 = vadd.f32 %v2800, %v3073
    %v3075 = vpop.f32.mrb[0].mxu0
    %v3076 = vpop.f32.mrb[0].mxu0
    %3077 = vdwg.mxu0
    %3078 = vmatprep.subr.bf16.mxu0 %v2976
    %3079 = vmatpush1.bf16.msra.mxu0 %v2975
    %3080 = vmatprep.subr.bf16.mxu0 %v2980
    %3081 = vmatpush1.bf16.msra.mxu0 %v2979
    %3082 = vmatprep.subr.bf16.mxu0 %v2984
    %3083 = vmatpush1.bf16.msra.mxu0 %v2983
    %3084 = vmatprep.subr.bf16.mxu0 %v2988
    %3085 = vmatpush1.bf16.msra.mxu0 %v2987
    %3086 = vmatprep.subr.bf16.mxu0 %v2992
    %3087 = vmatpush1.bf16.msra.mxu0 %v2991
    %3088 = vmatprep.subr.bf16.mxu0 %v2996
    %3089 = vmatpush1.bf16.msra.mxu0 %v2995
    %3090 = vmatprep.subr.bf16.mxu0 %v3000
    %3091 = vmatpush1.bf16.msra.mxu0 %v2999
    %3092 = vmatprep.subr.bf16.mxu0 %v3004
    %3093 = vmatpush1.bf16.msra.mxu0 %v3003
    %3094 = vmatprep.subr.bf16.mxu0 0
    %3095 = vmatpush1.bf16.msra.mxu0 0
    %3096 = vmatprep.subr.bf16.mxu0 0
    %3097 = vmatpush1.bf16.msra.mxu0 0
    %3098 = vmatprep.subr.bf16.mxu0 0
    %3099 = vmatpush1.bf16.msra.mxu0 0
    %3100 = vmatprep.subr.bf16.mxu0 0
    %3101 = vmatpush1.bf16.msra.mxu0 0
    %3102 = vmatprep.subr.bf16.mxu0 0
    %3103 = vmatpush1.bf16.msra.mxu0 0
    %3104 = vmatprep.subr.bf16.mxu0 0
    %3105 = vmatpush1.bf16.msra.mxu0 0
    %3106 = vmatprep.subr.bf16.mxu0 0
    %3107 = vmatpush1.bf16.msra.mxu0 0
    %3108 = vmatprep.subr.bf16.mxu0 0
    %3109 = vmatpush1.bf16.msra.mxu0 0
    %3110 = vmatprep.mubr.bf16.mxu0 0
    %3111 = vmatmul.mubr.bf16.gmra.mrb[0].mxu0 %v2569
    %v3112 = vpop.f32.mrb[0].mxu0
    %v3113 = vadd.f32 %v2839, %v3112
    %v3114 = vpop.f32.mrb[0].mxu0
    %v3115 = vadd.f32 %v2841, %v3114
    %v3116 = vpop.f32.mrb[0].mxu0
    %v3117 = vpop.f32.mrb[0].mxu0
    %3118 = vdwg.mxu0
    %v3119 = vxor.u32 %v3072, 2147483648
    %v3120 = vmul.f32 %v3119, 1.442695
    %v3121 = vpow.pop %v3120
    %v3122 = vadd.f32 %v3121, 1.0
    %v3123 = vrcp.pop %v3122
    %v3124 = vmul.f32 1.0, %v3123
    %v3125 = vxor.u32 %v3074, 2147483648
    %v3126 = vmul.f32 %v3125, 1.442695
    %v3127 = vpow.pop %v3126
    %v3128 = vadd.f32 %v3127, 1.0
    %v3129 = vrcp.pop %v3128
    %v3130 = vmul.f32 1.0, %v3129
    %v3131 = vtanh.pop %v3113
    %v3132 = vxor.u32 %v3115, 2147483648
    %v3133 = vmul.f32 %v3132, 1.442695
    %v3134 = vpow.pop %v3133
    %v3135 = vadd.f32 %v3134, 1.0
    %v3136 = vrcp.pop %v3135
    %v3137 = vmul.f32 1.0, %v3136
    %v3138 = vmul.f32 %v3130, %v2255
    %v3139 = vmul.f32 %v3124, %v3131
    %v3140 = vadd.f32 %v3138, %v3139
    %v3141 = vtanh.pop %v3140
    %v3142 = vmul.f32 %v3137, %v3141
    %s3143 = scalar_lea.vmem [#allocation12], 16
    %3144 = vst [vmem:[%s3143] sm:$0xff] %v3142
    %v3145 = vld [vmem:[#allocation9] sm:$0xff]
    %v3146 = vld [vmem:[#allocation9 + $0x8] sm:$0xff]
    %v3147 = vld [vmem:[#allocation9 + $0x10] sm:$0xff]
    %v3148 = vld [vmem:[#allocation9 + $0x18] sm:$0xff]
    %v3149 = vld [vmem:[#allocation9 + $0x20] sm:$0xff]
    %v3150 = vld [vmem:[#allocation9 + $0x28] sm:$0xff]
    %v3151 = vld [vmem:[#allocation9 + $0x30] sm:$0xff]
    %v3152 = vld [vmem:[#allocation9 + $0x38] sm:$0xff]
    %v3153 = vld [vmem:[#allocation9 + $0x40] sm:$0xff]
    %v3154 = vld [vmem:[#allocation9 + $0x48] sm:$0xff]
    %v3155 = vld [vmem:[#allocation9 + $0x50] sm:$0xff]
    %v3156 = vld [vmem:[#allocation9 + $0x58] sm:$0xff]
    %v3157 = vld [vmem:[#allocation9 + $0x60] sm:$0xff]
    %v3158 = vld [vmem:[#allocation9 + $0x68] sm:$0xff]
    %v3159 = vld [vmem:[#allocation9 + $0x70] sm:$0xff]
    %v3160 = vld [vmem:[#allocation9 + $0x78] sm:$0xff]
    %v3161 = vld [vmem:[#allocation9 + $0x80] sm:$0xff]
    %v3162 = vld [vmem:[#allocation9 + $0x88] sm:$0xff]
    %v3163 = vld [vmem:[#allocation9 + $0x90] sm:$0xff]
    %v3164 = vld [vmem:[#allocation9 + $0x98] sm:$0xff]
    %v3165 = vld [vmem:[#allocation9 + $0xa0] sm:$0xff]
    %v3166 = vld [vmem:[#allocation9 + $0xa8] sm:$0xff]
    %v3167 = vld [vmem:[#allocation9 + $0xb0] sm:$0xff]
    %v3168 = vld [vmem:[#allocation9 + $0xb8] sm:$0xff]
    %v3169 = vld [vmem:[#allocation9 + $0xc0] sm:$0xff]
    %v3170 = vld [vmem:[#allocation9 + $0xc8] sm:$0xff]
    %v3171 = vld [vmem:[#allocation9 + $0xd0] sm:$0xff]
    %v3172 = vld [vmem:[#allocation9 + $0xd8] sm:$0xff]
    %v3173 = vld [vmem:[#allocation9 + $0xe0] sm:$0xff]
    %v3174 = vld [vmem:[#allocation9 + $0xe8] sm:$0xff]
    %v3175 = vld [vmem:[#allocation9 + $0xf0] sm:$0xff]
    %v3176 = vld [vmem:[#allocation9 + $0xf8] sm:$0xff]
    %v3209 = vunpack.c.l.b16 %v3145
    %v3210 = vunpack.c.h.b16 %v3145
    %v3211 = vunpack.c.l.b16 %v3146
    %v3212 = vunpack.c.h.b16 %v3146
    %v3213 = vunpack.c.l.b16 %v3147
    %v3214 = vunpack.c.h.b16 %v3147
    %v3215 = vunpack.c.l.b16 %v3148
    %v3216 = vunpack.c.h.b16 %v3148
    %v3217 = vunpack.c.l.b16 %v3149
    %v3218 = vunpack.c.h.b16 %v3149
    %v3219 = vunpack.c.l.b16 %v3150
    %v3220 = vunpack.c.h.b16 %v3150
    %v3221 = vunpack.c.l.b16 %v3151
    %v3222 = vunpack.c.h.b16 %v3151
    %v3223 = vunpack.c.l.b16 %v3152
    %v3224 = vunpack.c.h.b16 %v3152
    %v3225 = vunpack.c.l.b16 %v3153
    %v3226 = vunpack.c.h.b16 %v3153
    %v3227 = vunpack.c.l.b16 %v3154
    %v3228 = vunpack.c.h.b16 %v3154
    %v3229 = vunpack.c.l.b16 %v3155
    %v3230 = vunpack.c.h.b16 %v3155
    %v3231 = vunpack.c.l.b16 %v3156
    %v3232 = vunpack.c.h.b16 %v3156
    %v3233 = vunpack.c.l.b16 %v3157
    %v3234 = vunpack.c.h.b16 %v3157
    %v3235 = vunpack.c.l.b16 %v3158
    %v3236 = vunpack.c.h.b16 %v3158
    %v3237 = vunpack.c.l.b16 %v3159
    %v3238 = vunpack.c.h.b16 %v3159
    %v3239 = vunpack.c.l.b16 %v3160
    %v3240 = vunpack.c.h.b16 %v3160
    %v3241 = vunpack.c.l.b16 %v3161
    %v3242 = vunpack.c.h.b16 %v3161
    %v3243 = vunpack.c.l.b16 %v3162
    %v3244 = vunpack.c.h.b16 %v3162
    %v3245 = vunpack.c.l.b16 %v3163
    %v3246 = vunpack.c.h.b16 %v3163
    %v3247 = vunpack.c.l.b16 %v3164
    %v3248 = vunpack.c.h.b16 %v3164
    %v3249 = vunpack.c.l.b16 %v3165
    %v3250 = vunpack.c.h.b16 %v3165
    %v3251 = vunpack.c.l.b16 %v3166
    %v3252 = vunpack.c.h.b16 %v3166
    %v3253 = vunpack.c.l.b16 %v3167
    %v3254 = vunpack.c.h.b16 %v3167
    %v3255 = vunpack.c.l.b16 %v3168
    %v3256 = vunpack.c.h.b16 %v3168
    %v3257 = vunpack.c.l.b16 %v3169
    %v3258 = vunpack.c.h.b16 %v3169
    %v3259 = vunpack.c.l.b16 %v3170
    %v3260 = vunpack.c.h.b16 %v3170
    %v3261 = vunpack.c.l.b16 %v3171
    %v3262 = vunpack.c.h.b16 %v3171
    %v3263 = vunpack.c.l.b16 %v3172
    %v3264 = vunpack.c.h.b16 %v3172
    %v3265 = vunpack.c.l.b16 %v3173
    %v3266 = vunpack.c.h.b16 %v3173
    %v3267 = vunpack.c.l.b16 %v3174
    %v3268 = vunpack.c.h.b16 %v3174
    %v3269 = vunpack.c.l.b16 %v3175
    %v3270 = vunpack.c.h.b16 %v3175
    %v3271 = vunpack.c.l.b16 %v3176
    %v3272 = vunpack.c.h.b16 %v3176
    %v3273 = vpack.c.b16 %v3213, %v3209
    %v3274 = vpack.c.b16 %v3214, %v3210
    %v3275 = vpack.c.b16 %v3215, %v3211
    %v3276 = vpack.c.b16 %v3216, %v3212
    %v3277 = vpack.c.b16 %v3221, %v3217
    %v3278 = vpack.c.b16 %v3222, %v3218
    %v3279 = vpack.c.b16 %v3223, %v3219
    %v3280 = vpack.c.b16 %v3224, %v3220
    %v3281 = vpack.c.b16 %v3229, %v3225
    %v3282 = vpack.c.b16 %v3230, %v3226
    %v3283 = vpack.c.b16 %v3231, %v3227
    %v3284 = vpack.c.b16 %v3232, %v3228
    %v3285 = vpack.c.b16 %v3237, %v3233
    %v3286 = vpack.c.b16 %v3238, %v3234
    %v3287 = vpack.c.b16 %v3239, %v3235
    %v3288 = vpack.c.b16 %v3240, %v3236
    %v3289 = vpack.c.b16 %v3245, %v3241
    %v3290 = vpack.c.b16 %v3246, %v3242
    %v3291 = vpack.c.b16 %v3247, %v3243
    %v3292 = vpack.c.b16 %v3248, %v3244
    %v3293 = vpack.c.b16 %v3253, %v3249
    %v3294 = vpack.c.b16 %v3254, %v3250
    %v3295 = vpack.c.b16 %v3255, %v3251
    %v3296 = vpack.c.b16 %v3256, %v3252
    %v3297 = vpack.c.b16 %v3261, %v3257
    %v3298 = vpack.c.b16 %v3262, %v3258
    %v3299 = vpack.c.b16 %v3263, %v3259
    %v3300 = vpack.c.b16 %v3264, %v3260
    %v3301 = vpack.c.b16 %v3269, %v3265
    %v3302 = vpack.c.b16 %v3270, %v3266
    %v3303 = vpack.c.b16 %v3271, %v3267
    %v3304 = vpack.c.b16 %v3272, %v3268
    %3337 = vmatprep.subr.bf16.mxu0 %v3274
    %3338 = vmatpush1.bf16.msra.mxu0 %v3273
    %3339 = vmatprep.subr.bf16.mxu0 %v3278
    %3340 = vmatpush1.bf16.msra.mxu0 %v3277
    %3341 = vmatprep.subr.bf16.mxu0 %v3282
    %3342 = vmatpush1.bf16.msra.mxu0 %v3281
    %3343 = vmatprep.subr.bf16.mxu0 %v3286
    %3344 = vmatpush1.bf16.msra.mxu0 %v3285
    %3345 = vmatprep.subr.bf16.mxu0 %v3290
    %3346 = vmatpush1.bf16.msra.mxu0 %v3289
    %3347 = vmatprep.subr.bf16.mxu0 %v3294
    %3348 = vmatpush1.bf16.msra.mxu0 %v3293
    %3349 = vmatprep.subr.bf16.mxu0 %v3298
    %3350 = vmatpush1.bf16.msra.mxu0 %v3297
    %3351 = vmatprep.subr.bf16.mxu0 %v3302
    %3352 = vmatpush1.bf16.msra.mxu0 %v3301
    %3353 = vmatprep.subr.bf16.mxu0 0
    %3354 = vmatpush1.bf16.msra.mxu0 0
    %3355 = vmatprep.subr.bf16.mxu0 0
    %3356 = vmatpush1.bf16.msra.mxu0 0
    %3357 = vmatprep.subr.bf16.mxu0 0
    %3358 = vmatpush1.bf16.msra.mxu0 0
    %3359 = vmatprep.subr.bf16.mxu0 0
    %3360 = vmatpush1.bf16.msra.mxu0 0
    %3361 = vmatprep.subr.bf16.mxu0 0
    %3362 = vmatpush1.bf16.msra.mxu0 0
    %3363 = vmatprep.subr.bf16.mxu0 0
    %3364 = vmatpush1.bf16.msra.mxu0 0
    %3365 = vmatprep.subr.bf16.mxu0 0
    %3366 = vmatpush1.bf16.msra.mxu0 0
    %3367 = vmatprep.subr.bf16.mxu0 0
    %3368 = vmatpush1.bf16.msra.mxu0 0
    %3369 = vmatprep.mubr.bf16.mxu0 0
    %3370 = vmatmul.mubr.bf16.gmra.mrb[0].mxu0 %v2569
    %v3371 = vpop.f32.mrb[0].mxu0
    %v3372 = vadd.f32 0.0, %v3371
    %v3373 = vpop.f32.mrb[0].mxu0
    %v3374 = vadd.f32 0.0, %v3373
    %v3375 = vpop.f32.mrb[0].mxu0
    %v3376 = vpop.f32.mrb[0].mxu0
    %3377 = vdwg.mxu0
    %3378 = vmatprep.subr.bf16.mxu0 %v3276
    %3379 = vmatpush1.bf16.msra.mxu0 %v3275
    %3380 = vmatprep.subr.bf16.mxu0 %v3280
    %3381 = vmatpush1.bf16.msra.mxu0 %v3279
    %3382 = vmatprep.subr.bf16.mxu0 %v3284
    %3383 = vmatpush1.bf16.msra.mxu0 %v3283
    %3384 = vmatprep.subr.bf16.mxu0 %v3288
    %3385 = vmatpush1.bf16.msra.mxu0 %v3287
    %3386 = vmatprep.subr.bf16.mxu0 %v3292
    %3387 = vmatpush1.bf16.msra.mxu0 %v3291
    %3388 = vmatprep.subr.bf16.mxu0 %v3296
    %3389 = vmatpush1.bf16.msra.mxu0 %v3295
    %3390 = vmatprep.subr.bf16.mxu0 %v3300
    %3391 = vmatpush1.bf16.msra.mxu0 %v3299
    %3392 = vmatprep.subr.bf16.mxu0 %v3304
    %3393 = vmatpush1.bf16.msra.mxu0 %v3303
    %3394 = vmatprep.subr.bf16.mxu0 0
    %3395 = vmatpush1.bf16.msra.mxu0 0
    %3396 = vmatprep.subr.bf16.mxu0 0
    %3397 = vmatpush1.bf16.msra.mxu0 0
    %3398 = vmatprep.subr.bf16.mxu0 0
    %3399 = vmatpush1.bf16.msra.mxu0 0
    %3400 = vmatprep.subr.bf16.mxu0 0
    %3401 = vmatpush1.bf16.msra.mxu0 0
    %3402 = vmatprep.subr.bf16.mxu0 0
    %3403 = vmatpush1.bf16.msra.mxu0 0
    %3404 = vmatprep.subr.bf16.mxu0 0
    %3405 = vmatpush1.bf16.msra.mxu0 0
    %3406 = vmatprep.subr.bf16.mxu0 0
    %3407 = vmatpush1.bf16.msra.mxu0 0
    %3408 = vmatprep.subr.bf16.mxu0 0
    %3409 = vmatpush1.bf16.msra.mxu0 0
    %3410 = vmatprep.mubr.bf16.mxu0 0
    %3411 = vmatmul.mubr.bf16.gmra.mrb[0].mxu0 %v2569
    %v3412 = vpop.f32.mrb[0].mxu0
    %v3413 = vadd.f32 0.0, %v3412
    %v3414 = vpop.f32.mrb[0].mxu0
    %v3415 = vadd.f32 0.0, %v3414
    %v3416 = vpop.f32.mrb[0].mxu0
    %v3417 = vpop.f32.mrb[0].mxu0
    %3418 = vdwg.mxu0
    %s3419 = smul.u32 3, 4
    %s3420 = smul.addr %s3419, 8
    %s3421 = scalar_lea.vmem [#allocation2], %s3420
    %v3422 = vld [vmem:[%s3421] sm:$0xff]
    %v3423 = vld [vmem:[%s3421 + $0x8] sm:$0xff]
    %v3424 = vld [vmem:[%s3421 + $0x10] sm:$0xff]
    %v3425 = vld [vmem:[%s3421 + $0x18] sm:$0xff]
    %v3426 = vadd.f32 %v3422, %v3372
    %v3427 = vadd.f32 %v3423, %v3374
    %v3428 = vadd.f32 %v3424, %v3413
    %v3429 = vadd.f32 %v3425, %v3415
    %v3430 = vxor.u32 %v3426, 2147483648
    %v3431 = vmul.f32 %v3430, 1.442695
    %v3432 = vpow.pop %v3431
    %v3433 = vadd.f32 %v3432, 1.0
    %v3434 = vrcp.pop %v3433
    %v3435 = vmul.f32 1.0, %v3434
    %v3436 = vxor.u32 %v3427, 2147483648
    %v3437 = vmul.f32 %v3436, 1.442695
    %v3438 = vpow.pop %v3437
    %v3439 = vadd.f32 %v3438, 1.0
    %v3440 = vrcp.pop %v3439
    %v3441 = vmul.f32 1.0, %v3440
    %v3442 = vtanh.pop %v3428
    %v3443 = vxor.u32 %v3429, 2147483648
    %v3444 = vmul.f32 %v3443, 1.442695
    %v3445 = vpow.pop %v3444
    %v3446 = vadd.f32 %v3445, 1.0
    %v3447 = vrcp.pop %v3446
    %v3448 = vmul.f32 1.0, %v3447
    %v3449 = vmul.f32 %v3441, %v2566
    %v3450 = vmul.f32 %v3435, %v3442
    %v3451 = vadd.f32 %v3449, %v3450
    %v3452 = vtanh.pop %v3451
    %v3453 = vmul.f32 %v3448, %v3452
    %v3454 = vpack.c.bf16 %v3453, %v3453
    %v3455 = vpack.c.bf16 %v3142, %v3142
    %v3456 = vld [vmem:[#allocation11] sm:$0xff]
    %v3457 = vld [vmem:[#allocation11 + $0x8] sm:$0xff]
    %v3458 = vld [vmem:[#allocation11 + $0x10] sm:$0xff]
    %v3459 = vld [vmem:[#allocation11 + $0x18] sm:$0xff]
    %v3460 = vld [vmem:[#allocation11 + $0x20] sm:$0xff]
    %v3461 = vld [vmem:[#allocation11 + $0x28] sm:$0xff]
    %v3462 = vld [vmem:[#allocation11 + $0x30] sm:$0xff]
    %v3463 = vld [vmem:[#allocation11 + $0x38] sm:$0xff]
    %v3464 = vld [vmem:[#allocation11 + $0x40] sm:$0xff]
    %v3465 = vld [vmem:[#allocation11 + $0x48] sm:$0xff]
    %v3466 = vld [vmem:[#allocation11 + $0x50] sm:$0xff]
    %v3467 = vld [vmem:[#allocation11 + $0x58] sm:$0xff]
    %v3468 = vld [vmem:[#allocation11 + $0x60] sm:$0xff]
    %v3469 = vld [vmem:[#allocation11 + $0x68] sm:$0xff]
    %v3470 = vld [vmem:[#allocation11 + $0x70] sm:$0xff]
    %v3471 = vld [vmem:[#allocation11 + $0x78] sm:$0xff]
    %v3472 = vld [vmem:[#allocation11 + $0x80] sm:$0xff]
    %v3473 = vld [vmem:[#allocation11 + $0x88] sm:$0xff]
    %v3474 = vld [vmem:[#allocation11 + $0x90] sm:$0xff]
    %v3475 = vld [vmem:[#allocation11 + $0x98] sm:$0xff]
    %v3476 = vld [vmem:[#allocation11 + $0xa0] sm:$0xff]
    %v3477 = vld [vmem:[#allocation11 + $0xa8] sm:$0xff]
    %v3478 = vld [vmem:[#allocation11 + $0xb0] sm:$0xff]
    %v3479 = vld [vmem:[#allocation11 + $0xb8] sm:$0xff]
    %v3480 = vld [vmem:[#allocation11 + $0xc0] sm:$0xff]
    %v3481 = vld [vmem:[#allocation11 + $0xc8] sm:$0xff]
    %v3482 = vld [vmem:[#allocation11 + $0xd0] sm:$0xff]
    %v3483 = vld [vmem:[#allocation11 + $0xd8] sm:$0xff]
    %v3484 = vld [vmem:[#allocation11 + $0xe0] sm:$0xff]
    %v3485 = vld [vmem:[#allocation11 + $0xe8] sm:$0xff]
    %v3486 = vld [vmem:[#allocation11 + $0xf0] sm:$0xff]
    %v3487 = vld [vmem:[#allocation11 + $0xf8] sm:$0xff]
    %v3520 = vunpack.c.l.b16 %v3456
    %v3521 = vunpack.c.h.b16 %v3456
    %v3522 = vunpack.c.l.b16 %v3457
    %v3523 = vunpack.c.h.b16 %v3457
    %v3524 = vunpack.c.l.b16 %v3458
    %v3525 = vunpack.c.h.b16 %v3458
    %v3526 = vunpack.c.l.b16 %v3459
    %v3527 = vunpack.c.h.b16 %v3459
    %v3528 = vunpack.c.l.b16 %v3460
    %v3529 = vunpack.c.h.b16 %v3460
    %v3530 = vunpack.c.l.b16 %v3461
    %v3531 = vunpack.c.h.b16 %v3461
    %v3532 = vunpack.c.l.b16 %v3462
    %v3533 = vunpack.c.h.b16 %v3462
    %v3534 = vunpack.c.l.b16 %v3463
    %v3535 = vunpack.c.h.b16 %v3463
    %v3536 = vunpack.c.l.b16 %v3464
    %v3537 = vunpack.c.h.b16 %v3464
    %v3538 = vunpack.c.l.b16 %v3465
    %v3539 = vunpack.c.h.b16 %v3465
    %v3540 = vunpack.c.l.b16 %v3466
    %v3541 = vunpack.c.h.b16 %v3466
    %v3542 = vunpack.c.l.b16 %v3467
    %v3543 = vunpack.c.h.b16 %v3467
    %v3544 = vunpack.c.l.b16 %v3468
    %v3545 = vunpack.c.h.b16 %v3468
    %v3546 = vunpack.c.l.b16 %v3469
    %v3547 = vunpack.c.h.b16 %v3469
    %v3548 = vunpack.c.l.b16 %v3470
    %v3549 = vunpack.c.h.b16 %v3470
    %v3550 = vunpack.c.l.b16 %v3471
    %v3551 = vunpack.c.h.b16 %v3471
    %v3552 = vunpack.c.l.b16 %v3472
    %v3553 = vunpack.c.h.b16 %v3472
    %v3554 = vunpack.c.l.b16 %v3473
    %v3555 = vunpack.c.h.b16 %v3473
    %v3556 = vunpack.c.l.b16 %v3474
    %v3557 = vunpack.c.h.b16 %v3474
    %v3558 = vunpack.c.l.b16 %v3475
    %v3559 = vunpack.c.h.b16 %v3475
    %v3560 = vunpack.c.l.b16 %v3476
    %v3561 = vunpack.c.h.b16 %v3476
    %v3562 = vunpack.c.l.b16 %v3477
    %v3563 = vunpack.c.h.b16 %v3477
    %v3564 = vunpack.c.l.b16 %v3478
    %v3565 = vunpack.c.h.b16 %v3478
    %v3566 = vunpack.c.l.b16 %v3479
    %v3567 = vunpack.c.h.b16 %v3479
    %v3568 = vunpack.c.l.b16 %v3480
    %v3569 = vunpack.c.h.b16 %v3480
    %v3570 = vunpack.c.l.b16 %v3481
    %v3571 = vunpack.c.h.b16 %v3481
    %v3572 = vunpack.c.l.b16 %v3482
    %v3573 = vunpack.c.h.b16 %v3482
    %v3574 = vunpack.c.l.b16 %v3483
    %v3575 = vunpack.c.h.b16 %v3483
    %v3576 = vunpack.c.l.b16 %v3484
    %v3577 = vunpack.c.h.b16 %v3484
    %v3578 = vunpack.c.l.b16 %v3485
    %v3579 = vunpack.c.h.b16 %v3485
    %v3580 = vunpack.c.l.b16 %v3486
    %v3581 = vunpack.c.h.b16 %v3486
    %v3582 = vunpack.c.l.b16 %v3487
    %v3583 = vunpack.c.h.b16 %v3487
    %v3584 = vpack.c.b16 %v3524, %v3520
    %v3585 = vpack.c.b16 %v3525, %v3521
    %v3586 = vpack.c.b16 %v3526, %v3522
    %v3587 = vpack.c.b16 %v3527, %v3523
    %v3588 = vpack.c.b16 %v3532, %v3528
    %v3589 = vpack.c.b16 %v3533, %v3529
    %v3590 = vpack.c.b16 %v3534, %v3530
    %v3591 = vpack.c.b16 %v3535, %v3531
    %v3592 = vpack.c.b16 %v3540, %v3536
    %v3593 = vpack.c.b16 %v3541, %v3537
    %v3594 = vpack.c.b16 %v3542, %v3538
    %v3595 = vpack.c.b16 %v3543, %v3539
    %v3596 = vpack.c.b16 %v3548, %v3544
    %v3597 = vpack.c.b16 %v3549, %v3545
    %v3598 = vpack.c.b16 %v3550, %v3546
    %v3599 = vpack.c.b16 %v3551, %v3547
    %v3600 = vpack.c.b16 %v3556, %v3552
    %v3601 = vpack.c.b16 %v3557, %v3553
    %v3602 = vpack.c.b16 %v3558, %v3554
    %v3603 = vpack.c.b16 %v3559, %v3555
    %v3604 = vpack.c.b16 %v3564, %v3560
    %v3605 = vpack.c.b16 %v3565, %v3561
    %v3606 = vpack.c.b16 %v3566, %v3562
    %v3607 = vpack.c.b16 %v3567, %v3563
    %v3608 = vpack.c.b16 %v3572, %v3568
    %v3609 = vpack.c.b16 %v3573, %v3569
    %v3610 = vpack.c.b16 %v3574, %v3570
    %v3611 = vpack.c.b16 %v3575, %v3571
    %v3612 = vpack.c.b16 %v3580, %v3576
    %v3613 = vpack.c.b16 %v3581, %v3577
    %v3614 = vpack.c.b16 %v3582, %v3578
    %v3615 = vpack.c.b16 %v3583, %v3579
    %3648 = vmatprep.subr.bf16.mxu0 %v3585
    %3649 = vmatpush1.bf16.msra.mxu0 %v3584
    %3650 = vmatprep.subr.bf16.mxu0 %v3589
    %3651 = vmatpush1.bf16.msra.mxu0 %v3588
    %3652 = vmatprep.subr.bf16.mxu0 %v3593
    %3653 = vmatpush1.bf16.msra.mxu0 %v3592
    %3654 = vmatprep.subr.bf16.mxu0 %v3597
    %3655 = vmatpush1.bf16.msra.mxu0 %v3596
    %3656 = vmatprep.subr.bf16.mxu0 %v3601
    %3657 = vmatpush1.bf16.msra.mxu0 %v3600
    %3658 = vmatprep.subr.bf16.mxu0 %v3605
    %3659 = vmatpush1.bf16.msra.mxu0 %v3604
    %3660 = vmatprep.subr.bf16.mxu0 %v3609
    %3661 = vmatpush1.bf16.msra.mxu0 %v3608
    %3662 = vmatprep.subr.bf16.mxu0 %v3613
    %3663 = vmatpush1.bf16.msra.mxu0 %v3612
    %3664 = vmatprep.subr.bf16.mxu0 0
    %3665 = vmatpush1.bf16.msra.mxu0 0
    %3666 = vmatprep.subr.bf16.mxu0 0
    %3667 = vmatpush1.bf16.msra.mxu0 0
    %3668 = vmatprep.subr.bf16.mxu0 0
    %3669 = vmatpush1.bf16.msra.mxu0 0
    %3670 = vmatprep.subr.bf16.mxu0 0
    %3671 = vmatpush1.bf16.msra.mxu0 0
    %3672 = vmatprep.subr.bf16.mxu0 0
    %3673 = vmatpush1.bf16.msra.mxu0 0
    %3674 = vmatprep.subr.bf16.mxu0 0
    %3675 = vmatpush1.bf16.msra.mxu0 0
    %3676 = vmatprep.subr.bf16.mxu0 0
    %3677 = vmatpush1.bf16.msra.mxu0 0
    %3678 = vmatprep.subr.bf16.mxu0 0
    %3679 = vmatpush1.bf16.msra.mxu0 0
    %3680 = vmatprep.mubr.bf16.mxu0 0
    %3681 = vmatmul.mubr.bf16.gmra.mrb[0].mxu0 %v3455
    %v3682 = vpop.f32.mrb[0].mxu0
    %v3683 = vadd.f32 0.0, %v3682
    %v3684 = vpop.f32.mrb[0].mxu0
    %v3685 = vadd.f32 0.0, %v3684
    %v3686 = vpop.f32.mrb[0].mxu0
    %v3687 = vpop.f32.mrb[0].mxu0
    %3688 = vdwg.mxu0
    %3689 = vmatprep.subr.bf16.mxu0 %v3587
    %3690 = vmatpush1.bf16.msra.mxu0 %v3586
    %3691 = vmatprep.subr.bf16.mxu0 %v3591
    %3692 = vmatpush1.bf16.msra.mxu0 %v3590
    %3693 = vmatprep.subr.bf16.mxu0 %v3595
    %3694 = vmatpush1.bf16.msra.mxu0 %v3594
    %3695 = vmatprep.subr.bf16.mxu0 %v3599
    %3696 = vmatpush1.bf16.msra.mxu0 %v3598
    %3697 = vmatprep.subr.bf16.mxu0 %v3603
    %3698 = vmatpush1.bf16.msra.mxu0 %v3602
    %3699 = vmatprep.subr.bf16.mxu0 %v3607
    %3700 = vmatpush1.bf16.msra.mxu0 %v3606
    %3701 = vmatprep.subr.bf16.mxu0 %v3611
    %3702 = vmatpush1.bf16.msra.mxu0 %v3610
    %3703 = vmatprep.subr.bf16.mxu0 %v3615
    %3704 = vmatpush1.bf16.msra.mxu0 %v3614
    %3705 = vmatprep.subr.bf16.mxu0 0
    %3706 = vmatpush1.bf16.msra.mxu0 0
    %3707 = vmatprep.subr.bf16.mxu0 0
    %3708 = vmatpush1.bf16.msra.mxu0 0
    %3709 = vmatprep.subr.bf16.mxu0 0
    %3710 = vmatpush1.bf16.msra.mxu0 0
    %3711 = vmatprep.subr.bf16.mxu0 0
    %3712 = vmatpush1.bf16.msra.mxu0 0
    %3713 = vmatprep.subr.bf16.mxu0 0
    %3714 = vmatpush1.bf16.msra.mxu0 0
    %3715 = vmatprep.subr.bf16.mxu0 0
    %3716 = vmatpush1.bf16.msra.mxu0 0
    %3717 = vmatprep.subr.bf16.mxu0 0
    %3718 = vmatpush1.bf16.msra.mxu0 0
    %3719 = vmatprep.subr.bf16.mxu0 0
    %3720 = vmatpush1.bf16.msra.mxu0 0
    %3721 = vmatprep.mubr.bf16.mxu0 0
    %3722 = vmatmul.mubr.bf16.gmra.mrb[0].mxu0 %v3455
    %v3723 = vpop.f32.mrb[0].mxu0
    %v3724 = vadd.f32 0.0, %v3723
    %v3725 = vpop.f32.mrb[0].mxu0
    %v3726 = vadd.f32 0.0, %v3725
    %v3727 = vpop.f32.mrb[0].mxu0
    %v3728 = vpop.f32.mrb[0].mxu0
    %3729 = vdwg.mxu0
    %v3730 = vld [vmem:[#allocation8] sm:$0xff]
    %v3731 = vld [vmem:[#allocation8 + $0x8] sm:$0xff]
    %v3732 = vld [vmem:[#allocation8 + $0x10] sm:$0xff]
    %v3733 = vld [vmem:[#allocation8 + $0x18] sm:$0xff]
    %v3734 = vld [vmem:[#allocation8 + $0x20] sm:$0xff]
    %v3735 = vld [vmem:[#allocation8 + $0x28] sm:$0xff]
    %v3736 = vld [vmem:[#allocation8 + $0x30] sm:$0xff]
    %v3737 = vld [vmem:[#allocation8 + $0x38] sm:$0xff]
    %v3738 = vld [vmem:[#allocation8 + $0x40] sm:$0xff]
    %v3739 = vld [vmem:[#allocation8 + $0x48] sm:$0xff]
    %v3740 = vld [vmem:[#allocation8 + $0x50] sm:$0xff]
    %v3741 = vld [vmem:[#allocation8 + $0x58] sm:$0xff]
    %v3742 = vld [vmem:[#allocation8 + $0x60] sm:$0xff]
    %v3743 = vld [vmem:[#allocation8 + $0x68] sm:$0xff]
    %v3744 = vld [vmem:[#allocation8 + $0x70] sm:$0xff]
    %v3745 = vld [vmem:[#allocation8 + $0x78] sm:$0xff]
    %v3746 = vld [vmem:[#allocation8 + $0x80] sm:$0xff]
    %v3747 = vld [vmem:[#allocation8 + $0x88] sm:$0xff]
    %v3748 = vld [vmem:[#allocation8 + $0x90] sm:$0xff]
    %v3749 = vld [vmem:[#allocation8 + $0x98] sm:$0xff]
    %v3750 = vld [vmem:[#allocation8 + $0xa0] sm:$0xff]
    %v3751 = vld [vmem:[#allocation8 + $0xa8] sm:$0xff]
    %v3752 = vld [vmem:[#allocation8 + $0xb0] sm:$0xff]
    %v3753 = vld [vmem:[#allocation8 + $0xb8] sm:$0xff]
    %v3754 = vld [vmem:[#allocation8 + $0xc0] sm:$0xff]
    %v3755 = vld [vmem:[#allocation8 + $0xc8] sm:$0xff]
    %v3756 = vld [vmem:[#allocation8 + $0xd0] sm:$0xff]
    %v3757 = vld [vmem:[#allocation8 + $0xd8] sm:$0xff]
    %v3758 = vld [vmem:[#allocation8 + $0xe0] sm:$0xff]
    %v3759 = vld [vmem:[#allocation8 + $0xe8] sm:$0xff]
    %v3760 = vld [vmem:[#allocation8 + $0xf0] sm:$0xff]
    %v3761 = vld [vmem:[#allocation8 + $0xf8] sm:$0xff]
    %v3794 = vunpack.c.l.b16 %v3730
    %v3795 = vunpack.c.h.b16 %v3730
    %v3796 = vunpack.c.l.b16 %v3731
    %v3797 = vunpack.c.h.b16 %v3731
    %v3798 = vunpack.c.l.b16 %v3732
    %v3799 = vunpack.c.h.b16 %v3732
    %v3800 = vunpack.c.l.b16 %v3733
    %v3801 = vunpack.c.h.b16 %v3733
    %v3802 = vunpack.c.l.b16 %v3734
    %v3803 = vunpack.c.h.b16 %v3734
    %v3804 = vunpack.c.l.b16 %v3735
    %v3805 = vunpack.c.h.b16 %v3735
    %v3806 = vunpack.c.l.b16 %v3736
    %v3807 = vunpack.c.h.b16 %v3736
    %v3808 = vunpack.c.l.b16 %v3737
    %v3809 = vunpack.c.h.b16 %v3737
    %v3810 = vunpack.c.l.b16 %v3738
    %v3811 = vunpack.c.h.b16 %v3738
    %v3812 = vunpack.c.l.b16 %v3739
    %v3813 = vunpack.c.h.b16 %v3739
    %v3814 = vunpack.c.l.b16 %v3740
    %v3815 = vunpack.c.h.b16 %v3740
    %v3816 = vunpack.c.l.b16 %v3741
    %v3817 = vunpack.c.h.b16 %v3741
    %v3818 = vunpack.c.l.b16 %v3742
    %v3819 = vunpack.c.h.b16 %v3742
    %v3820 = vunpack.c.l.b16 %v3743
    %v3821 = vunpack.c.h.b16 %v3743
    %v3822 = vunpack.c.l.b16 %v3744
    %v3823 = vunpack.c.h.b16 %v3744
    %v3824 = vunpack.c.l.b16 %v3745
    %v3825 = vunpack.c.h.b16 %v3745
    %v3826 = vunpack.c.l.b16 %v3746
    %v3827 = vunpack.c.h.b16 %v3746
    %v3828 = vunpack.c.l.b16 %v3747
    %v3829 = vunpack.c.h.b16 %v3747
    %v3830 = vunpack.c.l.b16 %v3748
    %v3831 = vunpack.c.h.b16 %v3748
    %v3832 = vunpack.c.l.b16 %v3749
    %v3833 = vunpack.c.h.b16 %v3749
    %v3834 = vunpack.c.l.b16 %v3750
    %v3835 = vunpack.c.h.b16 %v3750
    %v3836 = vunpack.c.l.b16 %v3751
    %v3837 = vunpack.c.h.b16 %v3751
    %v3838 = vunpack.c.l.b16 %v3752
    %v3839 = vunpack.c.h.b16 %v3752
    %v3840 = vunpack.c.l.b16 %v3753
    %v3841 = vunpack.c.h.b16 %v3753
    %v3842 = vunpack.c.l.b16 %v3754
    %v3843 = vunpack.c.h.b16 %v3754
    %v3844 = vunpack.c.l.b16 %v3755
    %v3845 = vunpack.c.h.b16 %v3755
    %v3846 = vunpack.c.l.b16 %v3756
    %v3847 = vunpack.c.h.b16 %v3756
    %v3848 = vunpack.c.l.b16 %v3757
    %v3849 = vunpack.c.h.b16 %v3757
    %v3850 = vunpack.c.l.b16 %v3758
    %v3851 = vunpack.c.h.b16 %v3758
    %v3852 = vunpack.c.l.b16 %v3759
    %v3853 = vunpack.c.h.b16 %v3759
    %v3854 = vunpack.c.l.b16 %v3760
    %v3855 = vunpack.c.h.b16 %v3760
    %v3856 = vunpack.c.l.b16 %v3761
    %v3857 = vunpack.c.h.b16 %v3761
    %v3858 = vpack.c.b16 %v3798, %v3794
    %v3859 = vpack.c.b16 %v3799, %v3795
    %v3860 = vpack.c.b16 %v3800, %v3796
    %v3861 = vpack.c.b16 %v3801, %v3797
    %v3862 = vpack.c.b16 %v3806, %v3802
    %v3863 = vpack.c.b16 %v3807, %v3803
    %v3864 = vpack.c.b16 %v3808, %v3804
    %v3865 = vpack.c.b16 %v3809, %v3805
    %v3866 = vpack.c.b16 %v3814, %v3810
    %v3867 = vpack.c.b16 %v3815, %v3811
    %v3868 = vpack.c.b16 %v3816, %v3812
    %v3869 = vpack.c.b16 %v3817, %v3813
    %v3870 = vpack.c.b16 %v3822, %v3818
    %v3871 = vpack.c.b16 %v3823, %v3819
    %v3872 = vpack.c.b16 %v3824, %v3820
    %v3873 = vpack.c.b16 %v3825, %v3821
    %v3874 = vpack.c.b16 %v3830, %v3826
    %v3875 = vpack.c.b16 %v3831, %v3827
    %v3876 = vpack.c.b16 %v3832, %v3828
    %v3877 = vpack.c.b16 %v3833, %v3829
    %v3878 = vpack.c.b16 %v3838, %v3834
    %v3879 = vpack.c.b16 %v3839, %v3835
    %v3880 = vpack.c.b16 %v3840, %v3836
    %v3881 = vpack.c.b16 %v3841, %v3837
    %v3882 = vpack.c.b16 %v3846, %v3842
    %v3883 = vpack.c.b16 %v3847, %v3843
    %v3884 = vpack.c.b16 %v3848, %v3844
    %v3885 = vpack.c.b16 %v3849, %v3845
    %v3886 = vpack.c.b16 %v3854, %v3850
    %v3887 = vpack.c.b16 %v3855, %v3851
    %v3888 = vpack.c.b16 %v3856, %v3852
    %v3889 = vpack.c.b16 %v3857, %v3853
    %3922 = vmatprep.subr.bf16.mxu0 %v3859
    %3923 = vmatpush1.bf16.msra.mxu0 %v3858
    %3924 = vmatprep.subr.bf16.mxu0 %v3863
    %3925 = vmatpush1.bf16.msra.mxu0 %v3862
    %3926 = vmatprep.subr.bf16.mxu0 %v3867
    %3927 = vmatpush1.bf16.msra.mxu0 %v3866
    %3928 = vmatprep.subr.bf16.mxu0 %v3871
    %3929 = vmatpush1.bf16.msra.mxu0 %v3870
    %3930 = vmatprep.subr.bf16.mxu0 %v3875
    %3931 = vmatpush1.bf16.msra.mxu0 %v3874
    %3932 = vmatprep.subr.bf16.mxu0 %v3879
    %3933 = vmatpush1.bf16.msra.mxu0 %v3878
    %3934 = vmatprep.subr.bf16.mxu0 %v3883
    %3935 = vmatpush1.bf16.msra.mxu0 %v3882
    %3936 = vmatprep.subr.bf16.mxu0 %v3887
    %3937 = vmatpush1.bf16.msra.mxu0 %v3886
    %3938 = vmatprep.subr.bf16.mxu0 0
    %3939 = vmatpush1.bf16.msra.mxu0 0
    %3940 = vmatprep.subr.bf16.mxu0 0
    %3941 = vmatpush1.bf16.msra.mxu0 0
    %3942 = vmatprep.subr.bf16.mxu0 0
    %3943 = vmatpush1.bf16.msra.mxu0 0
    %3944 = vmatprep.subr.bf16.mxu0 0
    %3945 = vmatpush1.bf16.msra.mxu0 0
    %3946 = vmatprep.subr.bf16.mxu0 0
    %3947 = vmatpush1.bf16.msra.mxu0 0
    %3948 = vmatprep.subr.bf16.mxu0 0
    %3949 = vmatpush1.bf16.msra.mxu0 0
    %3950 = vmatprep.subr.bf16.mxu0 0
    %3951 = vmatpush1.bf16.msra.mxu0 0
    %3952 = vmatprep.subr.bf16.mxu0 0
    %3953 = vmatpush1.bf16.msra.mxu0 0
    %3954 = vmatprep.mubr.bf16.mxu0 0
    %3955 = vmatmul.mubr.bf16.gmra.mrb[0].mxu0 %v3454
    %v3956 = vpop.f32.mrb[0].mxu0
    %v3957 = vadd.f32 %v3683, %v3956
    %v3958 = vpop.f32.mrb[0].mxu0
    %v3959 = vadd.f32 %v3685, %v3958
    %v3960 = vpop.f32.mrb[0].mxu0
    %v3961 = vpop.f32.mrb[0].mxu0
    %3962 = vdwg.mxu0
    %3963 = vmatprep.subr.bf16.mxu0 %v3861
    %3964 = vmatpush1.bf16.msra.mxu0 %v3860
    %3965 = vmatprep.subr.bf16.mxu0 %v3865
    %3966 = vmatpush1.bf16.msra.mxu0 %v3864
    %3967 = vmatprep.subr.bf16.mxu0 %v3869
    %3968 = vmatpush1.bf16.msra.mxu0 %v3868
    %3969 = vmatprep.subr.bf16.mxu0 %v3873
    %3970 = vmatpush1.bf16.msra.mxu0 %v3872
    %3971 = vmatprep.subr.bf16.mxu0 %v3877
    %3972 = vmatpush1.bf16.msra.mxu0 %v3876
    %3973 = vmatprep.subr.bf16.mxu0 %v3881
    %3974 = vmatpush1.bf16.msra.mxu0 %v3880
    %3975 = vmatprep.subr.bf16.mxu0 %v3885
    %3976 = vmatpush1.bf16.msra.mxu0 %v3884
    %3977 = vmatprep.subr.bf16.mxu0 %v3889
    %3978 = vmatpush1.bf16.msra.mxu0 %v3888
    %3979 = vmatprep.subr.bf16.mxu0 0
    %3980 = vmatpush1.bf16.msra.mxu0 0
    %3981 = vmatprep.subr.bf16.mxu0 0
    %3982 = vmatpush1.bf16.msra.mxu0 0
    %3983 = vmatprep.subr.bf16.mxu0 0
    %3984 = vmatpush1.bf16.msra.mxu0 0
    %3985 = vmatprep.subr.bf16.mxu0 0
    %3986 = vmatpush1.bf16.msra.mxu0 0
    %3987 = vmatprep.subr.bf16.mxu0 0
    %3988 = vmatpush1.bf16.msra.mxu0 0
    %3989 = vmatprep.subr.bf16.mxu0 0
    %3990 = vmatpush1.bf16.msra.mxu0 0
    %3991 = vmatprep.subr.bf16.mxu0 0
    %3992 = vmatpush1.bf16.msra.mxu0 0
    %3993 = vmatprep.subr.bf16.mxu0 0
    %3994 = vmatpush1.bf16.msra.mxu0 0
    %3995 = vmatprep.mubr.bf16.mxu0 0
    %3996 = vmatmul.mubr.bf16.gmra.mrb[0].mxu0 %v3454
    %v3997 = vpop.f32.mrb[0].mxu0
    %v3998 = vadd.f32 %v3724, %v3997
    %v3999 = vpop.f32.mrb[0].mxu0
    %v4000 = vadd.f32 %v3726, %v3999
    %v4001 = vpop.f32.mrb[0].mxu0
    %v4002 = vpop.f32.mrb[0].mxu0
    %4003 = vdwg.mxu0
    %v4004 = vxor.u32 %v3957, 2147483648
    %v4005 = vmul.f32 %v4004, 1.442695
    %v4006 = vpow.pop %v4005
    %v4007 = vadd.f32 %v4006, 1.0
    %v4008 = vrcp.pop %v4007
    %v4009 = vmul.f32 1.0, %v4008
    %v4010 = vxor.u32 %v3959, 2147483648
    %v4011 = vmul.f32 %v4010, 1.442695
    %v4012 = vpow.pop %v4011
    %v4013 = vadd.f32 %v4012, 1.0
    %v4014 = vrcp.pop %v4013
    %v4015 = vmul.f32 1.0, %v4014
    %v4016 = vtanh.pop %v3998
    %v4017 = vxor.u32 %v4000, 2147483648
    %v4018 = vmul.f32 %v4017, 1.442695
    %v4019 = vpow.pop %v4018
    %v4020 = vadd.f32 %v4019, 1.0
    %v4021 = vrcp.pop %v4020
    %v4022 = vmul.f32 1.0, %v4021
    %v4023 = vmul.f32 %v4015, %v3140
    %v4024 = vmul.f32 %v4009, %v4016
    %v4025 = vadd.f32 %v4023, %v4024
    %v4026 = vtanh.pop %v4025
    %v4027 = vmul.f32 %v4022, %v4026
    %s4028 = scalar_lea.vmem [#allocation12], 24
    %4029 = vst [vmem:[%s4028] sm:$0xff] %v4027
    %v4030 = vld [vmem:[#allocation9] sm:$0xff]
    %v4031 = vld [vmem:[#allocation9 + $0x8] sm:$0xff]
    %v4032 = vld [vmem:[#allocation9 + $0x10] sm:$0xff]
    %v4033 = vld [vmem:[#allocation9 + $0x18] sm:$0xff]
    %v4034 = vld [vmem:[#allocation9 + $0x20] sm:$0xff]
    %v4035 = vld [vmem:[#allocation9 + $0x28] sm:$0xff]
    %v4036 = vld [vmem:[#allocation9 + $0x30] sm:$0xff]
    %v4037 = vld [vmem:[#allocation9 + $0x38] sm:$0xff]
    %v4038 = vld [vmem:[#allocation9 + $0x40] sm:$0xff]
    %v4039 = vld [vmem:[#allocation9 + $0x48] sm:$0xff]
    %v4040 = vld [vmem:[#allocation9 + $0x50] sm:$0xff]
    %v4041 = vld [vmem:[#allocation9 + $0x58] sm:$0xff]
    %v4042 = vld [vmem:[#allocation9 + $0x60] sm:$0xff]
    %v4043 = vld [vmem:[#allocation9 + $0x68] sm:$0xff]
    %v4044 = vld [vmem:[#allocation9 + $0x70] sm:$0xff]
    %v4045 = vld [vmem:[#allocation9 + $0x78] sm:$0xff]
    %v4046 = vld [vmem:[#allocation9 + $0x80] sm:$0xff]
    %v4047 = vld [vmem:[#allocation9 + $0x88] sm:$0xff]
    %v4048 = vld [vmem:[#allocation9 + $0x90] sm:$0xff]
    %v4049 = vld [vmem:[#allocation9 + $0x98] sm:$0xff]
    %v4050 = vld [vmem:[#allocation9 + $0xa0] sm:$0xff]
    %v4051 = vld [vmem:[#allocation9 + $0xa8] sm:$0xff]
    %v4052 = vld [vmem:[#allocation9 + $0xb0] sm:$0xff]
    %v4053 = vld [vmem:[#allocation9 + $0xb8] sm:$0xff]
    %v4054 = vld [vmem:[#allocation9 + $0xc0] sm:$0xff]
    %v4055 = vld [vmem:[#allocation9 + $0xc8] sm:$0xff]
    %v4056 = vld [vmem:[#allocation9 + $0xd0] sm:$0xff]
    %v4057 = vld [vmem:[#allocation9 + $0xd8] sm:$0xff]
    %v4058 = vld [vmem:[#allocation9 + $0xe0] sm:$0xff]
    %v4059 = vld [vmem:[#allocation9 + $0xe8] sm:$0xff]
    %v4060 = vld [vmem:[#allocation9 + $0xf0] sm:$0xff]
    %v4061 = vld [vmem:[#allocation9 + $0xf8] sm:$0xff]
    %v4094 = vunpack.c.l.b16 %v4030
    %v4095 = vunpack.c.h.b16 %v4030
    %v4096 = vunpack.c.l.b16 %v4031
    %v4097 = vunpack.c.h.b16 %v4031
    %v4098 = vunpack.c.l.b16 %v4032
    %v4099 = vunpack.c.h.b16 %v4032
    %v4100 = vunpack.c.l.b16 %v4033
    %v4101 = vunpack.c.h.b16 %v4033
    %v4102 = vunpack.c.l.b16 %v4034
    %v4103 = vunpack.c.h.b16 %v4034
    %v4104 = vunpack.c.l.b16 %v4035
    %v4105 = vunpack.c.h.b16 %v4035
    %v4106 = vunpack.c.l.b16 %v4036
    %v4107 = vunpack.c.h.b16 %v4036
    %v4108 = vunpack.c.l.b16 %v4037
    %v4109 = vunpack.c.h.b16 %v4037
    %v4110 = vunpack.c.l.b16 %v4038
    %v4111 = vunpack.c.h.b16 %v4038
    %v4112 = vunpack.c.l.b16 %v4039
    %v4113 = vunpack.c.h.b16 %v4039
    %v4114 = vunpack.c.l.b16 %v4040
    %v4115 = vunpack.c.h.b16 %v4040
    %v4116 = vunpack.c.l.b16 %v4041
    %v4117 = vunpack.c.h.b16 %v4041
    %v4118 = vunpack.c.l.b16 %v4042
    %v4119 = vunpack.c.h.b16 %v4042
    %v4120 = vunpack.c.l.b16 %v4043
    %v4121 = vunpack.c.h.b16 %v4043
    %v4122 = vunpack.c.l.b16 %v4044
    %v4123 = vunpack.c.h.b16 %v4044
    %v4124 = vunpack.c.l.b16 %v4045
    %v4125 = vunpack.c.h.b16 %v4045
    %v4126 = vunpack.c.l.b16 %v4046
    %v4127 = vunpack.c.h.b16 %v4046
    %v4128 = vunpack.c.l.b16 %v4047
    %v4129 = vunpack.c.h.b16 %v4047
    %v4130 = vunpack.c.l.b16 %v4048
    %v4131 = vunpack.c.h.b16 %v4048
    %v4132 = vunpack.c.l.b16 %v4049
    %v4133 = vunpack.c.h.b16 %v4049
    %v4134 = vunpack.c.l.b16 %v4050
    %v4135 = vunpack.c.h.b16 %v4050
    %v4136 = vunpack.c.l.b16 %v4051
    %v4137 = vunpack.c.h.b16 %v4051
    %v4138 = vunpack.c.l.b16 %v4052
    %v4139 = vunpack.c.h.b16 %v4052
    %v4140 = vunpack.c.l.b16 %v4053
    %v4141 = vunpack.c.h.b16 %v4053
    %v4142 = vunpack.c.l.b16 %v4054
    %v4143 = vunpack.c.h.b16 %v4054
    %v4144 = vunpack.c.l.b16 %v4055
    %v4145 = vunpack.c.h.b16 %v4055
    %v4146 = vunpack.c.l.b16 %v4056
    %v4147 = vunpack.c.h.b16 %v4056
    %v4148 = vunpack.c.l.b16 %v4057
    %v4149 = vunpack.c.h.b16 %v4057
    %v4150 = vunpack.c.l.b16 %v4058
    %v4151 = vunpack.c.h.b16 %v4058
    %v4152 = vunpack.c.l.b16 %v4059
    %v4153 = vunpack.c.h.b16 %v4059
    %v4154 = vunpack.c.l.b16 %v4060
    %v4155 = vunpack.c.h.b16 %v4060
    %v4156 = vunpack.c.l.b16 %v4061
    %v4157 = vunpack.c.h.b16 %v4061
    %v4158 = vpack.c.b16 %v4098, %v4094
    %v4159 = vpack.c.b16 %v4099, %v4095
    %v4160 = vpack.c.b16 %v4100, %v4096
    %v4161 = vpack.c.b16 %v4101, %v4097
    %v4162 = vpack.c.b16 %v4106, %v4102
    %v4163 = vpack.c.b16 %v4107, %v4103
    %v4164 = vpack.c.b16 %v4108, %v4104
    %v4165 = vpack.c.b16 %v4109, %v4105
    %v4166 = vpack.c.b16 %v4114, %v4110
    %v4167 = vpack.c.b16 %v4115, %v4111
    %v4168 = vpack.c.b16 %v4116, %v4112
    %v4169 = vpack.c.b16 %v4117, %v4113
    %v4170 = vpack.c.b16 %v4122, %v4118
    %v4171 = vpack.c.b16 %v4123, %v4119
    %v4172 = vpack.c.b16 %v4124, %v4120
    %v4173 = vpack.c.b16 %v4125, %v4121
    %v4174 = vpack.c.b16 %v4130, %v4126
    %v4175 = vpack.c.b16 %v4131, %v4127
    %v4176 = vpack.c.b16 %v4132, %v4128
    %v4177 = vpack.c.b16 %v4133, %v4129
    %v4178 = vpack.c.b16 %v4138, %v4134
    %v4179 = vpack.c.b16 %v4139, %v4135
    %v4180 = vpack.c.b16 %v4140, %v4136
    %v4181 = vpack.c.b16 %v4141, %v4137
    %v4182 = vpack.c.b16 %v4146, %v4142
    %v4183 = vpack.c.b16 %v4147, %v4143
    %v4184 = vpack.c.b16 %v4148, %v4144
    %v4185 = vpack.c.b16 %v4149, %v4145
    %v4186 = vpack.c.b16 %v4154, %v4150
    %v4187 = vpack.c.b16 %v4155, %v4151
    %v4188 = vpack.c.b16 %v4156, %v4152
    %v4189 = vpack.c.b16 %v4157, %v4153
    %4222 = vmatprep.subr.bf16.mxu0 %v4159
    %4223 = vmatpush1.bf16.msra.mxu0 %v4158
    %4224 = vmatprep.subr.bf16.mxu0 %v4163
    %4225 = vmatpush1.bf16.msra.mxu0 %v4162
    %4226 = vmatprep.subr.bf16.mxu0 %v4167
    %4227 = vmatpush1.bf16.msra.mxu0 %v4166
    %4228 = vmatprep.subr.bf16.mxu0 %v4171
    %4229 = vmatpush1.bf16.msra.mxu0 %v4170
    %4230 = vmatprep.subr.bf16.mxu0 %v4175
    %4231 = vmatpush1.bf16.msra.mxu0 %v4174
    %4232 = vmatprep.subr.bf16.mxu0 %v4179
    %4233 = vmatpush1.bf16.msra.mxu0 %v4178
    %4234 = vmatprep.subr.bf16.mxu0 %v4183
    %4235 = vmatpush1.bf16.msra.mxu0 %v4182
    %4236 = vmatprep.subr.bf16.mxu0 %v4187
    %4237 = vmatpush1.bf16.msra.mxu0 %v4186
    %4238 = vmatprep.subr.bf16.mxu0 0
    %4239 = vmatpush1.bf16.msra.mxu0 0
    %4240 = vmatprep.subr.bf16.mxu0 0
    %4241 = vmatpush1.bf16.msra.mxu0 0
    %4242 = vmatprep.subr.bf16.mxu0 0
    %4243 = vmatpush1.bf16.msra.mxu0 0
    %4244 = vmatprep.subr.bf16.mxu0 0
    %4245 = vmatpush1.bf16.msra.mxu0 0
    %4246 = vmatprep.subr.bf16.mxu0 0
    %4247 = vmatpush1.bf16.msra.mxu0 0
    %4248 = vmatprep.subr.bf16.mxu0 0
    %4249 = vmatpush1.bf16.msra.mxu0 0
    %4250 = vmatprep.subr.bf16.mxu0 0
    %4251 = vmatpush1.bf16.msra.mxu0 0
    %4252 = vmatprep.subr.bf16.mxu0 0
    %4253 = vmatpush1.bf16.msra.mxu0 0
    %4254 = vmatprep.mubr.bf16.mxu0 0
    %4255 = vmatmul.mubr.bf16.gmra.mrb[0].mxu0 %v3454
    %v4256 = vpop.f32.mrb[0].mxu0
    %v4257 = vadd.f32 0.0, %v4256
    %v4258 = vpop.f32.mrb[0].mxu0
    %v4259 = vadd.f32 0.0, %v4258
    %v4260 = vpop.f32.mrb[0].mxu0
    %v4261 = vpop.f32.mrb[0].mxu0
    %4262 = vdwg.mxu0
    %4263 = vmatprep.subr.bf16.mxu0 %v4161
    %4264 = vmatpush1.bf16.msra.mxu0 %v4160
    %4265 = vmatprep.subr.bf16.mxu0 %v4165
    %4266 = vmatpush1.bf16.msra.mxu0 %v4164
    %4267 = vmatprep.subr.bf16.mxu0 %v4169
    %4268 = vmatpush1.bf16.msra.mxu0 %v4168
    %4269 = vmatprep.subr.bf16.mxu0 %v4173
    %4270 = vmatpush1.bf16.msra.mxu0 %v4172
    %4271 = vmatprep.subr.bf16.mxu0 %v4177
    %4272 = vmatpush1.bf16.msra.mxu0 %v4176
    %4273 = vmatprep.subr.bf16.mxu0 %v4181
    %4274 = vmatpush1.bf16.msra.mxu0 %v4180
    %4275 = vmatprep.subr.bf16.mxu0 %v4185
    %4276 = vmatpush1.bf16.msra.mxu0 %v4184
    %4277 = vmatprep.subr.bf16.mxu0 %v4189
    %4278 = vmatpush1.bf16.msra.mxu0 %v4188
    %4279 = vmatprep.subr.bf16.mxu0 0
    %4280 = vmatpush1.bf16.msra.mxu0 0
    %4281 = vmatprep.subr.bf16.mxu0 0
    %4282 = vmatpush1.bf16.msra.mxu0 0
    %4283 = vmatprep.subr.bf16.mxu0 0
    %4284 = vmatpush1.bf16.msra.mxu0 0
    %4285 = vmatprep.subr.bf16.mxu0 0
    %4286 = vmatpush1.bf16.msra.mxu0 0
    %4287 = vmatprep.subr.bf16.mxu0 0
    %4288 = vmatpush1.bf16.msra.mxu0 0
    %4289 = vmatprep.subr.bf16.mxu0 0
    %4290 = vmatpush1.bf16.msra.mxu0 0
    %4291 = vmatprep.subr.bf16.mxu0 0
    %4292 = vmatpush1.bf16.msra.mxu0 0
    %4293 = vmatprep.subr.bf16.mxu0 0
    %4294 = vmatpush1.bf16.msra.mxu0 0
    %4295 = vmatprep.mubr.bf16.mxu0 0
    %4296 = vmatmul.mubr.bf16.gmra.mrb[0].mxu0 %v3454
    %v4297 = vpop.f32.mrb[0].mxu0
    %v4298 = vadd.f32 0.0, %v4297
    %v4299 = vpop.f32.mrb[0].mxu0
    %v4300 = vadd.f32 0.0, %v4299
    %v4301 = vpop.f32.mrb[0].mxu0
    %v4302 = vpop.f32.mrb[0].mxu0
    %4303 = vdwg.mxu0
    %s4304 = smul.u32 4, 4
    %s4305 = smul.addr %s4304, 8
    %s4306 = scalar_lea.vmem [#allocation2], %s4305
    %v4307 = vld [vmem:[%s4306] sm:$0xff]
    %v4308 = vld [vmem:[%s4306 + $0x8] sm:$0xff]
    %v4309 = vld [vmem:[%s4306 + $0x10] sm:$0xff]
    %v4310 = vld [vmem:[%s4306 + $0x18] sm:$0xff]
    %v4311 = vadd.f32 %v4307, %v4257
    %v4312 = vadd.f32 %v4308, %v4259
    %v4313 = vadd.f32 %v4309, %v4298
    %v4314 = vadd.f32 %v4310, %v4300
    %v4315 = vxor.u32 %v4311, 2147483648
    %v4316 = vmul.f32 %v4315, 1.442695
    %v4317 = vpow.pop %v4316
    %v4318 = vadd.f32 %v4317, 1.0
    %v4319 = vrcp.pop %v4318
    %v4320 = vmul.f32 1.0, %v4319
    %v4321 = vxor.u32 %v4312, 2147483648
    %v4322 = vmul.f32 %v4321, 1.442695
    %v4323 = vpow.pop %v4322
    %v4324 = vadd.f32 %v4323, 1.0
    %v4325 = vrcp.pop %v4324
    %v4326 = vmul.f32 1.0, %v4325
    %v4327 = vtanh.pop %v4313
    %v4328 = vxor.u32 %v4314, 2147483648
    %v4329 = vmul.f32 %v4328, 1.442695
    %v4330 = vpow.pop %v4329
    %v4331 = vadd.f32 %v4330, 1.0
    %v4332 = vrcp.pop %v4331
    %v4333 = vmul.f32 1.0, %v4332
    %v4334 = vmul.f32 %v4326, %v3451
    %v4335 = vmul.f32 %v4320, %v4327
    %v4336 = vadd.f32 %v4334, %v4335
    %v4337 = vtanh.pop %v4336
    %v4338 = vmul.f32 %v4333, %v4337
    %v4339 = vpack.c.bf16 %v4338, %v4338
    %v4340 = vpack.c.bf16 %v4027, %v4027
    %v4341 = vld [vmem:[#allocation11] sm:$0xff]
    %v4342 = vld [vmem:[#allocation11 + $0x8] sm:$0xff]
    %v4343 = vld [vmem:[#allocation11 + $0x10] sm:$0xff]
    %v4344 = vld [vmem:[#allocation11 + $0x18] sm:$0xff]
    %v4345 = vld [vmem:[#allocation11 + $0x20] sm:$0xff]
    %v4346 = vld [vmem:[#allocation11 + $0x28] sm:$0xff]
    %v4347 = vld [vmem:[#allocation11 + $0x30] sm:$0xff]
    %v4348 = vld [vmem:[#allocation11 + $0x38] sm:$0xff]
    %v4349 = vld [vmem:[#allocation11 + $0x40] sm:$0xff]
    %v4350 = vld [vmem:[#allocation11 + $0x48] sm:$0xff]
    %v4351 = vld [vmem:[#allocation11 + $0x50] sm:$0xff]
    %v4352 = vld [vmem:[#allocation11 + $0x58] sm:$0xff]
    %v4353 = vld [vmem:[#allocation11 + $0x60] sm:$0xff]
    %v4354 = vld [vmem:[#allocation11 + $0x68] sm:$0xff]
    %v4355 = vld [vmem:[#allocation11 + $0x70] sm:$0xff]
    %v4356 = vld [vmem:[#allocation11 + $0x78] sm:$0xff]
    %v4357 = vld [vmem:[#allocation11 + $0x80] sm:$0xff]
    %v4358 = vld [vmem:[#allocation11 + $0x88] sm:$0xff]
    %v4359 = vld [vmem:[#allocation11 + $0x90] sm:$0xff]
    %v4360 = vld [vmem:[#allocation11 + $0x98] sm:$0xff]
    %v4361 = vld [vmem:[#allocation11 + $0xa0] sm:$0xff]
    %v4362 = vld [vmem:[#allocation11 + $0xa8] sm:$0xff]
    %v4363 = vld [vmem:[#allocation11 + $0xb0] sm:$0xff]
    %v4364 = vld [vmem:[#allocation11 + $0xb8] sm:$0xff]
    %v4365 = vld [vmem:[#allocation11 + $0xc0] sm:$0xff]
    %v4366 = vld [vmem:[#allocation11 + $0xc8] sm:$0xff]
    %v4367 = vld [vmem:[#allocation11 + $0xd0] sm:$0xff]
    %v4368 = vld [vmem:[#allocation11 + $0xd8] sm:$0xff]
    %v4369 = vld [vmem:[#allocation11 + $0xe0] sm:$0xff]
    %v4370 = vld [vmem:[#allocation11 + $0xe8] sm:$0xff]
    %v4371 = vld [vmem:[#allocation11 + $0xf0] sm:$0xff]
    %v4372 = vld [vmem:[#allocation11 + $0xf8] sm:$0xff]
    %v4405 = vunpack.c.l.b16 %v4341
    %v4406 = vunpack.c.h.b16 %v4341
    %v4407 = vunpack.c.l.b16 %v4342
    %v4408 = vunpack.c.h.b16 %v4342
    %v4409 = vunpack.c.l.b16 %v4343
    %v4410 = vunpack.c.h.b16 %v4343
    %v4411 = vunpack.c.l.b16 %v4344
    %v4412 = vunpack.c.h.b16 %v4344
    %v4413 = vunpack.c.l.b16 %v4345
    %v4414 = vunpack.c.h.b16 %v4345
    %v4415 = vunpack.c.l.b16 %v4346
    %v4416 = vunpack.c.h.b16 %v4346
    %v4417 = vunpack.c.l.b16 %v4347
    %v4418 = vunpack.c.h.b16 %v4347
    %v4419 = vunpack.c.l.b16 %v4348
    %v4420 = vunpack.c.h.b16 %v4348
    %v4421 = vunpack.c.l.b16 %v4349
    %v4422 = vunpack.c.h.b16 %v4349
    %v4423 = vunpack.c.l.b16 %v4350
    %v4424 = vunpack.c.h.b16 %v4350
    %v4425 = vunpack.c.l.b16 %v4351
    %v4426 = vunpack.c.h.b16 %v4351
    %v4427 = vunpack.c.l.b16 %v4352
    %v4428 = vunpack.c.h.b16 %v4352
    %v4429 = vunpack.c.l.b16 %v4353
    %v4430 = vunpack.c.h.b16 %v4353
    %v4431 = vunpack.c.l.b16 %v4354
    %v4432 = vunpack.c.h.b16 %v4354
    %v4433 = vunpack.c.l.b16 %v4355
    %v4434 = vunpack.c.h.b16 %v4355
    %v4435 = vunpack.c.l.b16 %v4356
    %v4436 = vunpack.c.h.b16 %v4356
    %v4437 = vunpack.c.l.b16 %v4357
    %v4438 = vunpack.c.h.b16 %v4357
    %v4439 = vunpack.c.l.b16 %v4358
    %v4440 = vunpack.c.h.b16 %v4358
    %v4441 = vunpack.c.l.b16 %v4359
    %v4442 = vunpack.c.h.b16 %v4359
    %v4443 = vunpack.c.l.b16 %v4360
    %v4444 = vunpack.c.h.b16 %v4360
    %v4445 = vunpack.c.l.b16 %v4361
    %v4446 = vunpack.c.h.b16 %v4361
    %v4447 = vunpack.c.l.b16 %v4362
    %v4448 = vunpack.c.h.b16 %v4362
    %v4449 = vunpack.c.l.b16 %v4363
    %v4450 = vunpack.c.h.b16 %v4363
    %v4451 = vunpack.c.l.b16 %v4364
    %v4452 = vunpack.c.h.b16 %v4364
    %v4453 = vunpack.c.l.b16 %v4365
    %v4454 = vunpack.c.h.b16 %v4365
    %v4455 = vunpack.c.l.b16 %v4366
    %v4456 = vunpack.c.h.b16 %v4366
    %v4457 = vunpack.c.l.b16 %v4367
    %v4458 = vunpack.c.h.b16 %v4367
    %v4459 = vunpack.c.l.b16 %v4368
    %v4460 = vunpack.c.h.b16 %v4368
    %v4461 = vunpack.c.l.b16 %v4369
    %v4462 = vunpack.c.h.b16 %v4369
    %v4463 = vunpack.c.l.b16 %v4370
    %v4464 = vunpack.c.h.b16 %v4370
    %v4465 = vunpack.c.l.b16 %v4371
    %v4466 = vunpack.c.h.b16 %v4371
    %v4467 = vunpack.c.l.b16 %v4372
    %v4468 = vunpack.c.h.b16 %v4372
    %v4469 = vpack.c.b16 %v4409, %v4405
    %v4470 = vpack.c.b16 %v4410, %v4406
    %v4471 = vpack.c.b16 %v4411, %v4407
    %v4472 = vpack.c.b16 %v4412, %v4408
    %v4473 = vpack.c.b16 %v4417, %v4413
    %v4474 = vpack.c.b16 %v4418, %v4414
    %v4475 = vpack.c.b16 %v4419, %v4415
    %v4476 = vpack.c.b16 %v4420, %v4416
    %v4477 = vpack.c.b16 %v4425, %v4421
    %v4478 = vpack.c.b16 %v4426, %v4422
    %v4479 = vpack.c.b16 %v4427, %v4423
    %v4480 = vpack.c.b16 %v4428, %v4424
    %v4481 = vpack.c.b16 %v4433, %v4429
    %v4482 = vpack.c.b16 %v4434, %v4430
    %v4483 = vpack.c.b16 %v4435, %v4431
    %v4484 = vpack.c.b16 %v4436, %v4432
    %v4485 = vpack.c.b16 %v4441, %v4437
    %v4486 = vpack.c.b16 %v4442, %v4438
    %v4487 = vpack.c.b16 %v4443, %v4439
    %v4488 = vpack.c.b16 %v4444, %v4440
    %v4489 = vpack.c.b16 %v4449, %v4445
    %v4490 = vpack.c.b16 %v4450, %v4446
    %v4491 = vpack.c.b16 %v4451, %v4447
    %v4492 = vpack.c.b16 %v4452, %v4448
    %v4493 = vpack.c.b16 %v4457, %v4453
    %v4494 = vpack.c.b16 %v4458, %v4454
    %v4495 = vpack.c.b16 %v4459, %v4455
    %v4496 = vpack.c.b16 %v4460, %v4456
    %v4497 = vpack.c.b16 %v4465, %v4461
    %v4498 = vpack.c.b16 %v4466, %v4462
    %v4499 = vpack.c.b16 %v4467, %v4463
    %v4500 = vpack.c.b16 %v4468, %v4464
    %4533 = vmatprep.subr.bf16.mxu0 %v4470
    %4534 = vmatpush1.bf16.msra.mxu0 %v4469
    %4535 = vmatprep.subr.bf16.mxu0 %v4474
    %4536 = vmatpush1.bf16.msra.mxu0 %v4473
    %4537 = vmatprep.subr.bf16.mxu0 %v4478
    %4538 = vmatpush1.bf16.msra.mxu0 %v4477
    %4539 = vmatprep.subr.bf16.mxu0 %v4482
    %4540 = vmatpush1.bf16.msra.mxu0 %v4481
    %4541 = vmatprep.subr.bf16.mxu0 %v4486
    %4542 = vmatpush1.bf16.msra.mxu0 %v4485
    %4543 = vmatprep.subr.bf16.mxu0 %v4490
    %4544 = vmatpush1.bf16.msra.mxu0 %v4489
    %4545 = vmatprep.subr.bf16.mxu0 %v4494
    %4546 = vmatpush1.bf16.msra.mxu0 %v4493
    %4547 = vmatprep.subr.bf16.mxu0 %v4498
    %4548 = vmatpush1.bf16.msra.mxu0 %v4497
    %4549 = vmatprep.subr.bf16.mxu0 0
    %4550 = vmatpush1.bf16.msra.mxu0 0
    %4551 = vmatprep.subr.bf16.mxu0 0
    %4552 = vmatpush1.bf16.msra.mxu0 0
    %4553 = vmatprep.subr.bf16.mxu0 0
    %4554 = vmatpush1.bf16.msra.mxu0 0
    %4555 = vmatprep.subr.bf16.mxu0 0
    %4556 = vmatpush1.bf16.msra.mxu0 0
    %4557 = vmatprep.subr.bf16.mxu0 0
    %4558 = vmatpush1.bf16.msra.mxu0 0
    %4559 = vmatprep.subr.bf16.mxu0 0
    %4560 = vmatpush1.bf16.msra.mxu0 0
    %4561 = vmatprep.subr.bf16.mxu0 0
    %4562 = vmatpush1.bf16.msra.mxu0 0
    %4563 = vmatprep.subr.bf16.mxu0 0
    %4564 = vmatpush1.bf16.msra.mxu0 0
    %4565 = vmatprep.mubr.bf16.mxu0 0
    %4566 = vmatmul.mubr.bf16.gmra.mrb[0].mxu0 %v4340
    %v4567 = vpop.f32.mrb[0].mxu0
    %v4568 = vadd.f32 0.0, %v4567
    %v4569 = vpop.f32.mrb[0].mxu0
    %v4570 = vadd.f32 0.0, %v4569
    %v4571 = vpop.f32.mrb[0].mxu0
    %v4572 = vpop.f32.mrb[0].mxu0
    %4573 = vdwg.mxu0
    %4574 = vmatprep.subr.bf16.mxu0 %v4472
    %4575 = vmatpush1.bf16.msra.mxu0 %v4471
    %4576 = vmatprep.subr.bf16.mxu0 %v4476
    %4577 = vmatpush1.bf16.msra.mxu0 %v4475
    %4578 = vmatprep.subr.bf16.mxu0 %v4480
    %4579 = vmatpush1.bf16.msra.mxu0 %v4479
    %4580 = vmatprep.subr.bf16.mxu0 %v4484
    %4581 = vmatpush1.bf16.msra.mxu0 %v4483
    %4582 = vmatprep.subr.bf16.mxu0 %v4488
    %4583 = vmatpush1.bf16.msra.mxu0 %v4487
    %4584 = vmatprep.subr.bf16.mxu0 %v4492
    %4585 = vmatpush1.bf16.msra.mxu0 %v4491
    %4586 = vmatprep.subr.bf16.mxu0 %v4496
    %4587 = vmatpush1.bf16.msra.mxu0 %v4495
    %4588 = vmatprep.subr.bf16.mxu0 %v4500
    %4589 = vmatpush1.bf16.msra.mxu0 %v4499
    %4590 = vmatprep.subr.bf16.mxu0 0
    %4591 = vmatpush1.bf16.msra.mxu0 0
    %4592 = vmatprep.subr.bf16.mxu0 0
    %4593 = vmatpush1.bf16.msra.mxu0 0
    %4594 = vmatprep.subr.bf16.mxu0 0
    %4595 = vmatpush1.bf16.msra.mxu0 0
    %4596 = vmatprep.subr.bf16.mxu0 0
    %4597 = vmatpush1.bf16.msra.mxu0 0
    %4598 = vmatprep.subr.bf16.mxu0 0
    %4599 = vmatpush1.bf16.msra.mxu0 0
    %4600 = vmatprep.subr.bf16.mxu0 0
    %4601 = vmatpush1.bf16.msra.mxu0 0
    %4602 = vmatprep.subr.bf16.mxu0 0
    %4603 = vmatpush1.bf16.msra.mxu0 0
    %4604 = vmatprep.subr.bf16.mxu0 0
    %4605 = vmatpush1.bf16.msra.mxu0 0
    %4606 = vmatprep.mubr.bf16.mxu0 0
    %4607 = vmatmul.mubr.bf16.gmra.mrb[0].mxu0 %v4340
    %v4608 = vpop.f32.mrb[0].mxu0
    %v4609 = vadd.f32 0.0, %v4608
    %v4610 = vpop.f32.mrb[0].mxu0
    %v4611 = vadd.f32 0.0, %v4610
    %v4612 = vpop.f32.mrb[0].mxu0
    %v4613 = vpop.f32.mrb[0].mxu0
    %4614 = vdwg.mxu0
    %v4615 = vld [vmem:[#allocation8] sm:$0xff]
    %v4616 = vld [vmem:[#allocation8 + $0x8] sm:$0xff]
    %v4617 = vld [vmem:[#allocation8 + $0x10] sm:$0xff]
    %v4618 = vld [vmem:[#allocation8 + $0x18] sm:$0xff]
    %v4619 = vld [vmem:[#allocation8 + $0x20] sm:$0xff]
    %v4620 = vld [vmem:[#allocation8 + $0x28] sm:$0xff]
    %v4621 = vld [vmem:[#allocation8 + $0x30] sm:$0xff]
    %v4622 = vld [vmem:[#allocation8 + $0x38] sm:$0xff]
    %v4623 = vld [vmem:[#allocation8 + $0x40] sm:$0xff]
    %v4624 = vld [vmem:[#allocation8 + $0x48] sm:$0xff]
    %v4625 = vld [vmem:[#allocation8 + $0x50] sm:$0xff]
    %v4626 = vld [vmem:[#allocation8 + $0x58] sm:$0xff]
    %v4627 = vld [vmem:[#allocation8 + $0x60] sm:$0xff]
    %v4628 = vld [vmem:[#allocation8 + $0x68] sm:$0xff]
    %v4629 = vld [vmem:[#allocation8 + $0x70] sm:$0xff]
    %v4630 = vld [vmem:[#allocation8 + $0x78] sm:$0xff]
    %v4631 = vld [vmem:[#allocation8 + $0x80] sm:$0xff]
    %v4632 = vld [vmem:[#allocation8 + $0x88] sm:$0xff]
    %v4633 = vld [vmem:[#allocation8 + $0x90] sm:$0xff]
    %v4634 = vld [vmem:[#allocation8 + $0x98] sm:$0xff]
    %v4635 = vld [vmem:[#allocation8 + $0xa0] sm:$0xff]
    %v4636 = vld [vmem:[#allocation8 + $0xa8] sm:$0xff]
    %v4637 = vld [vmem:[#allocation8 + $0xb0] sm:$0xff]
    %v4638 = vld [vmem:[#allocation8 + $0xb8] sm:$0xff]
    %v4639 = vld [vmem:[#allocation8 + $0xc0] sm:$0xff]
    %v4640 = vld [vmem:[#allocation8 + $0xc8] sm:$0xff]
    %v4641 = vld [vmem:[#allocation8 + $0xd0] sm:$0xff]
    %v4642 = vld [vmem:[#allocation8 + $0xd8] sm:$0xff]
    %v4643 = vld [vmem:[#allocation8 + $0xe0] sm:$0xff]
    %v4644 = vld [vmem:[#allocation8 + $0xe8] sm:$0xff]
    %v4645 = vld [vmem:[#allocation8 + $0xf0] sm:$0xff]
    %v4646 = vld [vmem:[#allocation8 + $0xf8] sm:$0xff]
    %v4679 = vunpack.c.l.b16 %v4615
    %v4680 = vunpack.c.h.b16 %v4615
    %v4681 = vunpack.c.l.b16 %v4616
    %v4682 = vunpack.c.h.b16 %v4616
    %v4683 = vunpack.c.l.b16 %v4617
    %v4684 = vunpack.c.h.b16 %v4617
    %v4685 = vunpack.c.l.b16 %v4618
    %v4686 = vunpack.c.h.b16 %v4618
    %v4687 = vunpack.c.l.b16 %v4619
    %v4688 = vunpack.c.h.b16 %v4619
    %v4689 = vunpack.c.l.b16 %v4620
    %v4690 = vunpack.c.h.b16 %v4620
    %v4691 = vunpack.c.l.b16 %v4621
    %v4692 = vunpack.c.h.b16 %v4621
    %v4693 = vunpack.c.l.b16 %v4622
    %v4694 = vunpack.c.h.b16 %v4622
    %v4695 = vunpack.c.l.b16 %v4623
    %v4696 = vunpack.c.h.b16 %v4623
    %v4697 = vunpack.c.l.b16 %v4624
    %v4698 = vunpack.c.h.b16 %v4624
    %v4699 = vunpack.c.l.b16 %v4625
    %v4700 = vunpack.c.h.b16 %v4625
    %v4701 = vunpack.c.l.b16 %v4626
    %v4702 = vunpack.c.h.b16 %v4626
    %v4703 = vunpack.c.l.b16 %v4627
    %v4704 = vunpack.c.h.b16 %v4627
    %v4705 = vunpack.c.l.b16 %v4628
    %v4706 = vunpack.c.h.b16 %v4628
    %v4707 = vunpack.c.l.b16 %v4629
    %v4708 = vunpack.c.h.b16 %v4629
    %v4709 = vunpack.c.l.b16 %v4630
    %v4710 = vunpack.c.h.b16 %v4630
    %v4711 = vunpack.c.l.b16 %v4631
    %v4712 = vunpack.c.h.b16 %v4631
    %v4713 = vunpack.c.l.b16 %v4632
    %v4714 = vunpack.c.h.b16 %v4632
    %v4715 = vunpack.c.l.b16 %v4633
    %v4716 = vunpack.c.h.b16 %v4633
    %v4717 = vunpack.c.l.b16 %v4634
    %v4718 = vunpack.c.h.b16 %v4634
    %v4719 = vunpack.c.l.b16 %v4635
    %v4720 = vunpack.c.h.b16 %v4635
    %v4721 = vunpack.c.l.b16 %v4636
    %v4722 = vunpack.c.h.b16 %v4636
    %v4723 = vunpack.c.l.b16 %v4637
    %v4724 = vunpack.c.h.b16 %v4637
    %v4725 = vunpack.c.l.b16 %v4638
    %v4726 = vunpack.c.h.b16 %v4638
    %v4727 = vunpack.c.l.b16 %v4639
    %v4728 = vunpack.c.h.b16 %v4639
    %v4729 = vunpack.c.l.b16 %v4640
    %v4730 = vunpack.c.h.b16 %v4640
    %v4731 = vunpack.c.l.b16 %v4641
    %v4732 = vunpack.c.h.b16 %v4641
    %v4733 = vunpack.c.l.b16 %v4642
    %v4734 = vunpack.c.h.b16 %v4642
    %v4735 = vunpack.c.l.b16 %v4643
    %v4736 = vunpack.c.h.b16 %v4643
    %v4737 = vunpack.c.l.b16 %v4644
    %v4738 = vunpack.c.h.b16 %v4644
    %v4739 = vunpack.c.l.b16 %v4645
    %v4740 = vunpack.c.h.b16 %v4645
    %v4741 = vunpack.c.l.b16 %v4646
    %v4742 = vunpack.c.h.b16 %v4646
    %v4743 = vpack.c.b16 %v4683, %v4679
    %v4744 = vpack.c.b16 %v4684, %v4680
    %v4745 = vpack.c.b16 %v4685, %v4681
    %v4746 = vpack.c.b16 %v4686, %v4682
    %v4747 = vpack.c.b16 %v4691, %v4687
    %v4748 = vpack.c.b16 %v4692, %v4688
    %v4749 = vpack.c.b16 %v4693, %v4689
    %v4750 = vpack.c.b16 %v4694, %v4690
    %v4751 = vpack.c.b16 %v4699, %v4695
    %v4752 = vpack.c.b16 %v4700, %v4696
    %v4753 = vpack.c.b16 %v4701, %v4697
    %v4754 = vpack.c.b16 %v4702, %v4698
    %v4755 = vpack.c.b16 %v4707, %v4703
    %v4756 = vpack.c.b16 %v4708, %v4704
    %v4757 = vpack.c.b16 %v4709, %v4705
    %v4758 = vpack.c.b16 %v4710, %v4706
    %v4759 = vpack.c.b16 %v4715, %v4711
    %v4760 = vpack.c.b16 %v4716, %v4712
    %v4761 = vpack.c.b16 %v4717, %v4713
    %v4762 = vpack.c.b16 %v4718, %v4714
    %v4763 = vpack.c.b16 %v4723, %v4719
    %v4764 = vpack.c.b16 %v4724, %v4720
    %v4765 = vpack.c.b16 %v4725, %v4721
    %v4766 = vpack.c.b16 %v4726, %v4722
    %v4767 = vpack.c.b16 %v4731, %v4727
    %v4768 = vpack.c.b16 %v4732, %v4728
    %v4769 = vpack.c.b16 %v4733, %v4729
    %v4770 = vpack.c.b16 %v4734, %v4730
    %v4771 = vpack.c.b16 %v4739, %v4735
    %v4772 = vpack.c.b16 %v4740, %v4736
    %v4773 = vpack.c.b16 %v4741, %v4737
    %v4774 = vpack.c.b16 %v4742, %v4738
    %4807 = vmatprep.subr.bf16.mxu0 %v4744
    %4808 = vmatpush1.bf16.msra.mxu0 %v4743
    %4809 = vmatprep.subr.bf16.mxu0 %v4748
    %4810 = vmatpush1.bf16.msra.mxu0 %v4747
    %4811 = vmatprep.subr.bf16.mxu0 %v4752
    %4812 = vmatpush1.bf16.msra.mxu0 %v4751
    %4813 = vmatprep.subr.bf16.mxu0 %v4756
    %4814 = vmatpush1.bf16.msra.mxu0 %v4755
    %4815 = vmatprep.subr.bf16.mxu0 %v4760
    %4816 = vmatpush1.bf16.msra.mxu0 %v4759
    %4817 = vmatprep.subr.bf16.mxu0 %v4764
    %4818 = vmatpush1.bf16.msra.mxu0 %v4763
    %4819 = vmatprep.subr.bf16.mxu0 %v4768
    %4820 = vmatpush1.bf16.msra.mxu0 %v4767
    %4821 = vmatprep.subr.bf16.mxu0 %v4772
    %4822 = vmatpush1.bf16.msra.mxu0 %v4771
    %4823 = vmatprep.subr.bf16.mxu0 0
    %4824 = vmatpush1.bf16.msra.mxu0 0
    %4825 = vmatprep.subr.bf16.mxu0 0
    %4826 = vmatpush1.bf16.msra.mxu0 0
    %4827 = vmatprep.subr.bf16.mxu0 0
    %4828 = vmatpush1.bf16.msra.mxu0 0
    %4829 = vmatprep.subr.bf16.mxu0 0
    %4830 = vmatpush1.bf16.msra.mxu0 0
    %4831 = vmatprep.subr.bf16.mxu0 0
    %4832 = vmatpush1.bf16.msra.mxu0 0
    %4833 = vmatprep.subr.bf16.mxu0 0
    %4834 = vmatpush1.bf16.msra.mxu0 0
    %4835 = vmatprep.subr.bf16.mxu0 0
    %4836 = vmatpush1.bf16.msra.mxu0 0
    %4837 = vmatprep.subr.bf16.mxu0 0
    %4838 = vmatpush1.bf16.msra.mxu0 0
    %4839 = vmatprep.mubr.bf16.mxu0 0
    %4840 = vmatmul.mubr.bf16.gmra.mrb[0].mxu0 %v4339
    %v4841 = vpop.f32.mrb[0].mxu0
    %v4842 = vadd.f32 %v4568, %v4841
    %v4843 = vpop.f32.mrb[0].mxu0
    %v4844 = vadd.f32 %v4570, %v4843
    %v4845 = vpop.f32.mrb[0].mxu0
    %v4846 = vpop.f32.mrb[0].mxu0
    %4847 = vdwg.mxu0
    %4848 = vmatprep.subr.bf16.mxu0 %v4746
    %4849 = vmatpush1.bf16.msra.mxu0 %v4745
    %4850 = vmatprep.subr.bf16.mxu0 %v4750
    %4851 = vmatpush1.bf16.msra.mxu0 %v4749
    %4852 = vmatprep.subr.bf16.mxu0 %v4754
    %4853 = vmatpush1.bf16.msra.mxu0 %v4753
    %4854 = vmatprep.subr.bf16.mxu0 %v4758
    %4855 = vmatpush1.bf16.msra.mxu0 %v4757
    %4856 = vmatprep.subr.bf16.mxu0 %v4762
    %4857 = vmatpush1.bf16.msra.mxu0 %v4761
    %4858 = vmatprep.subr.bf16.mxu0 %v4766
    %4859 = vmatpush1.bf16.msra.mxu0 %v4765
    %4860 = vmatprep.subr.bf16.mxu0 %v4770
    %4861 = vmatpush1.bf16.msra.mxu0 %v4769
    %4862 = vmatprep.subr.bf16.mxu0 %v4774
    %4863 = vmatpush1.bf16.msra.mxu0 %v4773
    %4864 = vmatprep.subr.bf16.mxu0 0
    %4865 = vmatpush1.bf16.msra.mxu0 0
    %4866 = vmatprep.subr.bf16.mxu0 0
    %4867 = vmatpush1.bf16.msra.mxu0 0
    %4868 = vmatprep.subr.bf16.mxu0 0
    %4869 = vmatpush1.bf16.msra.mxu0 0
    %4870 = vmatprep.subr.bf16.mxu0 0
    %4871 = vmatpush1.bf16.msra.mxu0 0
    %4872 = vmatprep.subr.bf16.mxu0 0
    %4873 = vmatpush1.bf16.msra.mxu0 0
    %4874 = vmatprep.subr.bf16.mxu0 0
    %4875 = vmatpush1.bf16.msra.mxu0 0
    %4876 = vmatprep.subr.bf16.mxu0 0
    %4877 = vmatpush1.bf16.msra.mxu0 0
    %4878 = vmatprep.subr.bf16.mxu0 0
    %4879 = vmatpush1.bf16.msra.mxu0 0
    %4880 = vmatprep.mubr.bf16.mxu0 0
    %4881 = vmatmul.mubr.bf16.gmra.mrb[0].mxu0 %v4339
    %v4882 = vpop.f32.mrb[0].mxu0
    %v4883 = vadd.f32 %v4609, %v4882
    %v4884 = vpop.f32.mrb[0].mxu0
    %v4885 = vadd.f32 %v4611, %v4884
    %v4886 = vpop.f32.mrb[0].mxu0
    %v4887 = vpop.f32.mrb[0].mxu0
    %4888 = vdwg.mxu0
    %v4889 = vxor.u32 %v4842, 2147483648
    %v4890 = vmul.f32 %v4889, 1.442695
    %v4891 = vpow.pop %v4890
    %v4892 = vadd.f32 %v4891, 1.0
    %v4893 = vrcp.pop %v4892
    %v4894 = vmul.f32 1.0, %v4893
    %v4895 = vxor.u32 %v4844, 2147483648
    %v4896 = vmul.f32 %v4895, 1.442695
    %v4897 = vpow.pop %v4896
    %v4898 = vadd.f32 %v4897, 1.0
    %v4899 = vrcp.pop %v4898
    %v4900 = vmul.f32 1.0, %v4899
    %v4901 = vtanh.pop %v4883
    %v4902 = vxor.u32 %v4885, 2147483648
    %v4903 = vmul.f32 %v4902, 1.442695
    %v4904 = vpow.pop %v4903
    %v4905 = vadd.f32 %v4904, 1.0
    %v4906 = vrcp.pop %v4905
    %v4907 = vmul.f32 1.0, %v4906
    %v4908 = vmul.f32 %v4900, %v4025
    %v4909 = vmul.f32 %v4894, %v4901
    %v4910 = vadd.f32 %v4908, %v4909
    %v4911 = vtanh.pop %v4910
    %v4912 = vmul.f32 %v4907, %v4911
    %s4913 = scalar_lea.vmem [#allocation12], 32
    %4914 = vst [vmem:[%s4913] sm:$0xff] %v4912
    %v4915 = vld [vmem:[#allocation9] sm:$0xff]
    %v4916 = vld [vmem:[#allocation9 + $0x8] sm:$0xff]
    %v4917 = vld [vmem:[#allocation9 + $0x10] sm:$0xff]
    %v4918 = vld [vmem:[#allocation9 + $0x18] sm:$0xff]
    %v4919 = vld [vmem:[#allocation9 + $0x20] sm:$0xff]
    %v4920 = vld [vmem:[#allocation9 + $0x28] sm:$0xff]
    %v4921 = vld [vmem:[#allocation9 + $0x30] sm:$0xff]
    %v4922 = vld [vmem:[#allocation9 + $0x38] sm:$0xff]
    %v4923 = vld [vmem:[#allocation9 + $0x40] sm:$0xff]
    %v4924 = vld [vmem:[#allocation9 + $0x48] sm:$0xff]
    %v4925 = vld [vmem:[#allocation9 + $0x50] sm:$0xff]
    %v4926 = vld [vmem:[#allocation9 + $0x58] sm:$0xff]
    %v4927 = vld [vmem:[#allocation9 + $0x60] sm:$0xff]
    %v4928 = vld [vmem:[#allocation9 + $0x68] sm:$0xff]
    %v4929 = vld [vmem:[#allocation9 + $0x70] sm:$0xff]
    %v4930 = vld [vmem:[#allocation9 + $0x78] sm:$0xff]
    %v4931 = vld [vmem:[#allocation9 + $0x80] sm:$0xff]
    %v4932 = vld [vmem:[#allocation9 + $0x88] sm:$0xff]
    %v4933 = vld [vmem:[#allocation9 + $0x90] sm:$0xff]
    %v4934 = vld [vmem:[#allocation9 + $0x98] sm:$0xff]
    %v4935 = vld [vmem:[#allocation9 + $0xa0] sm:$0xff]
    %v4936 = vld [vmem:[#allocation9 + $0xa8] sm:$0xff]
    %v4937 = vld [vmem:[#allocation9 + $0xb0] sm:$0xff]
    %v4938 = vld [vmem:[#allocation9 + $0xb8] sm:$0xff]
    %v4939 = vld [vmem:[#allocation9 + $0xc0] sm:$0xff]
    %v4940 = vld [vmem:[#allocation9 + $0xc8] sm:$0xff]
    %v4941 = vld [vmem:[#allocation9 + $0xd0] sm:$0xff]
    %v4942 = vld [vmem:[#allocation9 + $0xd8] sm:$0xff]
    %v4943 = vld [vmem:[#allocation9 + $0xe0] sm:$0xff]
    %v4944 = vld [vmem:[#allocation9 + $0xe8] sm:$0xff]
    %v4945 = vld [vmem:[#allocation9 + $0xf0] sm:$0xff]
    %v4946 = vld [vmem:[#allocation9 + $0xf8] sm:$0xff]
    %v4979 = vunpack.c.l.b16 %v4915
    %v4980 = vunpack.c.h.b16 %v4915
    %v4981 = vunpack.c.l.b16 %v4916
    %v4982 = vunpack.c.h.b16 %v4916
    %v4983 = vunpack.c.l.b16 %v4917
    %v4984 = vunpack.c.h.b16 %v4917
    %v4985 = vunpack.c.l.b16 %v4918
    %v4986 = vunpack.c.h.b16 %v4918
    %v4987 = vunpack.c.l.b16 %v4919
    %v4988 = vunpack.c.h.b16 %v4919
    %v4989 = vunpack.c.l.b16 %v4920
    %v4990 = vunpack.c.h.b16 %v4920
    %v4991 = vunpack.c.l.b16 %v4921
    %v4992 = vunpack.c.h.b16 %v4921
    %v4993 = vunpack.c.l.b16 %v4922
    %v4994 = vunpack.c.h.b16 %v4922
    %v4995 = vunpack.c.l.b16 %v4923
    %v4996 = vunpack.c.h.b16 %v4923
    %v4997 = vunpack.c.l.b16 %v4924
    %v4998 = vunpack.c.h.b16 %v4924
    %v4999 = vunpack.c.l.b16 %v4925
    %v5000 = vunpack.c.h.b16 %v4925
    %v5001 = vunpack.c.l.b16 %v4926
    %v5002 = vunpack.c.h.b16 %v4926
    %v5003 = vunpack.c.l.b16 %v4927
    %v5004 = vunpack.c.h.b16 %v4927
    %v5005 = vunpack.c.l.b16 %v4928
    %v5006 = vunpack.c.h.b16 %v4928
    %v5007 = vunpack.c.l.b16 %v4929
    %v5008 = vunpack.c.h.b16 %v4929
    %v5009 = vunpack.c.l.b16 %v4930
    %v5010 = vunpack.c.h.b16 %v4930
    %v5011 = vunpack.c.l.b16 %v4931
    %v5012 = vunpack.c.h.b16 %v4931
    %v5013 = vunpack.c.l.b16 %v4932
    %v5014 = vunpack.c.h.b16 %v4932
    %v5015 = vunpack.c.l.b16 %v4933
    %v5016 = vunpack.c.h.b16 %v4933
    %v5017 = vunpack.c.l.b16 %v4934
    %v5018 = vunpack.c.h.b16 %v4934
    %v5019 = vunpack.c.l.b16 %v4935
    %v5020 = vunpack.c.h.b16 %v4935
    %v5021 = vunpack.c.l.b16 %v4936
    %v5022 = vunpack.c.h.b16 %v4936
    %v5023 = vunpack.c.l.b16 %v4937
    %v5024 = vunpack.c.h.b16 %v4937
    %v5025 = vunpack.c.l.b16 %v4938
    %v5026 = vunpack.c.h.b16 %v4938
    %v5027 = vunpack.c.l.b16 %v4939
    %v5028 = vunpack.c.h.b16 %v4939
    %v5029 = vunpack.c.l.b16 %v4940
    %v5030 = vunpack.c.h.b16 %v4940
    %v5031 = vunpack.c.l.b16 %v4941
    %v5032 = vunpack.c.h.b16 %v4941
    %v5033 = vunpack.c.l.b16 %v4942
    %v5034 = vunpack.c.h.b16 %v4942
    %v5035 = vunpack.c.l.b16 %v4943
    %v5036 = vunpack.c.h.b16 %v4943
    %v5037 = vunpack.c.l.b16 %v4944
    %v5038 = vunpack.c.h.b16 %v4944
    %v5039 = vunpack.c.l.b16 %v4945
    %v5040 = vunpack.c.h.b16 %v4945
    %v5041 = vunpack.c.l.b16 %v4946
    %v5042 = vunpack.c.h.b16 %v4946
    %v5043 = vpack.c.b16 %v4983, %v4979
    %v5044 = vpack.c.b16 %v4984, %v4980
    %v5045 = vpack.c.b16 %v4985, %v4981
    %v5046 = vpack.c.b16 %v4986, %v4982
    %v5047 = vpack.c.b16 %v4991, %v4987
    %v5048 = vpack.c.b16 %v4992, %v4988
    %v5049 = vpack.c.b16 %v4993, %v4989
    %v5050 = vpack.c.b16 %v4994, %v4990
    %v5051 = vpack.c.b16 %v4999, %v4995
    %v5052 = vpack.c.b16 %v5000, %v4996
    %v5053 = vpack.c.b16 %v5001, %v4997
    %v5054 = vpack.c.b16 %v5002, %v4998
    %v5055 = vpack.c.b16 %v5007, %v5003
    %v5056 = vpack.c.b16 %v5008, %v5004
    %v5057 = vpack.c.b16 %v5009, %v5005
    %v5058 = vpack.c.b16 %v5010, %v5006
    %v5059 = vpack.c.b16 %v5015, %v5011
    %v5060 = vpack.c.b16 %v5016, %v5012
    %v5061 = vpack.c.b16 %v5017, %v5013
    %v5062 = vpack.c.b16 %v5018, %v5014
    %v5063 = vpack.c.b16 %v5023, %v5019
    %v5064 = vpack.c.b16 %v5024, %v5020
    %v5065 = vpack.c.b16 %v5025, %v5021
    %v5066 = vpack.c.b16 %v5026, %v5022
    %v5067 = vpack.c.b16 %v5031, %v5027
    %v5068 = vpack.c.b16 %v5032, %v5028
    %v5069 = vpack.c.b16 %v5033, %v5029
    %v5070 = vpack.c.b16 %v5034, %v5030
    %v5071 = vpack.c.b16 %v5039, %v5035
    %v5072 = vpack.c.b16 %v5040, %v5036
    %v5073 = vpack.c.b16 %v5041, %v5037
    %v5074 = vpack.c.b16 %v5042, %v5038
    %5107 = vmatprep.subr.bf16.mxu0 %v5044
    %5108 = vmatpush1.bf16.msra.mxu0 %v5043
    %5109 = vmatprep.subr.bf16.mxu0 %v5048
    %5110 = vmatpush1.bf16.msra.mxu0 %v5047
    %5111 = vmatprep.subr.bf16.mxu0 %v5052
    %5112 = vmatpush1.bf16.msra.mxu0 %v5051
    %5113 = vmatprep.subr.bf16.mxu0 %v5056
    %5114 = vmatpush1.bf16.msra.mxu0 %v5055
    %5115 = vmatprep.subr.bf16.mxu0 %v5060
    %5116 = vmatpush1.bf16.msra.mxu0 %v5059
    %5117 = vmatprep.subr.bf16.mxu0 %v5064
    %5118 = vmatpush1.bf16.msra.mxu0 %v5063
    %5119 = vmatprep.subr.bf16.mxu0 %v5068
    %5120 = vmatpush1.bf16.msra.mxu0 %v5067
    %5121 = vmatprep.subr.bf16.mxu0 %v5072
    %5122 = vmatpush1.bf16.msra.mxu0 %v5071
    %5123 = vmatprep.subr.bf16.mxu0 0
    %5124 = vmatpush1.bf16.msra.mxu0 0
    %5125 = vmatprep.subr.bf16.mxu0 0
    %5126 = vmatpush1.bf16.msra.mxu0 0
    %5127 = vmatprep.subr.bf16.mxu0 0
    %5128 = vmatpush1.bf16.msra.mxu0 0
    %5129 = vmatprep.subr.bf16.mxu0 0
    %5130 = vmatpush1.bf16.msra.mxu0 0
    %5131 = vmatprep.subr.bf16.mxu0 0
    %5132 = vmatpush1.bf16.msra.mxu0 0
    %5133 = vmatprep.subr.bf16.mxu0 0
    %5134 = vmatpush1.bf16.msra.mxu0 0
    %5135 = vmatprep.subr.bf16.mxu0 0
    %5136 = vmatpush1.bf16.msra.mxu0 0
    %5137 = vmatprep.subr.bf16.mxu0 0
    %5138 = vmatpush1.bf16.msra.mxu0 0
    %5139 = vmatprep.mubr.bf16.mxu0 0
    %5140 = vmatmul.mubr.bf16.gmra.mrb[0].mxu0 %v4339
    %v5141 = vpop.f32.mrb[0].mxu0
    %v5142 = vadd.f32 0.0, %v5141
    %v5143 = vpop.f32.mrb[0].mxu0
    %v5144 = vadd.f32 0.0, %v5143
    %v5145 = vpop.f32.mrb[0].mxu0
    %v5146 = vpop.f32.mrb[0].mxu0
    %5147 = vdwg.mxu0
    %5148 = vmatprep.subr.bf16.mxu0 %v5046
    %5149 = vmatpush1.bf16.msra.mxu0 %v5045
    %5150 = vmatprep.subr.bf16.mxu0 %v5050
    %5151 = vmatpush1.bf16.msra.mxu0 %v5049
    %5152 = vmatprep.subr.bf16.mxu0 %v5054
    %5153 = vmatpush1.bf16.msra.mxu0 %v5053
    %5154 = vmatprep.subr.bf16.mxu0 %v5058
    %5155 = vmatpush1.bf16.msra.mxu0 %v5057
    %5156 = vmatprep.subr.bf16.mxu0 %v5062
    %5157 = vmatpush1.bf16.msra.mxu0 %v5061
    %5158 = vmatprep.subr.bf16.mxu0 %v5066
    %5159 = vmatpush1.bf16.msra.mxu0 %v5065
    %5160 = vmatprep.subr.bf16.mxu0 %v5070
    %5161 = vmatpush1.bf16.msra.mxu0 %v5069
    %5162 = vmatprep.subr.bf16.mxu0 %v5074
    %5163 = vmatpush1.bf16.msra.mxu0 %v5073
    %5164 = vmatprep.subr.bf16.mxu0 0
    %5165 = vmatpush1.bf16.msra.mxu0 0
    %5166 = vmatprep.subr.bf16.mxu0 0
    %5167 = vmatpush1.bf16.msra.mxu0 0
    %5168 = vmatprep.subr.bf16.mxu0 0
    %5169 = vmatpush1.bf16.msra.mxu0 0
    %5170 = vmatprep.subr.bf16.mxu0 0
    %5171 = vmatpush1.bf16.msra.mxu0 0
    %5172 = vmatprep.subr.bf16.mxu0 0
    %5173 = vmatpush1.bf16.msra.mxu0 0
    %5174 = vmatprep.subr.bf16.mxu0 0
    %5175 = vmatpush1.bf16.msra.mxu0 0
    %5176 = vmatprep.subr.bf16.mxu0 0
    %5177 = vmatpush1.bf16.msra.mxu0 0
    %5178 = vmatprep.subr.bf16.mxu0 0
    %5179 = vmatpush1.bf16.msra.mxu0 0
    %5180 = vmatprep.mubr.bf16.mxu0 0
    %5181 = vmatmul.mubr.bf16.gmra.mrb[0].mxu0 %v4339
    %v5182 = vpop.f32.mrb[0].mxu0
    %v5183 = vadd.f32 0.0, %v5182
    %v5184 = vpop.f32.mrb[0].mxu0
    %v5185 = vadd.f32 0.0, %v5184
    %v5186 = vpop.f32.mrb[0].mxu0
    %v5187 = vpop.f32.mrb[0].mxu0
    %5188 = vdwg.mxu0
    %s5189 = smul.u32 5, 4
    %s5190 = smul.addr %s5189, 8
    %s5191 = scalar_lea.vmem [#allocation2], %s5190
    %v5192 = vld [vmem:[%s5191] sm:$0xff]
    %v5193 = vld [vmem:[%s5191 + $0x8] sm:$0xff]
    %v5194 = vld [vmem:[%s5191 + $0x10] sm:$0xff]
    %v5195 = vld [vmem:[%s5191 + $0x18] sm:$0xff]
    %v5196 = vadd.f32 %v5192, %v5142
    %v5197 = vadd.f32 %v5193, %v5144
    %v5198 = vadd.f32 %v5194, %v5183
    %v5199 = vadd.f32 %v5195, %v5185
    %v5200 = vxor.u32 %v5196, 2147483648
    %v5201 = vmul.f32 %v5200, 1.442695
    %v5202 = vpow.pop %v5201
    %v5203 = vadd.f32 %v5202, 1.0
    %v5204 = vrcp.pop %v5203
    %v5205 = vmul.f32 1.0, %v5204
    %v5206 = vxor.u32 %v5197, 2147483648
    %v5207 = vmul.f32 %v5206, 1.442695
    %v5208 = vpow.pop %v5207
    %v5209 = vadd.f32 %v5208, 1.0
    %v5210 = vrcp.pop %v5209
    %v5211 = vmul.f32 1.0, %v5210
    %v5212 = vtanh.pop %v5198
    %v5213 = vxor.u32 %v5199, 2147483648
    %v5214 = vmul.f32 %v5213, 1.442695
    %v5215 = vpow.pop %v5214
    %v5216 = vadd.f32 %v5215, 1.0
    %v5217 = vrcp.pop %v5216
    %v5218 = vmul.f32 1.0, %v5217
    %v5219 = vmul.f32 %v5211, %v4336
    %v5220 = vmul.f32 %v5205, %v5212
    %v5221 = vadd.f32 %v5219, %v5220
    %v5222 = vtanh.pop %v5221
    %v5223 = vmul.f32 %v5218, %v5222
    %v5224 = vpack.c.bf16 %v5223, %v5223
    %v5225 = vpack.c.bf16 %v4912, %v4912
    %v5226 = vld [vmem:[#allocation11] sm:$0xff]
    %v5227 = vld [vmem:[#allocation11 + $0x8] sm:$0xff]
    %v5228 = vld [vmem:[#allocation11 + $0x10] sm:$0xff]
    %v5229 = vld [vmem:[#allocation11 + $0x18] sm:$0xff]
    %v5230 = vld [vmem:[#allocation11 + $0x20] sm:$0xff]
    %v5231 = vld [vmem:[#allocation11 + $0x28] sm:$0xff]
    %v5232 = vld [vmem:[#allocation11 + $0x30] sm:$0xff]
    %v5233 = vld [vmem:[#allocation11 + $0x38] sm:$0xff]
    %v5234 = vld [vmem:[#allocation11 + $0x40] sm:$0xff]
    %v5235 = vld [vmem:[#allocation11 + $0x48] sm:$0xff]
    %v5236 = vld [vmem:[#allocation11 + $0x50] sm:$0xff]
    %v5237 = vld [vmem:[#allocation11 + $0x58] sm:$0xff]
    %v5238 = vld [vmem:[#allocation11 + $0x60] sm:$0xff]
    %v5239 = vld [vmem:[#allocation11 + $0x68] sm:$0xff]
    %v5240 = vld [vmem:[#allocation11 + $0x70] sm:$0xff]
    %v5241 = vld [vmem:[#allocation11 + $0x78] sm:$0xff]
    %v5242 = vld [vmem:[#allocation11 + $0x80] sm:$0xff]
    %v5243 = vld [vmem:[#allocation11 + $0x88] sm:$0xff]
    %v5244 = vld [vmem:[#allocation11 + $0x90] sm:$0xff]
    %v5245 = vld [vmem:[#allocation11 + $0x98] sm:$0xff]
    %v5246 = vld [vmem:[#allocation11 + $0xa0] sm:$0xff]
    %v5247 = vld [vmem:[#allocation11 + $0xa8] sm:$0xff]
    %v5248 = vld [vmem:[#allocation11 + $0xb0] sm:$0xff]
    %v5249 = vld [vmem:[#allocation11 + $0xb8] sm:$0xff]
    %v5250 = vld [vmem:[#allocation11 + $0xc0] sm:$0xff]
    %v5251 = vld [vmem:[#allocation11 + $0xc8] sm:$0xff]
    %v5252 = vld [vmem:[#allocation11 + $0xd0] sm:$0xff]
    %v5253 = vld [vmem:[#allocation11 + $0xd8] sm:$0xff]
    %v5254 = vld [vmem:[#allocation11 + $0xe0] sm:$0xff]
    %v5255 = vld [vmem:[#allocation11 + $0xe8] sm:$0xff]
    %v5256 = vld [vmem:[#allocation11 + $0xf0] sm:$0xff]
    %v5257 = vld [vmem:[#allocation11 + $0xf8] sm:$0xff]
    %v5290 = vunpack.c.l.b16 %v5226
    %v5291 = vunpack.c.h.b16 %v5226
    %v5292 = vunpack.c.l.b16 %v5227
    %v5293 = vunpack.c.h.b16 %v5227
    %v5294 = vunpack.c.l.b16 %v5228
    %v5295 = vunpack.c.h.b16 %v5228
    %v5296 = vunpack.c.l.b16 %v5229
    %v5297 = vunpack.c.h.b16 %v5229
    %v5298 = vunpack.c.l.b16 %v5230
    %v5299 = vunpack.c.h.b16 %v5230
    %v5300 = vunpack.c.l.b16 %v5231
    %v5301 = vunpack.c.h.b16 %v5231
    %v5302 = vunpack.c.l.b16 %v5232
    %v5303 = vunpack.c.h.b16 %v5232
    %v5304 = vunpack.c.l.b16 %v5233
    %v5305 = vunpack.c.h.b16 %v5233
    %v5306 = vunpack.c.l.b16 %v5234
    %v5307 = vunpack.c.h.b16 %v5234
    %v5308 = vunpack.c.l.b16 %v5235
    %v5309 = vunpack.c.h.b16 %v5235
    %v5310 = vunpack.c.l.b16 %v5236
    %v5311 = vunpack.c.h.b16 %v5236
    %v5312 = vunpack.c.l.b16 %v5237
    %v5313 = vunpack.c.h.b16 %v5237
    %v5314 = vunpack.c.l.b16 %v5238
    %v5315 = vunpack.c.h.b16 %v5238
    %v5316 = vunpack.c.l.b16 %v5239
    %v5317 = vunpack.c.h.b16 %v5239
    %v5318 = vunpack.c.l.b16 %v5240
    %v5319 = vunpack.c.h.b16 %v5240
    %v5320 = vunpack.c.l.b16 %v5241
    %v5321 = vunpack.c.h.b16 %v5241
    %v5322 = vunpack.c.l.b16 %v5242
    %v5323 = vunpack.c.h.b16 %v5242
    %v5324 = vunpack.c.l.b16 %v5243
    %v5325 = vunpack.c.h.b16 %v5243
    %v5326 = vunpack.c.l.b16 %v5244
    %v5327 = vunpack.c.h.b16 %v5244
    %v5328 = vunpack.c.l.b16 %v5245
    %v5329 = vunpack.c.h.b16 %v5245
    %v5330 = vunpack.c.l.b16 %v5246
    %v5331 = vunpack.c.h.b16 %v5246
    %v5332 = vunpack.c.l.b16 %v5247
    %v5333 = vunpack.c.h.b16 %v5247
    %v5334 = vunpack.c.l.b16 %v5248
    %v5335 = vunpack.c.h.b16 %v5248
    %v5336 = vunpack.c.l.b16 %v5249
    %v5337 = vunpack.c.h.b16 %v5249
    %v5338 = vunpack.c.l.b16 %v5250
    %v5339 = vunpack.c.h.b16 %v5250
    %v5340 = vunpack.c.l.b16 %v5251
    %v5341 = vunpack.c.h.b16 %v5251
    %v5342 = vunpack.c.l.b16 %v5252
    %v5343 = vunpack.c.h.b16 %v5252
    %v5344 = vunpack.c.l.b16 %v5253
    %v5345 = vunpack.c.h.b16 %v5253
    %v5346 = vunpack.c.l.b16 %v5254
    %v5347 = vunpack.c.h.b16 %v5254
    %v5348 = vunpack.c.l.b16 %v5255
    %v5349 = vunpack.c.h.b16 %v5255
    %v5350 = vunpack.c.l.b16 %v5256
    %v5351 = vunpack.c.h.b16 %v5256
    %v5352 = vunpack.c.l.b16 %v5257
    %v5353 = vunpack.c.h.b16 %v5257
    %v5354 = vpack.c.b16 %v5294, %v5290
    %v5355 = vpack.c.b16 %v5295, %v5291
    %v5356 = vpack.c.b16 %v5296, %v5292
    %v5357 = vpack.c.b16 %v5297, %v5293
    %v5358 = vpack.c.b16 %v5302, %v5298
    %v5359 = vpack.c.b16 %v5303, %v5299
    %v5360 = vpack.c.b16 %v5304, %v5300
    %v5361 = vpack.c.b16 %v5305, %v5301
    %v5362 = vpack.c.b16 %v5310, %v5306
    %v5363 = vpack.c.b16 %v5311, %v5307
    %v5364 = vpack.c.b16 %v5312, %v5308
    %v5365 = vpack.c.b16 %v5313, %v5309
    %v5366 = vpack.c.b16 %v5318, %v5314
    %v5367 = vpack.c.b16 %v5319, %v5315
    %v5368 = vpack.c.b16 %v5320, %v5316
    %v5369 = vpack.c.b16 %v5321, %v5317
    %v5370 = vpack.c.b16 %v5326, %v5322
    %v5371 = vpack.c.b16 %v5327, %v5323
    %v5372 = vpack.c.b16 %v5328, %v5324
    %v5373 = vpack.c.b16 %v5329, %v5325
    %v5374 = vpack.c.b16 %v5334, %v5330
    %v5375 = vpack.c.b16 %v5335, %v5331
    %v5376 = vpack.c.b16 %v5336, %v5332
    %v5377 = vpack.c.b16 %v5337, %v5333
    %v5378 = vpack.c.b16 %v5342, %v5338
    %v5379 = vpack.c.b16 %v5343, %v5339
    %v5380 = vpack.c.b16 %v5344, %v5340
    %v5381 = vpack.c.b16 %v5345, %v5341
    %v5382 = vpack.c.b16 %v5350, %v5346
    %v5383 = vpack.c.b16 %v5351, %v5347
    %v5384 = vpack.c.b16 %v5352, %v5348
    %v5385 = vpack.c.b16 %v5353, %v5349
    %5418 = vmatprep.subr.bf16.mxu0 %v5355
    %5419 = vmatpush1.bf16.msra.mxu0 %v5354
    %5420 = vmatprep.subr.bf16.mxu0 %v5359
    %5421 = vmatpush1.bf16.msra.mxu0 %v5358
    %5422 = vmatprep.subr.bf16.mxu0 %v5363
    %5423 = vmatpush1.bf16.msra.mxu0 %v5362
    %5424 = vmatprep.subr.bf16.mxu0 %v5367
    %5425 = vmatpush1.bf16.msra.mxu0 %v5366
    %5426 = vmatprep.subr.bf16.mxu0 %v5371
    %5427 = vmatpush1.bf16.msra.mxu0 %v5370
    %5428 = vmatprep.subr.bf16.mxu0 %v5375
    %5429 = vmatpush1.bf16.msra.mxu0 %v5374
    %5430 = vmatprep.subr.bf16.mxu0 %v5379
    %5431 = vmatpush1.bf16.msra.mxu0 %v5378
    %5432 = vmatprep.subr.bf16.mxu0 %v5383
    %5433 = vmatpush1.bf16.msra.mxu0 %v5382
    %5434 = vmatprep.subr.bf16.mxu0 0
    %5435 = vmatpush1.bf16.msra.mxu0 0
    %5436 = vmatprep.subr.bf16.mxu0 0
    %5437 = vmatpush1.bf16.msra.mxu0 0
    %5438 = vmatprep.subr.bf16.mxu0 0
    %5439 = vmatpush1.bf16.msra.mxu0 0
    %5440 = vmatprep.subr.bf16.mxu0 0
    %5441 = vmatpush1.bf16.msra.mxu0 0
    %5442 = vmatprep.subr.bf16.mxu0 0
    %5443 = vmatpush1.bf16.msra.mxu0 0
    %5444 = vmatprep.subr.bf16.mxu0 0
    %5445 = vmatpush1.bf16.msra.mxu0 0
    %5446 = vmatprep.subr.bf16.mxu0 0
    %5447 = vmatpush1.bf16.msra.mxu0 0
    %5448 = vmatprep.subr.bf16.mxu0 0
    %5449 = vmatpush1.bf16.msra.mxu0 0
    %5450 = vmatprep.mubr.bf16.mxu0 0
    %5451 = vmatmul.mubr.bf16.gmra.mrb[0].mxu0 %v5225
    %v5452 = vpop.f32.mrb[0].mxu0
    %v5453 = vadd.f32 0.0, %v5452
    %v5454 = vpop.f32.mrb[0].mxu0
    %v5455 = vadd.f32 0.0, %v5454
    %v5456 = vpop.f32.mrb[0].mxu0
    %v5457 = vpop.f32.mrb[0].mxu0
    %5458 = vdwg.mxu0
    %5459 = vmatprep.subr.bf16.mxu0 %v5357
    %5460 = vmatpush1.bf16.msra.mxu0 %v5356
    %5461 = vmatprep.subr.bf16.mxu0 %v5361
    %5462 = vmatpush1.bf16.msra.mxu0 %v5360
    %5463 = vmatprep.subr.bf16.mxu0 %v5365
    %5464 = vmatpush1.bf16.msra.mxu0 %v5364
    %5465 = vmatprep.subr.bf16.mxu0 %v5369
    %5466 = vmatpush1.bf16.msra.mxu0 %v5368
    %5467 = vmatprep.subr.bf16.mxu0 %v5373
    %5468 = vmatpush1.bf16.msra.mxu0 %v5372
    %5469 = vmatprep.subr.bf16.mxu0 %v5377
    %5470 = vmatpush1.bf16.msra.mxu0 %v5376
    %5471 = vmatprep.subr.bf16.mxu0 %v5381
    %5472 = vmatpush1.bf16.msra.mxu0 %v5380
    %5473 = vmatprep.subr.bf16.mxu0 %v5385
    %5474 = vmatpush1.bf16.msra.mxu0 %v5384
    %5475 = vmatprep.subr.bf16.mxu0 0
    %5476 = vmatpush1.bf16.msra.mxu0 0
    %5477 = vmatprep.subr.bf16.mxu0 0
    %5478 = vmatpush1.bf16.msra.mxu0 0
    %5479 = vmatprep.subr.bf16.mxu0 0
    %5480 = vmatpush1.bf16.msra.mxu0 0
    %5481 = vmatprep.subr.bf16.mxu0 0
    %5482 = vmatpush1.bf16.msra.mxu0 0
    %5483 = vmatprep.subr.bf16.mxu0 0
    %5484 = vmatpush1.bf16.msra.mxu0 0
    %5485 = vmatprep.subr.bf16.mxu0 0
    %5486 = vmatpush1.bf16.msra.mxu0 0
    %5487 = vmatprep.subr.bf16.mxu0 0
    %5488 = vmatpush1.bf16.msra.mxu0 0
    %5489 = vmatprep.subr.bf16.mxu0 0
    %5490 = vmatpush1.bf16.msra.mxu0 0
    %5491 = vmatprep.mubr.bf16.mxu0 0
    %5492 = vmatmul.mubr.bf16.gmra.mrb[0].mxu0 %v5225
    %v5493 = vpop.f32.mrb[0].mxu0
    %v5494 = vadd.f32 0.0, %v5493
    %v5495 = vpop.f32.mrb[0].mxu0
    %v5496 = vadd.f32 0.0, %v5495
    %v5497 = vpop.f32.mrb[0].mxu0
    %v5498 = vpop.f32.mrb[0].mxu0
    %5499 = vdwg.mxu0
    %v5500 = vld [vmem:[#allocation8] sm:$0xff]
    %v5501 = vld [vmem:[#allocation8 + $0x8] sm:$0xff]
    %v5502 = vld [vmem:[#allocation8 + $0x10] sm:$0xff]
    %v5503 = vld [vmem:[#allocation8 + $0x18] sm:$0xff]
    %v5504 = vld [vmem:[#allocation8 + $0x20] sm:$0xff]
    %v5505 = vld [vmem:[#allocation8 + $0x28] sm:$0xff]
    %v5506 = vld [vmem:[#allocation8 + $0x30] sm:$0xff]
    %v5507 = vld [vmem:[#allocation8 + $0x38] sm:$0xff]
    %v5508 = vld [vmem:[#allocation8 + $0x40] sm:$0xff]
    %v5509 = vld [vmem:[#allocation8 + $0x48] sm:$0xff]
    %v5510 = vld [vmem:[#allocation8 + $0x50] sm:$0xff]
    %v5511 = vld [vmem:[#allocation8 + $0x58] sm:$0xff]
    %v5512 = vld [vmem:[#allocation8 + $0x60] sm:$0xff]
    %v5513 = vld [vmem:[#allocation8 + $0x68] sm:$0xff]
    %v5514 = vld [vmem:[#allocation8 + $0x70] sm:$0xff]
    %v5515 = vld [vmem:[#allocation8 + $0x78] sm:$0xff]
    %v5516 = vld [vmem:[#allocation8 + $0x80] sm:$0xff]
    %v5517 = vld [vmem:[#allocation8 + $0x88] sm:$0xff]
    %v5518 = vld [vmem:[#allocation8 + $0x90] sm:$0xff]
    %v5519 = vld [vmem:[#allocation8 + $0x98] sm:$0xff]
    %v5520 = vld [vmem:[#allocation8 + $0xa0] sm:$0xff]
    %v5521 = vld [vmem:[#allocation8 + $0xa8] sm:$0xff]
    %v5522 = vld [vmem:[#allocation8 + $0xb0] sm:$0xff]
    %v5523 = vld [vmem:[#allocation8 + $0xb8] sm:$0xff]
    %v5524 = vld [vmem:[#allocation8 + $0xc0] sm:$0xff]
    %v5525 = vld [vmem:[#allocation8 + $0xc8] sm:$0xff]
    %v5526 = vld [vmem:[#allocation8 + $0xd0] sm:$0xff]
    %v5527 = vld [vmem:[#allocation8 + $0xd8] sm:$0xff]
    %v5528 = vld [vmem:[#allocation8 + $0xe0] sm:$0xff]
    %v5529 = vld [vmem:[#allocation8 + $0xe8] sm:$0xff]
    %v5530 = vld [vmem:[#allocation8 + $0xf0] sm:$0xff]
    %v5531 = vld [vmem:[#allocation8 + $0xf8] sm:$0xff]
    %v5564 = vunpack.c.l.b16 %v5500
    %v5565 = vunpack.c.h.b16 %v5500
    %v5566 = vunpack.c.l.b16 %v5501
    %v5567 = vunpack.c.h.b16 %v5501
    %v5568 = vunpack.c.l.b16 %v5502
    %v5569 = vunpack.c.h.b16 %v5502
    %v5570 = vunpack.c.l.b16 %v5503
    %v5571 = vunpack.c.h.b16 %v5503
    %v5572 = vunpack.c.l.b16 %v5504
    %v5573 = vunpack.c.h.b16 %v5504
    %v5574 = vunpack.c.l.b16 %v5505
    %v5575 = vunpack.c.h.b16 %v5505
    %v5576 = vunpack.c.l.b16 %v5506
    %v5577 = vunpack.c.h.b16 %v5506
    %v5578 = vunpack.c.l.b16 %v5507
    %v5579 = vunpack.c.h.b16 %v5507
    %v5580 = vunpack.c.l.b16 %v5508
    %v5581 = vunpack.c.h.b16 %v5508
    %v5582 = vunpack.c.l.b16 %v5509
    %v5583 = vunpack.c.h.b16 %v5509
    %v5584 = vunpack.c.l.b16 %v5510
    %v5585 = vunpack.c.h.b16 %v5510
    %v5586 = vunpack.c.l.b16 %v5511
    %v5587 = vunpack.c.h.b16 %v5511
    %v5588 = vunpack.c.l.b16 %v5512
    %v5589 = vunpack.c.h.b16 %v5512
    %v5590 = vunpack.c.l.b16 %v5513
    %v5591 = vunpack.c.h.b16 %v5513
    %v5592 = vunpack.c.l.b16 %v5514
    %v5593 = vunpack.c.h.b16 %v5514
    %v5594 = vunpack.c.l.b16 %v5515
    %v5595 = vunpack.c.h.b16 %v5515
    %v5596 = vunpack.c.l.b16 %v5516
    %v5597 = vunpack.c.h.b16 %v5516
    %v5598 = vunpack.c.l.b16 %v5517
    %v5599 = vunpack.c.h.b16 %v5517
    %v5600 = vunpack.c.l.b16 %v5518
    %v5601 = vunpack.c.h.b16 %v5518
    %v5602 = vunpack.c.l.b16 %v5519
    %v5603 = vunpack.c.h.b16 %v5519
    %v5604 = vunpack.c.l.b16 %v5520
    %v5605 = vunpack.c.h.b16 %v5520
    %v5606 = vunpack.c.l.b16 %v5521
    %v5607 = vunpack.c.h.b16 %v5521
    %v5608 = vunpack.c.l.b16 %v5522
    %v5609 = vunpack.c.h.b16 %v5522
    %v5610 = vunpack.c.l.b16 %v5523
    %v5611 = vunpack.c.h.b16 %v5523
    %v5612 = vunpack.c.l.b16 %v5524
    %v5613 = vunpack.c.h.b16 %v5524
    %v5614 = vunpack.c.l.b16 %v5525
    %v5615 = vunpack.c.h.b16 %v5525
    %v5616 = vunpack.c.l.b16 %v5526
    %v5617 = vunpack.c.h.b16 %v5526
    %v5618 = vunpack.c.l.b16 %v5527
    %v5619 = vunpack.c.h.b16 %v5527
    %v5620 = vunpack.c.l.b16 %v5528
    %v5621 = vunpack.c.h.b16 %v5528
    %v5622 = vunpack.c.l.b16 %v5529
    %v5623 = vunpack.c.h.b16 %v5529
    %v5624 = vunpack.c.l.b16 %v5530
    %v5625 = vunpack.c.h.b16 %v5530
    %v5626 = vunpack.c.l.b16 %v5531
    %v5627 = vunpack.c.h.b16 %v5531
    %v5628 = vpack.c.b16 %v5568, %v5564
    %v5629 = vpack.c.b16 %v5569, %v5565
    %v5630 = vpack.c.b16 %v5570, %v5566
    %v5631 = vpack.c.b16 %v5571, %v5567
    %v5632 = vpack.c.b16 %v5576, %v5572
    %v5633 = vpack.c.b16 %v5577, %v5573
    %v5634 = vpack.c.b16 %v5578, %v5574
    %v5635 = vpack.c.b16 %v5579, %v5575
    %v5636 = vpack.c.b16 %v5584, %v5580
    %v5637 = vpack.c.b16 %v5585, %v5581
    %v5638 = vpack.c.b16 %v5586, %v5582
    %v5639 = vpack.c.b16 %v5587, %v5583
    %v5640 = vpack.c.b16 %v5592, %v5588
    %v5641 = vpack.c.b16 %v5593, %v5589
    %v5642 = vpack.c.b16 %v5594, %v5590
    %v5643 = vpack.c.b16 %v5595, %v5591
    %v5644 = vpack.c.b16 %v5600, %v5596
    %v5645 = vpack.c.b16 %v5601, %v5597
    %v5646 = vpack.c.b16 %v5602, %v5598
    %v5647 = vpack.c.b16 %v5603, %v5599
    %v5648 = vpack.c.b16 %v5608, %v5604
    %v5649 = vpack.c.b16 %v5609, %v5605
    %v5650 = vpack.c.b16 %v5610, %v5606
    %v5651 = vpack.c.b16 %v5611, %v5607
    %v5652 = vpack.c.b16 %v5616, %v5612
    %v5653 = vpack.c.b16 %v5617, %v5613
    %v5654 = vpack.c.b16 %v5618, %v5614
    %v5655 = vpack.c.b16 %v5619, %v5615
    %v5656 = vpack.c.b16 %v5624, %v5620
    %v5657 = vpack.c.b16 %v5625, %v5621
    %v5658 = vpack.c.b16 %v5626, %v5622
    %v5659 = vpack.c.b16 %v5627, %v5623
    %5692 = vmatprep.subr.bf16.mxu0 %v5629
    %5693 = vmatpush1.bf16.msra.mxu0 %v5628
    %5694 = vmatprep.subr.bf16.mxu0 %v5633
    %5695 = vmatpush1.bf16.msra.mxu0 %v5632
    %5696 = vmatprep.subr.bf16.mxu0 %v5637
    %5697 = vmatpush1.bf16.msra.mxu0 %v5636
    %5698 = vmatprep.subr.bf16.mxu0 %v5641
    %5699 = vmatpush1.bf16.msra.mxu0 %v5640
    %5700 = vmatprep.subr.bf16.mxu0 %v5645
    %5701 = vmatpush1.bf16.msra.mxu0 %v5644
    %5702 = vmatprep.subr.bf16.mxu0 %v5649
    %5703 = vmatpush1.bf16.msra.mxu0 %v5648
    %5704 = vmatprep.subr.bf16.mxu0 %v5653
    %5705 = vmatpush1.bf16.msra.mxu0 %v5652
    %5706 = vmatprep.subr.bf16.mxu0 %v5657
    %5707 = vmatpush1.bf16.msra.mxu0 %v5656
    %5708 = vmatprep.subr.bf16.mxu0 0
    %5709 = vmatpush1.bf16.msra.mxu0 0
    %5710 = vmatprep.subr.bf16.mxu0 0
    %5711 = vmatpush1.bf16.msra.mxu0 0
    %5712 = vmatprep.subr.bf16.mxu0 0
    %5713 = vmatpush1.bf16.msra.mxu0 0
    %5714 = vmatprep.subr.bf16.mxu0 0
    %5715 = vmatpush1.bf16.msra.mxu0 0
    %5716 = vmatprep.subr.bf16.mxu0 0
    %5717 = vmatpush1.bf16.msra.mxu0 0
    %5718 = vmatprep.subr.bf16.mxu0 0
    %5719 = vmatpush1.bf16.msra.mxu0 0
    %5720 = vmatprep.subr.bf16.mxu0 0
    %5721 = vmatpush1.bf16.msra.mxu0 0
    %5722 = vmatprep.subr.bf16.mxu0 0
    %5723 = vmatpush1.bf16.msra.mxu0 0
    %5724 = vmatprep.mubr.bf16.mxu0 0
    %5725 = vmatmul.mubr.bf16.gmra.mrb[0].mxu0 %v5224
    %v5726 = vpop.f32.mrb[0].mxu0
    %v5727 = vadd.f32 %v5453, %v5726
    %v5728 = vpop.f32.mrb[0].mxu0
    %v5729 = vadd.f32 %v5455, %v5728
    %v5730 = vpop.f32.mrb[0].mxu0
    %v5731 = vpop.f32.mrb[0].mxu0
    %5732 = vdwg.mxu0
    %5733 = vmatprep.subr.bf16.mxu0 %v5631
    %5734 = vmatpush1.bf16.msra.mxu0 %v5630
    %5735 = vmatprep.subr.bf16.mxu0 %v5635
    %5736 = vmatpush1.bf16.msra.mxu0 %v5634
    %5737 = vmatprep.subr.bf16.mxu0 %v5639
    %5738 = vmatpush1.bf16.msra.mxu0 %v5638
    %5739 = vmatprep.subr.bf16.mxu0 %v5643
    %5740 = vmatpush1.bf16.msra.mxu0 %v5642
    %5741 = vmatprep.subr.bf16.mxu0 %v5647
    %5742 = vmatpush1.bf16.msra.mxu0 %v5646
    %5743 = vmatprep.subr.bf16.mxu0 %v5651
    %5744 = vmatpush1.bf16.msra.mxu0 %v5650
    %5745 = vmatprep.subr.bf16.mxu0 %v5655
    %5746 = vmatpush1.bf16.msra.mxu0 %v5654
    %5747 = vmatprep.subr.bf16.mxu0 %v5659
    %5748 = vmatpush1.bf16.msra.mxu0 %v5658
    %5749 = vmatprep.subr.bf16.mxu0 0
    %5750 = vmatpush1.bf16.msra.mxu0 0
    %5751 = vmatprep.subr.bf16.mxu0 0
    %5752 = vmatpush1.bf16.msra.mxu0 0
    %5753 = vmatprep.subr.bf16.mxu0 0
    %5754 = vmatpush1.bf16.msra.mxu0 0
    %5755 = vmatprep.subr.bf16.mxu0 0
    %5756 = vmatpush1.bf16.msra.mxu0 0
    %5757 = vmatprep.subr.bf16.mxu0 0
    %5758 = vmatpush1.bf16.msra.mxu0 0
    %5759 = vmatprep.subr.bf16.mxu0 0
    %5760 = vmatpush1.bf16.msra.mxu0 0
    %5761 = vmatprep.subr.bf16.mxu0 0
    %5762 = vmatpush1.bf16.msra.mxu0 0
    %5763 = vmatprep.subr.bf16.mxu0 0
    %5764 = vmatpush1.bf16.msra.mxu0 0
    %5765 = vmatprep.mubr.bf16.mxu0 0
    %5766 = vmatmul.mubr.bf16.gmra.mrb[0].mxu0 %v5224
    %v5767 = vpop.f32.mrb[0].mxu0
    %v5768 = vadd.f32 %v5494, %v5767
    %v5769 = vpop.f32.mrb[0].mxu0
    %v5770 = vadd.f32 %v5496, %v5769
    %v5771 = vpop.f32.mrb[0].mxu0
    %v5772 = vpop.f32.mrb[0].mxu0
    %5773 = vdwg.mxu0
    %v5774 = vxor.u32 %v5727, 2147483648
    %v5775 = vmul.f32 %v5774, 1.442695
    %v5776 = vpow.pop %v5775
    %v5777 = vadd.f32 %v5776, 1.0
    %v5778 = vrcp.pop %v5777
    %v5779 = vmul.f32 1.0, %v5778
    %v5780 = vxor.u32 %v5729, 2147483648
    %v5781 = vmul.f32 %v5780, 1.442695
    %v5782 = vpow.pop %v5781
    %v5783 = vadd.f32 %v5782, 1.0
    %v5784 = vrcp.pop %v5783
    %v5785 = vmul.f32 1.0, %v5784
    %v5786 = vtanh.pop %v5768
    %v5787 = vxor.u32 %v5770, 2147483648
    %v5788 = vmul.f32 %v5787, 1.442695
    %v5789 = vpow.pop %v5788
    %v5790 = vadd.f32 %v5789, 1.0
    %v5791 = vrcp.pop %v5790
    %v5792 = vmul.f32 1.0, %v5791
    %v5793 = vmul.f32 %v5785, %v4910
    %v5794 = vmul.f32 %v5779, %v5786
    %v5795 = vadd.f32 %v5793, %v5794
    %v5796 = vtanh.pop %v5795
    %v5797 = vmul.f32 %v5792, %v5796
    %s5798 = scalar_lea.vmem [#allocation12], 40
    %5799 = vst [vmem:[%s5798] sm:$0xff] %v5797
    %v5800 = vld [vmem:[#allocation9] sm:$0xff]
    %v5801 = vld [vmem:[#allocation9 + $0x8] sm:$0xff]
    %v5802 = vld [vmem:[#allocation9 + $0x10] sm:$0xff]
    %v5803 = vld [vmem:[#allocation9 + $0x18] sm:$0xff]
    %v5804 = vld [vmem:[#allocation9 + $0x20] sm:$0xff]
    %v5805 = vld [vmem:[#allocation9 + $0x28] sm:$0xff]
    %v5806 = vld [vmem:[#allocation9 + $0x30] sm:$0xff]
    %v5807 = vld [vmem:[#allocation9 + $0x38] sm:$0xff]
    %v5808 = vld [vmem:[#allocation9 + $0x40] sm:$0xff]
    %v5809 = vld [vmem:[#allocation9 + $0x48] sm:$0xff]
    %v5810 = vld [vmem:[#allocation9 + $0x50] sm:$0xff]
    %v5811 = vld [vmem:[#allocation9 + $0x58] sm:$0xff]
    %v5812 = vld [vmem:[#allocation9 + $0x60] sm:$0xff]
    %v5813 = vld [vmem:[#allocation9 + $0x68] sm:$0xff]
    %v5814 = vld [vmem:[#allocation9 + $0x70] sm:$0xff]
    %v5815 = vld [vmem:[#allocation9 + $0x78] sm:$0xff]
    %v5816 = vld [vmem:[#allocation9 + $0x80] sm:$0xff]
    %v5817 = vld [vmem:[#allocation9 + $0x88] sm:$0xff]
    %v5818 = vld [vmem:[#allocation9 + $0x90] sm:$0xff]
    %v5819 = vld [vmem:[#allocation9 + $0x98] sm:$0xff]
    %v5820 = vld [vmem:[#allocation9 + $0xa0] sm:$0xff]
    %v5821 = vld [vmem:[#allocation9 + $0xa8] sm:$0xff]
    %v5822 = vld [vmem:[#allocation9 + $0xb0] sm:$0xff]
    %v5823 = vld [vmem:[#allocation9 + $0xb8] sm:$0xff]
    %v5824 = vld [vmem:[#allocation9 + $0xc0] sm:$0xff]
    %v5825 = vld [vmem:[#allocation9 + $0xc8] sm:$0xff]
    %v5826 = vld [vmem:[#allocation9 + $0xd0] sm:$0xff]
    %v5827 = vld [vmem:[#allocation9 + $0xd8] sm:$0xff]
    %v5828 = vld [vmem:[#allocation9 + $0xe0] sm:$0xff]
    %v5829 = vld [vmem:[#allocation9 + $0xe8] sm:$0xff]
    %v5830 = vld [vmem:[#allocation9 + $0xf0] sm:$0xff]
    %v5831 = vld [vmem:[#allocation9 + $0xf8] sm:$0xff]
    %v5864 = vunpack.c.l.b16 %v5800
    %v5865 = vunpack.c.h.b16 %v5800
    %v5866 = vunpack.c.l.b16 %v5801
    %v5867 = vunpack.c.h.b16 %v5801
    %v5868 = vunpack.c.l.b16 %v5802
    %v5869 = vunpack.c.h.b16 %v5802
    %v5870 = vunpack.c.l.b16 %v5803
    %v5871 = vunpack.c.h.b16 %v5803
    %v5872 = vunpack.c.l.b16 %v5804
    %v5873 = vunpack.c.h.b16 %v5804
    %v5874 = vunpack.c.l.b16 %v5805
    %v5875 = vunpack.c.h.b16 %v5805
    %v5876 = vunpack.c.l.b16 %v5806
    %v5877 = vunpack.c.h.b16 %v5806
    %v5878 = vunpack.c.l.b16 %v5807
    %v5879 = vunpack.c.h.b16 %v5807
    %v5880 = vunpack.c.l.b16 %v5808
    %v5881 = vunpack.c.h.b16 %v5808
    %v5882 = vunpack.c.l.b16 %v5809
    %v5883 = vunpack.c.h.b16 %v5809
    %v5884 = vunpack.c.l.b16 %v5810
    %v5885 = vunpack.c.h.b16 %v5810
    %v5886 = vunpack.c.l.b16 %v5811
    %v5887 = vunpack.c.h.b16 %v5811
    %v5888 = vunpack.c.l.b16 %v5812
    %v5889 = vunpack.c.h.b16 %v5812
    %v5890 = vunpack.c.l.b16 %v5813
    %v5891 = vunpack.c.h.b16 %v5813
    %v5892 = vunpack.c.l.b16 %v5814
    %v5893 = vunpack.c.h.b16 %v5814
    %v5894 = vunpack.c.l.b16 %v5815
    %v5895 = vunpack.c.h.b16 %v5815
    %v5896 = vunpack.c.l.b16 %v5816
    %v5897 = vunpack.c.h.b16 %v5816
    %v5898 = vunpack.c.l.b16 %v5817
    %v5899 = vunpack.c.h.b16 %v5817
    %v5900 = vunpack.c.l.b16 %v5818
    %v5901 = vunpack.c.h.b16 %v5818
    %v5902 = vunpack.c.l.b16 %v5819
    %v5903 = vunpack.c.h.b16 %v5819
    %v5904 = vunpack.c.l.b16 %v5820
    %v5905 = vunpack.c.h.b16 %v5820
    %v5906 = vunpack.c.l.b16 %v5821
    %v5907 = vunpack.c.h.b16 %v5821
    %v5908 = vunpack.c.l.b16 %v5822
    %v5909 = vunpack.c.h.b16 %v5822
    %v5910 = vunpack.c.l.b16 %v5823
    %v5911 = vunpack.c.h.b16 %v5823
    %v5912 = vunpack.c.l.b16 %v5824
    %v5913 = vunpack.c.h.b16 %v5824
    %v5914 = vunpack.c.l.b16 %v5825
    %v5915 = vunpack.c.h.b16 %v5825
    %v5916 = vunpack.c.l.b16 %v5826
    %v5917 = vunpack.c.h.b16 %v5826
    %v5918 = vunpack.c.l.b16 %v5827
    %v5919 = vunpack.c.h.b16 %v5827
    %v5920 = vunpack.c.l.b16 %v5828
    %v5921 = vunpack.c.h.b16 %v5828
    %v5922 = vunpack.c.l.b16 %v5829
    %v5923 = vunpack.c.h.b16 %v5829
    %v5924 = vunpack.c.l.b16 %v5830
    %v5925 = vunpack.c.h.b16 %v5830
    %v5926 = vunpack.c.l.b16 %v5831
    %v5927 = vunpack.c.h.b16 %v5831
    %v5928 = vpack.c.b16 %v5868, %v5864
    %v5929 = vpack.c.b16 %v5869, %v5865
    %v5930 = vpack.c.b16 %v5870, %v5866
    %v5931 = vpack.c.b16 %v5871, %v5867
    %v5932 = vpack.c.b16 %v5876, %v5872
    %v5933 = vpack.c.b16 %v5877, %v5873
    %v5934 = vpack.c.b16 %v5878, %v5874
    %v5935 = vpack.c.b16 %v5879, %v5875
    %v5936 = vpack.c.b16 %v5884, %v5880
    %v5937 = vpack.c.b16 %v5885, %v5881
    %v5938 = vpack.c.b16 %v5886, %v5882
    %v5939 = vpack.c.b16 %v5887, %v5883
    %v5940 = vpack.c.b16 %v5892, %v5888
    %v5941 = vpack.c.b16 %v5893, %v5889
    %v5942 = vpack.c.b16 %v5894, %v5890
    %v5943 = vpack.c.b16 %v5895, %v5891
    %v5944 = vpack.c.b16 %v5900, %v5896
    %v5945 = vpack.c.b16 %v5901, %v5897
    %v5946 = vpack.c.b16 %v5902, %v5898
    %v5947 = vpack.c.b16 %v5903, %v5899
    %v5948 = vpack.c.b16 %v5908, %v5904
    %v5949 = vpack.c.b16 %v5909, %v5905
    %v5950 = vpack.c.b16 %v5910, %v5906
    %v5951 = vpack.c.b16 %v5911, %v5907
    %v5952 = vpack.c.b16 %v5916, %v5912
    %v5953 = vpack.c.b16 %v5917, %v5913
    %v5954 = vpack.c.b16 %v5918, %v5914
    %v5955 = vpack.c.b16 %v5919, %v5915
    %v5956 = vpack.c.b16 %v5924, %v5920
    %v5957 = vpack.c.b16 %v5925, %v5921
    %v5958 = vpack.c.b16 %v5926, %v5922
    %v5959 = vpack.c.b16 %v5927, %v5923
    %5992 = vmatprep.subr.bf16.mxu0 %v5929
    %5993 = vmatpush1.bf16.msra.mxu0 %v5928
    %5994 = vmatprep.subr.bf16.mxu0 %v5933
    %5995 = vmatpush1.bf16.msra.mxu0 %v5932
    %5996 = vmatprep.subr.bf16.mxu0 %v5937
    %5997 = vmatpush1.bf16.msra.mxu0 %v5936
    %5998 = vmatprep.subr.bf16.mxu0 %v5941
    %5999 = vmatpush1.bf16.msra.mxu0 %v5940
    %6000 = vmatprep.subr.bf16.mxu0 %v5945
    %6001 = vmatpush1.bf16.msra.mxu0 %v5944
    %6002 = vmatprep.subr.bf16.mxu0 %v5949
    %6003 = vmatpush1.bf16.msra.mxu0 %v5948
    %6004 = vmatprep.subr.bf16.mxu0 %v5953
    %6005 = vmatpush1.bf16.msra.mxu0 %v5952
    %6006 = vmatprep.subr.bf16.mxu0 %v5957
    %6007 = vmatpush1.bf16.msra.mxu0 %v5956
    %6008 = vmatprep.subr.bf16.mxu0 0
    %6009 = vmatpush1.bf16.msra.mxu0 0
    %6010 = vmatprep.subr.bf16.mxu0 0
    %6011 = vmatpush1.bf16.msra.mxu0 0
    %6012 = vmatprep.subr.bf16.mxu0 0
    %6013 = vmatpush1.bf16.msra.mxu0 0
    %6014 = vmatprep.subr.bf16.mxu0 0
    %6015 = vmatpush1.bf16.msra.mxu0 0
    %6016 = vmatprep.subr.bf16.mxu0 0
    %6017 = vmatpush1.bf16.msra.mxu0 0
    %6018 = vmatprep.subr.bf16.mxu0 0
    %6019 = vmatpush1.bf16.msra.mxu0 0
    %6020 = vmatprep.subr.bf16.mxu0 0
    %6021 = vmatpush1.bf16.msra.mxu0 0
    %6022 = vmatprep.subr.bf16.mxu0 0
    %6023 = vmatpush1.bf16.msra.mxu0 0
    %6024 = vmatprep.mubr.bf16.mxu0 0
    %6025 = vmatmul.mubr.bf16.gmra.mrb[0].mxu0 %v5224
    %v6026 = vpop.f32.mrb[0].mxu0
    %v6027 = vadd.f32 0.0, %v6026
    %v6028 = vpop.f32.mrb[0].mxu0
    %v6029 = vadd.f32 0.0, %v6028
    %v6030 = vpop.f32.mrb[0].mxu0
    %v6031 = vpop.f32.mrb[0].mxu0
    %6032 = vdwg.mxu0
    %6033 = vmatprep.subr.bf16.mxu0 %v5931
    %6034 = vmatpush1.bf16.msra.mxu0 %v5930
    %6035 = vmatprep.subr.bf16.mxu0 %v5935
    %6036 = vmatpush1.bf16.msra.mxu0 %v5934
    %6037 = vmatprep.subr.bf16.mxu0 %v5939
    %6038 = vmatpush1.bf16.msra.mxu0 %v5938
    %6039 = vmatprep.subr.bf16.mxu0 %v5943
    %6040 = vmatpush1.bf16.msra.mxu0 %v5942
    %6041 = vmatprep.subr.bf16.mxu0 %v5947
    %6042 = vmatpush1.bf16.msra.mxu0 %v5946
    %6043 = vmatprep.subr.bf16.mxu0 %v5951
    %6044 = vmatpush1.bf16.msra.mxu0 %v5950
    %6045 = vmatprep.subr.bf16.mxu0 %v5955
    %6046 = vmatpush1.bf16.msra.mxu0 %v5954
    %6047 = vmatprep.subr.bf16.mxu0 %v5959
    %6048 = vmatpush1.bf16.msra.mxu0 %v5958
    %6049 = vmatprep.subr.bf16.mxu0 0
    %6050 = vmatpush1.bf16.msra.mxu0 0
    %6051 = vmatprep.subr.bf16.mxu0 0
    %6052 = vmatpush1.bf16.msra.mxu0 0
    %6053 = vmatprep.subr.bf16.mxu0 0
    %6054 = vmatpush1.bf16.msra.mxu0 0
    %6055 = vmatprep.subr.bf16.mxu0 0
    %6056 = vmatpush1.bf16.msra.mxu0 0
    %6057 = vmatprep.subr.bf16.mxu0 0
    %6058 = vmatpush1.bf16.msra.mxu0 0
    %6059 = vmatprep.subr.bf16.mxu0 0
    %6060 = vmatpush1.bf16.msra.mxu0 0
    %6061 = vmatprep.subr.bf16.mxu0 0
    %6062 = vmatpush1.bf16.msra.mxu0 0
    %6063 = vmatprep.subr.bf16.mxu0 0
    %6064 = vmatpush1.bf16.msra.mxu0 0
    %6065 = vmatprep.mubr.bf16.mxu0 0
    %6066 = vmatmul.mubr.bf16.gmra.mrb[0].mxu0 %v5224
    %v6067 = vpop.f32.mrb[0].mxu0
    %v6068 = vadd.f32 0.0, %v6067
    %v6069 = vpop.f32.mrb[0].mxu0
    %v6070 = vadd.f32 0.0, %v6069
    %v6071 = vpop.f32.mrb[0].mxu0
    %v6072 = vpop.f32.mrb[0].mxu0
    %6073 = vdwg.mxu0
    %s6074 = smul.u32 6, 4
    %s6075 = smul.addr %s6074, 8
    %s6076 = scalar_lea.vmem [#allocation2], %s6075
    %v6077 = vld [vmem:[%s6076] sm:$0xff]
    %v6078 = vld [vmem:[%s6076 + $0x8] sm:$0xff]
    %v6079 = vld [vmem:[%s6076 + $0x10] sm:$0xff]
    %v6080 = vld [vmem:[%s6076 + $0x18] sm:$0xff]
    %v6081 = vadd.f32 %v6077, %v6027
    %v6082 = vadd.f32 %v6078, %v6029
    %v6083 = vadd.f32 %v6079, %v6068
    %v6084 = vadd.f32 %v6080, %v6070
    %v6085 = vxor.u32 %v6081, 2147483648
    %v6086 = vmul.f32 %v6085, 1.442695
    %v6087 = vpow.pop %v6086
    %v6088 = vadd.f32 %v6087, 1.0
    %v6089 = vrcp.pop %v6088
    %v6090 = vmul.f32 1.0, %v6089
    %v6091 = vxor.u32 %v6082, 2147483648
    %v6092 = vmul.f32 %v6091, 1.442695
    %v6093 = vpow.pop %v6092
    %v6094 = vadd.f32 %v6093, 1.0
    %v6095 = vrcp.pop %v6094
    %v6096 = vmul.f32 1.0, %v6095
    %v6097 = vtanh.pop %v6083
    %v6098 = vxor.u32 %v6084, 2147483648
    %v6099 = vmul.f32 %v6098, 1.442695
    %v6100 = vpow.pop %v6099
    %v6101 = vadd.f32 %v6100, 1.0
    %v6102 = vrcp.pop %v6101
    %v6103 = vmul.f32 1.0, %v6102
    %v6104 = vmul.f32 %v6096, %v5221
    %v6105 = vmul.f32 %v6090, %v6097
    %v6106 = vadd.f32 %v6104, %v6105
    %v6107 = vtanh.pop %v6106
    %v6108 = vmul.f32 %v6103, %v6107
    %v6109 = vpack.c.bf16 %v6108, %v6108
    %v6110 = vpack.c.bf16 %v5797, %v5797
    %v6111 = vld [vmem:[#allocation11] sm:$0xff]
    %v6112 = vld [vmem:[#allocation11 + $0x8] sm:$0xff]
    %v6113 = vld [vmem:[#allocation11 + $0x10] sm:$0xff]
    %v6114 = vld [vmem:[#allocation11 + $0x18] sm:$0xff]
    %v6115 = vld [vmem:[#allocation11 + $0x20] sm:$0xff]
    %v6116 = vld [vmem:[#allocation11 + $0x28] sm:$0xff]
    %v6117 = vld [vmem:[#allocation11 + $0x30] sm:$0xff]
    %v6118 = vld [vmem:[#allocation11 + $0x38] sm:$0xff]
    %v6119 = vld [vmem:[#allocation11 + $0x40] sm:$0xff]
    %v6120 = vld [vmem:[#allocation11 + $0x48] sm:$0xff]
    %v6121 = vld [vmem:[#allocation11 + $0x50] sm:$0xff]
    %v6122 = vld [vmem:[#allocation11 + $0x58] sm:$0xff]
    %v6123 = vld [vmem:[#allocation11 + $0x60] sm:$0xff]
    %v6124 = vld [vmem:[#allocation11 + $0x68] sm:$0xff]
    %v6125 = vld [vmem:[#allocation11 + $0x70] sm:$0xff]
    %v6126 = vld [vmem:[#allocation11 + $0x78] sm:$0xff]
    %v6127 = vld [vmem:[#allocation11 + $0x80] sm:$0xff]
    %v6128 = vld [vmem:[#allocation11 + $0x88] sm:$0xff]
    %v6129 = vld [vmem:[#allocation11 + $0x90] sm:$0xff]
    %v6130 = vld [vmem:[#allocation11 + $0x98] sm:$0xff]
    %v6131 = vld [vmem:[#allocation11 + $0xa0] sm:$0xff]
    %v6132 = vld [vmem:[#allocation11 + $0xa8] sm:$0xff]
    %v6133 = vld [vmem:[#allocation11 + $0xb0] sm:$0xff]
    %v6134 = vld [vmem:[#allocation11 + $0xb8] sm:$0xff]
    %v6135 = vld [vmem:[#allocation11 + $0xc0] sm:$0xff]
    %v6136 = vld [vmem:[#allocation11 + $0xc8] sm:$0xff]
    %v6137 = vld [vmem:[#allocation11 + $0xd0] sm:$0xff]
    %v6138 = vld [vmem:[#allocation11 + $0xd8] sm:$0xff]
    %v6139 = vld [vmem:[#allocation11 + $0xe0] sm:$0xff]
    %v6140 = vld [vmem:[#allocation11 + $0xe8] sm:$0xff]
    %v6141 = vld [vmem:[#allocation11 + $0xf0] sm:$0xff]
    %v6142 = vld [vmem:[#allocation11 + $0xf8] sm:$0xff]
    %v6175 = vunpack.c.l.b16 %v6111
    %v6176 = vunpack.c.h.b16 %v6111
    %v6177 = vunpack.c.l.b16 %v6112
    %v6178 = vunpack.c.h.b16 %v6112
    %v6179 = vunpack.c.l.b16 %v6113
    %v6180 = vunpack.c.h.b16 %v6113
    %v6181 = vunpack.c.l.b16 %v6114
    %v6182 = vunpack.c.h.b16 %v6114
    %v6183 = vunpack.c.l.b16 %v6115
    %v6184 = vunpack.c.h.b16 %v6115
    %v6185 = vunpack.c.l.b16 %v6116
    %v6186 = vunpack.c.h.b16 %v6116
    %v6187 = vunpack.c.l.b16 %v6117
    %v6188 = vunpack.c.h.b16 %v6117
    %v6189 = vunpack.c.l.b16 %v6118
    %v6190 = vunpack.c.h.b16 %v6118
    %v6191 = vunpack.c.l.b16 %v6119
    %v6192 = vunpack.c.h.b16 %v6119
    %v6193 = vunpack.c.l.b16 %v6120
    %v6194 = vunpack.c.h.b16 %v6120
    %v6195 = vunpack.c.l.b16 %v6121
    %v6196 = vunpack.c.h.b16 %v6121
    %v6197 = vunpack.c.l.b16 %v6122
    %v6198 = vunpack.c.h.b16 %v6122
    %v6199 = vunpack.c.l.b16 %v6123
    %v6200 = vunpack.c.h.b16 %v6123
    %v6201 = vunpack.c.l.b16 %v6124
    %v6202 = vunpack.c.h.b16 %v6124
    %v6203 = vunpack.c.l.b16 %v6125
    %v6204 = vunpack.c.h.b16 %v6125
    %v6205 = vunpack.c.l.b16 %v6126
    %v6206 = vunpack.c.h.b16 %v6126
    %v6207 = vunpack.c.l.b16 %v6127
    %v6208 = vunpack.c.h.b16 %v6127
    %v6209 = vunpack.c.l.b16 %v6128
    %v6210 = vunpack.c.h.b16 %v6128
    %v6211 = vunpack.c.l.b16 %v6129
    %v6212 = vunpack.c.h.b16 %v6129
    %v6213 = vunpack.c.l.b16 %v6130
    %v6214 = vunpack.c.h.b16 %v6130
    %v6215 = vunpack.c.l.b16 %v6131
    %v6216 = vunpack.c.h.b16 %v6131
    %v6217 = vunpack.c.l.b16 %v6132
    %v6218 = vunpack.c.h.b16 %v6132
    %v6219 = vunpack.c.l.b16 %v6133
    %v6220 = vunpack.c.h.b16 %v6133
    %v6221 = vunpack.c.l.b16 %v6134
    %v6222 = vunpack.c.h.b16 %v6134
    %v6223 = vunpack.c.l.b16 %v6135
    %v6224 = vunpack.c.h.b16 %v6135
    %v6225 = vunpack.c.l.b16 %v6136
    %v6226 = vunpack.c.h.b16 %v6136
    %v6227 = vunpack.c.l.b16 %v6137
    %v6228 = vunpack.c.h.b16 %v6137
    %v6229 = vunpack.c.l.b16 %v6138
    %v6230 = vunpack.c.h.b16 %v6138
    %v6231 = vunpack.c.l.b16 %v6139
    %v6232 = vunpack.c.h.b16 %v6139
    %v6233 = vunpack.c.l.b16 %v6140
    %v6234 = vunpack.c.h.b16 %v6140
    %v6235 = vunpack.c.l.b16 %v6141
    %v6236 = vunpack.c.h.b16 %v6141
    %v6237 = vunpack.c.l.b16 %v6142
    %v6238 = vunpack.c.h.b16 %v6142
    %v6239 = vpack.c.b16 %v6179, %v6175
    %v6240 = vpack.c.b16 %v6180, %v6176
    %v6241 = vpack.c.b16 %v6181, %v6177
    %v6242 = vpack.c.b16 %v6182, %v6178
    %v6243 = vpack.c.b16 %v6187, %v6183
    %v6244 = vpack.c.b16 %v6188, %v6184
    %v6245 = vpack.c.b16 %v6189, %v6185
    %v6246 = vpack.c.b16 %v6190, %v6186
    %v6247 = vpack.c.b16 %v6195, %v6191
    %v6248 = vpack.c.b16 %v6196, %v6192
    %v6249 = vpack.c.b16 %v6197, %v6193
    %v6250 = vpack.c.b16 %v6198, %v6194
    %v6251 = vpack.c.b16 %v6203, %v6199
    %v6252 = vpack.c.b16 %v6204, %v6200
    %v6253 = vpack.c.b16 %v6205, %v6201
    %v6254 = vpack.c.b16 %v6206, %v6202
    %v6255 = vpack.c.b16 %v6211, %v6207
    %v6256 = vpack.c.b16 %v6212, %v6208
    %v6257 = vpack.c.b16 %v6213, %v6209
    %v6258 = vpack.c.b16 %v6214, %v6210
    %v6259 = vpack.c.b16 %v6219, %v6215
    %v6260 = vpack.c.b16 %v6220, %v6216
    %v6261 = vpack.c.b16 %v6221, %v6217
    %v6262 = vpack.c.b16 %v6222, %v6218
    %v6263 = vpack.c.b16 %v6227, %v6223
    %v6264 = vpack.c.b16 %v6228, %v6224
    %v6265 = vpack.c.b16 %v6229, %v6225
    %v6266 = vpack.c.b16 %v6230, %v6226
    %v6267 = vpack.c.b16 %v6235, %v6231
    %v6268 = vpack.c.b16 %v6236, %v6232
    %v6269 = vpack.c.b16 %v6237, %v6233
    %v6270 = vpack.c.b16 %v6238, %v6234
    %6303 = vmatprep.subr.bf16.mxu0 %v6240
    %6304 = vmatpush1.bf16.msra.mxu0 %v6239
    %6305 = vmatprep.subr.bf16.mxu0 %v6244
    %6306 = vmatpush1.bf16.msra.mxu0 %v6243
    %6307 = vmatprep.subr.bf16.mxu0 %v6248
    %6308 = vmatpush1.bf16.msra.mxu0 %v6247
    %6309 = vmatprep.subr.bf16.mxu0 %v6252
    %6310 = vmatpush1.bf16.msra.mxu0 %v6251
    %6311 = vmatprep.subr.bf16.mxu0 %v6256
    %6312 = vmatpush1.bf16.msra.mxu0 %v6255
    %6313 = vmatprep.subr.bf16.mxu0 %v6260
    %6314 = vmatpush1.bf16.msra.mxu0 %v6259
    %6315 = vmatprep.subr.bf16.mxu0 %v6264
    %6316 = vmatpush1.bf16.msra.mxu0 %v6263
    %6317 = vmatprep.subr.bf16.mxu0 %v6268
    %6318 = vmatpush1.bf16.msra.mxu0 %v6267
    %6319 = vmatprep.subr.bf16.mxu0 0
    %6320 = vmatpush1.bf16.msra.mxu0 0
    %6321 = vmatprep.subr.bf16.mxu0 0
    %6322 = vmatpush1.bf16.msra.mxu0 0
    %6323 = vmatprep.subr.bf16.mxu0 0
    %6324 = vmatpush1.bf16.msra.mxu0 0
    %6325 = vmatprep.subr.bf16.mxu0 0
    %6326 = vmatpush1.bf16.msra.mxu0 0
    %6327 = vmatprep.subr.bf16.mxu0 0
    %6328 = vmatpush1.bf16.msra.mxu0 0
    %6329 = vmatprep.subr.bf16.mxu0 0
    %6330 = vmatpush1.bf16.msra.mxu0 0
    %6331 = vmatprep.subr.bf16.mxu0 0
    %6332 = vmatpush1.bf16.msra.mxu0 0
    %6333 = vmatprep.subr.bf16.mxu0 0
    %6334 = vmatpush1.bf16.msra.mxu0 0
    %6335 = vmatprep.mubr.bf16.mxu0 0
    %6336 = vmatmul.mubr.bf16.gmra.mrb[0].mxu0 %v6110
    %v6337 = vpop.f32.mrb[0].mxu0
    %v6338 = vadd.f32 0.0, %v6337
    %v6339 = vpop.f32.mrb[0].mxu0
    %v6340 = vadd.f32 0.0, %v6339
    %v6341 = vpop.f32.mrb[0].mxu0
    %v6342 = vpop.f32.mrb[0].mxu0
    %6343 = vdwg.mxu0
    %6344 = vmatprep.subr.bf16.mxu0 %v6242
    %6345 = vmatpush1.bf16.msra.mxu0 %v6241
    %6346 = vmatprep.subr.bf16.mxu0 %v6246
    %6347 = vmatpush1.bf16.msra.mxu0 %v6245
    %6348 = vmatprep.subr.bf16.mxu0 %v6250
    %6349 = vmatpush1.bf16.msra.mxu0 %v6249
    %6350 = vmatprep.subr.bf16.mxu0 %v6254
    %6351 = vmatpush1.bf16.msra.mxu0 %v6253
    %6352 = vmatprep.subr.bf16.mxu0 %v6258
    %6353 = vmatpush1.bf16.msra.mxu0 %v6257
    %6354 = vmatprep.subr.bf16.mxu0 %v6262
    %6355 = vmatpush1.bf16.msra.mxu0 %v6261
    %6356 = vmatprep.subr.bf16.mxu0 %v6266
    %6357 = vmatpush1.bf16.msra.mxu0 %v6265
    %6358 = vmatprep.subr.bf16.mxu0 %v6270
    %6359 = vmatpush1.bf16.msra.mxu0 %v6269
    %6360 = vmatprep.subr.bf16.mxu0 0
    %6361 = vmatpush1.bf16.msra.mxu0 0
    %6362 = vmatprep.subr.bf16.mxu0 0
    %6363 = vmatpush1.bf16.msra.mxu0 0
    %6364 = vmatprep.subr.bf16.mxu0 0
    %6365 = vmatpush1.bf16.msra.mxu0 0
    %6366 = vmatprep.subr.bf16.mxu0 0
    %6367 = vmatpush1.bf16.msra.mxu0 0
    %6368 = vmatprep.subr.bf16.mxu0 0
    %6369 = vmatpush1.bf16.msra.mxu0 0
    %6370 = vmatprep.subr.bf16.mxu0 0
    %6371 = vmatpush1.bf16.msra.mxu0 0
    %6372 = vmatprep.subr.bf16.mxu0 0
    %6373 = vmatpush1.bf16.msra.mxu0 0
    %6374 = vmatprep.subr.bf16.mxu0 0
    %6375 = vmatpush1.bf16.msra.mxu0 0
    %6376 = vmatprep.mubr.bf16.mxu0 0
    %6377 = vmatmul.mubr.bf16.gmra.mrb[0].mxu0 %v6110
    %v6378 = vpop.f32.mrb[0].mxu0
    %v6379 = vadd.f32 0.0, %v6378
    %v6380 = vpop.f32.mrb[0].mxu0
    %v6381 = vadd.f32 0.0, %v6380
    %v6382 = vpop.f32.mrb[0].mxu0
    %v6383 = vpop.f32.mrb[0].mxu0
    %6384 = vdwg.mxu0
    %v6385 = vld [vmem:[#allocation8] sm:$0xff]
    %v6386 = vld [vmem:[#allocation8 + $0x8] sm:$0xff]
    %v6387 = vld [vmem:[#allocation8 + $0x10] sm:$0xff]
    %v6388 = vld [vmem:[#allocation8 + $0x18] sm:$0xff]
    %v6389 = vld [vmem:[#allocation8 + $0x20] sm:$0xff]
    %v6390 = vld [vmem:[#allocation8 + $0x28] sm:$0xff]
    %v6391 = vld [vmem:[#allocation8 + $0x30] sm:$0xff]
    %v6392 = vld [vmem:[#allocation8 + $0x38] sm:$0xff]
    %v6393 = vld [vmem:[#allocation8 + $0x40] sm:$0xff]
    %v6394 = vld [vmem:[#allocation8 + $0x48] sm:$0xff]
    %v6395 = vld [vmem:[#allocation8 + $0x50] sm:$0xff]
    %v6396 = vld [vmem:[#allocation8 + $0x58] sm:$0xff]
    %v6397 = vld [vmem:[#allocation8 + $0x60] sm:$0xff]
    %v6398 = vld [vmem:[#allocation8 + $0x68] sm:$0xff]
    %v6399 = vld [vmem:[#allocation8 + $0x70] sm:$0xff]
    %v6400 = vld [vmem:[#allocation8 + $0x78] sm:$0xff]
    %v6401 = vld [vmem:[#allocation8 + $0x80] sm:$0xff]
    %v6402 = vld [vmem:[#allocation8 + $0x88] sm:$0xff]
    %v6403 = vld [vmem:[#allocation8 + $0x90] sm:$0xff]
    %v6404 = vld [vmem:[#allocation8 + $0x98] sm:$0xff]
    %v6405 = vld [vmem:[#allocation8 + $0xa0] sm:$0xff]
    %v6406 = vld [vmem:[#allocation8 + $0xa8] sm:$0xff]
    %v6407 = vld [vmem:[#allocation8 + $0xb0] sm:$0xff]
    %v6408 = vld [vmem:[#allocation8 + $0xb8] sm:$0xff]
    %v6409 = vld [vmem:[#allocation8 + $0xc0] sm:$0xff]
    %v6410 = vld [vmem:[#allocation8 + $0xc8] sm:$0xff]
    %v6411 = vld [vmem:[#allocation8 + $0xd0] sm:$0xff]
    %v6412 = vld [vmem:[#allocation8 + $0xd8] sm:$0xff]
    %v6413 = vld [vmem:[#allocation8 + $0xe0] sm:$0xff]
    %v6414 = vld [vmem:[#allocation8 + $0xe8] sm:$0xff]
    %v6415 = vld [vmem:[#allocation8 + $0xf0] sm:$0xff]
    %v6416 = vld [vmem:[#allocation8 + $0xf8] sm:$0xff]
    %v6449 = vunpack.c.l.b16 %v6385
    %v6450 = vunpack.c.h.b16 %v6385
    %v6451 = vunpack.c.l.b16 %v6386
    %v6452 = vunpack.c.h.b16 %v6386
    %v6453 = vunpack.c.l.b16 %v6387
    %v6454 = vunpack.c.h.b16 %v6387
    %v6455 = vunpack.c.l.b16 %v6388
    %v6456 = vunpack.c.h.b16 %v6388
    %v6457 = vunpack.c.l.b16 %v6389
    %v6458 = vunpack.c.h.b16 %v6389
    %v6459 = vunpack.c.l.b16 %v6390
    %v6460 = vunpack.c.h.b16 %v6390
    %v6461 = vunpack.c.l.b16 %v6391
    %v6462 = vunpack.c.h.b16 %v6391
    %v6463 = vunpack.c.l.b16 %v6392
    %v6464 = vunpack.c.h.b16 %v6392
    %v6465 = vunpack.c.l.b16 %v6393
    %v6466 = vunpack.c.h.b16 %v6393
    %v6467 = vunpack.c.l.b16 %v6394
    %v6468 = vunpack.c.h.b16 %v6394
    %v6469 = vunpack.c.l.b16 %v6395
    %v6470 = vunpack.c.h.b16 %v6395
    %v6471 = vunpack.c.l.b16 %v6396
    %v6472 = vunpack.c.h.b16 %v6396
    %v6473 = vunpack.c.l.b16 %v6397
    %v6474 = vunpack.c.h.b16 %v6397
    %v6475 = vunpack.c.l.b16 %v6398
    %v6476 = vunpack.c.h.b16 %v6398
    %v6477 = vunpack.c.l.b16 %v6399
    %v6478 = vunpack.c.h.b16 %v6399
    %v6479 = vunpack.c.l.b16 %v6400
    %v6480 = vunpack.c.h.b16 %v6400
    %v6481 = vunpack.c.l.b16 %v6401
    %v6482 = vunpack.c.h.b16 %v6401
    %v6483 = vunpack.c.l.b16 %v6402
    %v6484 = vunpack.c.h.b16 %v6402
    %v6485 = vunpack.c.l.b16 %v6403
    %v6486 = vunpack.c.h.b16 %v6403
    %v6487 = vunpack.c.l.b16 %v6404
    %v6488 = vunpack.c.h.b16 %v6404
    %v6489 = vunpack.c.l.b16 %v6405
    %v6490 = vunpack.c.h.b16 %v6405
    %v6491 = vunpack.c.l.b16 %v6406
    %v6492 = vunpack.c.h.b16 %v6406
    %v6493 = vunpack.c.l.b16 %v6407
    %v6494 = vunpack.c.h.b16 %v6407
    %v6495 = vunpack.c.l.b16 %v6408
    %v6496 = vunpack.c.h.b16 %v6408
    %v6497 = vunpack.c.l.b16 %v6409
    %v6498 = vunpack.c.h.b16 %v6409
    %v6499 = vunpack.c.l.b16 %v6410
    %v6500 = vunpack.c.h.b16 %v6410
    %v6501 = vunpack.c.l.b16 %v6411
    %v6502 = vunpack.c.h.b16 %v6411
    %v6503 = vunpack.c.l.b16 %v6412
    %v6504 = vunpack.c.h.b16 %v6412
    %v6505 = vunpack.c.l.b16 %v6413
    %v6506 = vunpack.c.h.b16 %v6413
    %v6507 = vunpack.c.l.b16 %v6414
    %v6508 = vunpack.c.h.b16 %v6414
    %v6509 = vunpack.c.l.b16 %v6415
    %v6510 = vunpack.c.h.b16 %v6415
    %v6511 = vunpack.c.l.b16 %v6416
    %v6512 = vunpack.c.h.b16 %v6416
    %v6513 = vpack.c.b16 %v6453, %v6449
    %v6514 = vpack.c.b16 %v6454, %v6450
    %v6515 = vpack.c.b16 %v6455, %v6451
    %v6516 = vpack.c.b16 %v6456, %v6452
    %v6517 = vpack.c.b16 %v6461, %v6457
    %v6518 = vpack.c.b16 %v6462, %v6458
    %v6519 = vpack.c.b16 %v6463, %v6459
    %v6520 = vpack.c.b16 %v6464, %v6460
    %v6521 = vpack.c.b16 %v6469, %v6465
    %v6522 = vpack.c.b16 %v6470, %v6466
    %v6523 = vpack.c.b16 %v6471, %v6467
    %v6524 = vpack.c.b16 %v6472, %v6468
    %v6525 = vpack.c.b16 %v6477, %v6473
    %v6526 = vpack.c.b16 %v6478, %v6474
    %v6527 = vpack.c.b16 %v6479, %v6475
    %v6528 = vpack.c.b16 %v6480, %v6476
    %v6529 = vpack.c.b16 %v6485, %v6481
    %v6530 = vpack.c.b16 %v6486, %v6482
    %v6531 = vpack.c.b16 %v6487, %v6483
    %v6532 = vpack.c.b16 %v6488, %v6484
    %v6533 = vpack.c.b16 %v6493, %v6489
    %v6534 = vpack.c.b16 %v6494, %v6490
    %v6535 = vpack.c.b16 %v6495, %v6491
    %v6536 = vpack.c.b16 %v6496, %v6492
    %v6537 = vpack.c.b16 %v6501, %v6497
    %v6538 = vpack.c.b16 %v6502, %v6498
    %v6539 = vpack.c.b16 %v6503, %v6499
    %v6540 = vpack.c.b16 %v6504, %v6500
    %v6541 = vpack.c.b16 %v6509, %v6505
    %v6542 = vpack.c.b16 %v6510, %v6506
    %v6543 = vpack.c.b16 %v6511, %v6507
    %v6544 = vpack.c.b16 %v6512, %v6508
    %6577 = vmatprep.subr.bf16.mxu0 %v6514
    %6578 = vmatpush1.bf16.msra.mxu0 %v6513
    %6579 = vmatprep.subr.bf16.mxu0 %v6518
    %6580 = vmatpush1.bf16.msra.mxu0 %v6517
    %6581 = vmatprep.subr.bf16.mxu0 %v6522
    %6582 = vmatpush1.bf16.msra.mxu0 %v6521
    %6583 = vmatprep.subr.bf16.mxu0 %v6526
    %6584 = vmatpush1.bf16.msra.mxu0 %v6525
    %6585 = vmatprep.subr.bf16.mxu0 %v6530
    %6586 = vmatpush1.bf16.msra.mxu0 %v6529
    %6587 = vmatprep.subr.bf16.mxu0 %v6534
    %6588 = vmatpush1.bf16.msra.mxu0 %v6533
    %6589 = vmatprep.subr.bf16.mxu0 %v6538
    %6590 = vmatpush1.bf16.msra.mxu0 %v6537
    %6591 = vmatprep.subr.bf16.mxu0 %v6542
    %6592 = vmatpush1.bf16.msra.mxu0 %v6541
    %6593 = vmatprep.subr.bf16.mxu0 0
    %6594 = vmatpush1.bf16.msra.mxu0 0
    %6595 = vmatprep.subr.bf16.mxu0 0
    %6596 = vmatpush1.bf16.msra.mxu0 0
    %6597 = vmatprep.subr.bf16.mxu0 0
    %6598 = vmatpush1.bf16.msra.mxu0 0
    %6599 = vmatprep.subr.bf16.mxu0 0
    %6600 = vmatpush1.bf16.msra.mxu0 0
    %6601 = vmatprep.subr.bf16.mxu0 0
    %6602 = vmatpush1.bf16.msra.mxu0 0
    %6603 = vmatprep.subr.bf16.mxu0 0
    %6604 = vmatpush1.bf16.msra.mxu0 0
    %6605 = vmatprep.subr.bf16.mxu0 0
    %6606 = vmatpush1.bf16.msra.mxu0 0
    %6607 = vmatprep.subr.bf16.mxu0 0
    %6608 = vmatpush1.bf16.msra.mxu0 0
    %6609 = vmatprep.mubr.bf16.mxu0 0
    %6610 = vmatmul.mubr.bf16.gmra.mrb[0].mxu0 %v6109
    %v6611 = vpop.f32.mrb[0].mxu0
    %v6612 = vadd.f32 %v6338, %v6611
    %v6613 = vpop.f32.mrb[0].mxu0
    %v6614 = vadd.f32 %v6340, %v6613
    %v6615 = vpop.f32.mrb[0].mxu0
    %v6616 = vpop.f32.mrb[0].mxu0
    %6617 = vdwg.mxu0
    %6618 = vmatprep.subr.bf16.mxu0 %v6516
    %6619 = vmatpush1.bf16.msra.mxu0 %v6515
    %6620 = vmatprep.subr.bf16.mxu0 %v6520
    %6621 = vmatpush1.bf16.msra.mxu0 %v6519
    %6622 = vmatprep.subr.bf16.mxu0 %v6524
    %6623 = vmatpush1.bf16.msra.mxu0 %v6523
    %6624 = vmatprep.subr.bf16.mxu0 %v6528
    %6625 = vmatpush1.bf16.msra.mxu0 %v6527
    %6626 = vmatprep.subr.bf16.mxu0 %v6532
    %6627 = vmatpush1.bf16.msra.mxu0 %v6531
    %6628 = vmatprep.subr.bf16.mxu0 %v6536
    %6629 = vmatpush1.bf16.msra.mxu0 %v6535
    %6630 = vmatprep.subr.bf16.mxu0 %v6540
    %6631 = vmatpush1.bf16.msra.mxu0 %v6539
    %6632 = vmatprep.subr.bf16.mxu0 %v6544
    %6633 = vmatpush1.bf16.msra.mxu0 %v6543
    %6634 = vmatprep.subr.bf16.mxu0 0
    %6635 = vmatpush1.bf16.msra.mxu0 0
    %6636 = vmatprep.subr.bf16.mxu0 0
    %6637 = vmatpush1.bf16.msra.mxu0 0
    %6638 = vmatprep.subr.bf16.mxu0 0
    %6639 = vmatpush1.bf16.msra.mxu0 0
    %6640 = vmatprep.subr.bf16.mxu0 0
    %6641 = vmatpush1.bf16.msra.mxu0 0
    %6642 = vmatprep.subr.bf16.mxu0 0
    %6643 = vmatpush1.bf16.msra.mxu0 0
    %6644 = vmatprep.subr.bf16.mxu0 0
    %6645 = vmatpush1.bf16.msra.mxu0 0
    %6646 = vmatprep.subr.bf16.mxu0 0
    %6647 = vmatpush1.bf16.msra.mxu0 0
    %6648 = vmatprep.subr.bf16.mxu0 0
    %6649 = vmatpush1.bf16.msra.mxu0 0
    %6650 = vmatprep.mubr.bf16.mxu0 0
    %6651 = vmatmul.mubr.bf16.gmra.mrb[0].mxu0 %v6109
    %v6652 = vpop.f32.mrb[0].mxu0
    %v6653 = vadd.f32 %v6379, %v6652
    %v6654 = vpop.f32.mrb[0].mxu0
    %v6655 = vadd.f32 %v6381, %v6654
    %v6656 = vpop.f32.mrb[0].mxu0
    %v6657 = vpop.f32.mrb[0].mxu0
    %6658 = vdwg.mxu0
    %v6659 = vxor.u32 %v6612, 2147483648
    %v6660 = vmul.f32 %v6659, 1.442695
    %v6661 = vpow.pop %v6660
    %v6662 = vadd.f32 %v6661, 1.0
    %v6663 = vrcp.pop %v6662
    %v6664 = vmul.f32 1.0, %v6663
    %v6665 = vxor.u32 %v6614, 2147483648
    %v6666 = vmul.f32 %v6665, 1.442695
    %v6667 = vpow.pop %v6666
    %v6668 = vadd.f32 %v6667, 1.0
    %v6669 = vrcp.pop %v6668
    %v6670 = vmul.f32 1.0, %v6669
    %v6671 = vtanh.pop %v6653
    %v6672 = vxor.u32 %v6655, 2147483648
    %v6673 = vmul.f32 %v6672, 1.442695
    %v6674 = vpow.pop %v6673
    %v6675 = vadd.f32 %v6674, 1.0
    %v6676 = vrcp.pop %v6675
    %v6677 = vmul.f32 1.0, %v6676
    %v6678 = vmul.f32 %v6670, %v5795
    %v6679 = vmul.f32 %v6664, %v6671
    %v6680 = vadd.f32 %v6678, %v6679
    %v6681 = vtanh.pop %v6680
    %v6682 = vmul.f32 %v6677, %v6681
    %s6683 = scalar_lea.vmem [#allocation12], 48
    %6684 = vst [vmem:[%s6683] sm:$0xff] %v6682
    %v6685 = vld [vmem:[#allocation9] sm:$0xff]
    %v6686 = vld [vmem:[#allocation9 + $0x8] sm:$0xff]
    %v6687 = vld [vmem:[#allocation9 + $0x10] sm:$0xff]
    %v6688 = vld [vmem:[#allocation9 + $0x18] sm:$0xff]
    %v6689 = vld [vmem:[#allocation9 + $0x20] sm:$0xff]
    %v6690 = vld [vmem:[#allocation9 + $0x28] sm:$0xff]
    %v6691 = vld [vmem:[#allocation9 + $0x30] sm:$0xff]
    %v6692 = vld [vmem:[#allocation9 + $0x38] sm:$0xff]
    %v6693 = vld [vmem:[#allocation9 + $0x40] sm:$0xff]
    %v6694 = vld [vmem:[#allocation9 + $0x48] sm:$0xff]
    %v6695 = vld [vmem:[#allocation9 + $0x50] sm:$0xff]
    %v6696 = vld [vmem:[#allocation9 + $0x58] sm:$0xff]
    %v6697 = vld [vmem:[#allocation9 + $0x60] sm:$0xff]
    %v6698 = vld [vmem:[#allocation9 + $0x68] sm:$0xff]
    %v6699 = vld [vmem:[#allocation9 + $0x70] sm:$0xff]
    %v6700 = vld [vmem:[#allocation9 + $0x78] sm:$0xff]
    %v6701 = vld [vmem:[#allocation9 + $0x80] sm:$0xff]
    %v6702 = vld [vmem:[#allocation9 + $0x88] sm:$0xff]
    %v6703 = vld [vmem:[#allocation9 + $0x90] sm:$0xff]
    %v6704 = vld [vmem:[#allocation9 + $0x98] sm:$0xff]
    %v6705 = vld [vmem:[#allocation9 + $0xa0] sm:$0xff]
    %v6706 = vld [vmem:[#allocation9 + $0xa8] sm:$0xff]
    %v6707 = vld [vmem:[#allocation9 + $0xb0] sm:$0xff]
    %v6708 = vld [vmem:[#allocation9 + $0xb8] sm:$0xff]
    %v6709 = vld [vmem:[#allocation9 + $0xc0] sm:$0xff]
    %v6710 = vld [vmem:[#allocation9 + $0xc8] sm:$0xff]
    %v6711 = vld [vmem:[#allocation9 + $0xd0] sm:$0xff]
    %v6712 = vld [vmem:[#allocation9 + $0xd8] sm:$0xff]
    %v6713 = vld [vmem:[#allocation9 + $0xe0] sm:$0xff]
    %v6714 = vld [vmem:[#allocation9 + $0xe8] sm:$0xff]
    %v6715 = vld [vmem:[#allocation9 + $0xf0] sm:$0xff]
    %v6716 = vld [vmem:[#allocation9 + $0xf8] sm:$0xff]
    %v6749 = vunpack.c.l.b16 %v6685
    %v6750 = vunpack.c.h.b16 %v6685
    %v6751 = vunpack.c.l.b16 %v6686
    %v6752 = vunpack.c.h.b16 %v6686
    %v6753 = vunpack.c.l.b16 %v6687
    %v6754 = vunpack.c.h.b16 %v6687
    %v6755 = vunpack.c.l.b16 %v6688
    %v6756 = vunpack.c.h.b16 %v6688
    %v6757 = vunpack.c.l.b16 %v6689
    %v6758 = vunpack.c.h.b16 %v6689
    %v6759 = vunpack.c.l.b16 %v6690
    %v6760 = vunpack.c.h.b16 %v6690
    %v6761 = vunpack.c.l.b16 %v6691
    %v6762 = vunpack.c.h.b16 %v6691
    %v6763 = vunpack.c.l.b16 %v6692
    %v6764 = vunpack.c.h.b16 %v6692
    %v6765 = vunpack.c.l.b16 %v6693
    %v6766 = vunpack.c.h.b16 %v6693
    %v6767 = vunpack.c.l.b16 %v6694
    %v6768 = vunpack.c.h.b16 %v6694
    %v6769 = vunpack.c.l.b16 %v6695
    %v6770 = vunpack.c.h.b16 %v6695
    %v6771 = vunpack.c.l.b16 %v6696
    %v6772 = vunpack.c.h.b16 %v6696
    %v6773 = vunpack.c.l.b16 %v6697
    %v6774 = vunpack.c.h.b16 %v6697
    %v6775 = vunpack.c.l.b16 %v6698
    %v6776 = vunpack.c.h.b16 %v6698
    %v6777 = vunpack.c.l.b16 %v6699
    %v6778 = vunpack.c.h.b16 %v6699
    %v6779 = vunpack.c.l.b16 %v6700
    %v6780 = vunpack.c.h.b16 %v6700
    %v6781 = vunpack.c.l.b16 %v6701
    %v6782 = vunpack.c.h.b16 %v6701
    %v6783 = vunpack.c.l.b16 %v6702
    %v6784 = vunpack.c.h.b16 %v6702
    %v6785 = vunpack.c.l.b16 %v6703
    %v6786 = vunpack.c.h.b16 %v6703
    %v6787 = vunpack.c.l.b16 %v6704
    %v6788 = vunpack.c.h.b16 %v6704
    %v6789 = vunpack.c.l.b16 %v6705
    %v6790 = vunpack.c.h.b16 %v6705
    %v6791 = vunpack.c.l.b16 %v6706
    %v6792 = vunpack.c.h.b16 %v6706
    %v6793 = vunpack.c.l.b16 %v6707
    %v6794 = vunpack.c.h.b16 %v6707
    %v6795 = vunpack.c.l.b16 %v6708
    %v6796 = vunpack.c.h.b16 %v6708
    %v6797 = vunpack.c.l.b16 %v6709
    %v6798 = vunpack.c.h.b16 %v6709
    %v6799 = vunpack.c.l.b16 %v6710
    %v6800 = vunpack.c.h.b16 %v6710
    %v6801 = vunpack.c.l.b16 %v6711
    %v6802 = vunpack.c.h.b16 %v6711
    %v6803 = vunpack.c.l.b16 %v6712
    %v6804 = vunpack.c.h.b16 %v6712
    %v6805 = vunpack.c.l.b16 %v6713
    %v6806 = vunpack.c.h.b16 %v6713
    %v6807 = vunpack.c.l.b16 %v6714
    %v6808 = vunpack.c.h.b16 %v6714
    %v6809 = vunpack.c.l.b16 %v6715
    %v6810 = vunpack.c.h.b16 %v6715
    %v6811 = vunpack.c.l.b16 %v6716
    %v6812 = vunpack.c.h.b16 %v6716
    %v6813 = vpack.c.b16 %v6753, %v6749
    %v6814 = vpack.c.b16 %v6754, %v6750
    %v6815 = vpack.c.b16 %v6755, %v6751
    %v6816 = vpack.c.b16 %v6756, %v6752
    %v6817 = vpack.c.b16 %v6761, %v6757
    %v6818 = vpack.c.b16 %v6762, %v6758
    %v6819 = vpack.c.b16 %v6763, %v6759
    %v6820 = vpack.c.b16 %v6764, %v6760
    %v6821 = vpack.c.b16 %v6769, %v6765
    %v6822 = vpack.c.b16 %v6770, %v6766
    %v6823 = vpack.c.b16 %v6771, %v6767
    %v6824 = vpack.c.b16 %v6772, %v6768
    %v6825 = vpack.c.b16 %v6777, %v6773
    %v6826 = vpack.c.b16 %v6778, %v6774
    %v6827 = vpack.c.b16 %v6779, %v6775
    %v6828 = vpack.c.b16 %v6780, %v6776
    %v6829 = vpack.c.b16 %v6785, %v6781
    %v6830 = vpack.c.b16 %v6786, %v6782
    %v6831 = vpack.c.b16 %v6787, %v6783
    %v6832 = vpack.c.b16 %v6788, %v6784
    %v6833 = vpack.c.b16 %v6793, %v6789
    %v6834 = vpack.c.b16 %v6794, %v6790
    %v6835 = vpack.c.b16 %v6795, %v6791
    %v6836 = vpack.c.b16 %v6796, %v6792
    %v6837 = vpack.c.b16 %v6801, %v6797
    %v6838 = vpack.c.b16 %v6802, %v6798
    %v6839 = vpack.c.b16 %v6803, %v6799
    %v6840 = vpack.c.b16 %v6804, %v6800
    %v6841 = vpack.c.b16 %v6809, %v6805
    %v6842 = vpack.c.b16 %v6810, %v6806
    %v6843 = vpack.c.b16 %v6811, %v6807
    %v6844 = vpack.c.b16 %v6812, %v6808
    %6877 = vmatprep.subr.bf16.mxu0 %v6814
    %6878 = vmatpush1.bf16.msra.mxu0 %v6813
    %6879 = vmatprep.subr.bf16.mxu0 %v6818
    %6880 = vmatpush1.bf16.msra.mxu0 %v6817
    %6881 = vmatprep.subr.bf16.mxu0 %v6822
    %6882 = vmatpush1.bf16.msra.mxu0 %v6821
    %6883 = vmatprep.subr.bf16.mxu0 %v6826
    %6884 = vmatpush1.bf16.msra.mxu0 %v6825
    %6885 = vmatprep.subr.bf16.mxu0 %v6830
    %6886 = vmatpush1.bf16.msra.mxu0 %v6829
    %6887 = vmatprep.subr.bf16.mxu0 %v6834
    %6888 = vmatpush1.bf16.msra.mxu0 %v6833
    %6889 = vmatprep.subr.bf16.mxu0 %v6838
    %6890 = vmatpush1.bf16.msra.mxu0 %v6837
    %6891 = vmatprep.subr.bf16.mxu0 %v6842
    %6892 = vmatpush1.bf16.msra.mxu0 %v6841
    %6893 = vmatprep.subr.bf16.mxu0 0
    %6894 = vmatpush1.bf16.msra.mxu0 0
    %6895 = vmatprep.subr.bf16.mxu0 0
    %6896 = vmatpush1.bf16.msra.mxu0 0
    %6897 = vmatprep.subr.bf16.mxu0 0
    %6898 = vmatpush1.bf16.msra.mxu0 0
    %6899 = vmatprep.subr.bf16.mxu0 0
    %6900 = vmatpush1.bf16.msra.mxu0 0
    %6901 = vmatprep.subr.bf16.mxu0 0
    %6902 = vmatpush1.bf16.msra.mxu0 0
    %6903 = vmatprep.subr.bf16.mxu0 0
    %6904 = vmatpush1.bf16.msra.mxu0 0
    %6905 = vmatprep.subr.bf16.mxu0 0
    %6906 = vmatpush1.bf16.msra.mxu0 0
    %6907 = vmatprep.subr.bf16.mxu0 0
    %6908 = vmatpush1.bf16.msra.mxu0 0
    %6909 = vmatprep.mubr.bf16.mxu0 0
    %6910 = vmatmul.mubr.bf16.gmra.mrb[0].mxu0 %v6109
    %v6911 = vpop.f32.mrb[0].mxu0
    %v6912 = vadd.f32 0.0, %v6911
    %v6913 = vpop.f32.mrb[0].mxu0
    %v6914 = vadd.f32 0.0, %v6913
    %v6915 = vpop.f32.mrb[0].mxu0
    %v6916 = vpop.f32.mrb[0].mxu0
    %6917 = vdwg.mxu0
    %6918 = vmatprep.subr.bf16.mxu0 %v6816
    %6919 = vmatpush1.bf16.msra.mxu0 %v6815
    %6920 = vmatprep.subr.bf16.mxu0 %v6820
    %6921 = vmatpush1.bf16.msra.mxu0 %v6819
    %6922 = vmatprep.subr.bf16.mxu0 %v6824
    %6923 = vmatpush1.bf16.msra.mxu0 %v6823
    %6924 = vmatprep.subr.bf16.mxu0 %v6828
    %6925 = vmatpush1.bf16.msra.mxu0 %v6827
    %6926 = vmatprep.subr.bf16.mxu0 %v6832
    %6927 = vmatpush1.bf16.msra.mxu0 %v6831
    %6928 = vmatprep.subr.bf16.mxu0 %v6836
    %6929 = vmatpush1.bf16.msra.mxu0 %v6835
    %6930 = vmatprep.subr.bf16.mxu0 %v6840
    %6931 = vmatpush1.bf16.msra.mxu0 %v6839
    %6932 = vmatprep.subr.bf16.mxu0 %v6844
    %6933 = vmatpush1.bf16.msra.mxu0 %v6843
    %6934 = vmatprep.subr.bf16.mxu0 0
    %6935 = vmatpush1.bf16.msra.mxu0 0
    %6936 = vmatprep.subr.bf16.mxu0 0
    %6937 = vmatpush1.bf16.msra.mxu0 0
    %6938 = vmatprep.subr.bf16.mxu0 0
    %6939 = vmatpush1.bf16.msra.mxu0 0
    %6940 = vmatprep.subr.bf16.mxu0 0
    %6941 = vmatpush1.bf16.msra.mxu0 0
    %6942 = vmatprep.subr.bf16.mxu0 0
    %6943 = vmatpush1.bf16.msra.mxu0 0
    %6944 = vmatprep.subr.bf16.mxu0 0
    %6945 = vmatpush1.bf16.msra.mxu0 0
    %6946 = vmatprep.subr.bf16.mxu0 0
    %6947 = vmatpush1.bf16.msra.mxu0 0
    %6948 = vmatprep.subr.bf16.mxu0 0
    %6949 = vmatpush1.bf16.msra.mxu0 0
    %6950 = vmatprep.mubr.bf16.mxu0 0
    %6951 = vmatmul.mubr.bf16.gmra.mrb[0].mxu0 %v6109
    %v6952 = vpop.f32.mrb[0].mxu0
    %v6953 = vadd.f32 0.0, %v6952
    %v6954 = vpop.f32.mrb[0].mxu0
    %v6955 = vadd.f32 0.0, %v6954
    %v6956 = vpop.f32.mrb[0].mxu0
    %v6957 = vpop.f32.mrb[0].mxu0
    %6958 = vdwg.mxu0
    %s6959 = smul.u32 7, 4
    %s6960 = smul.addr %s6959, 8
    %s6961 = scalar_lea.vmem [#allocation2], %s6960
    %v6962 = vld [vmem:[%s6961] sm:$0xff]
    %v6963 = vld [vmem:[%s6961 + $0x8] sm:$0xff]
    %v6964 = vld [vmem:[%s6961 + $0x10] sm:$0xff]
    %v6965 = vld [vmem:[%s6961 + $0x18] sm:$0xff]
    %v6966 = vadd.f32 %v6962, %v6912
    %v6967 = vadd.f32 %v6963, %v6914
    %v6968 = vadd.f32 %v6964, %v6953
    %v6969 = vadd.f32 %v6965, %v6955
    %v6970 = vxor.u32 %v6966, 2147483648
    %v6971 = vmul.f32 %v6970, 1.442695
    %v6972 = vpow.pop %v6971
    %v6973 = vadd.f32 %v6972, 1.0
    %v6974 = vrcp.pop %v6973
    %v6975 = vmul.f32 1.0, %v6974
    %v6976 = vxor.u32 %v6967, 2147483648
    %v6977 = vmul.f32 %v6976, 1.442695
    %v6978 = vpow.pop %v6977
    %v6979 = vadd.f32 %v6978, 1.0
    %v6980 = vrcp.pop %v6979
    %v6981 = vmul.f32 1.0, %v6980
    %v6982 = vtanh.pop %v6968
    %v6983 = vxor.u32 %v6969, 2147483648
    %v6984 = vmul.f32 %v6983, 1.442695
    %v6985 = vpow.pop %v6984
    %v6986 = vadd.f32 %v6985, 1.0
    %v6987 = vrcp.pop %v6986
    %v6988 = vmul.f32 1.0, %v6987
    %v6989 = vmul.f32 %v6981, %v6106
    %v6990 = vmul.f32 %v6975, %v6982
    %v6991 = vadd.f32 %v6989, %v6990
    %v6992 = vtanh.pop %v6991
    %v6993 = vmul.f32 %v6988, %v6992
    %v6994 = vpack.c.bf16 %v6993, %v6993
    %v6995 = vpack.c.bf16 %v6682, %v6682
    %v6996 = vld [vmem:[#allocation11] sm:$0xff]
    %v6997 = vld [vmem:[#allocation11 + $0x8] sm:$0xff]
    %v6998 = vld [vmem:[#allocation11 + $0x10] sm:$0xff]
    %v6999 = vld [vmem:[#allocation11 + $0x18] sm:$0xff]
    %v7000 = vld [vmem:[#allocation11 + $0x20] sm:$0xff]
    %v7001 = vld [vmem:[#allocation11 + $0x28] sm:$0xff]
    %v7002 = vld [vmem:[#allocation11 + $0x30] sm:$0xff]
    %v7003 = vld [vmem:[#allocation11 + $0x38] sm:$0xff]
    %v7004 = vld [vmem:[#allocation11 + $0x40] sm:$0xff]
    %v7005 = vld [vmem:[#allocation11 + $0x48] sm:$0xff]
    %v7006 = vld [vmem:[#allocation11 + $0x50] sm:$0xff]
    %v7007 = vld [vmem:[#allocation11 + $0x58] sm:$0xff]
    %v7008 = vld [vmem:[#allocation11 + $0x60] sm:$0xff]
    %v7009 = vld [vmem:[#allocation11 + $0x68] sm:$0xff]
    %v7010 = vld [vmem:[#allocation11 + $0x70] sm:$0xff]
    %v7011 = vld [vmem:[#allocation11 + $0x78] sm:$0xff]
    %v7012 = vld [vmem:[#allocation11 + $0x80] sm:$0xff]
    %v7013 = vld [vmem:[#allocation11 + $0x88] sm:$0xff]
    %v7014 = vld [vmem:[#allocation11 + $0x90] sm:$0xff]
    %v7015 = vld [vmem:[#allocation11 + $0x98] sm:$0xff]
    %v7016 = vld [vmem:[#allocation11 + $0xa0] sm:$0xff]
    %v7017 = vld [vmem:[#allocation11 + $0xa8] sm:$0xff]
    %v7018 = vld [vmem:[#allocation11 + $0xb0] sm:$0xff]
    %v7019 = vld [vmem:[#allocation11 + $0xb8] sm:$0xff]
    %v7020 = vld [vmem:[#allocation11 + $0xc0] sm:$0xff]
    %v7021 = vld [vmem:[#allocation11 + $0xc8] sm:$0xff]
    %v7022 = vld [vmem:[#allocation11 + $0xd0] sm:$0xff]
    %v7023 = vld [vmem:[#allocation11 + $0xd8] sm:$0xff]
    %v7024 = vld [vmem:[#allocation11 + $0xe0] sm:$0xff]
    %v7025 = vld [vmem:[#allocation11 + $0xe8] sm:$0xff]
    %v7026 = vld [vmem:[#allocation11 + $0xf0] sm:$0xff]
    %v7027 = vld [vmem:[#allocation11 + $0xf8] sm:$0xff]
    %v7060 = vunpack.c.l.b16 %v6996
    %v7061 = vunpack.c.h.b16 %v6996
    %v7062 = vunpack.c.l.b16 %v6997
    %v7063 = vunpack.c.h.b16 %v6997
    %v7064 = vunpack.c.l.b16 %v6998
    %v7065 = vunpack.c.h.b16 %v6998
    %v7066 = vunpack.c.l.b16 %v6999
    %v7067 = vunpack.c.h.b16 %v6999
    %v7068 = vunpack.c.l.b16 %v7000
    %v7069 = vunpack.c.h.b16 %v7000
    %v7070 = vunpack.c.l.b16 %v7001
    %v7071 = vunpack.c.h.b16 %v7001
    %v7072 = vunpack.c.l.b16 %v7002
    %v7073 = vunpack.c.h.b16 %v7002
    %v7074 = vunpack.c.l.b16 %v7003
    %v7075 = vunpack.c.h.b16 %v7003
    %v7076 = vunpack.c.l.b16 %v7004
    %v7077 = vunpack.c.h.b16 %v7004
    %v7078 = vunpack.c.l.b16 %v7005
    %v7079 = vunpack.c.h.b16 %v7005
    %v7080 = vunpack.c.l.b16 %v7006
    %v7081 = vunpack.c.h.b16 %v7006
    %v7082 = vunpack.c.l.b16 %v7007
    %v7083 = vunpack.c.h.b16 %v7007
    %v7084 = vunpack.c.l.b16 %v7008
    %v7085 = vunpack.c.h.b16 %v7008
    %v7086 = vunpack.c.l.b16 %v7009
    %v7087 = vunpack.c.h.b16 %v7009
    %v7088 = vunpack.c.l.b16 %v7010
    %v7089 = vunpack.c.h.b16 %v7010
    %v7090 = vunpack.c.l.b16 %v7011
    %v7091 = vunpack.c.h.b16 %v7011
    %v7092 = vunpack.c.l.b16 %v7012
    %v7093 = vunpack.c.h.b16 %v7012
    %v7094 = vunpack.c.l.b16 %v7013
    %v7095 = vunpack.c.h.b16 %v7013
    %v7096 = vunpack.c.l.b16 %v7014
    %v7097 = vunpack.c.h.b16 %v7014
    %v7098 = vunpack.c.l.b16 %v7015
    %v7099 = vunpack.c.h.b16 %v7015
    %v7100 = vunpack.c.l.b16 %v7016
    %v7101 = vunpack.c.h.b16 %v7016
    %v7102 = vunpack.c.l.b16 %v7017
    %v7103 = vunpack.c.h.b16 %v7017
    %v7104 = vunpack.c.l.b16 %v7018
    %v7105 = vunpack.c.h.b16 %v7018
    %v7106 = vunpack.c.l.b16 %v7019
    %v7107 = vunpack.c.h.b16 %v7019
    %v7108 = vunpack.c.l.b16 %v7020
    %v7109 = vunpack.c.h.b16 %v7020
    %v7110 = vunpack.c.l.b16 %v7021
    %v7111 = vunpack.c.h.b16 %v7021
    %v7112 = vunpack.c.l.b16 %v7022
    %v7113 = vunpack.c.h.b16 %v7022
    %v7114 = vunpack.c.l.b16 %v7023
    %v7115 = vunpack.c.h.b16 %v7023
    %v7116 = vunpack.c.l.b16 %v7024
    %v7117 = vunpack.c.h.b16 %v7024
    %v7118 = vunpack.c.l.b16 %v7025
    %v7119 = vunpack.c.h.b16 %v7025
    %v7120 = vunpack.c.l.b16 %v7026
    %v7121 = vunpack.c.h.b16 %v7026
    %v7122 = vunpack.c.l.b16 %v7027
    %v7123 = vunpack.c.h.b16 %v7027
    %v7124 = vpack.c.b16 %v7064, %v7060
    %v7125 = vpack.c.b16 %v7065, %v7061
    %v7126 = vpack.c.b16 %v7066, %v7062
    %v7127 = vpack.c.b16 %v7067, %v7063
    %v7128 = vpack.c.b16 %v7072, %v7068
    %v7129 = vpack.c.b16 %v7073, %v7069
    %v7130 = vpack.c.b16 %v7074, %v7070
    %v7131 = vpack.c.b16 %v7075, %v7071
    %v7132 = vpack.c.b16 %v7080, %v7076
    %v7133 = vpack.c.b16 %v7081, %v7077
    %v7134 = vpack.c.b16 %v7082, %v7078
    %v7135 = vpack.c.b16 %v7083, %v7079
    %v7136 = vpack.c.b16 %v7088, %v7084
    %v7137 = vpack.c.b16 %v7089, %v7085
    %v7138 = vpack.c.b16 %v7090, %v7086
    %v7139 = vpack.c.b16 %v7091, %v7087
    %v7140 = vpack.c.b16 %v7096, %v7092
    %v7141 = vpack.c.b16 %v7097, %v7093
    %v7142 = vpack.c.b16 %v7098, %v7094
    %v7143 = vpack.c.b16 %v7099, %v7095
    %v7144 = vpack.c.b16 %v7104, %v7100
    %v7145 = vpack.c.b16 %v7105, %v7101
    %v7146 = vpack.c.b16 %v7106, %v7102
    %v7147 = vpack.c.b16 %v7107, %v7103
    %v7148 = vpack.c.b16 %v7112, %v7108
    %v7149 = vpack.c.b16 %v7113, %v7109
    %v7150 = vpack.c.b16 %v7114, %v7110
    %v7151 = vpack.c.b16 %v7115, %v7111
    %v7152 = vpack.c.b16 %v7120, %v7116
    %v7153 = vpack.c.b16 %v7121, %v7117
    %v7154 = vpack.c.b16 %v7122, %v7118
    %v7155 = vpack.c.b16 %v7123, %v7119
    %7188 = vmatprep.subr.bf16.mxu0 %v7125
    %7189 = vmatpush1.bf16.msra.mxu0 %v7124
    %7190 = vmatprep.subr.bf16.mxu0 %v7129
    %7191 = vmatpush1.bf16.msra.mxu0 %v7128
    %7192 = vmatprep.subr.bf16.mxu0 %v7133
    %7193 = vmatpush1.bf16.msra.mxu0 %v7132
    %7194 = vmatprep.subr.bf16.mxu0 %v7137
    %7195 = vmatpush1.bf16.msra.mxu0 %v7136
    %7196 = vmatprep.subr.bf16.mxu0 %v7141
    %7197 = vmatpush1.bf16.msra.mxu0 %v7140
    %7198 = vmatprep.subr.bf16.mxu0 %v7145
    %7199 = vmatpush1.bf16.msra.mxu0 %v7144
    %7200 = vmatprep.subr.bf16.mxu0 %v7149
    %7201 = vmatpush1.bf16.msra.mxu0 %v7148
    %7202 = vmatprep.subr.bf16.mxu0 %v7153
    %7203 = vmatpush1.bf16.msra.mxu0 %v7152
    %7204 = vmatprep.subr.bf16.mxu0 0
    %7205 = vmatpush1.bf16.msra.mxu0 0
    %7206 = vmatprep.subr.bf16.mxu0 0
    %7207 = vmatpush1.bf16.msra.mxu0 0
    %7208 = vmatprep.subr.bf16.mxu0 0
    %7209 = vmatpush1.bf16.msra.mxu0 0
    %7210 = vmatprep.subr.bf16.mxu0 0
    %7211 = vmatpush1.bf16.msra.mxu0 0
    %7212 = vmatprep.subr.bf16.mxu0 0
    %7213 = vmatpush1.bf16.msra.mxu0 0
    %7214 = vmatprep.subr.bf16.mxu0 0
    %7215 = vmatpush1.bf16.msra.mxu0 0
    %7216 = vmatprep.subr.bf16.mxu0 0
    %7217 = vmatpush1.bf16.msra.mxu0 0
    %7218 = vmatprep.subr.bf16.mxu0 0
    %7219 = vmatpush1.bf16.msra.mxu0 0
    %7220 = vmatprep.mubr.bf16.mxu0 0
    %7221 = vmatmul.mubr.bf16.gmra.mrb[0].mxu0 %v6995
    %v7222 = vpop.f32.mrb[0].mxu0
    %v7223 = vadd.f32 0.0, %v7222
    %v7224 = vpop.f32.mrb[0].mxu0
    %v7225 = vadd.f32 0.0, %v7224
    %v7226 = vpop.f32.mrb[0].mxu0
    %v7227 = vpop.f32.mrb[0].mxu0
    %7228 = vdwg.mxu0
    %7229 = vmatprep.subr.bf16.mxu0 %v7127
    %7230 = vmatpush1.bf16.msra.mxu0 %v7126
    %7231 = vmatprep.subr.bf16.mxu0 %v7131
    %7232 = vmatpush1.bf16.msra.mxu0 %v7130
    %7233 = vmatprep.subr.bf16.mxu0 %v7135
    %7234 = vmatpush1.bf16.msra.mxu0 %v7134
    %7235 = vmatprep.subr.bf16.mxu0 %v7139
    %7236 = vmatpush1.bf16.msra.mxu0 %v7138
    %7237 = vmatprep.subr.bf16.mxu0 %v7143
    %7238 = vmatpush1.bf16.msra.mxu0 %v7142
    %7239 = vmatprep.subr.bf16.mxu0 %v7147
    %7240 = vmatpush1.bf16.msra.mxu0 %v7146
    %7241 = vmatprep.subr.bf16.mxu0 %v7151
    %7242 = vmatpush1.bf16.msra.mxu0 %v7150
    %7243 = vmatprep.subr.bf16.mxu0 %v7155
    %7244 = vmatpush1.bf16.msra.mxu0 %v7154
    %7245 = vmatprep.subr.bf16.mxu0 0
    %7246 = vmatpush1.bf16.msra.mxu0 0
    %7247 = vmatprep.subr.bf16.mxu0 0
    %7248 = vmatpush1.bf16.msra.mxu0 0
    %7249 = vmatprep.subr.bf16.mxu0 0
    %7250 = vmatpush1.bf16.msra.mxu0 0
    %7251 = vmatprep.subr.bf16.mxu0 0
    %7252 = vmatpush1.bf16.msra.mxu0 0
    %7253 = vmatprep.subr.bf16.mxu0 0
    %7254 = vmatpush1.bf16.msra.mxu0 0
    %7255 = vmatprep.subr.bf16.mxu0 0
    %7256 = vmatpush1.bf16.msra.mxu0 0
    %7257 = vmatprep.subr.bf16.mxu0 0
    %7258 = vmatpush1.bf16.msra.mxu0 0
    %7259 = vmatprep.subr.bf16.mxu0 0
    %7260 = vmatpush1.bf16.msra.mxu0 0
    %7261 = vmatprep.mubr.bf16.mxu0 0
    %7262 = vmatmul.mubr.bf16.gmra.mrb[0].mxu0 %v6995
    %v7263 = vpop.f32.mrb[0].mxu0
    %v7264 = vadd.f32 0.0, %v7263
    %v7265 = vpop.f32.mrb[0].mxu0
    %v7266 = vadd.f32 0.0, %v7265
    %v7267 = vpop.f32.mrb[0].mxu0
    %v7268 = vpop.f32.mrb[0].mxu0
    %7269 = vdwg.mxu0
    %v7270 = vld [vmem:[#allocation8] sm:$0xff]
    %v7271 = vld [vmem:[#allocation8 + $0x8] sm:$0xff]
    %v7272 = vld [vmem:[#allocation8 + $0x10] sm:$0xff]
    %v7273 = vld [vmem:[#allocation8 + $0x18] sm:$0xff]
    %v7274 = vld [vmem:[#allocation8 + $0x20] sm:$0xff]
    %v7275 = vld [vmem:[#allocation8 + $0x28] sm:$0xff]
    %v7276 = vld [vmem:[#allocation8 + $0x30] sm:$0xff]
    %v7277 = vld [vmem:[#allocation8 + $0x38] sm:$0xff]
    %v7278 = vld [vmem:[#allocation8 + $0x40] sm:$0xff]
    %v7279 = vld [vmem:[#allocation8 + $0x48] sm:$0xff]
    %v7280 = vld [vmem:[#allocation8 + $0x50] sm:$0xff]
    %v7281 = vld [vmem:[#allocation8 + $0x58] sm:$0xff]
    %v7282 = vld [vmem:[#allocation8 + $0x60] sm:$0xff]
    %v7283 = vld [vmem:[#allocation8 + $0x68] sm:$0xff]
    %v7284 = vld [vmem:[#allocation8 + $0x70] sm:$0xff]
    %v7285 = vld [vmem:[#allocation8 + $0x78] sm:$0xff]
    %v7286 = vld [vmem:[#allocation8 + $0x80] sm:$0xff]
    %v7287 = vld [vmem:[#allocation8 + $0x88] sm:$0xff]
    %v7288 = vld [vmem:[#allocation8 + $0x90] sm:$0xff]
    %v7289 = vld [vmem:[#allocation8 + $0x98] sm:$0xff]
    %v7290 = vld [vmem:[#allocation8 + $0xa0] sm:$0xff]
    %v7291 = vld [vmem:[#allocation8 + $0xa8] sm:$0xff]
    %v7292 = vld [vmem:[#allocation8 + $0xb0] sm:$0xff]
    %v7293 = vld [vmem:[#allocation8 + $0xb8] sm:$0xff]
    %v7294 = vld [vmem:[#allocation8 + $0xc0] sm:$0xff]
    %v7295 = vld [vmem:[#allocation8 + $0xc8] sm:$0xff]
    %v7296 = vld [vmem:[#allocation8 + $0xd0] sm:$0xff]
    %v7297 = vld [vmem:[#allocation8 + $0xd8] sm:$0xff]
    %v7298 = vld [vmem:[#allocation8 + $0xe0] sm:$0xff]
    %v7299 = vld [vmem:[#allocation8 + $0xe8] sm:$0xff]
    %v7300 = vld [vmem:[#allocation8 + $0xf0] sm:$0xff]
    %v7301 = vld [vmem:[#allocation8 + $0xf8] sm:$0xff]
    %v7334 = vunpack.c.l.b16 %v7270
    %v7335 = vunpack.c.h.b16 %v7270
    %v7336 = vunpack.c.l.b16 %v7271
    %v7337 = vunpack.c.h.b16 %v7271
    %v7338 = vunpack.c.l.b16 %v7272
    %v7339 = vunpack.c.h.b16 %v7272
    %v7340 = vunpack.c.l.b16 %v7273
    %v7341 = vunpack.c.h.b16 %v7273
    %v7342 = vunpack.c.l.b16 %v7274
    %v7343 = vunpack.c.h.b16 %v7274
    %v7344 = vunpack.c.l.b16 %v7275
    %v7345 = vunpack.c.h.b16 %v7275
    %v7346 = vunpack.c.l.b16 %v7276
    %v7347 = vunpack.c.h.b16 %v7276
    %v7348 = vunpack.c.l.b16 %v7277
    %v7349 = vunpack.c.h.b16 %v7277
    %v7350 = vunpack.c.l.b16 %v7278
    %v7351 = vunpack.c.h.b16 %v7278
    %v7352 = vunpack.c.l.b16 %v7279
    %v7353 = vunpack.c.h.b16 %v7279
    %v7354 = vunpack.c.l.b16 %v7280
    %v7355 = vunpack.c.h.b16 %v7280
    %v7356 = vunpack.c.l.b16 %v7281
    %v7357 = vunpack.c.h.b16 %v7281
    %v7358 = vunpack.c.l.b16 %v7282
    %v7359 = vunpack.c.h.b16 %v7282
    %v7360 = vunpack.c.l.b16 %v7283
    %v7361 = vunpack.c.h.b16 %v7283
    %v7362 = vunpack.c.l.b16 %v7284
    %v7363 = vunpack.c.h.b16 %v7284
    %v7364 = vunpack.c.l.b16 %v7285
    %v7365 = vunpack.c.h.b16 %v7285
    %v7366 = vunpack.c.l.b16 %v7286
    %v7367 = vunpack.c.h.b16 %v7286
    %v7368 = vunpack.c.l.b16 %v7287
    %v7369 = vunpack.c.h.b16 %v7287
    %v7370 = vunpack.c.l.b16 %v7288
    %v7371 = vunpack.c.h.b16 %v7288
    %v7372 = vunpack.c.l.b16 %v7289
    %v7373 = vunpack.c.h.b16 %v7289
    %v7374 = vunpack.c.l.b16 %v7290
    %v7375 = vunpack.c.h.b16 %v7290
    %v7376 = vunpack.c.l.b16 %v7291
    %v7377 = vunpack.c.h.b16 %v7291
    %v7378 = vunpack.c.l.b16 %v7292
    %v7379 = vunpack.c.h.b16 %v7292
    %v7380 = vunpack.c.l.b16 %v7293
    %v7381 = vunpack.c.h.b16 %v7293
    %v7382 = vunpack.c.l.b16 %v7294
    %v7383 = vunpack.c.h.b16 %v7294
    %v7384 = vunpack.c.l.b16 %v7295
    %v7385 = vunpack.c.h.b16 %v7295
    %v7386 = vunpack.c.l.b16 %v7296
    %v7387 = vunpack.c.h.b16 %v7296
    %v7388 = vunpack.c.l.b16 %v7297
    %v7389 = vunpack.c.h.b16 %v7297
    %v7390 = vunpack.c.l.b16 %v7298
    %v7391 = vunpack.c.h.b16 %v7298
    %v7392 = vunpack.c.l.b16 %v7299
    %v7393 = vunpack.c.h.b16 %v7299
    %v7394 = vunpack.c.l.b16 %v7300
    %v7395 = vunpack.c.h.b16 %v7300
    %v7396 = vunpack.c.l.b16 %v7301
    %v7397 = vunpack.c.h.b16 %v7301
    %v7398 = vpack.c.b16 %v7338, %v7334
    %v7399 = vpack.c.b16 %v7339, %v7335
    %v7400 = vpack.c.b16 %v7340, %v7336
    %v7401 = vpack.c.b16 %v7341, %v7337
    %v7402 = vpack.c.b16 %v7346, %v7342
    %v7403 = vpack.c.b16 %v7347, %v7343
    %v7404 = vpack.c.b16 %v7348, %v7344
    %v7405 = vpack.c.b16 %v7349, %v7345
    %v7406 = vpack.c.b16 %v7354, %v7350
    %v7407 = vpack.c.b16 %v7355, %v7351
    %v7408 = vpack.c.b16 %v7356, %v7352
    %v7409 = vpack.c.b16 %v7357, %v7353
    %v7410 = vpack.c.b16 %v7362, %v7358
    %v7411 = vpack.c.b16 %v7363, %v7359
    %v7412 = vpack.c.b16 %v7364, %v7360
    %v7413 = vpack.c.b16 %v7365, %v7361
    %v7414 = vpack.c.b16 %v7370, %v7366
    %v7415 = vpack.c.b16 %v7371, %v7367
    %v7416 = vpack.c.b16 %v7372, %v7368
    %v7417 = vpack.c.b16 %v7373, %v7369
    %v7418 = vpack.c.b16 %v7378, %v7374
    %v7419 = vpack.c.b16 %v7379, %v7375
    %v7420 = vpack.c.b16 %v7380, %v7376
    %v7421 = vpack.c.b16 %v7381, %v7377
    %v7422 = vpack.c.b16 %v7386, %v7382
    %v7423 = vpack.c.b16 %v7387, %v7383
    %v7424 = vpack.c.b16 %v7388, %v7384
    %v7425 = vpack.c.b16 %v7389, %v7385
    %v7426 = vpack.c.b16 %v7394, %v7390
    %v7427 = vpack.c.b16 %v7395, %v7391
    %v7428 = vpack.c.b16 %v7396, %v7392
    %v7429 = vpack.c.b16 %v7397, %v7393
    %7462 = vmatprep.subr.bf16.mxu0 %v7399
    %7463 = vmatpush1.bf16.msra.mxu0 %v7398
    %7464 = vmatprep.subr.bf16.mxu0 %v7403
    %7465 = vmatpush1.bf16.msra.mxu0 %v7402
    %7466 = vmatprep.subr.bf16.mxu0 %v7407
    %7467 = vmatpush1.bf16.msra.mxu0 %v7406
    %7468 = vmatprep.subr.bf16.mxu0 %v7411
    %7469 = vmatpush1.bf16.msra.mxu0 %v7410
    %7470 = vmatprep.subr.bf16.mxu0 %v7415
    %7471 = vmatpush1.bf16.msra.mxu0 %v7414
    %7472 = vmatprep.subr.bf16.mxu0 %v7419
    %7473 = vmatpush1.bf16.msra.mxu0 %v7418
    %7474 = vmatprep.subr.bf16.mxu0 %v7423
    %7475 = vmatpush1.bf16.msra.mxu0 %v7422
    %7476 = vmatprep.subr.bf16.mxu0 %v7427
    %7477 = vmatpush1.bf16.msra.mxu0 %v7426
    %7478 = vmatprep.subr.bf16.mxu0 0
    %7479 = vmatpush1.bf16.msra.mxu0 0
    %7480 = vmatprep.subr.bf16.mxu0 0
    %7481 = vmatpush1.bf16.msra.mxu0 0
    %7482 = vmatprep.subr.bf16.mxu0 0
    %7483 = vmatpush1.bf16.msra.mxu0 0
    %7484 = vmatprep.subr.bf16.mxu0 0
    %7485 = vmatpush1.bf16.msra.mxu0 0
    %7486 = vmatprep.subr.bf16.mxu0 0
    %7487 = vmatpush1.bf16.msra.mxu0 0
    %7488 = vmatprep.subr.bf16.mxu0 0
    %7489 = vmatpush1.bf16.msra.mxu0 0
    %7490 = vmatprep.subr.bf16.mxu0 0
    %7491 = vmatpush1.bf16.msra.mxu0 0
    %7492 = vmatprep.subr.bf16.mxu0 0
    %7493 = vmatpush1.bf16.msra.mxu0 0
    %7494 = vmatprep.mubr.bf16.mxu0 0
    %7495 = vmatmul.mubr.bf16.gmra.mrb[0].mxu0 %v6994
    %v7496 = vpop.f32.mrb[0].mxu0
    %v7497 = vadd.f32 %v7223, %v7496
    %v7498 = vpop.f32.mrb[0].mxu0
    %v7499 = vadd.f32 %v7225, %v7498
    %v7500 = vpop.f32.mrb[0].mxu0
    %v7501 = vpop.f32.mrb[0].mxu0
    %7502 = vdwg.mxu0
    %7503 = vmatprep.subr.bf16.mxu0 %v7401
    %7504 = vmatpush1.bf16.msra.mxu0 %v7400
    %7505 = vmatprep.subr.bf16.mxu0 %v7405
    %7506 = vmatpush1.bf16.msra.mxu0 %v7404
    %7507 = vmatprep.subr.bf16.mxu0 %v7409
    %7508 = vmatpush1.bf16.msra.mxu0 %v7408
    %7509 = vmatprep.subr.bf16.mxu0 %v7413
    %7510 = vmatpush1.bf16.msra.mxu0 %v7412
    %7511 = vmatprep.subr.bf16.mxu0 %v7417
    %7512 = vmatpush1.bf16.msra.mxu0 %v7416
    %7513 = vmatprep.subr.bf16.mxu0 %v7421
    %7514 = vmatpush1.bf16.msra.mxu0 %v7420
    %7515 = vmatprep.subr.bf16.mxu0 %v7425
    %7516 = vmatpush1.bf16.msra.mxu0 %v7424
    %7517 = vmatprep.subr.bf16.mxu0 %v7429
    %7518 = vmatpush1.bf16.msra.mxu0 %v7428
    %7519 = vmatprep.subr.bf16.mxu0 0
    %7520 = vmatpush1.bf16.msra.mxu0 0
    %7521 = vmatprep.subr.bf16.mxu0 0
    %7522 = vmatpush1.bf16.msra.mxu0 0
    %7523 = vmatprep.subr.bf16.mxu0 0
    %7524 = vmatpush1.bf16.msra.mxu0 0
    %7525 = vmatprep.subr.bf16.mxu0 0
    %7526 = vmatpush1.bf16.msra.mxu0 0
    %7527 = vmatprep.subr.bf16.mxu0 0
    %7528 = vmatpush1.bf16.msra.mxu0 0
    %7529 = vmatprep.subr.bf16.mxu0 0
    %7530 = vmatpush1.bf16.msra.mxu0 0
    %7531 = vmatprep.subr.bf16.mxu0 0
    %7532 = vmatpush1.bf16.msra.mxu0 0
    %7533 = vmatprep.subr.bf16.mxu0 0
    %7534 = vmatpush1.bf16.msra.mxu0 0
    %7535 = vmatprep.mubr.bf16.mxu0 0
    %7536 = vmatmul.mubr.bf16.gmra.mrb[0].mxu0 %v6994
    %v7537 = vpop.f32.mrb[0].mxu0
    %v7538 = vadd.f32 %v7264, %v7537
    %v7539 = vpop.f32.mrb[0].mxu0
    %v7540 = vadd.f32 %v7266, %v7539
    %v7541 = vpop.f32.mrb[0].mxu0
    %v7542 = vpop.f32.mrb[0].mxu0
    %7543 = vdwg.mxu0
    %v7544 = vxor.u32 %v7497, 2147483648
    %v7545 = vmul.f32 %v7544, 1.442695
    %v7546 = vpow.pop %v7545
    %v7547 = vadd.f32 %v7546, 1.0
    %v7548 = vrcp.pop %v7547
    %v7549 = vmul.f32 1.0, %v7548
    %v7550 = vxor.u32 %v7499, 2147483648
    %v7551 = vmul.f32 %v7550, 1.442695
    %v7552 = vpow.pop %v7551
    %v7553 = vadd.f32 %v7552, 1.0
    %v7554 = vrcp.pop %v7553
    %v7555 = vmul.f32 1.0, %v7554
    %v7556 = vtanh.pop %v7538
    %v7557 = vxor.u32 %v7540, 2147483648
    %v7558 = vmul.f32 %v7557, 1.442695
    %v7559 = vpow.pop %v7558
    %v7560 = vadd.f32 %v7559, 1.0
    %v7561 = vrcp.pop %v7560
    %v7562 = vmul.f32 1.0, %v7561
    %v7563 = vmul.f32 %v7555, %v6680
    %v7564 = vmul.f32 %v7549, %v7556
    %v7565 = vadd.f32 %v7563, %v7564
    %v7566 = vtanh.pop %v7565
    %v7567 = vmul.f32 %v7562, %v7566
    %s7568 = scalar_lea.vmem [#allocation12], 56
    %7569 = vst [vmem:[%s7568] sm:$0xff] %v7567
    // Predicated region
    $region42: #{tpu_custom_call.1} parent=1 // pred_check
      _
    $region43: #{tpu_custom_call.1} parent=1 // pred_check_branch
      %7571 = sbr.rel (0) target = $region45
    $region44: #{tpu_custom_call.1} parent=1 // pred_region
      %s7573 = ssub.s32 1024, 1024
      %7574 = vsyncadd [#allocation5], %s7573
      %s7575 = sshll.u32 [#allocation12], 4
      %s7576 = int_to_ptr.vmem [resolvable:$true] %s7575
      %7581 = dma.vmem_to_hbm [thread:$0]  %s7576, 1024, %s5, [#allocation5], 128, 128, 8
    $region45: #{tpu_custom_call.1} parent=1 // pred_fallthru
      _
    // Predicated region
    $region46: #{tpu_custom_call.1} parent=1 // pred_check
      _
    $region47: #{tpu_custom_call.1} parent=1 // pred_check_branch
      %7583 = sbr.rel (0) target = $region49
    $region48: #{tpu_custom_call.1} parent=1 // pred_region
      %7584 = dma.done [#allocation5], 1024
    $region49: #{tpu_custom_call.1} parent=1 // pred_fallthru
      _
    %7585 = vsyncpa [#allocation4], 1
    %7586 = vsyncpa [#allocation7], 1
    %7587 = vsyncpa [#allocation10], 1
    %7588 = vsyncpa [#allocation5], 1

</llo_original>
